<compile_context>
chip_gen: v6e
topology: v6e:2x2x1
jax: 0.10.0
libtpu: 0.0.40
codegen_flags: <defaults>
</compile_context>

<pallas_src>
import functools
import math

import jax
import jax.numpy as jnp
import numpy as np
from jax.experimental import pallas as pl
from jax.experimental.pallas import tpu as pltpu

EPS = 1e-12


def _layernorm(x, g, b):
    mu = jnp.mean(x, axis=-1, keepdims=True)
    var = jnp.mean((x - mu) ** 2, axis=-1, keepdims=True)
    return (x - mu) * jax.lax.rsqrt(var + EPS) * g + b


def _gelu_exact(x):
    # torch.nn.GELU() default = exact erf-based GELU
    return 0.5 * x * (1.0 + jax.lax.erf(x / jnp.sqrt(2.0).astype(x.dtype)))


# Per-chip tile / scoped-VMEM selection (review: v5e/v6e can afford a larger
# query tile and limit; v7x has 64 MiB/TC so keep tq=128 with headroom).
def _select_tiling():
    try:
        cap = int(pltpu.get_tpu_info().vmem_capacity_bytes)
    except Exception:
        cap = 64 * 1024 * 1024          # conservative default (v7x-sized)
    if cap >= 100 * 1024 * 1024:        # v5e / v6e: 128 MiB physical VMEM
        return 256, 80 * 1024 * 1024
    return 128, 48 * 1024 * 1024        # v7x: 64 MiB per TensorCore


_TQ_CAP, _VMEM_LIMIT = _select_tiling()


# ----------------------------- kernel ---------------------------------------


def bert_layer_kernel(h_ref, mask_ref,
                      wq_ref, bq_ref, wk_ref, bk_ref, wv_ref, bv_ref,
                      wo_ref, bo_ref, ln1g_ref, ln1b_ref,
                      w1_ref, b1_ref, w2_ref, b2_ref, ln2g_ref, ln2b_ref,
                      o_ref, *, n_head, k_dim, v_dim):
    f32 = jnp.float32
    bf16 = jnp.bfloat16

    tq = o_ref.shape[1]
    s_len = h_ref.shape[1]

    # Single activation operand: full sequence for K/V; this tile's query rows
    # sliced from the same VMEM block (review: drop duplicated h input).
    q_start = pl.multiple_of(pl.program_id(1) * tq, tq)
    hq = h_ref[0, pl.ds(q_start, tq), :]            # (TQ, E) f32
    hkv = h_ref[0]                                  # (S,  E) f32
    mask = mask_ref[0]                              # (1,  S) f32

    hq_bf = hq.astype(bf16)
    hkv_bf = hkv.astype(bf16)

    # ---- QKV projections: bf16 MXU matmuls, f32 accumulation -----------------
    scale = 1.0 / math.sqrt(k_dim)
    q = jnp.dot(hq_bf, wq_ref[...], preferred_element_type=f32) + bq_ref[...]
    q = q * scale                                   # fold 1/sqrt(k_dim) once
    k = jnp.dot(hkv_bf, wk_ref[...], preferred_element_type=f32) + bk_ref[...]
    v = jnp.dot(hkv_bf, wv_ref[...], preferred_element_type=f32) + bv_ref[...]

    # Head-major layout (H, rows, dim) for the batched score / PV matmuls.
    q3 = q.astype(bf16).reshape(tq, n_head, k_dim).transpose(1, 0, 2)     # (H,TQ,K)
    k3 = k.astype(bf16).reshape(s_len, n_head, k_dim).transpose(1, 0, 2)  # (H,S,K)
    v3 = v.astype(bf16).reshape(s_len, n_head, v_dim).transpose(1, 0, 2)  # (H,S,V)

    # Scores; low MXU fill (contraction depth = k_dim) is structural, accepted.
    s = jnp.einsum('hqk,hsk->hqs', q3, k3, preferred_element_type=f32)    # (H,TQ,S)

    # masked_softmax exactly as in the PyTorch reference (multiplicative mask).
    m = mask[None, :, :]                            # (1, 1, S), broadcast once
    masked = s * m
    mx = jnp.max(masked, axis=-1, keepdims=True)
    exps = jnp.exp(masked - mx)
    mexps = exps * m
    sums = jnp.sum(mexps, axis=-1, keepdims=True)
    sums = sums + (sums == 0).astype(f32)
    p = mexps * pl.reciprocal(sums, approx=True)    # (H, TQ, S)

    # Context, then ONE full-width output projection (contraction over H*V).
    ctx = jnp.einsum('hqs,hsv->hqv', p.astype(bf16), v3,
                     preferred_element_type=f32)    # (H, TQ, V)
    ctx = ctx.astype(bf16).transpose(1, 0, 2).reshape(tq, n_head * v_dim)
    attn = jnp.dot(ctx, wo_ref[...], preferred_element_type=f32) + bo_ref[...]

    h1 = _layernorm(hq + attn, ln1g_ref[...], ln1b_ref[...])

    # ---- Feed-forward (exact erf GELU) ---------------------------------------
    ff = jnp.dot(h1.astype(bf16), w1_ref[...], preferred_element_type=f32) \
        + b1_ref[...]
    ff = _gelu_exact(ff)
    ff2 = jnp.dot(ff.astype(bf16), w2_ref[...], preferred_element_type=f32) \
        + b2_ref[...]

    o_ref[0] = _layernorm(h1 + ff2, ln2g_ref[...], ln2b_ref[...])


# ----------------------------- wrapper ---------------------------------------


def bert_layer(h, mask3, p, *, n_head, k_dim, v_dim, single_buffer_weights):
    B, S, E = h.shape
    # Query-row tile: whole sequence when short, else a per-chip cap; pad S up
    # to a multiple of tq (padded key columns are masked, padded query rows are
    # sliced off) so an odd S never forces the full sequence resident per step.
    tq = S if S <= _TQ_CAP else _TQ_CAP
    n_q = pl.cdiv(S, tq)
    s_pad = n_q * tq
    if s_pad != S:
        h = jnp.pad(h, ((0, 0), (0, s_pad - S), (0, 0)))
        mask3 = jnp.pad(mask3, ((0, 0), (0, 0), (0, s_pad - S)))

    bf16 = jnp.bfloat16
    weights = [p['wq'].astype(bf16), p['bq'], p['wk'].astype(bf16), p['bk'],
               p['wv'].astype(bf16), p['bv'], p['wo'].astype(bf16), p['bo'],
               p['ln1_g'], p['ln1_b'],
               p['w1'].astype(bf16), p['b1'], p['w2'].astype(bf16), p['b2'],
               p['ln2_g'], p['ln2_b']]

    def weight_spec(a):
        nd = a.ndim
        idx = lambda b, qi, _nd=nd: (0,) * _nd
        if single_buffer_weights:
            # Grid-invariant block: one VMEM copy instead of the default
            # double buffer (halves resident weight VMEM).
            return pl.BlockSpec(a.shape, idx, pipeline_mode=pl.Buffered(1))
        return pl.BlockSpec(a.shape, idx)

    in_specs = ([pl.BlockSpec((1, s_pad, E), lambda b, qi: (b, 0, 0)),   # h (K/V + query slice)
                 pl.BlockSpec((1, 1, s_pad), lambda b, qi: (b, 0, 0))]   # mask
                + [weight_spec(a) for a in weights])

    out = pl.pallas_call(
        functools.partial(bert_layer_kernel,
                          n_head=n_head, k_dim=k_dim, v_dim=v_dim),
        out_shape=jax.ShapeDtypeStruct((B, s_pad, E), h.dtype),
        grid=(B, n_q),
        in_specs=in_specs,
        out_specs=pl.BlockSpec((1, tq, E), lambda b, qi: (b, qi, 0)),
        compiler_params=pltpu.CompilerParams(
            dimension_semantics=("parallel", "parallel"),
            vmem_limit_bytes=_VMEM_LIMIT),
    )(h, mask3, *weights)
    return out[:, :S, :] if s_pad != S else out


def bert_forward(params, input_ids, attention_mask, *, n_head, k_dim, v_dim,
                 single_buffer_weights=True):
    B, S = input_ids.shape
    word = params['word_emb'][input_ids]                      # (B,S,E) gather (glue)
    pos = params['pos_emb'][jnp.arange(S)][None, :, :]        # (1,S,E)
    tok = params['tok_emb'][0][None, None, :]                 # token_type_ids == 0
    h = _layernorm(word + pos + tok, params['emb_ln_g'], params['emb_ln_b'])
    mask3 = attention_mask.astype(jnp.float32).reshape(B, 1, S)
    for layer in params['layers']:
        h = bert_layer(h, mask3, layer, n_head=n_head, k_dim=k_dim, v_dim=v_dim,
                       single_buffer_weights=single_buffer_weights)
    return h


bert_forward_jit = jax.jit(
    bert_forward,
    static_argnames=('n_head', 'k_dim', 'v_dim', 'single_buffer_weights'))


# ----------------------------- params / reference ----------------------------


def init_params(key, vocab, max_len, E, n_head, k_dim, v_dim, F, n_layer):
    def nrm(k, shape):
        return jax.random.normal(k, shape, jnp.float32) * 0.02

    keys = jax.random.split(key, 4 + n_layer)
    word = nrm(keys[0], (vocab, E)).at[0].set(0.0)   # padding_idx = 0
    pos = nrm(keys[1], (max_len, E)).at[0].set(0.0)  # padding_idx = 0
    tok = nrm(keys[2], (2, E))
    params = dict(word_emb=word, pos_emb=pos, tok_emb=tok,
                  emb_ln_g=jnp.ones((1, E), jnp.float32),
                  emb_ln_b=jnp.zeros((1, E), jnp.float32),
                  layers=[])
    for i in range(n_layer):
        lk = jax.random.split(keys[4 + i], 12)
        layer = dict(
            wq=nrm(lk[0], (E, n_head * k_dim)), bq=nrm(lk[1], (1, n_head * k_dim)),
            wk=nrm(lk[2], (E, n_head * k_dim)), bk=nrm(lk[3], (1, n_head * k_dim)),
            wv=nrm(lk[4], (E, n_head * v_dim)), bv=nrm(lk[5], (1, n_head * v_dim)),
            wo=nrm(lk[6], (n_head * v_dim, E)), bo=nrm(lk[7], (1, E)),
            ln1_g=jnp.ones((1, E), jnp.float32), ln1_b=jnp.zeros((1, E), jnp.float32),
            w1=nrm(lk[8], (E, F)), b1=nrm(lk[9], (1, F)),
            w2=nrm(lk[10], (F, E)), b2=nrm(lk[11], (1, E)),
            ln2_g=jnp.ones((1, E), jnp.float32), ln2_b=jnp.zeros((1, E), jnp.float32))
        params['layers'].append(layer)
    return params


def reference_forward(params, input_ids, attention_mask, *, n_head, k_dim, v_dim):
    # Pure f32 JAX reference that mirrors the PyTorch module exactly.
    B, S = input_ids.shape
    word = params['word_emb'][input_ids]
    pos = params['pos_emb'][jnp.arange(S)][None, :, :]
    tok = params['tok_emb'][0][None, None, :]
    h = _layernorm(word + pos + tok, params['emb_ln_g'], params['emb_ln_b'])
    mask = attention_mask.astype(jnp.float32)
    for p in params['layers']:
        q = (h @ p['wq'] + p['bq']).reshape(B, S, n_head, k_dim).transpose(0, 2, 1, 3)
        k = (h @ p['wk'] + p['bk']).reshape(B, S, n_head, k_dim).transpose(0, 2, 3, 1)
        v = (h @ p['wv'] + p['bv']).reshape(B, S, n_head, v_dim).transpose(0, 2, 1, 3)
        a = jnp.matmul(q, k) / math.sqrt(k_dim)
        m = mask[:, None, None, :]
        mv = a * m
        mx = jnp.max(mv, axis=3, keepdims=True)
        ex = jnp.exp(mv - mx) * m
        sm = jnp.sum(ex, axis=3, keepdims=True)
        sm = sm + (sm == 0).astype(jnp.float32)
        attn_p = ex / sm
        o = jnp.matmul(attn_p, v).transpose(0, 2, 1, 3).reshape(B, S, n_head * v_dim)
        o = o @ p['wo'] + p['bo']
        h = _layernorm(h + o, p['ln1_g'], p['ln1_b'])
        ff = _gelu_exact(h @ p['w1'] + p['b1'])
        ff = ff @ p['w2'] + p['b2']
        h = _layernorm(h + ff, p['ln2_g'], p['ln2_b'])
    return h


# ----------------------------- main -------------------------------------------


if __name__ == "__main__":
    # Small, forward-consistent config (scaled-down BERT).  E, n_head*k_dim,
    # n_head*v_dim and F are multiples of 128 so all matmul / store lanes are
    # dense (no masked partial stores).
    B, S = 2, 8
    VOCAB, MAXLEN, E = 100, 16, 128
    NH, KD, VD, FF, NL = 4, 32, 32, 256, 2

    key = jax.random.PRNGKey(0)
    pkey, ikey = jax.random.split(key)

    params = init_params(pkey, VOCAB, MAXLEN, E, NH, KD, VD, FF, NL)
    input_ids = jax.random.randint(ikey, (B, S), 1, VOCAB)
    attention_mask = jnp.ones((B, S), jnp.float32).at[1, 6:].set(0.0)

    ref = reference_forward(params, input_ids, attention_mask,
                            n_head=NH, k_dim=KD, v_dim=VD)

    def run_and_check(single_buffer_weights):
        out = bert_forward_jit(params, input_ids, attention_mask,
                               n_head=NH, k_dim=KD, v_dim=VD,
                               single_buffer_weights=single_buffer_weights)
        out = jax.block_until_ready(out)
        # Kernel runs its matmuls with bf16 inputs (f32 accumulation); compare
        # to the pure-f32 reference with a correspondingly relaxed tolerance.
        np.testing.assert_allclose(np.asarray(out), np.asarray(ref),
                                   rtol=2e-2, atol=2e-2)

    try:
        run_and_check(True)          # single-buffered (pl.Buffered(1)) weights
    except Exception:
        # Fallback: identical kernel with default double-buffered weight
        # BlockSpecs, in case this jax build rejects pipeline_mode=Buffered(1).
        run_and_check(False)

    print("KERNEL_OK")
</pallas_src>

<mosaic_0001>
module attributes {stable_mosaic.version = 11 : i64} {
  func.func @bert_layer_kernel(%arg0: i32, %arg1: i32, %arg2: memref<1x8x128xf32, #tpu.memory_space<vmem>>, %arg3: memref<1x1x8xf32, #tpu.memory_space<vmem>>, %arg4: memref<128x128xbf16, #tpu.memory_space<vmem>>, %arg5: memref<1x128xf32, #tpu.memory_space<vmem>>, %arg6: memref<128x128xbf16, #tpu.memory_space<vmem>>, %arg7: memref<1x128xf32, #tpu.memory_space<vmem>>, %arg8: memref<128x128xbf16, #tpu.memory_space<vmem>>, %arg9: memref<1x128xf32, #tpu.memory_space<vmem>>, %arg10: memref<128x128xbf16, #tpu.memory_space<vmem>>, %arg11: memref<1x128xf32, #tpu.memory_space<vmem>>, %arg12: memref<1x128xf32, #tpu.memory_space<vmem>>, %arg13: memref<1x128xf32, #tpu.memory_space<vmem>>, %arg14: memref<128x256xbf16, #tpu.memory_space<vmem>>, %arg15: memref<1x256xf32, #tpu.memory_space<vmem>>, %arg16: memref<256x128xbf16, #tpu.memory_space<vmem>>, %arg17: memref<1x128xf32, #tpu.memory_space<vmem>>, %arg18: memref<1x128xf32, #tpu.memory_space<vmem>>, %arg19: memref<1x128xf32, #tpu.memory_space<vmem>>, %arg20: memref<1x8x128xf32, #tpu.memory_space<vmem>>) attributes {dimension_semantics = [#tpu.dimension_semantics<parallel>, #tpu.dimension_semantics<parallel>], iteration_bounds = array<i64: 2, 1>, scalar_prefetch = 0 : i64, scratch_operands = 0 : i64, tpu.core_type = #tpu.core_type<tc>, window_params = [{transform_indices = @transform_0, window_bounds = array<i64: 1, 8, 128>}, {transform_indices = @transform_1, window_bounds = array<i64: 1, 1, 8>}, {pipeline_mode = #tpu.pipeline_mode<synchronous>, transform_indices = @transform_2, window_bounds = array<i64: 128, 128>}, {pipeline_mode = #tpu.pipeline_mode<synchronous>, transform_indices = @transform_3, window_bounds = array<i64: 1, 128>}, {pipeline_mode = #tpu.pipeline_mode<synchronous>, transform_indices = @transform_4, window_bounds = array<i64: 128, 128>}, {pipeline_mode = #tpu.pipeline_mode<synchronous>, transform_indices = @transform_5, window_bounds = array<i64: 1, 128>}, {pipeline_mode = #tpu.pipeline_mode<synchronous>, transform_indices = @transform_6, window_bounds = array<i64: 128, 128>}, {pipeline_mode = #tpu.pipeline_mode<synchronous>, transform_indices = @transform_7, window_bounds = array<i64: 1, 128>}, {pipeline_mode = #tpu.pipeline_mode<synchronous>, transform_indices = @transform_8, window_bounds = array<i64: 128, 128>}, {pipeline_mode = #tpu.pipeline_mode<synchronous>, transform_indices = @transform_9, window_bounds = array<i64: 1, 128>}, {pipeline_mode = #tpu.pipeline_mode<synchronous>, transform_indices = @transform_10, window_bounds = array<i64: 1, 128>}, {pipeline_mode = #tpu.pipeline_mode<synchronous>, transform_indices = @transform_11, window_bounds = array<i64: 1, 128>}, {pipeline_mode = #tpu.pipeline_mode<synchronous>, transform_indices = @transform_12, window_bounds = array<i64: 128, 256>}, {pipeline_mode = #tpu.pipeline_mode<synchronous>, transform_indices = @transform_13, window_bounds = array<i64: 1, 256>}, {pipeline_mode = #tpu.pipeline_mode<synchronous>, transform_indices = @transform_14, window_bounds = array<i64: 256, 128>}, {pipeline_mode = #tpu.pipeline_mode<synchronous>, transform_indices = @transform_15, window_bounds = array<i64: 1, 128>}, {pipeline_mode = #tpu.pipeline_mode<synchronous>, transform_indices = @transform_16, window_bounds = array<i64: 1, 128>}, {pipeline_mode = #tpu.pipeline_mode<synchronous>, transform_indices = @transform_17, window_bounds = array<i64: 1, 128>}, {transform_indices = @transform_18, window_bounds = array<i64: 1, 8, 128>}]} {
    %c8_i32 = arith.constant 8 : i32
    %0 = arith.muli %arg1, %c8_i32 : i32
    %1 = tpu.assume_multiple %0, 8 : i32
    %c0 = arith.constant 0 : index
    %2 = arith.index_cast %1 : i32 to index
    %c0_0 = arith.constant 0 : index
    %3 = vector.load %arg2[%c0, %2, %c0_0] : memref<1x8x128xf32, #tpu.memory_space<vmem>>, vector<1x8x128xf32>
    %4 = vector.shape_cast %3 : vector<1x8x128xf32> to vector<8x128xf32>
    %c0_1 = arith.constant 0 : index
    %c0_2 = arith.constant 0 : index
    %c0_3 = arith.constant 0 : index
    %5 = vector.load %arg2[%c0_1, %c0_2, %c0_3] : memref<1x8x128xf32, #tpu.memory_space<vmem>>, vector<1x8x128xf32>
    %6 = vector.shape_cast %5 : vector<1x8x128xf32> to vector<8x128xf32>
    %c0_4 = arith.constant 0 : index
    %c0_5 = arith.constant 0 : index
    %c0_6 = arith.constant 0 : index
    %7 = vector.load %arg3[%c0_4, %c0_5, %c0_6] : memref<1x1x8xf32, #tpu.memory_space<vmem>>, vector<1x1x8xf32>
    %8 = vector.shape_cast %7 : vector<1x1x8xf32> to vector<1x8xf32>
    %9 = arith.truncf %4 : vector<8x128xf32> to vector<8x128xbf16>
    %10 = arith.truncf %6 : vector<8x128xf32> to vector<8x128xbf16>
    %c0_7 = arith.constant 0 : index
    %c0_8 = arith.constant 0 : index
    %11 = vector.load %arg4[%c0_7, %c0_8] : memref<128x128xbf16, #tpu.memory_space<vmem>>, vector<128x128xbf16>
    %cst = arith.constant dense<0.000000e+00> : vector<8x128xf32>
    %12 = tpu.matmul %9, %11, %cst {dimension_numbers = #tpu.dot_dimension_numbers<[1], [0], [0], [1], [0, 0, 1, 1], [], []>} : vector<8x128xbf16>, vector<128x128xbf16>, vector<8x128xf32> -> vector<8x128xf32>
    %c0_9 = arith.constant 0 : index
    %c0_10 = arith.constant 0 : index
    %13 = vector.load %arg5[%c0_9, %c0_10] : memref<1x128xf32, #tpu.memory_space<vmem>>, vector<1x128xf32>
    %14 = vector.broadcast %13 : vector<1x128xf32> to vector<8x128xf32>
    %15 = arith.addf %12, %14 : vector<8x128xf32>
    %cst_11 = arith.constant 0.176776692 : f32
    %16 = vector.broadcast %cst_11 : f32 to vector<8x128xf32>
    %17 = arith.mulf %15, %16 : vector<8x128xf32>
    %c0_12 = arith.constant 0 : index
    %c0_13 = arith.constant 0 : index
    %18 = vector.load %arg6[%c0_12, %c0_13] : memref<128x128xbf16, #tpu.memory_space<vmem>>, vector<128x128xbf16>
    %cst_14 = arith.constant dense<0.000000e+00> : vector<8x128xf32>
    %19 = tpu.matmul %10, %18, %cst_14 {dimension_numbers = #tpu.dot_dimension_numbers<[1], [0], [0], [1], [0, 0, 1, 1], [], []>} : vector<8x128xbf16>, vector<128x128xbf16>, vector<8x128xf32> -> vector<8x128xf32>
    %c0_15 = arith.constant 0 : index
    %c0_16 = arith.constant 0 : index
    %20 = vector.load %arg7[%c0_15, %c0_16] : memref<1x128xf32, #tpu.memory_space<vmem>>, vector<1x128xf32>
    %21 = vector.broadcast %20 : vector<1x128xf32> to vector<8x128xf32>
    %22 = arith.addf %19, %21 : vector<8x128xf32>
    %c0_17 = arith.constant 0 : index
    %c0_18 = arith.constant 0 : index
    %23 = vector.load %arg8[%c0_17, %c0_18] : memref<128x128xbf16, #tpu.memory_space<vmem>>, vector<128x128xbf16>
    %cst_19 = arith.constant dense<0.000000e+00> : vector<8x128xf32>
    %24 = tpu.matmul %10, %23, %cst_19 {dimension_numbers = #tpu.dot_dimension_numbers<[1], [0], [0], [1], [0, 0, 1, 1], [], []>} : vector<8x128xbf16>, vector<128x128xbf16>, vector<8x128xf32> -> vector<8x128xf32>
    %c0_20 = arith.constant 0 : index
    %c0_21 = arith.constant 0 : index
    %25 = vector.load %arg9[%c0_20, %c0_21] : memref<1x128xf32, #tpu.memory_space<vmem>>, vector<1x128xf32>
    %26 = vector.broadcast %25 : vector<1x128xf32> to vector<8x128xf32>
    %27 = arith.addf %24, %26 : vector<8x128xf32>
    %28 = arith.truncf %17 : vector<8x128xf32> to vector<8x128xbf16>
    %29 = vector.shape_cast %28 : vector<8x128xbf16> to vector<8x4x32xbf16>
    %30 = tpu.transpose %29, [1, 0, 2] : vector<8x4x32xbf16> -> vector<4x8x32xbf16>
    %31 = arith.truncf %22 : vector<8x128xf32> to vector<8x128xbf16>
    %32 = vector.shape_cast %31 : vector<8x128xbf16> to vector<8x4x32xbf16>
    %33 = tpu.transpose %32, [1, 0, 2] : vector<8x4x32xbf16> -> vector<4x8x32xbf16>
    %34 = arith.truncf %27 : vector<8x128xf32> to vector<8x128xbf16>
    %35 = vector.shape_cast %34 : vector<8x128xbf16> to vector<8x4x32xbf16>
    %36 = tpu.transpose %35, [1, 0, 2] : vector<8x4x32xbf16> -> vector<4x8x32xbf16>
    "tpu.trace_start"() <{level = 10 : i32, message = "hqk,hsk->hqs"}> : () -> ()
    %cst_22 = arith.constant dense<0.000000e+00> : vector<4x8x8xf32>
    %37 = tpu.matmul %30, %33, %cst_22 {dimension_numbers = #tpu.dot_dimension_numbers<[2], [2], [1], [1], [0, 0, 0, 1, 1, 1], [0], [0]>} : vector<4x8x32xbf16>, vector<4x8x32xbf16>, vector<4x8x8xf32> -> vector<4x8x8xf32>
    "tpu.trace_stop"() : () -> ()
    %38 = vector.shape_cast %8 : vector<1x8xf32> to vector<1x1x8xf32>
    %39 = vector.broadcast %38 : vector<1x1x8xf32> to vector<4x8x8xf32>
    %40 = arith.mulf %37, %39 : vector<4x8x8xf32>
    %cst_23 = arith.constant dense<0xFF800000> : vector<4x8xf32>
    %41 = vector.multi_reduction <maximumf>, %40, %cst_23 [2] : vector<4x8x8xf32> to vector<4x8xf32>
    %42 = vector.shape_cast %41 : vector<4x8xf32> to vector<4x8x1xf32>
    %43 = vector.broadcast %42 : vector<4x8x1xf32> to vector<4x8x8xf32>
    %44 = arith.subf %40, %43 : vector<4x8x8xf32>
    %45 = math.exp %44 : vector<4x8x8xf32>
    %46 = vector.broadcast %38 : vector<1x1x8xf32> to vector<4x8x8xf32>
    %47 = arith.mulf %45, %46 : vector<4x8x8xf32>
    %cst_24 = arith.constant dense<0.000000e+00> : vector<4x8xf32>
    %48 = vector.multi_reduction <add>, %47, %cst_24 [2] : vector<4x8x8xf32> to vector<4x8xf32>
    %49 = vector.shape_cast %48 : vector<4x8xf32> to vector<4x8x1xf32>
    %cst_25 = arith.constant 0.000000e+00 : f32
    %50 = vector.broadcast %cst_25 : f32 to vector<4x8x1xf32>
    %51 = arith.cmpf oeq, %49, %50 : vector<4x8x1xf32>
    %52 = arith.extui %51 : vector<4x8x1xi1> to vector<4x8x1xi32>
    %53 = arith.sitofp %52 : vector<4x8x1xi32> to vector<4x8x1xf32>
    %54 = arith.addf %49, %53 : vector<4x8x1xf32>
    %55 = tpu.reciprocal %54 {approx = true} : vector<4x8x1xf32> -> vector<4x8x1xf32>
    %56 = vector.broadcast %55 : vector<4x8x1xf32> to vector<4x8x8xf32>
    %57 = arith.mulf %47, %56 : vector<4x8x8xf32>
    %58 = arith.truncf %57 : vector<4x8x8xf32> to vector<4x8x8xbf16>
    "tpu.trace_start"() <{level = 10 : i32, message = "hqs,hsv->hqv"}> : () -> ()
    %cst_26 = arith.constant dense<0.000000e+00> : vector<4x8x32xf32>
    %59 = tpu.matmul %58, %36, %cst_26 {dimension_numbers = #tpu.dot_dimension_numbers<[2], [1], [1], [2], [0, 0, 0, 1, 1, 2], [0], [0]>} : vector<4x8x8xbf16>, vector<4x8x32xbf16>, vector<4x8x32xf32> -> vector<4x8x32xf32>
    "tpu.trace_stop"() : () -> ()
    %60 = arith.truncf %59 : vector<4x8x32xf32> to vector<4x8x32xbf16>
    %61 = tpu.transpose %60, [1, 0, 2] : vector<4x8x32xbf16> -> vector<8x4x32xbf16>
    %62 = vector.shape_cast %61 : vector<8x4x32xbf16> to vector<8x128xbf16>
    %c0_27 = arith.constant 0 : index
    %c0_28 = arith.constant 0 : index
    %63 = vector.load %arg10[%c0_27, %c0_28] : memref<128x128xbf16, #tpu.memory_space<vmem>>, vector<128x128xbf16>
    %cst_29 = arith.constant dense<0.000000e+00> : vector<8x128xf32>
    %64 = tpu.matmul %62, %63, %cst_29 {dimension_numbers = #tpu.dot_dimension_numbers<[1], [0], [0], [1], [0, 0, 1, 1], [], []>} : vector<8x128xbf16>, vector<128x128xbf16>, vector<8x128xf32> -> vector<8x128xf32>
    %c0_30 = arith.constant 0 : index
    %c0_31 = arith.constant 0 : index
    %65 = vector.load %arg11[%c0_30, %c0_31] : memref<1x128xf32, #tpu.memory_space<vmem>>, vector<1x128xf32>
    %66 = vector.broadcast %65 : vector<1x128xf32> to vector<8x128xf32>
    %67 = arith.addf %64, %66 : vector<8x128xf32>
    %68 = arith.addf %4, %67 : vector<8x128xf32>
    %c0_32 = arith.constant 0 : index
    %c0_33 = arith.constant 0 : index
    %69 = vector.load %arg12[%c0_32, %c0_33] : memref<1x128xf32, #tpu.memory_space<vmem>>, vector<1x128xf32>
    %c0_34 = arith.constant 0 : index
    %c0_35 = arith.constant 0 : index
    %70 = vector.load %arg13[%c0_34, %c0_35] : memref<1x128xf32, #tpu.memory_space<vmem>>, vector<1x128xf32>
    %cst_36 = arith.constant dense<0.000000e+00> : vector<8xf32>
    %71 = vector.multi_reduction <add>, %68, %cst_36 [1] : vector<8x128xf32> to vector<8xf32>
    %72 = vector.shape_cast %71 : vector<8xf32> to vector<8x1xf32>
    %cst_37 = arith.constant 1.280000e+02 : f32
    %73 = vector.broadcast %cst_37 : f32 to vector<8x1xf32>
    %74 = arith.divf %72, %73 : vector<8x1xf32>
    %75 = vector.broadcast %74 : vector<8x1xf32> to vector<8x128xf32>
    %76 = arith.subf %68, %75 : vector<8x128xf32>
    %77 = arith.mulf %76, %76 : vector<8x128xf32>
    %cst_38 = arith.constant dense<0.000000e+00> : vector<8xf32>
    %78 = vector.multi_reduction <add>, %77, %cst_38 [1] : vector<8x128xf32> to vector<8xf32>
    %79 = vector.shape_cast %78 : vector<8xf32> to vector<8x1xf32>
    %cst_39 = arith.constant 1.280000e+02 : f32
    %80 = vector.broadcast %cst_39 : f32 to vector<8x1xf32>
    %81 = arith.divf %79, %80 : vector<8x1xf32>
    %82 = vector.broadcast %74 : vector<8x1xf32> to vector<8x128xf32>
    %83 = arith.subf %68, %82 : vector<8x128xf32>
    %cst_40 = arith.constant 9.99999996E-13 : f32
    %84 = vector.broadcast %cst_40 : f32 to vector<8x1xf32>
    %85 = arith.addf %81, %84 : vector<8x1xf32>
    %86 = math.rsqrt %85 : vector<8x1xf32>
    %87 = vector.broadcast %86 : vector<8x1xf32> to vector<8x128xf32>
    %88 = arith.mulf %83, %87 : vector<8x128xf32>
    %89 = vector.broadcast %69 : vector<1x128xf32> to vector<8x128xf32>
    %90 = arith.mulf %88, %89 : vector<8x128xf32>
    %91 = vector.broadcast %70 : vector<1x128xf32> to vector<8x128xf32>
    %92 = arith.addf %90, %91 : vector<8x128xf32>
    %93 = arith.truncf %92 : vector<8x128xf32> to vector<8x128xbf16>
    %c0_41 = arith.constant 0 : index
    %c0_42 = arith.constant 0 : index
    %94 = vector.load %arg14[%c0_41, %c0_42] : memref<128x256xbf16, #tpu.memory_space<vmem>>, vector<128x256xbf16>
    %cst_43 = arith.constant dense<0.000000e+00> : vector<8x256xf32>
    %95 = tpu.matmul %93, %94, %cst_43 {dimension_numbers = #tpu.dot_dimension_numbers<[1], [0], [0], [1], [0, 0, 1, 1], [], []>} : vector<8x128xbf16>, vector<128x256xbf16>, vector<8x256xf32> -> vector<8x256xf32>
    %c0_44 = arith.constant 0 : index
    %c0_45 = arith.constant 0 : index
    %96 = vector.load %arg15[%c0_44, %c0_45] : memref<1x256xf32, #tpu.memory_space<vmem>>, vector<1x256xf32>
    %97 = vector.broadcast %96 : vector<1x256xf32> to vector<8x256xf32>
    %98 = arith.addf %95, %97 : vector<8x256xf32>
    %cst_46 = arith.constant 5.000000e-01 : f32
    %99 = vector.broadcast %cst_46 : f32 to vector<8x256xf32>
    %100 = arith.mulf %99, %98 : vector<8x256xf32>
    %cst_47 = arith.constant 2.000000e+00 : f32
    %101 = math.sqrt %cst_47 : f32
    %102 = vector.broadcast %101 : f32 to vector<8x256xf32>
    %103 = arith.divf %98, %102 : vector<8x256xf32>
    %104 = math.erf %103 : vector<8x256xf32>
    %cst_48 = arith.constant 1.000000e+00 : f32
    %105 = vector.broadcast %cst_48 : f32 to vector<8x256xf32>
    %106 = arith.addf %105, %104 : vector<8x256xf32>
    %107 = arith.mulf %100, %106 : vector<8x256xf32>
    %108 = arith.truncf %107 : vector<8x256xf32> to vector<8x256xbf16>
    %c0_49 = arith.constant 0 : index
    %c0_50 = arith.constant 0 : index
    %109 = vector.load %arg16[%c0_49, %c0_50] : memref<256x128xbf16, #tpu.memory_space<vmem>>, vector<256x128xbf16>
    %cst_51 = arith.constant dense<0.000000e+00> : vector<8x128xf32>
    %110 = tpu.matmul %108, %109, %cst_51 {dimension_numbers = #tpu.dot_dimension_numbers<[1], [0], [0], [1], [0, 0, 1, 1], [], []>} : vector<8x256xbf16>, vector<256x128xbf16>, vector<8x128xf32> -> vector<8x128xf32>
    %c0_52 = arith.constant 0 : index
    %c0_53 = arith.constant 0 : index
    %111 = vector.load %arg17[%c0_52, %c0_53] : memref<1x128xf32, #tpu.memory_space<vmem>>, vector<1x128xf32>
    %112 = vector.broadcast %111 : vector<1x128xf32> to vector<8x128xf32>
    %113 = arith.addf %110, %112 : vector<8x128xf32>
    %114 = arith.addf %92, %113 : vector<8x128xf32>
    %c0_54 = arith.constant 0 : index
    %c0_55 = arith.constant 0 : index
    %115 = vector.load %arg18[%c0_54, %c0_55] : memref<1x128xf32, #tpu.memory_space<vmem>>, vector<1x128xf32>
    %c0_56 = arith.constant 0 : index
    %c0_57 = arith.constant 0 : index
    %116 = vector.load %arg19[%c0_56, %c0_57] : memref<1x128xf32, #tpu.memory_space<vmem>>, vector<1x128xf32>
    %cst_58 = arith.constant dense<0.000000e+00> : vector<8xf32>
    %117 = vector.multi_reduction <add>, %114, %cst_58 [1] : vector<8x128xf32> to vector<8xf32>
    %118 = vector.shape_cast %117 : vector<8xf32> to vector<8x1xf32>
    %cst_59 = arith.constant 1.280000e+02 : f32
    %119 = vector.broadcast %cst_59 : f32 to vector<8x1xf32>
    %120 = arith.divf %118, %119 : vector<8x1xf32>
    %121 = vector.broadcast %120 : vector<8x1xf32> to vector<8x128xf32>
    %122 = arith.subf %114, %121 : vector<8x128xf32>
    %123 = arith.mulf %122, %122 : vector<8x128xf32>
    %cst_60 = arith.constant dense<0.000000e+00> : vector<8xf32>
    %124 = vector.multi_reduction <add>, %123, %cst_60 [1] : vector<8x128xf32> to vector<8xf32>
    %125 = vector.shape_cast %124 : vector<8xf32> to vector<8x1xf32>
    %cst_61 = arith.constant 1.280000e+02 : f32
    %126 = vector.broadcast %cst_61 : f32 to vector<8x1xf32>
    %127 = arith.divf %125, %126 : vector<8x1xf32>
    %128 = vector.broadcast %120 : vector<8x1xf32> to vector<8x128xf32>
    %129 = arith.subf %114, %128 : vector<8x128xf32>
    %cst_62 = arith.constant 9.99999996E-13 : f32
    %130 = vector.broadcast %cst_62 : f32 to vector<8x1xf32>
    %131 = arith.addf %127, %130 : vector<8x1xf32>
    %132 = math.rsqrt %131 : vector<8x1xf32>
    %133 = vector.broadcast %132 : vector<8x1xf32> to vector<8x128xf32>
    %134 = arith.mulf %129, %133 : vector<8x128xf32>
    %135 = vector.broadcast %115 : vector<1x128xf32> to vector<8x128xf32>
    %136 = arith.mulf %134, %135 : vector<8x128xf32>
    %137 = vector.broadcast %116 : vector<1x128xf32> to vector<8x128xf32>
    %138 = arith.addf %136, %137 : vector<8x128xf32>
    %c0_63 = arith.constant 0 : index
    %c0_64 = arith.constant 0 : index
    %c0_65 = arith.constant 0 : index
    %139 = vector.load %arg20[%c0_63, %c0_64, %c0_65] : memref<1x8x128xf32, #tpu.memory_space<vmem>>, vector<1x8x128xf32>
    %140 = vector.shape_cast %139 : vector<1x8x128xf32> to vector<8x128xf32>
    %141 = vector.shape_cast %138 : vector<8x128xf32> to vector<1x8x128xf32>
    tpu.vector_store %arg20[%c0_63, %c0_64, %c0_65], %141 {strides = array<i32>} : memref<1x8x128xf32, #tpu.memory_space<vmem>>, vector<1x8x128xf32>,
    return
  }
  func.func @transform_0(%arg0: i32, %arg1: i32) -> (i32, i32, i32) {
    %c0_i32 = arith.constant 0 : i32
    %c0_i32_0 = arith.constant 0 : i32
    %c0_i32_1 = arith.constant 0 : i32
    return %arg0, %c0_i32, %c0_i32_0 : i32, i32, i32
  }
  func.func @transform_1(%arg0: i32, %arg1: i32) -> (i32, i32, i32) {
    %c0_i32 = arith.constant 0 : i32
    %c0_i32_0 = arith.constant 0 : i32
    %c0_i32_1 = arith.constant 0 : i32
    return %arg0, %c0_i32, %c0_i32_0 : i32, i32, i32
  }
  func.func @transform_2(%arg0: i32, %arg1: i32) -> (i32, i32) {
    %c0_i32 = arith.constant 0 : i32
    %c0_i32_0 = arith.constant 0 : i32
    %c0_i32_1 = arith.constant 0 : i32
    return %c0_i32, %c0_i32_0 : i32, i32
  }
  func.func @transform_3(%arg0: i32, %arg1: i32) -> (i32, i32) {
    %c0_i32 = arith.constant 0 : i32
    %c0_i32_0 = arith.constant 0 : i32
    %c0_i32_1 = arith.constant 0 : i32
    return %c0_i32, %c0_i32_0 : i32, i32
  }
  func.func @transform_4(%arg0: i32, %arg1: i32) -> (i32, i32) {
    %c0_i32 = arith.constant 0 : i32
    %c0_i32_0 = arith.constant 0 : i32
    %c0_i32_1 = arith.constant 0 : i32
    return %c0_i32, %c0_i32_0 : i32, i32
  }
  func.func @transform_5(%arg0: i32, %arg1: i32) -> (i32, i32) {
    %c0_i32 = arith.constant 0 : i32
    %c0_i32_0 = arith.constant 0 : i32
    %c0_i32_1 = arith.constant 0 : i32
    return %c0_i32, %c0_i32_0 : i32, i32
  }
  func.func @transform_6(%arg0: i32, %arg1: i32) -> (i32, i32) {
    %c0_i32 = arith.constant 0 : i32
    %c0_i32_0 = arith.constant 0 : i32
    %c0_i32_1 = arith.constant 0 : i32
    return %c0_i32, %c0_i32_0 : i32, i32
  }
  func.func @transform_7(%arg0: i32, %arg1: i32) -> (i32, i32) {
    %c0_i32 = arith.constant 0 : i32
    %c0_i32_0 = arith.constant 0 : i32
    %c0_i32_1 = arith.constant 0 : i32
    return %c0_i32, %c0_i32_0 : i32, i32
  }
  func.func @transform_8(%arg0: i32, %arg1: i32) -> (i32, i32) {
    %c0_i32 = arith.constant 0 : i32
    %c0_i32_0 = arith.constant 0 : i32
    %c0_i32_1 = arith.constant 0 : i32
    return %c0_i32, %c0_i32_0 : i32, i32
  }
  func.func @transform_9(%arg0: i32, %arg1: i32) -> (i32, i32) {
    %c0_i32 = arith.constant 0 : i32
    %c0_i32_0 = arith.constant 0 : i32
    %c0_i32_1 = arith.constant 0 : i32
    return %c0_i32, %c0_i32_0 : i32, i32
  }
  func.func @transform_10(%arg0: i32, %arg1: i32) -> (i32, i32) {
    %c0_i32 = arith.constant 0 : i32
    %c0_i32_0 = arith.constant 0 : i32
    %c0_i32_1 = arith.constant 0 : i32
    return %c0_i32, %c0_i32_0 : i32, i32
  }
  func.func @transform_11(%arg0: i32, %arg1: i32) -> (i32, i32) {
    %c0_i32 = arith.constant 0 : i32
    %c0_i32_0 = arith.constant 0 : i32
    %c0_i32_1 = arith.constant 0 : i32
    return %c0_i32, %c0_i32_0 : i32, i32
  }
  func.func @transform_12(%arg0: i32, %arg1: i32) -> (i32, i32) {
    %c0_i32 = arith.constant 0 : i32
    %c0_i32_0 = arith.constant 0 : i32
    %c0_i32_1 = arith.constant 0 : i32
    return %c0_i32, %c0_i32_0 : i32, i32
  }
  func.func @transform_13(%arg0: i32, %arg1: i32) -> (i32, i32) {
    %c0_i32 = arith.constant 0 : i32
    %c0_i32_0 = arith.constant 0 : i32
    %c0_i32_1 = arith.constant 0 : i32
    return %c0_i32, %c0_i32_0 : i32, i32
  }
  func.func @transform_14(%arg0: i32, %arg1: i32) -> (i32, i32) {
    %c0_i32 = arith.constant 0 : i32
    %c0_i32_0 = arith.constant 0 : i32
    %c0_i32_1 = arith.constant 0 : i32
    return %c0_i32, %c0_i32_0 : i32, i32
  }
  func.func @transform_15(%arg0: i32, %arg1: i32) -> (i32, i32) {
    %c0_i32 = arith.constant 0 : i32
    %c0_i32_0 = arith.constant 0 : i32
    %c0_i32_1 = arith.constant 0 : i32
    return %c0_i32, %c0_i32_0 : i32, i32
  }
  func.func @transform_16(%arg0: i32, %arg1: i32) -> (i32, i32) {
    %c0_i32 = arith.constant 0 : i32
    %c0_i32_0 = arith.constant 0 : i32
    %c0_i32_1 = arith.constant 0 : i32
    return %c0_i32, %c0_i32_0 : i32, i32
  }
  func.func @transform_17(%arg0: i32, %arg1: i32) -> (i32, i32) {
    %c0_i32 = arith.constant 0 : i32
    %c0_i32_0 = arith.constant 0 : i32
    %c0_i32_1 = arith.constant 0 : i32
    return %c0_i32, %c0_i32_0 : i32, i32
  }
  func.func @transform_18(%arg0: i32, %arg1: i32) -> (i32, i32, i32) {
    %c0_i32 = arith.constant 0 : i32
    %c0_i32_0 = arith.constant 0 : i32
    return %arg0, %arg1, %c0_i32 : i32, i32, i32
  }
}

module attributes {stable_mosaic.version = 11 : i64} {
  func.func @bert_layer_kernel(%arg0: i32, %arg1: i32, %arg2: memref<1x8x128xf32, #tpu.memory_space<vmem>>, %arg3: memref<1x1x8xf32, #tpu.memory_space<vmem>>, %arg4: memref<128x128xbf16, #tpu.memory_space<vmem>>, %arg5: memref<1x128xf32, #tpu.memory_space<vmem>>, %arg6: memref<128x128xbf16, #tpu.memory_space<vmem>>, %arg7: memref<1x128xf32, #tpu.memory_space<vmem>>, %arg8: memref<128x128xbf16, #tpu.memory_space<vmem>>, %arg9: memref<1x128xf32, #tpu.memory_space<vmem>>, %arg10: memref<128x128xbf16, #tpu.memory_space<vmem>>, %arg11: memref<1x128xf32, #tpu.memory_space<vmem>>, %arg12: memref<1x128xf32, #tpu.memory_space<vmem>>, %arg13: memref<1x128xf32, #tpu.memory_space<vmem>>, %arg14: memref<128x256xbf16, #tpu.memory_space<vmem>>, %arg15: memref<1x256xf32, #tpu.memory_space<vmem>>, %arg16: memref<256x128xbf16, #tpu.memory_space<vmem>>, %arg17: memref<1x128xf32, #tpu.memory_space<vmem>>, %arg18: memref<1x128xf32, #tpu.memory_space<vmem>>, %arg19: memref<1x128xf32, #tpu.memory_space<vmem>>, %arg20: memref<1x8x128xf32, #tpu.memory_space<vmem>>) attributes {dimension_semantics = [#tpu.dimension_semantics<parallel>, #tpu.dimension_semantics<parallel>], iteration_bounds = array<i64: 2, 1>, scalar_prefetch = 0 : i64, scratch_operands = 0 : i64, tpu.core_type = #tpu.core_type<tc>, window_params = [{transform_indices = @transform_0, window_bounds = array<i64: 1, 8, 128>}, {transform_indices = @transform_1, window_bounds = array<i64: 1, 1, 8>}, {pipeline_mode = #tpu.pipeline_mode<synchronous>, transform_indices = @transform_2, window_bounds = array<i64: 128, 128>}, {pipeline_mode = #tpu.pipeline_mode<synchronous>, transform_indices = @transform_3, window_bounds = array<i64: 1, 128>}, {pipeline_mode = #tpu.pipeline_mode<synchronous>, transform_indices = @transform_4, window_bounds = array<i64: 128, 128>}, {pipeline_mode = #tpu.pipeline_mode<synchronous>, transform_indices = @transform_5, window_bounds = array<i64: 1, 128>}, {pipeline_mode = #tpu.pipeline_mode<synchronous>, transform_indices = @transform_6, window_bounds = array<i64: 128, 128>}, {pipeline_mode = #tpu.pipeline_mode<synchronous>, transform_indices = @transform_7, window_bounds = array<i64: 1, 128>}, {pipeline_mode = #tpu.pipeline_mode<synchronous>, transform_indices = @transform_8, window_bounds = array<i64: 128, 128>}, {pipeline_mode = #tpu.pipeline_mode<synchronous>, transform_indices = @transform_9, window_bounds = array<i64: 1, 128>}, {pipeline_mode = #tpu.pipeline_mode<synchronous>, transform_indices = @transform_10, window_bounds = array<i64: 1, 128>}, {pipeline_mode = #tpu.pipeline_mode<synchronous>, transform_indices = @transform_11, window_bounds = array<i64: 1, 128>}, {pipeline_mode = #tpu.pipeline_mode<synchronous>, transform_indices = @transform_12, window_bounds = array<i64: 128, 256>}, {pipeline_mode = #tpu.pipeline_mode<synchronous>, transform_indices = @transform_13, window_bounds = array<i64: 1, 256>}, {pipeline_mode = #tpu.pipeline_mode<synchronous>, transform_indices = @transform_14, window_bounds = array<i64: 256, 128>}, {pipeline_mode = #tpu.pipeline_mode<synchronous>, transform_indices = @transform_15, window_bounds = array<i64: 1, 128>}, {pipeline_mode = #tpu.pipeline_mode<synchronous>, transform_indices = @transform_16, window_bounds = array<i64: 1, 128>}, {pipeline_mode = #tpu.pipeline_mode<synchronous>, transform_indices = @transform_17, window_bounds = array<i64: 1, 128>}, {transform_indices = @transform_18, window_bounds = array<i64: 1, 8, 128>}]} {
    %c8_i32 = arith.constant 8 : i32
    %0 = arith.muli %arg1, %c8_i32 : i32
    %1 = tpu.assume_multiple %0, 8 : i32
    %c0 = arith.constant 0 : index
    %2 = arith.index_cast %1 : i32 to index
    %c0_0 = arith.constant 0 : index
    %3 = vector.load %arg2[%c0, %2, %c0_0] : memref<1x8x128xf32, #tpu.memory_space<vmem>>, vector<1x8x128xf32>
    %4 = vector.shape_cast %3 : vector<1x8x128xf32> to vector<8x128xf32>
    %c0_1 = arith.constant 0 : index
    %c0_2 = arith.constant 0 : index
    %c0_3 = arith.constant 0 : index
    %5 = vector.load %arg2[%c0_1, %c0_2, %c0_3] : memref<1x8x128xf32, #tpu.memory_space<vmem>>, vector<1x8x128xf32>
    %6 = vector.shape_cast %5 : vector<1x8x128xf32> to vector<8x128xf32>
    %c0_4 = arith.constant 0 : index
    %c0_5 = arith.constant 0 : index
    %c0_6 = arith.constant 0 : index
    %7 = vector.load %arg3[%c0_4, %c0_5, %c0_6] : memref<1x1x8xf32, #tpu.memory_space<vmem>>, vector<1x1x8xf32>
    %8 = vector.shape_cast %7 : vector<1x1x8xf32> to vector<1x8xf32>
    %9 = arith.truncf %4 : vector<8x128xf32> to vector<8x128xbf16>
    %10 = arith.truncf %6 : vector<8x128xf32> to vector<8x128xbf16>
    %c0_7 = arith.constant 0 : index
    %c0_8 = arith.constant 0 : index
    %11 = vector.load %arg4[%c0_7, %c0_8] : memref<128x128xbf16, #tpu.memory_space<vmem>>, vector<128x128xbf16>
    %cst = arith.constant dense<0.000000e+00> : vector<8x128xf32>
    %12 = tpu.matmul %9, %11, %cst {dimension_numbers = #tpu.dot_dimension_numbers<[1], [0], [0], [1], [0, 0, 1, 1], [], []>} : vector<8x128xbf16>, vector<128x128xbf16>, vector<8x128xf32> -> vector<8x128xf32>
    %c0_9 = arith.constant 0 : index
    %c0_10 = arith.constant 0 : index
    %13 = vector.load %arg5[%c0_9, %c0_10] : memref<1x128xf32, #tpu.memory_space<vmem>>, vector<1x128xf32>
    %14 = vector.broadcast %13 : vector<1x128xf32> to vector<8x128xf32>
    %15 = arith.addf %12, %14 : vector<8x128xf32>
    %cst_11 = arith.constant 0.176776692 : f32
    %16 = vector.broadcast %cst_11 : f32 to vector<8x128xf32>
    %17 = arith.mulf %15, %16 : vector<8x128xf32>
    %c0_12 = arith.constant 0 : index
    %c0_13 = arith.constant 0 : index
    %18 = vector.load %arg6[%c0_12, %c0_13] : memref<128x128xbf16, #tpu.memory_space<vmem>>, vector<128x128xbf16>
    %cst_14 = arith.constant dense<0.000000e+00> : vector<8x128xf32>
    %19 = tpu.matmul %10, %18, %cst_14 {dimension_numbers = #tpu.dot_dimension_numbers<[1], [0], [0], [1], [0, 0, 1, 1], [], []>} : vector<8x128xbf16>, vector<128x128xbf16>, vector<8x128xf32> -> vector<8x128xf32>
    %c0_15 = arith.constant 0 : index
    %c0_16 = arith.constant 0 : index
    %20 = vector.load %arg7[%c0_15, %c0_16] : memref<1x128xf32, #tpu.memory_space<vmem>>, vector<1x128xf32>
    %21 = vector.broadcast %20 : vector<1x128xf32> to vector<8x128xf32>
    %22 = arith.addf %19, %21 : vector<8x128xf32>
    %c0_17 = arith.constant 0 : index
    %c0_18 = arith.constant 0 : index
    %23 = vector.load %arg8[%c0_17, %c0_18] : memref<128x128xbf16, #tpu.memory_space<vmem>>, vector<128x128xbf16>
    %cst_19 = arith.constant dense<0.000000e+00> : vector<8x128xf32>
    %24 = tpu.matmul %10, %23, %cst_19 {dimension_numbers = #tpu.dot_dimension_numbers<[1], [0], [0], [1], [0, 0, 1, 1], [], []>} : vector<8x128xbf16>, vector<128x128xbf16>, vector<8x128xf32> -> vector<8x128xf32>
    %c0_20 = arith.constant 0 : index
    %c0_21 = arith.constant 0 : index
    %25 = vector.load %arg9[%c0_20, %c0_21] : memref<1x128xf32, #tpu.memory_space<vmem>>, vector<1x128xf32>
    %26 = vector.broadcast %25 : vector<1x128xf32> to vector<8x128xf32>
    %27 = arith.addf %24, %26 : vector<8x128xf32>
    %28 = arith.truncf %17 : vector<8x128xf32> to vector<8x128xbf16>
    %29 = vector.shape_cast %28 : vector<8x128xbf16> to vector<8x4x32xbf16>
    %30 = tpu.transpose %29, [1, 0, 2] : vector<8x4x32xbf16> -> vector<4x8x32xbf16>
    %31 = arith.truncf %22 : vector<8x128xf32> to vector<8x128xbf16>
    %32 = vector.shape_cast %31 : vector<8x128xbf16> to vector<8x4x32xbf16>
    %33 = tpu.transpose %32, [1, 0, 2] : vector<8x4x32xbf16> -> vector<4x8x32xbf16>
    %34 = arith.truncf %27 : vector<8x128xf32> to vector<8x128xbf16>
    %35 = vector.shape_cast %34 : vector<8x128xbf16> to vector<8x4x32xbf16>
    %36 = tpu.transpose %35, [1, 0, 2] : vector<8x4x32xbf16> -> vector<4x8x32xbf16>
    "tpu.trace_start"() <{level = 10 : i32, message = "hqk,hsk->hqs"}> : () -> ()
    %cst_22 = arith.constant dense<0.000000e+00> : vector<4x8x8xf32>
    %37 = tpu.matmul %30, %33, %cst_22 {dimension_numbers = #tpu.dot_dimension_numbers<[2], [2], [1], [1], [0, 0, 0, 1, 1, 1], [0], [0]>} : vector<4x8x32xbf16>, vector<4x8x32xbf16>, vector<4x8x8xf32> -> vector<4x8x8xf32>
    "tpu.trace_stop"() : () -> ()
    %38 = vector.shape_cast %8 : vector<1x8xf32> to vector<1x1x8xf32>
    %39 = vector.broadcast %38 : vector<1x1x8xf32> to vector<4x8x8xf32>
    %40 = arith.mulf %37, %39 : vector<4x8x8xf32>
    %cst_23 = arith.constant dense<0xFF800000> : vector<4x8xf32>
    %41 = vector.multi_reduction <maximumf>, %40, %cst_23 [2] : vector<4x8x8xf32> to vector<4x8xf32>
    %42 = vector.shape_cast %41 : vector<4x8xf32> to vector<4x8x1xf32>
    %43 = vector.broadcast %42 : vector<4x8x1xf32> to vector<4x8x8xf32>
    %44 = arith.subf %40, %43 : vector<4x8x8xf32>
    %45 = math.exp %44 : vector<4x8x8xf32>
    %46 = vector.broadcast %38 : vector<1x1x8xf32> to vector<4x8x8xf32>
    %47 = arith.mulf %45, %46 : vector<4x8x8xf32>
    %cst_24 = arith.constant dense<0.000000e+00> : vector<4x8xf32>
    %48 = vector.multi_reduction <add>, %47, %cst_24 [2] : vector<4x8x8xf32> to vector<4x8xf32>
    %49 = vector.shape_cast %48 : vector<4x8xf32> to vector<4x8x1xf32>
    %cst_25 = arith.constant 0.000000e+00 : f32
    %50 = vector.broadcast %cst_25 : f32 to vector<4x8x1xf32>
    %51 = arith.cmpf oeq, %49, %50 : vector<4x8x1xf32>
    %52 = arith.extui %51 : vector<4x8x1xi1> to vector<4x8x1xi32>
    %53 = arith.sitofp %52 : vector<4x8x1xi32> to vector<4x8x1xf32>
    %54 = arith.addf %49, %53 : vector<4x8x1xf32>
    %55 = tpu.reciprocal %54 {approx = true} : vector<4x8x1xf32> -> vector<4x8x1xf32>
    %56 = vector.broadcast %55 : vector<4x8x1xf32> to vector<4x8x8xf32>
    %57 = arith.mulf %47, %56 : vector<4x8x8xf32>
    %58 = arith.truncf %57 : vector<4x8x8xf32> to vector<4x8x8xbf16>
    "tpu.trace_start"() <{level = 10 : i32, message = "hqs,hsv->hqv"}> : () -> ()
    %cst_26 = arith.constant dense<0.000000e+00> : vector<4x8x32xf32>
    %59 = tpu.matmul %58, %36, %cst_26 {dimension_numbers = #tpu.dot_dimension_numbers<[2], [1], [1], [2], [0, 0, 0, 1, 1, 2], [0], [0]>} : vector<4x8x8xbf16>, vector<4x8x32xbf16>, vector<4x8x32xf32> -> vector<4x8x32xf32>
    "tpu.trace_stop"() : () -> ()
    %60 = arith.truncf %59 : vector<4x8x32xf32> to vector<4x8x32xbf16>
    %61 = tpu.transpose %60, [1, 0, 2] : vector<4x8x32xbf16> -> vector<8x4x32xbf16>
    %62 = vector.shape_cast %61 : vector<8x4x32xbf16> to vector<8x128xbf16>
    %c0_27 = arith.constant 0 : index
    %c0_28 = arith.constant 0 : index
    %63 = vector.load %arg10[%c0_27, %c0_28] : memref<128x128xbf16, #tpu.memory_space<vmem>>, vector<128x128xbf16>
    %cst_29 = arith.constant dense<0.000000e+00> : vector<8x128xf32>
    %64 = tpu.matmul %62, %63, %cst_29 {dimension_numbers = #tpu.dot_dimension_numbers<[1], [0], [0], [1], [0, 0, 1, 1], [], []>} : vector<8x128xbf16>, vector<128x128xbf16>, vector<8x128xf32> -> vector<8x128xf32>
    %c0_30 = arith.constant 0 : index
    %c0_31 = arith.constant 0 : index
    %65 = vector.load %arg11[%c0_30, %c0_31] : memref<1x128xf32, #tpu.memory_space<vmem>>, vector<1x128xf32>
    %66 = vector.broadcast %65 : vector<1x128xf32> to vector<8x128xf32>
    %67 = arith.addf %64, %66 : vector<8x128xf32>
    %68 = arith.addf %4, %67 : vector<8x128xf32>
    %c0_32 = arith.constant 0 : index
    %c0_33 = arith.constant 0 : index
    %69 = vector.load %arg12[%c0_32, %c0_33] : memref<1x128xf32, #tpu.memory_space<vmem>>, vector<1x128xf32>
    %c0_34 = arith.constant 0 : index
    %c0_35 = arith.constant 0 : index
    %70 = vector.load %arg13[%c0_34, %c0_35] : memref<1x128xf32, #tpu.memory_space<vmem>>, vector<1x128xf32>
    %cst_36 = arith.constant dense<0.000000e+00> : vector<8xf32>
    %71 = vector.multi_reduction <add>, %68, %cst_36 [1] : vector<8x128xf32> to vector<8xf32>
    %72 = vector.shape_cast %71 : vector<8xf32> to vector<8x1xf32>
    %cst_37 = arith.constant 1.280000e+02 : f32
    %73 = vector.broadcast %cst_37 : f32 to vector<8x1xf32>
    %74 = arith.divf %72, %73 : vector<8x1xf32>
    %75 = vector.broadcast %74 : vector<8x1xf32> to vector<8x128xf32>
    %76 = arith.subf %68, %75 : vector<8x128xf32>
    %77 = arith.mulf %76, %76 : vector<8x128xf32>
    %cst_38 = arith.constant dense<0.000000e+00> : vector<8xf32>
    %78 = vector.multi_reduction <add>, %77, %cst_38 [1] : vector<8x128xf32> to vector<8xf32>
    %79 = vector.shape_cast %78 : vector<8xf32> to vector<8x1xf32>
    %cst_39 = arith.constant 1.280000e+02 : f32
    %80 = vector.broadcast %cst_39 : f32 to vector<8x1xf32>
    %81 = arith.divf %79, %80 : vector<8x1xf32>
    %82 = vector.broadcast %74 : vector<8x1xf32> to vector<8x128xf32>
    %83 = arith.subf %68, %82 : vector<8x128xf32>
    %cst_40 = arith.constant 9.99999996E-13 : f32
    %84 = vector.broadcast %cst_40 : f32 to vector<8x1xf32>
    %85 = arith.addf %81, %84 : vector<8x1xf32>
    %86 = math.rsqrt %85 : vector<8x1xf32>
    %87 = vector.broadcast %86 : vector<8x1xf32> to vector<8x128xf32>
    %88 = arith.mulf %83, %87 : vector<8x128xf32>
    %89 = vector.broadcast %69 : vector<1x128xf32> to vector<8x128xf32>
    %90 = arith.mulf %88, %89 : vector<8x128xf32>
    %91 = vector.broadcast %70 : vector<1x128xf32> to vector<8x128xf32>
    %92 = arith.addf %90, %91 : vector<8x128xf32>
    %93 = arith.truncf %92 : vector<8x128xf32> to vector<8x128xbf16>
    %c0_41 = arith.constant 0 : index
    %c0_42 = arith.constant 0 : index
    %94 = vector.load %arg14[%c0_41, %c0_42] : memref<128x256xbf16, #tpu.memory_space<vmem>>, vector<128x256xbf16>
    %cst_43 = arith.constant dense<0.000000e+00> : vector<8x256xf32>
    %95 = tpu.matmul %93, %94, %cst_43 {dimension_numbers = #tpu.dot_dimension_numbers<[1], [0], [0], [1], [0, 0, 1, 1], [], []>} : vector<8x128xbf16>, vector<128x256xbf16>, vector<8x256xf32> -> vector<8x256xf32>
    %c0_44 = arith.constant 0 : index
    %c0_45 = arith.constant 0 : index
    %96 = vector.load %arg15[%c0_44, %c0_45] : memref<1x256xf32, #tpu.memory_space<vmem>>, vector<1x256xf32>
    %97 = vector.broadcast %96 : vector<1x256xf32> to vector<8x256xf32>
    %98 = arith.addf %95, %97 : vector<8x256xf32>
    %cst_46 = arith.constant 5.000000e-01 : f32
    %99 = vector.broadcast %cst_46 : f32 to vector<8x256xf32>
    %100 = arith.mulf %99, %98 : vector<8x256xf32>
    %cst_47 = arith.constant 2.000000e+00 : f32
    %101 = math.sqrt %cst_47 : f32
    %102 = vector.broadcast %101 : f32 to vector<8x256xf32>
    %103 = arith.divf %98, %102 : vector<8x256xf32>
    %104 = math.erf %103 : vector<8x256xf32>
    %cst_48 = arith.constant 1.000000e+00 : f32
    %105 = vector.broadcast %cst_48 : f32 to vector<8x256xf32>
    %106 = arith.addf %105, %104 : vector<8x256xf32>
    %107 = arith.mulf %100, %106 : vector<8x256xf32>
    %108 = arith.truncf %107 : vector<8x256xf32> to vector<8x256xbf16>
    %c0_49 = arith.constant 0 : index
    %c0_50 = arith.constant 0 : index
    %109 = vector.load %arg16[%c0_49, %c0_50] : memref<256x128xbf16, #tpu.memory_space<vmem>>, vector<256x128xbf16>
    %cst_51 = arith.constant dense<0.000000e+00> : vector<8x128xf32>
    %110 = tpu.matmul %108, %109, %cst_51 {dimension_numbers = #tpu.dot_dimension_numbers<[1], [0], [0], [1], [0, 0, 1, 1], [], []>} : vector<8x256xbf16>, vector<256x128xbf16>, vector<8x128xf32> -> vector<8x128xf32>
    %c0_52 = arith.constant 0 : index
    %c0_53 = arith.constant 0 : index
    %111 = vector.load %arg17[%c0_52, %c0_53] : memref<1x128xf32, #tpu.memory_space<vmem>>, vector<1x128xf32>
    %112 = vector.broadcast %111 : vector<1x128xf32> to vector<8x128xf32>
    %113 = arith.addf %110, %112 : vector<8x128xf32>
    %114 = arith.addf %92, %113 : vector<8x128xf32>
    %c0_54 = arith.constant 0 : index
    %c0_55 = arith.constant 0 : index
    %115 = vector.load %arg18[%c0_54, %c0_55] : memref<1x128xf32, #tpu.memory_space<vmem>>, vector<1x128xf32>
    %c0_56 = arith.constant 0 : index
    %c0_57 = arith.constant 0 : index
    %116 = vector.load %arg19[%c0_56, %c0_57] : memref<1x128xf32, #tpu.memory_space<vmem>>, vector<1x128xf32>
    %cst_58 = arith.constant dense<0.000000e+00> : vector<8xf32>
    %117 = vector.multi_reduction <add>, %114, %cst_58 [1] : vector<8x128xf32> to vector<8xf32>
    %118 = vector.shape_cast %117 : vector<8xf32> to vector<8x1xf32>
    %cst_59 = arith.constant 1.280000e+02 : f32
    %119 = vector.broadcast %cst_59 : f32 to vector<8x1xf32>
    %120 = arith.divf %118, %119 : vector<8x1xf32>
    %121 = vector.broadcast %120 : vector<8x1xf32> to vector<8x128xf32>
    %122 = arith.subf %114, %121 : vector<8x128xf32>
    %123 = arith.mulf %122, %122 : vector<8x128xf32>
    %cst_60 = arith.constant dense<0.000000e+00> : vector<8xf32>
    %124 = vector.multi_reduction <add>, %123, %cst_60 [1] : vector<8x128xf32> to vector<8xf32>
    %125 = vector.shape_cast %124 : vector<8xf32> to vector<8x1xf32>
    %cst_61 = arith.constant 1.280000e+02 : f32
    %126 = vector.broadcast %cst_61 : f32 to vector<8x1xf32>
    %127 = arith.divf %125, %126 : vector<8x1xf32>
    %128 = vector.broadcast %120 : vector<8x1xf32> to vector<8x128xf32>
    %129 = arith.subf %114, %128 : vector<8x128xf32>
    %cst_62 = arith.constant 9.99999996E-13 : f32
    %130 = vector.broadcast %cst_62 : f32 to vector<8x1xf32>
    %131 = arith.addf %127, %130 : vector<8x1xf32>
    %132 = math.rsqrt %131 : vector<8x1xf32>
    %133 = vector.broadcast %132 : vector<8x1xf32> to vector<8x128xf32>
    %134 = arith.mulf %129, %133 : vector<8x128xf32>
    %135 = vector.broadcast %115 : vector<1x128xf32> to vector<8x128xf32>
    %136 = arith.mulf %134, %135 : vector<8x128xf32>
    %137 = vector.broadcast %116 : vector<1x128xf32> to vector<8x128xf32>
    %138 = arith.addf %136, %137 : vector<8x128xf32>
    %c0_63 = arith.constant 0 : index
    %c0_64 = arith.constant 0 : index
    %c0_65 = arith.constant 0 : index
    %139 = vector.load %arg20[%c0_63, %c0_64, %c0_65] : memref<1x8x128xf32, #tpu.memory_space<vmem>>, vector<1x8x128xf32>
    %140 = vector.shape_cast %139 : vector<1x8x128xf32> to vector<8x128xf32>
    %141 = vector.shape_cast %138 : vector<8x128xf32> to vector<1x8x128xf32>
    tpu.vector_store %arg20[%c0_63, %c0_64, %c0_65], %141 {strides = array<i32>} : memref<1x8x128xf32, #tpu.memory_space<vmem>>, vector<1x8x128xf32>,
    return
  }
  func.func @transform_0(%arg0: i32, %arg1: i32) -> (i32, i32, i32) {
    %c0_i32 = arith.constant 0 : i32
    %c0_i32_0 = arith.constant 0 : i32
    %c0_i32_1 = arith.constant 0 : i32
    return %arg0, %c0_i32, %c0_i32_0 : i32, i32, i32
  }
  func.func @transform_1(%arg0: i32, %arg1: i32) -> (i32, i32, i32) {
    %c0_i32 = arith.constant 0 : i32
    %c0_i32_0 = arith.constant 0 : i32
    %c0_i32_1 = arith.constant 0 : i32
    return %arg0, %c0_i32, %c0_i32_0 : i32, i32, i32
  }
  func.func @transform_2(%arg0: i32, %arg1: i32) -> (i32, i32) {
    %c0_i32 = arith.constant 0 : i32
    %c0_i32_0 = arith.constant 0 : i32
    %c0_i32_1 = arith.constant 0 : i32
    return %c0_i32, %c0_i32_0 : i32, i32
  }
  func.func @transform_3(%arg0: i32, %arg1: i32) -> (i32, i32) {
    %c0_i32 = arith.constant 0 : i32
    %c0_i32_0 = arith.constant 0 : i32
    %c0_i32_1 = arith.constant 0 : i32
    return %c0_i32, %c0_i32_0 : i32, i32
  }
  func.func @transform_4(%arg0: i32, %arg1: i32) -> (i32, i32) {
    %c0_i32 = arith.constant 0 : i32
    %c0_i32_0 = arith.constant 0 : i32
    %c0_i32_1 = arith.constant 0 : i32
    return %c0_i32, %c0_i32_0 : i32, i32
  }
  func.func @transform_5(%arg0: i32, %arg1: i32) -> (i32, i32) {
    %c0_i32 = arith.constant 0 : i32
    %c0_i32_0 = arith.constant 0 : i32
    %c0_i32_1 = arith.constant 0 : i32
    return %c0_i32, %c0_i32_0 : i32, i32
  }
  func.func @transform_6(%arg0: i32, %arg1: i32) -> (i32, i32) {
    %c0_i32 = arith.constant 0 : i32
    %c0_i32_0 = arith.constant 0 : i32
    %c0_i32_1 = arith.constant 0 : i32
    return %c0_i32, %c0_i32_0 : i32, i32
  }
  func.func @transform_7(%arg0: i32, %arg1: i32) -> (i32, i32) {
    %c0_i32 = arith.constant 0 : i32
    %c0_i32_0 = arith.constant 0 : i32
    %c0_i32_1 = arith.constant 0 : i32
    return %c0_i32, %c0_i32_0 : i32, i32
  }
  func.func @transform_8(%arg0: i32, %arg1: i32) -> (i32, i32) {
    %c0_i32 = arith.constant 0 : i32
    %c0_i32_0 = arith.constant 0 : i32
    %c0_i32_1 = arith.constant 0 : i32
    return %c0_i32, %c0_i32_0 : i32, i32
  }
  func.func @transform_9(%arg0: i32, %arg1: i32) -> (i32, i32) {
    %c0_i32 = arith.constant 0 : i32
    %c0_i32_0 = arith.constant 0 : i32
    %c0_i32_1 = arith.constant 0 : i32
    return %c0_i32, %c0_i32_0 : i32, i32
  }
  func.func @transform_10(%arg0: i32, %arg1: i32) -> (i32, i32) {
    %c0_i32 = arith.constant 0 : i32
    %c0_i32_0 = arith.constant 0 : i32
    %c0_i32_1 = arith.constant 0 : i32
    return %c0_i32, %c0_i32_0 : i32, i32
  }
  func.func @transform_11(%arg0: i32, %arg1: i32) -> (i32, i32) {
    %c0_i32 = arith.constant 0 : i32
    %c0_i32_0 = arith.constant 0 : i32
    %c0_i32_1 = arith.constant 0 : i32
    return %c0_i32, %c0_i32_0 : i32, i32
  }
  func.func @transform_12(%arg0: i32, %arg1: i32) -> (i32, i32) {
    %c0_i32 = arith.constant 0 : i32
    %c0_i32_0 = arith.constant 0 : i32
    %c0_i32_1 = arith.constant 0 : i32
    return %c0_i32, %c0_i32_0 : i32, i32
  }
  func.func @transform_13(%arg0: i32, %arg1: i32) -> (i32, i32) {
    %c0_i32 = arith.constant 0 : i32
    %c0_i32_0 = arith.constant 0 : i32
    %c0_i32_1 = arith.constant 0 : i32
    return %c0_i32, %c0_i32_0 : i32, i32
  }
  func.func @transform_14(%arg0: i32, %arg1: i32) -> (i32, i32) {
    %c0_i32 = arith.constant 0 : i32
    %c0_i32_0 = arith.constant 0 : i32
    %c0_i32_1 = arith.constant 0 : i32
    return %c0_i32, %c0_i32_0 : i32, i32
  }
  func.func @transform_15(%arg0: i32, %arg1: i32) -> (i32, i32) {
    %c0_i32 = arith.constant 0 : i32
    %c0_i32_0 = arith.constant 0 : i32
    %c0_i32_1 = arith.constant 0 : i32
    return %c0_i32, %c0_i32_0 : i32, i32
  }
  func.func @transform_16(%arg0: i32, %arg1: i32) -> (i32, i32) {
    %c0_i32 = arith.constant 0 : i32
    %c0_i32_0 = arith.constant 0 : i32
    %c0_i32_1 = arith.constant 0 : i32
    return %c0_i32, %c0_i32_0 : i32, i32
  }
  func.func @transform_17(%arg0: i32, %arg1: i32) -> (i32, i32) {
    %c0_i32 = arith.constant 0 : i32
    %c0_i32_0 = arith.constant 0 : i32
    %c0_i32_1 = arith.constant 0 : i32
    return %c0_i32, %c0_i32_0 : i32, i32
  }
  func.func @transform_18(%arg0: i32, %arg1: i32) -> (i32, i32, i32) {
    %c0_i32 = arith.constant 0 : i32
    %c0_i32_0 = arith.constant 0 : i32
    return %arg0, %arg1, %c0_i32 : i32, i32, i32
  }
}

module attributes {stable_mosaic.version = 11 : i64} {
  func.func @bert_layer_kernel(%arg0: i32, %arg1: i32, %arg2: memref<1x8x128xf32, #tpu.memory_space<vmem>>, %arg3: memref<1x1x8xf32, #tpu.memory_space<vmem>>, %arg4: memref<128x128xbf16, #tpu.memory_space<vmem>>, %arg5: memref<1x128xf32, #tpu.memory_space<vmem>>, %arg6: memref<128x128xbf16, #tpu.memory_space<vmem>>, %arg7: memref<1x128xf32, #tpu.memory_space<vmem>>, %arg8: memref<128x128xbf16, #tpu.memory_space<vmem>>, %arg9: memref<1x128xf32, #tpu.memory_space<vmem>>, %arg10: memref<128x128xbf16, #tpu.memory_space<vmem>>, %arg11: memref<1x128xf32, #tpu.memory_space<vmem>>, %arg12: memref<1x128xf32, #tpu.memory_space<vmem>>, %arg13: memref<1x128xf32, #tpu.memory_space<vmem>>, %arg14: memref<128x256xbf16, #tpu.memory_space<vmem>>, %arg15: memref<1x256xf32, #tpu.memory_space<vmem>>, %arg16: memref<256x128xbf16, #tpu.memory_space<vmem>>, %arg17: memref<1x128xf32, #tpu.memory_space<vmem>>, %arg18: memref<1x128xf32, #tpu.memory_space<vmem>>, %arg19: memref<1x128xf32, #tpu.memory_space<vmem>>, %arg20: memref<1x8x128xf32, #tpu.memory_space<vmem>>) attributes {dimension_semantics = [#tpu.dimension_semantics<parallel>, #tpu.dimension_semantics<parallel>], iteration_bounds = array<i64: 2, 1>, scalar_prefetch = 0 : i64, scratch_operands = 0 : i64, tpu.core_type = #tpu.core_type<tc>, window_params = [{transform_indices = @transform_0, window_bounds = array<i64: 1, 8, 128>}, {transform_indices = @transform_1, window_bounds = array<i64: 1, 1, 8>}, {pipeline_mode = #tpu.pipeline_mode<synchronous>, transform_indices = @transform_2, window_bounds = array<i64: 128, 128>}, {pipeline_mode = #tpu.pipeline_mode<synchronous>, transform_indices = @transform_3, window_bounds = array<i64: 1, 128>}, {pipeline_mode = #tpu.pipeline_mode<synchronous>, transform_indices = @transform_4, window_bounds = array<i64: 128, 128>}, {pipeline_mode = #tpu.pipeline_mode<synchronous>, transform_indices = @transform_5, window_bounds = array<i64: 1, 128>}, {pipeline_mode = #tpu.pipeline_mode<synchronous>, transform_indices = @transform_6, window_bounds = array<i64: 128, 128>}, {pipeline_mode = #tpu.pipeline_mode<synchronous>, transform_indices = @transform_7, window_bounds = array<i64: 1, 128>}, {pipeline_mode = #tpu.pipeline_mode<synchronous>, transform_indices = @transform_8, window_bounds = array<i64: 128, 128>}, {pipeline_mode = #tpu.pipeline_mode<synchronous>, transform_indices = @transform_9, window_bounds = array<i64: 1, 128>}, {pipeline_mode = #tpu.pipeline_mode<synchronous>, transform_indices = @transform_10, window_bounds = array<i64: 1, 128>}, {pipeline_mode = #tpu.pipeline_mode<synchronous>, transform_indices = @transform_11, window_bounds = array<i64: 1, 128>}, {pipeline_mode = #tpu.pipeline_mode<synchronous>, transform_indices = @transform_12, window_bounds = array<i64: 128, 256>}, {pipeline_mode = #tpu.pipeline_mode<synchronous>, transform_indices = @transform_13, window_bounds = array<i64: 1, 256>}, {pipeline_mode = #tpu.pipeline_mode<synchronous>, transform_indices = @transform_14, window_bounds = array<i64: 256, 128>}, {pipeline_mode = #tpu.pipeline_mode<synchronous>, transform_indices = @transform_15, window_bounds = array<i64: 1, 128>}, {pipeline_mode = #tpu.pipeline_mode<synchronous>, transform_indices = @transform_16, window_bounds = array<i64: 1, 128>}, {pipeline_mode = #tpu.pipeline_mode<synchronous>, transform_indices = @transform_17, window_bounds = array<i64: 1, 128>}, {transform_indices = @transform_18, window_bounds = array<i64: 1, 8, 128>}]} {
    %c8_i32 = arith.constant 8 : i32
    %0 = arith.muli %arg1, %c8_i32 : i32
    %1 = tpu.assume_multiple %0, 8 : i32
    %c0 = arith.constant 0 : index
    %2 = arith.index_cast %1 : i32 to index
    %c0_0 = arith.constant 0 : index
    %3 = vector.load %arg2[%c0, %2, %c0_0] : memref<1x8x128xf32, #tpu.memory_space<vmem>>, vector<1x8x128xf32>
    %4 = vector.shape_cast %3 : vector<1x8x128xf32> to vector<8x128xf32>
    %c0_1 = arith.constant 0 : index
    %c0_2 = arith.constant 0 : index
    %c0_3 = arith.constant 0 : index
    %5 = vector.load %arg2[%c0_1, %c0_2, %c0_3] : memref<1x8x128xf32, #tpu.memory_space<vmem>>, vector<1x8x128xf32>
    %6 = vector.shape_cast %5 : vector<1x8x128xf32> to vector<8x128xf32>
    %c0_4 = arith.constant 0 : index
    %c0_5 = arith.constant 0 : index
    %c0_6 = arith.constant 0 : index
    %7 = vector.load %arg3[%c0_4, %c0_5, %c0_6] : memref<1x1x8xf32, #tpu.memory_space<vmem>>, vector<1x1x8xf32>
    %8 = vector.shape_cast %7 : vector<1x1x8xf32> to vector<1x8xf32>
    %9 = arith.truncf %4 : vector<8x128xf32> to vector<8x128xbf16>
    %10 = arith.truncf %6 : vector<8x128xf32> to vector<8x128xbf16>
    %c0_7 = arith.constant 0 : index
    %c0_8 = arith.constant 0 : index
    %11 = vector.load %arg4[%c0_7, %c0_8] : memref<128x128xbf16, #tpu.memory_space<vmem>>, vector<128x128xbf16>
    %cst = arith.constant dense<0.000000e+00> : vector<8x128xf32>
    %12 = tpu.matmul %9, %11, %cst {dimension_numbers = #tpu.dot_dimension_numbers<[1], [0], [0], [1], [0, 0, 1, 1], [], []>} : vector<8x128xbf16>, vector<128x128xbf16>, vector<8x128xf32> -> vector<8x128xf32>
    %c0_9 = arith.constant 0 : index
    %c0_10 = arith.constant 0 : index
    %13 = vector.load %arg5[%c0_9, %c0_10] : memref<1x128xf32, #tpu.memory_space<vmem>>, vector<1x128xf32>
    %14 = vector.broadcast %13 : vector<1x128xf32> to vector<8x128xf32>
    %15 = arith.addf %12, %14 : vector<8x128xf32>
    %cst_11 = arith.constant 0.176776692 : f32
    %16 = vector.broadcast %cst_11 : f32 to vector<8x128xf32>
    %17 = arith.mulf %15, %16 : vector<8x128xf32>
    %c0_12 = arith.constant 0 : index
    %c0_13 = arith.constant 0 : index
    %18 = vector.load %arg6[%c0_12, %c0_13] : memref<128x128xbf16, #tpu.memory_space<vmem>>, vector<128x128xbf16>
    %cst_14 = arith.constant dense<0.000000e+00> : vector<8x128xf32>
    %19 = tpu.matmul %10, %18, %cst_14 {dimension_numbers = #tpu.dot_dimension_numbers<[1], [0], [0], [1], [0, 0, 1, 1], [], []>} : vector<8x128xbf16>, vector<128x128xbf16>, vector<8x128xf32> -> vector<8x128xf32>
    %c0_15 = arith.constant 0 : index
    %c0_16 = arith.constant 0 : index
    %20 = vector.load %arg7[%c0_15, %c0_16] : memref<1x128xf32, #tpu.memory_space<vmem>>, vector<1x128xf32>
    %21 = vector.broadcast %20 : vector<1x128xf32> to vector<8x128xf32>
    %22 = arith.addf %19, %21 : vector<8x128xf32>
    %c0_17 = arith.constant 0 : index
    %c0_18 = arith.constant 0 : index
    %23 = vector.load %arg8[%c0_17, %c0_18] : memref<128x128xbf16, #tpu.memory_space<vmem>>, vector<128x128xbf16>
    %cst_19 = arith.constant dense<0.000000e+00> : vector<8x128xf32>
    %24 = tpu.matmul %10, %23, %cst_19 {dimension_numbers = #tpu.dot_dimension_numbers<[1], [0], [0], [1], [0, 0, 1, 1], [], []>} : vector<8x128xbf16>, vector<128x128xbf16>, vector<8x128xf32> -> vector<8x128xf32>
    %c0_20 = arith.constant 0 : index
    %c0_21 = arith.constant 0 : index
    %25 = vector.load %arg9[%c0_20, %c0_21] : memref<1x128xf32, #tpu.memory_space<vmem>>, vector<1x128xf32>
    %26 = vector.broadcast %25 : vector<1x128xf32> to vector<8x128xf32>
    %27 = arith.addf %24, %26 : vector<8x128xf32>
    %28 = arith.truncf %17 : vector<8x128xf32> to vector<8x128xbf16>
    %29 = vector.shape_cast %28 : vector<8x128xbf16> to vector<8x4x32xbf16>
    %30 = tpu.transpose %29, [1, 0, 2] : vector<8x4x32xbf16> -> vector<4x8x32xbf16>
    %31 = arith.truncf %22 : vector<8x128xf32> to vector<8x128xbf16>
    %32 = vector.shape_cast %31 : vector<8x128xbf16> to vector<8x4x32xbf16>
    %33 = tpu.transpose %32, [1, 0, 2] : vector<8x4x32xbf16> -> vector<4x8x32xbf16>
    %34 = arith.truncf %27 : vector<8x128xf32> to vector<8x128xbf16>
    %35 = vector.shape_cast %34 : vector<8x128xbf16> to vector<8x4x32xbf16>
    %36 = tpu.transpose %35, [1, 0, 2] : vector<8x4x32xbf16> -> vector<4x8x32xbf16>
    "tpu.trace_start"() <{level = 10 : i32, message = "hqk,hsk->hqs"}> : () -> ()
    %cst_22 = arith.constant dense<0.000000e+00> : vector<4x8x8xf32>
    %37 = tpu.matmul %30, %33, %cst_22 {dimension_numbers = #tpu.dot_dimension_numbers<[2], [2], [1], [1], [0, 0, 0, 1, 1, 1], [0], [0]>} : vector<4x8x32xbf16>, vector<4x8x32xbf16>, vector<4x8x8xf32> -> vector<4x8x8xf32>
    "tpu.trace_stop"() : () -> ()
    %38 = vector.shape_cast %8 : vector<1x8xf32> to vector<1x1x8xf32>
    %39 = vector.broadcast %38 : vector<1x1x8xf32> to vector<4x8x8xf32>
    %40 = arith.mulf %37, %39 : vector<4x8x8xf32>
    %cst_23 = arith.constant dense<0xFF800000> : vector<4x8xf32>
    %41 = vector.multi_reduction <maximumf>, %40, %cst_23 [2] : vector<4x8x8xf32> to vector<4x8xf32>
    %42 = vector.shape_cast %41 : vector<4x8xf32> to vector<4x8x1xf32>
    %43 = vector.broadcast %42 : vector<4x8x1xf32> to vector<4x8x8xf32>
    %44 = arith.subf %40, %43 : vector<4x8x8xf32>
    %45 = math.exp %44 : vector<4x8x8xf32>
    %46 = vector.broadcast %38 : vector<1x1x8xf32> to vector<4x8x8xf32>
    %47 = arith.mulf %45, %46 : vector<4x8x8xf32>
    %cst_24 = arith.constant dense<0.000000e+00> : vector<4x8xf32>
    %48 = vector.multi_reduction <add>, %47, %cst_24 [2] : vector<4x8x8xf32> to vector<4x8xf32>
    %49 = vector.shape_cast %48 : vector<4x8xf32> to vector<4x8x1xf32>
    %cst_25 = arith.constant 0.000000e+00 : f32
    %50 = vector.broadcast %cst_25 : f32 to vector<4x8x1xf32>
    %51 = arith.cmpf oeq, %49, %50 : vector<4x8x1xf32>
    %52 = arith.extui %51 : vector<4x8x1xi1> to vector<4x8x1xi32>
    %53 = arith.sitofp %52 : vector<4x8x1xi32> to vector<4x8x1xf32>
    %54 = arith.addf %49, %53 : vector<4x8x1xf32>
    %55 = tpu.reciprocal %54 {approx = true} : vector<4x8x1xf32> -> vector<4x8x1xf32>
    %56 = vector.broadcast %55 : vector<4x8x1xf32> to vector<4x8x8xf32>
    %57 = arith.mulf %47, %56 : vector<4x8x8xf32>
    %58 = arith.truncf %57 : vector<4x8x8xf32> to vector<4x8x8xbf16>
    "tpu.trace_start"() <{level = 10 : i32, message = "hqs,hsv->hqv"}> : () -> ()
    %cst_26 = arith.constant dense<0.000000e+00> : vector<4x8x32xf32>
    %59 = tpu.matmul %58, %36, %cst_26 {dimension_numbers = #tpu.dot_dimension_numbers<[2], [1], [1], [2], [0, 0, 0, 1, 1, 2], [0], [0]>} : vector<4x8x8xbf16>, vector<4x8x32xbf16>, vector<4x8x32xf32> -> vector<4x8x32xf32>
    "tpu.trace_stop"() : () -> ()
    %60 = arith.truncf %59 : vector<4x8x32xf32> to vector<4x8x32xbf16>
    %61 = tpu.transpose %60, [1, 0, 2] : vector<4x8x32xbf16> -> vector<8x4x32xbf16>
    %62 = vector.shape_cast %61 : vector<8x4x32xbf16> to vector<8x128xbf16>
    %c0_27 = arith.constant 0 : index
    %c0_28 = arith.constant 0 : index
    %63 = vector.load %arg10[%c0_27, %c0_28] : memref<128x128xbf16, #tpu.memory_space<vmem>>, vector<128x128xbf16>
    %cst_29 = arith.constant dense<0.000000e+00> : vector<8x128xf32>
    %64 = tpu.matmul %62, %63, %cst_29 {dimension_numbers = #tpu.dot_dimension_numbers<[1], [0], [0], [1], [0, 0, 1, 1], [], []>} : vector<8x128xbf16>, vector<128x128xbf16>, vector<8x128xf32> -> vector<8x128xf32>
    %c0_30 = arith.constant 0 : index
    %c0_31 = arith.constant 0 : index
    %65 = vector.load %arg11[%c0_30, %c0_31] : memref<1x128xf32, #tpu.memory_space<vmem>>, vector<1x128xf32>
    %66 = vector.broadcast %65 : vector<1x128xf32> to vector<8x128xf32>
    %67 = arith.addf %64, %66 : vector<8x128xf32>
    %68 = arith.addf %4, %67 : vector<8x128xf32>
    %c0_32 = arith.constant 0 : index
    %c0_33 = arith.constant 0 : index
    %69 = vector.load %arg12[%c0_32, %c0_33] : memref<1x128xf32, #tpu.memory_space<vmem>>, vector<1x128xf32>
    %c0_34 = arith.constant 0 : index
    %c0_35 = arith.constant 0 : index
    %70 = vector.load %arg13[%c0_34, %c0_35] : memref<1x128xf32, #tpu.memory_space<vmem>>, vector<1x128xf32>
    %cst_36 = arith.constant dense<0.000000e+00> : vector<8xf32>
    %71 = vector.multi_reduction <add>, %68, %cst_36 [1] : vector<8x128xf32> to vector<8xf32>
    %72 = vector.shape_cast %71 : vector<8xf32> to vector<8x1xf32>
    %cst_37 = arith.constant 1.280000e+02 : f32
    %73 = vector.broadcast %cst_37 : f32 to vector<8x1xf32>
    %74 = arith.divf %72, %73 : vector<8x1xf32>
    %75 = vector.broadcast %74 : vector<8x1xf32> to vector<8x128xf32>
    %76 = arith.subf %68, %75 : vector<8x128xf32>
    %77 = arith.mulf %76, %76 : vector<8x128xf32>
    %cst_38 = arith.constant dense<0.000000e+00> : vector<8xf32>
    %78 = vector.multi_reduction <add>, %77, %cst_38 [1] : vector<8x128xf32> to vector<8xf32>
    %79 = vector.shape_cast %78 : vector<8xf32> to vector<8x1xf32>
    %cst_39 = arith.constant 1.280000e+02 : f32
    %80 = vector.broadcast %cst_39 : f32 to vector<8x1xf32>
    %81 = arith.divf %79, %80 : vector<8x1xf32>
    %82 = vector.broadcast %74 : vector<8x1xf32> to vector<8x128xf32>
    %83 = arith.subf %68, %82 : vector<8x128xf32>
    %cst_40 = arith.constant 9.99999996E-13 : f32
    %84 = vector.broadcast %cst_40 : f32 to vector<8x1xf32>
    %85 = arith.addf %81, %84 : vector<8x1xf32>
    %86 = math.rsqrt %85 : vector<8x1xf32>
    %87 = vector.broadcast %86 : vector<8x1xf32> to vector<8x128xf32>
    %88 = arith.mulf %83, %87 : vector<8x128xf32>
    %89 = vector.broadcast %69 : vector<1x128xf32> to vector<8x128xf32>
    %90 = arith.mulf %88, %89 : vector<8x128xf32>
    %91 = vector.broadcast %70 : vector<1x128xf32> to vector<8x128xf32>
    %92 = arith.addf %90, %91 : vector<8x128xf32>
    %93 = arith.truncf %92 : vector<8x128xf32> to vector<8x128xbf16>
    %c0_41 = arith.constant 0 : index
    %c0_42 = arith.constant 0 : index
    %94 = vector.load %arg14[%c0_41, %c0_42] : memref<128x256xbf16, #tpu.memory_space<vmem>>, vector<128x256xbf16>
    %cst_43 = arith.constant dense<0.000000e+00> : vector<8x256xf32>
    %95 = tpu.matmul %93, %94, %cst_43 {dimension_numbers = #tpu.dot_dimension_numbers<[1], [0], [0], [1], [0, 0, 1, 1], [], []>} : vector<8x128xbf16>, vector<128x256xbf16>, vector<8x256xf32> -> vector<8x256xf32>
    %c0_44 = arith.constant 0 : index
    %c0_45 = arith.constant 0 : index
    %96 = vector.load %arg15[%c0_44, %c0_45] : memref<1x256xf32, #tpu.memory_space<vmem>>, vector<1x256xf32>
    %97 = vector.broadcast %96 : vector<1x256xf32> to vector<8x256xf32>
    %98 = arith.addf %95, %97 : vector<8x256xf32>
    %cst_46 = arith.constant 5.000000e-01 : f32
    %99 = vector.broadcast %cst_46 : f32 to vector<8x256xf32>
    %100 = arith.mulf %99, %98 : vector<8x256xf32>
    %cst_47 = arith.constant 2.000000e+00 : f32
    %101 = math.sqrt %cst_47 : f32
    %102 = vector.broadcast %101 : f32 to vector<8x256xf32>
    %103 = arith.divf %98, %102 : vector<8x256xf32>
    %104 = math.erf %103 : vector<8x256xf32>
    %cst_48 = arith.constant 1.000000e+00 : f32
    %105 = vector.broadcast %cst_48 : f32 to vector<8x256xf32>
    %106 = arith.addf %105, %104 : vector<8x256xf32>
    %107 = arith.mulf %100, %106 : vector<8x256xf32>
    %108 = arith.truncf %107 : vector<8x256xf32> to vector<8x256xbf16>
    %c0_49 = arith.constant 0 : index
    %c0_50 = arith.constant 0 : index
    %109 = vector.load %arg16[%c0_49, %c0_50] : memref<256x128xbf16, #tpu.memory_space<vmem>>, vector<256x128xbf16>
    %cst_51 = arith.constant dense<0.000000e+00> : vector<8x128xf32>
    %110 = tpu.matmul %108, %109, %cst_51 {dimension_numbers = #tpu.dot_dimension_numbers<[1], [0], [0], [1], [0, 0, 1, 1], [], []>} : vector<8x256xbf16>, vector<256x128xbf16>, vector<8x128xf32> -> vector<8x128xf32>
    %c0_52 = arith.constant 0 : index
    %c0_53 = arith.constant 0 : index
    %111 = vector.load %arg17[%c0_52, %c0_53] : memref<1x128xf32, #tpu.memory_space<vmem>>, vector<1x128xf32>
    %112 = vector.broadcast %111 : vector<1x128xf32> to vector<8x128xf32>
    %113 = arith.addf %110, %112 : vector<8x128xf32>
    %114 = arith.addf %92, %113 : vector<8x128xf32>
    %c0_54 = arith.constant 0 : index
    %c0_55 = arith.constant 0 : index
    %115 = vector.load %arg18[%c0_54, %c0_55] : memref<1x128xf32, #tpu.memory_space<vmem>>, vector<1x128xf32>
    %c0_56 = arith.constant 0 : index
    %c0_57 = arith.constant 0 : index
    %116 = vector.load %arg19[%c0_56, %c0_57] : memref<1x128xf32, #tpu.memory_space<vmem>>, vector<1x128xf32>
    %cst_58 = arith.constant dense<0.000000e+00> : vector<8xf32>
    %117 = vector.multi_reduction <add>, %114, %cst_58 [1] : vector<8x128xf32> to vector<8xf32>
    %118 = vector.shape_cast %117 : vector<8xf32> to vector<8x1xf32>
    %cst_59 = arith.constant 1.280000e+02 : f32
    %119 = vector.broadcast %cst_59 : f32 to vector<8x1xf32>
    %120 = arith.divf %118, %119 : vector<8x1xf32>
    %121 = vector.broadcast %120 : vector<8x1xf32> to vector<8x128xf32>
    %122 = arith.subf %114, %121 : vector<8x128xf32>
    %123 = arith.mulf %122, %122 : vector<8x128xf32>
    %cst_60 = arith.constant dense<0.000000e+00> : vector<8xf32>
    %124 = vector.multi_reduction <add>, %123, %cst_60 [1] : vector<8x128xf32> to vector<8xf32>
    %125 = vector.shape_cast %124 : vector<8xf32> to vector<8x1xf32>
    %cst_61 = arith.constant 1.280000e+02 : f32
    %126 = vector.broadcast %cst_61 : f32 to vector<8x1xf32>
    %127 = arith.divf %125, %126 : vector<8x1xf32>
    %128 = vector.broadcast %120 : vector<8x1xf32> to vector<8x128xf32>
    %129 = arith.subf %114, %128 : vector<8x128xf32>
    %cst_62 = arith.constant 9.99999996E-13 : f32
    %130 = vector.broadcast %cst_62 : f32 to vector<8x1xf32>
    %131 = arith.addf %127, %130 : vector<8x1xf32>
    %132 = math.rsqrt %131 : vector<8x1xf32>
    %133 = vector.broadcast %132 : vector<8x1xf32> to vector<8x128xf32>
    %134 = arith.mulf %129, %133 : vector<8x128xf32>
    %135 = vector.broadcast %115 : vector<1x128xf32> to vector<8x128xf32>
    %136 = arith.mulf %134, %135 : vector<8x128xf32>
    %137 = vector.broadcast %116 : vector<1x128xf32> to vector<8x128xf32>
    %138 = arith.addf %136, %137 : vector<8x128xf32>
    %c0_63 = arith.constant 0 : index
    %c0_64 = arith.constant 0 : index
    %c0_65 = arith.constant 0 : index
    %139 = vector.load %arg20[%c0_63, %c0_64, %c0_65] : memref<1x8x128xf32, #tpu.memory_space<vmem>>, vector<1x8x128xf32>
    %140 = vector.shape_cast %139 : vector<1x8x128xf32> to vector<8x128xf32>
    %141 = vector.shape_cast %138 : vector<8x128xf32> to vector<1x8x128xf32>
    tpu.vector_store %arg20[%c0_63, %c0_64, %c0_65], %141 {strides = array<i32>} : memref<1x8x128xf32, #tpu.memory_space<vmem>>, vector<1x8x128xf32>,
    return
  }
  func.func @transform_0(%arg0: i32, %arg1: i32) -> (i32, i32, i32) {
    %c0_i32 = arith.constant 0 : i32
    %c0_i32_0 = arith.constant 0 : i32
    %c0_i32_1 = arith.constant 0 : i32
    return %arg0, %c0_i32, %c0_i32_0 : i32, i32, i32
  }
  func.func @transform_1(%arg0: i32, %arg1: i32) -> (i32, i32, i32) {
    %c0_i32 = arith.constant 0 : i32
    %c0_i32_0 = arith.constant 0 : i32
    %c0_i32_1 = arith.constant 0 : i32
    return %arg0, %c0_i32, %c0_i32_0 : i32, i32, i32
  }
  func.func @transform_2(%arg0: i32, %arg1: i32) -> (i32, i32) {
    %c0_i32 = arith.constant 0 : i32
    %c0_i32_0 = arith.constant 0 : i32
    %c0_i32_1 = arith.constant 0 : i32
    return %c0_i32, %c0_i32_0 : i32, i32
  }
  func.func @transform_3(%arg0: i32, %arg1: i32) -> (i32, i32) {
    %c0_i32 = arith.constant 0 : i32
    %c0_i32_0 = arith.constant 0 : i32
    %c0_i32_1 = arith.constant 0 : i32
    return %c0_i32, %c0_i32_0 : i32, i32
  }
  func.func @transform_4(%arg0: i32, %arg1: i32) -> (i32, i32) {
    %c0_i32 = arith.constant 0 : i32
    %c0_i32_0 = arith.constant 0 : i32
    %c0_i32_1 = arith.constant 0 : i32
    return %c0_i32, %c0_i32_0 : i32, i32
  }
  func.func @transform_5(%arg0: i32, %arg1: i32) -> (i32, i32) {
    %c0_i32 = arith.constant 0 : i32
    %c0_i32_0 = arith.constant 0 : i32
    %c0_i32_1 = arith.constant 0 : i32
    return %c0_i32, %c0_i32_0 : i32, i32
  }
  func.func @transform_6(%arg0: i32, %arg1: i32) -> (i32, i32) {
    %c0_i32 = arith.constant 0 : i32
    %c0_i32_0 = arith.constant 0 : i32
    %c0_i32_1 = arith.constant 0 : i32
    return %c0_i32, %c0_i32_0 : i32, i32
  }
  func.func @transform_7(%arg0: i32, %arg1: i32) -> (i32, i32) {
    %c0_i32 = arith.constant 0 : i32
    %c0_i32_0 = arith.constant 0 : i32
    %c0_i32_1 = arith.constant 0 : i32
    return %c0_i32, %c0_i32_0 : i32, i32
  }
  func.func @transform_8(%arg0: i32, %arg1: i32) -> (i32, i32) {
    %c0_i32 = arith.constant 0 : i32
    %c0_i32_0 = arith.constant 0 : i32
    %c0_i32_1 = arith.constant 0 : i32
    return %c0_i32, %c0_i32_0 : i32, i32
  }
  func.func @transform_9(%arg0: i32, %arg1: i32) -> (i32, i32) {
    %c0_i32 = arith.constant 0 : i32
    %c0_i32_0 = arith.constant 0 : i32
    %c0_i32_1 = arith.constant 0 : i32
    return %c0_i32, %c0_i32_0 : i32, i32
  }
  func.func @transform_10(%arg0: i32, %arg1: i32) -> (i32, i32) {
    %c0_i32 = arith.constant 0 : i32
    %c0_i32_0 = arith.constant 0 : i32
    %c0_i32_1 = arith.constant 0 : i32
    return %c0_i32, %c0_i32_0 : i32, i32
  }
  func.func @transform_11(%arg0: i32, %arg1: i32) -> (i32, i32) {
    %c0_i32 = arith.constant 0 : i32
    %c0_i32_0 = arith.constant 0 : i32
    %c0_i32_1 = arith.constant 0 : i32
    return %c0_i32, %c0_i32_0 : i32, i32
  }
  func.func @transform_12(%arg0: i32, %arg1: i32) -> (i32, i32) {
    %c0_i32 = arith.constant 0 : i32
    %c0_i32_0 = arith.constant 0 : i32
    %c0_i32_1 = arith.constant 0 : i32
    return %c0_i32, %c0_i32_0 : i32, i32
  }
  func.func @transform_13(%arg0: i32, %arg1: i32) -> (i32, i32) {
    %c0_i32 = arith.constant 0 : i32
    %c0_i32_0 = arith.constant 0 : i32
    %c0_i32_1 = arith.constant 0 : i32
    return %c0_i32, %c0_i32_0 : i32, i32
  }
  func.func @transform_14(%arg0: i32, %arg1: i32) -> (i32, i32) {
    %c0_i32 = arith.constant 0 : i32
    %c0_i32_0 = arith.constant 0 : i32
    %c0_i32_1 = arith.constant 0 : i32
    return %c0_i32, %c0_i32_0 : i32, i32
  }
  func.func @transform_15(%arg0: i32, %arg1: i32) -> (i32, i32) {
    %c0_i32 = arith.constant 0 : i32
    %c0_i32_0 = arith.constant 0 : i32
    %c0_i32_1 = arith.constant 0 : i32
    return %c0_i32, %c0_i32_0 : i32, i32
  }
  func.func @transform_16(%arg0: i32, %arg1: i32) -> (i32, i32) {
    %c0_i32 = arith.constant 0 : i32
    %c0_i32_0 = arith.constant 0 : i32
    %c0_i32_1 = arith.constant 0 : i32
    return %c0_i32, %c0_i32_0 : i32, i32
  }
  func.func @transform_17(%arg0: i32, %arg1: i32) -> (i32, i32) {
    %c0_i32 = arith.constant 0 : i32
    %c0_i32_0 = arith.constant 0 : i32
    %c0_i32_1 = arith.constant 0 : i32
    return %c0_i32, %c0_i32_0 : i32, i32
  }
  func.func @transform_18(%arg0: i32, %arg1: i32) -> (i32, i32, i32) {
    %c0_i32 = arith.constant 0 : i32
    %c0_i32_0 = arith.constant 0 : i32
    return %arg0, %arg1, %c0_i32 : i32, i32, i32
  }
}

module attributes {stable_mosaic.version = 11 : i64} {
  func.func @bert_layer_kernel(%arg0: i32, %arg1: i32, %arg2: memref<1x8x128xf32, #tpu.memory_space<vmem>>, %arg3: memref<1x1x8xf32, #tpu.memory_space<vmem>>, %arg4: memref<128x128xbf16, #tpu.memory_space<vmem>>, %arg5: memref<1x128xf32, #tpu.memory_space<vmem>>, %arg6: memref<128x128xbf16, #tpu.memory_space<vmem>>, %arg7: memref<1x128xf32, #tpu.memory_space<vmem>>, %arg8: memref<128x128xbf16, #tpu.memory_space<vmem>>, %arg9: memref<1x128xf32, #tpu.memory_space<vmem>>, %arg10: memref<128x128xbf16, #tpu.memory_space<vmem>>, %arg11: memref<1x128xf32, #tpu.memory_space<vmem>>, %arg12: memref<1x128xf32, #tpu.memory_space<vmem>>, %arg13: memref<1x128xf32, #tpu.memory_space<vmem>>, %arg14: memref<128x256xbf16, #tpu.memory_space<vmem>>, %arg15: memref<1x256xf32, #tpu.memory_space<vmem>>, %arg16: memref<256x128xbf16, #tpu.memory_space<vmem>>, %arg17: memref<1x128xf32, #tpu.memory_space<vmem>>, %arg18: memref<1x128xf32, #tpu.memory_space<vmem>>, %arg19: memref<1x128xf32, #tpu.memory_space<vmem>>, %arg20: memref<1x8x128xf32, #tpu.memory_space<vmem>>) attributes {dimension_semantics = [#tpu.dimension_semantics<parallel>, #tpu.dimension_semantics<parallel>], iteration_bounds = array<i64: 2, 1>, scalar_prefetch = 0 : i64, scratch_operands = 0 : i64, tpu.core_type = #tpu.core_type<tc>, window_params = [{transform_indices = @transform_0, window_bounds = array<i64: 1, 8, 128>}, {transform_indices = @transform_1, window_bounds = array<i64: 1, 1, 8>}, {pipeline_mode = #tpu.pipeline_mode<synchronous>, transform_indices = @transform_2, window_bounds = array<i64: 128, 128>}, {pipeline_mode = #tpu.pipeline_mode<synchronous>, transform_indices = @transform_3, window_bounds = array<i64: 1, 128>}, {pipeline_mode = #tpu.pipeline_mode<synchronous>, transform_indices = @transform_4, window_bounds = array<i64: 128, 128>}, {pipeline_mode = #tpu.pipeline_mode<synchronous>, transform_indices = @transform_5, window_bounds = array<i64: 1, 128>}, {pipeline_mode = #tpu.pipeline_mode<synchronous>, transform_indices = @transform_6, window_bounds = array<i64: 128, 128>}, {pipeline_mode = #tpu.pipeline_mode<synchronous>, transform_indices = @transform_7, window_bounds = array<i64: 1, 128>}, {pipeline_mode = #tpu.pipeline_mode<synchronous>, transform_indices = @transform_8, window_bounds = array<i64: 128, 128>}, {pipeline_mode = #tpu.pipeline_mode<synchronous>, transform_indices = @transform_9, window_bounds = array<i64: 1, 128>}, {pipeline_mode = #tpu.pipeline_mode<synchronous>, transform_indices = @transform_10, window_bounds = array<i64: 1, 128>}, {pipeline_mode = #tpu.pipeline_mode<synchronous>, transform_indices = @transform_11, window_bounds = array<i64: 1, 128>}, {pipeline_mode = #tpu.pipeline_mode<synchronous>, transform_indices = @transform_12, window_bounds = array<i64: 128, 256>}, {pipeline_mode = #tpu.pipeline_mode<synchronous>, transform_indices = @transform_13, window_bounds = array<i64: 1, 256>}, {pipeline_mode = #tpu.pipeline_mode<synchronous>, transform_indices = @transform_14, window_bounds = array<i64: 256, 128>}, {pipeline_mode = #tpu.pipeline_mode<synchronous>, transform_indices = @transform_15, window_bounds = array<i64: 1, 128>}, {pipeline_mode = #tpu.pipeline_mode<synchronous>, transform_indices = @transform_16, window_bounds = array<i64: 1, 128>}, {pipeline_mode = #tpu.pipeline_mode<synchronous>, transform_indices = @transform_17, window_bounds = array<i64: 1, 128>}, {transform_indices = @transform_18, window_bounds = array<i64: 1, 8, 128>}]} {
    %c8_i32 = arith.constant 8 : i32
    %0 = arith.muli %arg1, %c8_i32 : i32
    %1 = tpu.assume_multiple %0, 8 : i32
    %c0 = arith.constant 0 : index
    %2 = arith.index_cast %1 : i32 to index
    %c0_0 = arith.constant 0 : index
    %3 = vector.load %arg2[%c0, %2, %c0_0] : memref<1x8x128xf32, #tpu.memory_space<vmem>>, vector<1x8x128xf32>
    %4 = vector.shape_cast %3 : vector<1x8x128xf32> to vector<8x128xf32>
    %c0_1 = arith.constant 0 : index
    %c0_2 = arith.constant 0 : index
    %c0_3 = arith.constant 0 : index
    %5 = vector.load %arg2[%c0_1, %c0_2, %c0_3] : memref<1x8x128xf32, #tpu.memory_space<vmem>>, vector<1x8x128xf32>
    %6 = vector.shape_cast %5 : vector<1x8x128xf32> to vector<8x128xf32>
    %c0_4 = arith.constant 0 : index
    %c0_5 = arith.constant 0 : index
    %c0_6 = arith.constant 0 : index
    %7 = vector.load %arg3[%c0_4, %c0_5, %c0_6] : memref<1x1x8xf32, #tpu.memory_space<vmem>>, vector<1x1x8xf32>
    %8 = vector.shape_cast %7 : vector<1x1x8xf32> to vector<1x8xf32>
    %9 = arith.truncf %4 : vector<8x128xf32> to vector<8x128xbf16>
    %10 = arith.truncf %6 : vector<8x128xf32> to vector<8x128xbf16>
    %c0_7 = arith.constant 0 : index
    %c0_8 = arith.constant 0 : index
    %11 = vector.load %arg4[%c0_7, %c0_8] : memref<128x128xbf16, #tpu.memory_space<vmem>>, vector<128x128xbf16>
    %cst = arith.constant dense<0.000000e+00> : vector<8x128xf32>
    %12 = tpu.matmul %9, %11, %cst {dimension_numbers = #tpu.dot_dimension_numbers<[1], [0], [0], [1], [0, 0, 1, 1], [], []>} : vector<8x128xbf16>, vector<128x128xbf16>, vector<8x128xf32> -> vector<8x128xf32>
    %c0_9 = arith.constant 0 : index
    %c0_10 = arith.constant 0 : index
    %13 = vector.load %arg5[%c0_9, %c0_10] : memref<1x128xf32, #tpu.memory_space<vmem>>, vector<1x128xf32>
    %14 = vector.broadcast %13 : vector<1x128xf32> to vector<8x128xf32>
    %15 = arith.addf %12, %14 : vector<8x128xf32>
    %cst_11 = arith.constant 0.176776692 : f32
    %16 = vector.broadcast %cst_11 : f32 to vector<8x128xf32>
    %17 = arith.mulf %15, %16 : vector<8x128xf32>
    %c0_12 = arith.constant 0 : index
    %c0_13 = arith.constant 0 : index
    %18 = vector.load %arg6[%c0_12, %c0_13] : memref<128x128xbf16, #tpu.memory_space<vmem>>, vector<128x128xbf16>
    %cst_14 = arith.constant dense<0.000000e+00> : vector<8x128xf32>
    %19 = tpu.matmul %10, %18, %cst_14 {dimension_numbers = #tpu.dot_dimension_numbers<[1], [0], [0], [1], [0, 0, 1, 1], [], []>} : vector<8x128xbf16>, vector<128x128xbf16>, vector<8x128xf32> -> vector<8x128xf32>
    %c0_15 = arith.constant 0 : index
    %c0_16 = arith.constant 0 : index
    %20 = vector.load %arg7[%c0_15, %c0_16] : memref<1x128xf32, #tpu.memory_space<vmem>>, vector<1x128xf32>
    %21 = vector.broadcast %20 : vector<1x128xf32> to vector<8x128xf32>
    %22 = arith.addf %19, %21 : vector<8x128xf32>
    %c0_17 = arith.constant 0 : index
    %c0_18 = arith.constant 0 : index
    %23 = vector.load %arg8[%c0_17, %c0_18] : memref<128x128xbf16, #tpu.memory_space<vmem>>, vector<128x128xbf16>
    %cst_19 = arith.constant dense<0.000000e+00> : vector<8x128xf32>
    %24 = tpu.matmul %10, %23, %cst_19 {dimension_numbers = #tpu.dot_dimension_numbers<[1], [0], [0], [1], [0, 0, 1, 1], [], []>} : vector<8x128xbf16>, vector<128x128xbf16>, vector<8x128xf32> -> vector<8x128xf32>
    %c0_20 = arith.constant 0 : index
    %c0_21 = arith.constant 0 : index
    %25 = vector.load %arg9[%c0_20, %c0_21] : memref<1x128xf32, #tpu.memory_space<vmem>>, vector<1x128xf32>
    %26 = vector.broadcast %25 : vector<1x128xf32> to vector<8x128xf32>
    %27 = arith.addf %24, %26 : vector<8x128xf32>
    %28 = arith.truncf %17 : vector<8x128xf32> to vector<8x128xbf16>
    %29 = vector.shape_cast %28 : vector<8x128xbf16> to vector<8x4x32xbf16>
    %30 = tpu.transpose %29, [1, 0, 2] : vector<8x4x32xbf16> -> vector<4x8x32xbf16>
    %31 = arith.truncf %22 : vector<8x128xf32> to vector<8x128xbf16>
    %32 = vector.shape_cast %31 : vector<8x128xbf16> to vector<8x4x32xbf16>
    %33 = tpu.transpose %32, [1, 0, 2] : vector<8x4x32xbf16> -> vector<4x8x32xbf16>
    %34 = arith.truncf %27 : vector<8x128xf32> to vector<8x128xbf16>
    %35 = vector.shape_cast %34 : vector<8x128xbf16> to vector<8x4x32xbf16>
    %36 = tpu.transpose %35, [1, 0, 2] : vector<8x4x32xbf16> -> vector<4x8x32xbf16>
    "tpu.trace_start"() <{level = 10 : i32, message = "hqk,hsk->hqs"}> : () -> ()
    %cst_22 = arith.constant dense<0.000000e+00> : vector<4x8x8xf32>
    %37 = tpu.matmul %30, %33, %cst_22 {dimension_numbers = #tpu.dot_dimension_numbers<[2], [2], [1], [1], [0, 0, 0, 1, 1, 1], [0], [0]>} : vector<4x8x32xbf16>, vector<4x8x32xbf16>, vector<4x8x8xf32> -> vector<4x8x8xf32>
    "tpu.trace_stop"() : () -> ()
    %38 = vector.shape_cast %8 : vector<1x8xf32> to vector<1x1x8xf32>
    %39 = vector.broadcast %38 : vector<1x1x8xf32> to vector<4x8x8xf32>
    %40 = arith.mulf %37, %39 : vector<4x8x8xf32>
    %cst_23 = arith.constant dense<0xFF800000> : vector<4x8xf32>
    %41 = vector.multi_reduction <maximumf>, %40, %cst_23 [2] : vector<4x8x8xf32> to vector<4x8xf32>
    %42 = vector.shape_cast %41 : vector<4x8xf32> to vector<4x8x1xf32>
    %43 = vector.broadcast %42 : vector<4x8x1xf32> to vector<4x8x8xf32>
    %44 = arith.subf %40, %43 : vector<4x8x8xf32>
    %45 = math.exp %44 : vector<4x8x8xf32>
    %46 = vector.broadcast %38 : vector<1x1x8xf32> to vector<4x8x8xf32>
    %47 = arith.mulf %45, %46 : vector<4x8x8xf32>
    %cst_24 = arith.constant dense<0.000000e+00> : vector<4x8xf32>
    %48 = vector.multi_reduction <add>, %47, %cst_24 [2] : vector<4x8x8xf32> to vector<4x8xf32>
    %49 = vector.shape_cast %48 : vector<4x8xf32> to vector<4x8x1xf32>
    %cst_25 = arith.constant 0.000000e+00 : f32
    %50 = vector.broadcast %cst_25 : f32 to vector<4x8x1xf32>
    %51 = arith.cmpf oeq, %49, %50 : vector<4x8x1xf32>
    %52 = arith.extui %51 : vector<4x8x1xi1> to vector<4x8x1xi32>
    %53 = arith.sitofp %52 : vector<4x8x1xi32> to vector<4x8x1xf32>
    %54 = arith.addf %49, %53 : vector<4x8x1xf32>
    %55 = tpu.reciprocal %54 {approx = true} : vector<4x8x1xf32> -> vector<4x8x1xf32>
    %56 = vector.broadcast %55 : vector<4x8x1xf32> to vector<4x8x8xf32>
    %57 = arith.mulf %47, %56 : vector<4x8x8xf32>
    %58 = arith.truncf %57 : vector<4x8x8xf32> to vector<4x8x8xbf16>
    "tpu.trace_start"() <{level = 10 : i32, message = "hqs,hsv->hqv"}> : () -> ()
    %cst_26 = arith.constant dense<0.000000e+00> : vector<4x8x32xf32>
    %59 = tpu.matmul %58, %36, %cst_26 {dimension_numbers = #tpu.dot_dimension_numbers<[2], [1], [1], [2], [0, 0, 0, 1, 1, 2], [0], [0]>} : vector<4x8x8xbf16>, vector<4x8x32xbf16>, vector<4x8x32xf32> -> vector<4x8x32xf32>
    "tpu.trace_stop"() : () -> ()
    %60 = arith.truncf %59 : vector<4x8x32xf32> to vector<4x8x32xbf16>
    %61 = tpu.transpose %60, [1, 0, 2] : vector<4x8x32xbf16> -> vector<8x4x32xbf16>
    %62 = vector.shape_cast %61 : vector<8x4x32xbf16> to vector<8x128xbf16>
    %c0_27 = arith.constant 0 : index
    %c0_28 = arith.constant 0 : index
    %63 = vector.load %arg10[%c0_27, %c0_28] : memref<128x128xbf16, #tpu.memory_space<vmem>>, vector<128x128xbf16>
    %cst_29 = arith.constant dense<0.000000e+00> : vector<8x128xf32>
    %64 = tpu.matmul %62, %63, %cst_29 {dimension_numbers = #tpu.dot_dimension_numbers<[1], [0], [0], [1], [0, 0, 1, 1], [], []>} : vector<8x128xbf16>, vector<128x128xbf16>, vector<8x128xf32> -> vector<8x128xf32>
    %c0_30 = arith.constant 0 : index
    %c0_31 = arith.constant 0 : index
    %65 = vector.load %arg11[%c0_30, %c0_31] : memref<1x128xf32, #tpu.memory_space<vmem>>, vector<1x128xf32>
    %66 = vector.broadcast %65 : vector<1x128xf32> to vector<8x128xf32>
    %67 = arith.addf %64, %66 : vector<8x128xf32>
    %68 = arith.addf %4, %67 : vector<8x128xf32>
    %c0_32 = arith.constant 0 : index
    %c0_33 = arith.constant 0 : index
    %69 = vector.load %arg12[%c0_32, %c0_33] : memref<1x128xf32, #tpu.memory_space<vmem>>, vector<1x128xf32>
    %c0_34 = arith.constant 0 : index
    %c0_35 = arith.constant 0 : index
    %70 = vector.load %arg13[%c0_34, %c0_35] : memref<1x128xf32, #tpu.memory_space<vmem>>, vector<1x128xf32>
    %cst_36 = arith.constant dense<0.000000e+00> : vector<8xf32>
    %71 = vector.multi_reduction <add>, %68, %cst_36 [1] : vector<8x128xf32> to vector<8xf32>
    %72 = vector.shape_cast %71 : vector<8xf32> to vector<8x1xf32>
    %cst_37 = arith.constant 1.280000e+02 : f32
    %73 = vector.broadcast %cst_37 : f32 to vector<8x1xf32>
    %74 = arith.divf %72, %73 : vector<8x1xf32>
    %75 = vector.broadcast %74 : vector<8x1xf32> to vector<8x128xf32>
    %76 = arith.subf %68, %75 : vector<8x128xf32>
    %77 = arith.mulf %76, %76 : vector<8x128xf32>
    %cst_38 = arith.constant dense<0.000000e+00> : vector<8xf32>
    %78 = vector.multi_reduction <add>, %77, %cst_38 [1] : vector<8x128xf32> to vector<8xf32>
    %79 = vector.shape_cast %78 : vector<8xf32> to vector<8x1xf32>
    %cst_39 = arith.constant 1.280000e+02 : f32
    %80 = vector.broadcast %cst_39 : f32 to vector<8x1xf32>
    %81 = arith.divf %79, %80 : vector<8x1xf32>
    %82 = vector.broadcast %74 : vector<8x1xf32> to vector<8x128xf32>
    %83 = arith.subf %68, %82 : vector<8x128xf32>
    %cst_40 = arith.constant 9.99999996E-13 : f32
    %84 = vector.broadcast %cst_40 : f32 to vector<8x1xf32>
    %85 = arith.addf %81, %84 : vector<8x1xf32>
    %86 = math.rsqrt %85 : vector<8x1xf32>
    %87 = vector.broadcast %86 : vector<8x1xf32> to vector<8x128xf32>
    %88 = arith.mulf %83, %87 : vector<8x128xf32>
    %89 = vector.broadcast %69 : vector<1x128xf32> to vector<8x128xf32>
    %90 = arith.mulf %88, %89 : vector<8x128xf32>
    %91 = vector.broadcast %70 : vector<1x128xf32> to vector<8x128xf32>
    %92 = arith.addf %90, %91 : vector<8x128xf32>
    %93 = arith.truncf %92 : vector<8x128xf32> to vector<8x128xbf16>
    %c0_41 = arith.constant 0 : index
    %c0_42 = arith.constant 0 : index
    %94 = vector.load %arg14[%c0_41, %c0_42] : memref<128x256xbf16, #tpu.memory_space<vmem>>, vector<128x256xbf16>
    %cst_43 = arith.constant dense<0.000000e+00> : vector<8x256xf32>
    %95 = tpu.matmul %93, %94, %cst_43 {dimension_numbers = #tpu.dot_dimension_numbers<[1], [0], [0], [1], [0, 0, 1, 1], [], []>} : vector<8x128xbf16>, vector<128x256xbf16>, vector<8x256xf32> -> vector<8x256xf32>
    %c0_44 = arith.constant 0 : index
    %c0_45 = arith.constant 0 : index
    %96 = vector.load %arg15[%c0_44, %c0_45] : memref<1x256xf32, #tpu.memory_space<vmem>>, vector<1x256xf32>
    %97 = vector.broadcast %96 : vector<1x256xf32> to vector<8x256xf32>
    %98 = arith.addf %95, %97 : vector<8x256xf32>
    %cst_46 = arith.constant 5.000000e-01 : f32
    %99 = vector.broadcast %cst_46 : f32 to vector<8x256xf32>
    %100 = arith.mulf %99, %98 : vector<8x256xf32>
    %cst_47 = arith.constant 2.000000e+00 : f32
    %101 = math.sqrt %cst_47 : f32
    %102 = vector.broadcast %101 : f32 to vector<8x256xf32>
    %103 = arith.divf %98, %102 : vector<8x256xf32>
    %104 = math.erf %103 : vector<8x256xf32>
    %cst_48 = arith.constant 1.000000e+00 : f32
    %105 = vector.broadcast %cst_48 : f32 to vector<8x256xf32>
    %106 = arith.addf %105, %104 : vector<8x256xf32>
    %107 = arith.mulf %100, %106 : vector<8x256xf32>
    %108 = arith.truncf %107 : vector<8x256xf32> to vector<8x256xbf16>
    %c0_49 = arith.constant 0 : index
    %c0_50 = arith.constant 0 : index
    %109 = vector.load %arg16[%c0_49, %c0_50] : memref<256x128xbf16, #tpu.memory_space<vmem>>, vector<256x128xbf16>
    %cst_51 = arith.constant dense<0.000000e+00> : vector<8x128xf32>
    %110 = tpu.matmul %108, %109, %cst_51 {dimension_numbers = #tpu.dot_dimension_numbers<[1], [0], [0], [1], [0, 0, 1, 1], [], []>} : vector<8x256xbf16>, vector<256x128xbf16>, vector<8x128xf32> -> vector<8x128xf32>
    %c0_52 = arith.constant 0 : index
    %c0_53 = arith.constant 0 : index
    %111 = vector.load %arg17[%c0_52, %c0_53] : memref<1x128xf32, #tpu.memory_space<vmem>>, vector<1x128xf32>
    %112 = vector.broadcast %111 : vector<1x128xf32> to vector<8x128xf32>
    %113 = arith.addf %110, %112 : vector<8x128xf32>
    %114 = arith.addf %92, %113 : vector<8x128xf32>
    %c0_54 = arith.constant 0 : index
    %c0_55 = arith.constant 0 : index
    %115 = vector.load %arg18[%c0_54, %c0_55] : memref<1x128xf32, #tpu.memory_space<vmem>>, vector<1x128xf32>
    %c0_56 = arith.constant 0 : index
    %c0_57 = arith.constant 0 : index
    %116 = vector.load %arg19[%c0_56, %c0_57] : memref<1x128xf32, #tpu.memory_space<vmem>>, vector<1x128xf32>
    %cst_58 = arith.constant dense<0.000000e+00> : vector<8xf32>
    %117 = vector.multi_reduction <add>, %114, %cst_58 [1] : vector<8x128xf32> to vector<8xf32>
    %118 = vector.shape_cast %117 : vector<8xf32> to vector<8x1xf32>
    %cst_59 = arith.constant 1.280000e+02 : f32
    %119 = vector.broadcast %cst_59 : f32 to vector<8x1xf32>
    %120 = arith.divf %118, %119 : vector<8x1xf32>
    %121 = vector.broadcast %120 : vector<8x1xf32> to vector<8x128xf32>
    %122 = arith.subf %114, %121 : vector<8x128xf32>
    %123 = arith.mulf %122, %122 : vector<8x128xf32>
    %cst_60 = arith.constant dense<0.000000e+00> : vector<8xf32>
    %124 = vector.multi_reduction <add>, %123, %cst_60 [1] : vector<8x128xf32> to vector<8xf32>
    %125 = vector.shape_cast %124 : vector<8xf32> to vector<8x1xf32>
    %cst_61 = arith.constant 1.280000e+02 : f32
    %126 = vector.broadcast %cst_61 : f32 to vector<8x1xf32>
    %127 = arith.divf %125, %126 : vector<8x1xf32>
    %128 = vector.broadcast %120 : vector<8x1xf32> to vector<8x128xf32>
    %129 = arith.subf %114, %128 : vector<8x128xf32>
    %cst_62 = arith.constant 9.99999996E-13 : f32
    %130 = vector.broadcast %cst_62 : f32 to vector<8x1xf32>
    %131 = arith.addf %127, %130 : vector<8x1xf32>
    %132 = math.rsqrt %131 : vector<8x1xf32>
    %133 = vector.broadcast %132 : vector<8x1xf32> to vector<8x128xf32>
    %134 = arith.mulf %129, %133 : vector<8x128xf32>
    %135 = vector.broadcast %115 : vector<1x128xf32> to vector<8x128xf32>
    %136 = arith.mulf %134, %135 : vector<8x128xf32>
    %137 = vector.broadcast %116 : vector<1x128xf32> to vector<8x128xf32>
    %138 = arith.addf %136, %137 : vector<8x128xf32>
    %c0_63 = arith.constant 0 : index
    %c0_64 = arith.constant 0 : index
    %c0_65 = arith.constant 0 : index
    %139 = vector.load %arg20[%c0_63, %c0_64, %c0_65] : memref<1x8x128xf32, #tpu.memory_space<vmem>>, vector<1x8x128xf32>
    %140 = vector.shape_cast %139 : vector<1x8x128xf32> to vector<8x128xf32>
    %141 = vector.shape_cast %138 : vector<8x128xf32> to vector<1x8x128xf32>
    tpu.vector_store %arg20[%c0_63, %c0_64, %c0_65], %141 {strides = array<i32>} : memref<1x8x128xf32, #tpu.memory_space<vmem>>, vector<1x8x128xf32>,
    return
  }
  func.func @transform_0(%arg0: i32, %arg1: i32) -> (i32, i32, i32) {
    %c0_i32 = arith.constant 0 : i32
    %c0_i32_0 = arith.constant 0 : i32
    %c0_i32_1 = arith.constant 0 : i32
    return %arg0, %c0_i32, %c0_i32_0 : i32, i32, i32
  }
  func.func @transform_1(%arg0: i32, %arg1: i32) -> (i32, i32, i32) {
    %c0_i32 = arith.constant 0 : i32
    %c0_i32_0 = arith.constant 0 : i32
    %c0_i32_1 = arith.constant 0 : i32
    return %arg0, %c0_i32, %c0_i32_0 : i32, i32, i32
  }
  func.func @transform_2(%arg0: i32, %arg1: i32) -> (i32, i32) {
    %c0_i32 = arith.constant 0 : i32
    %c0_i32_0 = arith.constant 0 : i32
    %c0_i32_1 = arith.constant 0 : i32
    return %c0_i32, %c0_i32_0 : i32, i32
  }
  func.func @transform_3(%arg0: i32, %arg1: i32) -> (i32, i32) {
    %c0_i32 = arith.constant 0 : i32
    %c0_i32_0 = arith.constant 0 : i32
    %c0_i32_1 = arith.constant 0 : i32
    return %c0_i32, %c0_i32_0 : i32, i32
  }
  func.func @transform_4(%arg0: i32, %arg1: i32) -> (i32, i32) {
    %c0_i32 = arith.constant 0 : i32
    %c0_i32_0 = arith.constant 0 : i32
    %c0_i32_1 = arith.constant 0 : i32
    return %c0_i32, %c0_i32_0 : i32, i32
  }
  func.func @transform_5(%arg0: i32, %arg1: i32) -> (i32, i32) {
    %c0_i32 = arith.constant 0 : i32
    %c0_i32_0 = arith.constant 0 : i32
    %c0_i32_1 = arith.constant 0 : i32
    return %c0_i32, %c0_i32_0 : i32, i32
  }
  func.func @transform_6(%arg0: i32, %arg1: i32) -> (i32, i32) {
    %c0_i32 = arith.constant 0 : i32
    %c0_i32_0 = arith.constant 0 : i32
    %c0_i32_1 = arith.constant 0 : i32
    return %c0_i32, %c0_i32_0 : i32, i32
  }
  func.func @transform_7(%arg0: i32, %arg1: i32) -> (i32, i32) {
    %c0_i32 = arith.constant 0 : i32
    %c0_i32_0 = arith.constant 0 : i32
    %c0_i32_1 = arith.constant 0 : i32
    return %c0_i32, %c0_i32_0 : i32, i32
  }
  func.func @transform_8(%arg0: i32, %arg1: i32) -> (i32, i32) {
    %c0_i32 = arith.constant 0 : i32
    %c0_i32_0 = arith.constant 0 : i32
    %c0_i32_1 = arith.constant 0 : i32
    return %c0_i32, %c0_i32_0 : i32, i32
  }
  func.func @transform_9(%arg0: i32, %arg1: i32) -> (i32, i32) {
    %c0_i32 = arith.constant 0 : i32
    %c0_i32_0 = arith.constant 0 : i32
    %c0_i32_1 = arith.constant 0 : i32
    return %c0_i32, %c0_i32_0 : i32, i32
  }
  func.func @transform_10(%arg0: i32, %arg1: i32) -> (i32, i32) {
    %c0_i32 = arith.constant 0 : i32
    %c0_i32_0 = arith.constant 0 : i32
    %c0_i32_1 = arith.constant 0 : i32
    return %c0_i32, %c0_i32_0 : i32, i32
  }
  func.func @transform_11(%arg0: i32, %arg1: i32) -> (i32, i32) {
    %c0_i32 = arith.constant 0 : i32
    %c0_i32_0 = arith.constant 0 : i32
    %c0_i32_1 = arith.constant 0 : i32
    return %c0_i32, %c0_i32_0 : i32, i32
  }
  func.func @transform_12(%arg0: i32, %arg1: i32) -> (i32, i32) {
    %c0_i32 = arith.constant 0 : i32
    %c0_i32_0 = arith.constant 0 : i32
    %c0_i32_1 = arith.constant 0 : i32
    return %c0_i32, %c0_i32_0 : i32, i32
  }
  func.func @transform_13(%arg0: i32, %arg1: i32) -> (i32, i32) {
    %c0_i32 = arith.constant 0 : i32
    %c0_i32_0 = arith.constant 0 : i32
    %c0_i32_1 = arith.constant 0 : i32
    return %c0_i32, %c0_i32_0 : i32, i32
  }
  func.func @transform_14(%arg0: i32, %arg1: i32) -> (i32, i32) {
    %c0_i32 = arith.constant 0 : i32
    %c0_i32_0 = arith.constant 0 : i32
    %c0_i32_1 = arith.constant 0 : i32
    return %c0_i32, %c0_i32_0 : i32, i32
  }
  func.func @transform_15(%arg0: i32, %arg1: i32) -> (i32, i32) {
    %c0_i32 = arith.constant 0 : i32
    %c0_i32_0 = arith.constant 0 : i32
    %c0_i32_1 = arith.constant 0 : i32
    return %c0_i32, %c0_i32_0 : i32, i32
  }
  func.func @transform_16(%arg0: i32, %arg1: i32) -> (i32, i32) {
    %c0_i32 = arith.constant 0 : i32
    %c0_i32_0 = arith.constant 0 : i32
    %c0_i32_1 = arith.constant 0 : i32
    return %c0_i32, %c0_i32_0 : i32, i32
  }
  func.func @transform_17(%arg0: i32, %arg1: i32) -> (i32, i32) {
    %c0_i32 = arith.constant 0 : i32
    %c0_i32_0 = arith.constant 0 : i32
    %c0_i32_1 = arith.constant 0 : i32
    return %c0_i32, %c0_i32_0 : i32, i32
  }
  func.func @transform_18(%arg0: i32, %arg1: i32) -> (i32, i32, i32) {
    %c0_i32 = arith.constant 0 : i32
    %c0_i32_0 = arith.constant 0 : i32
    return %arg0, %arg1, %c0_i32 : i32, i32, i32
  }
}

</mosaic_0001>

<llo_original>
// kernel: bert_forward.3
$region0: #{bert_forward.3}
  #allocation0 [shape = 'u32[]', space=smem, size = 0x4, offset = 0x4, fixed_abs, tag = 'smem constant byte address 0x4 - core index']
  #allocation1 [shape = 'u32[144,128]{1,0:T(1,128)}', space=vmem, size = 0x12000, scoped, tag = 'internal scratch']
  %s0 = inlined_call_operand.vmem [shape: f32[2,8,128], index: 0, kind: input, shape index: {}]
  %s1 = inlined_call_operand.vmem [shape: f32[2,1,8], index: 1, kind: input, shape index: {}]
  %s2 = inlined_call_operand.vmem [shape: bf16[128,128], index: 2, kind: input, shape index: {}]
  %s3 = inlined_call_operand.vmem [shape: f32[1,128], index: 3, kind: input, shape index: {}]
  %s4 = inlined_call_operand.vmem [shape: bf16[128,128], index: 4, kind: input, shape index: {}]
  %s5 = inlined_call_operand.vmem [shape: f32[1,128], index: 5, kind: input, shape index: {}]
  %s6 = inlined_call_operand.vmem [shape: bf16[128,128], index: 6, kind: input, shape index: {}]
  %s7 = inlined_call_operand.vmem [shape: f32[1,128], index: 7, kind: input, shape index: {}]
  %s8 = inlined_call_operand.vmem [shape: bf16[128,128], index: 8, kind: input, shape index: {}]
  %s9 = inlined_call_operand.vmem [shape: f32[1,128], index: 9, kind: input, shape index: {}]
  %s10 = inlined_call_operand.vmem [shape: f32[1,128], index: 10, kind: input, shape index: {}]
  %s11 = inlined_call_operand.vmem [shape: f32[1,128], index: 11, kind: input, shape index: {}]
  %s12 = inlined_call_operand.vmem [shape: bf16[128,256], index: 12, kind: input, shape index: {}]
  %s13 = inlined_call_operand.vmem [shape: f32[1,256], index: 13, kind: input, shape index: {}]
  %s14 = inlined_call_operand.vmem [shape: bf16[256,128], index: 14, kind: input, shape index: {}]
  %s15 = inlined_call_operand.vmem [shape: f32[1,128], index: 15, kind: input, shape index: {}]
  %s16 = inlined_call_operand.vmem [shape: f32[1,128], index: 16, kind: input, shape index: {}]
  %s17 = inlined_call_operand.vmem [shape: f32[1,128], index: 17, kind: input, shape index: {}]
  %s18 = inlined_call_operand.hbm [shape: f32[2,8,128], index: 18, kind: output, shape index: {}]
  %s19 = sld [smem:[#allocation0]]
  $region105: #{bert_forward.3} parent=0
    _
  %s21 = ssub.s32 1, %s19
  %s22 = scalar_select 0, %s21, %s19
  $region1: #{bert_forward.3} parent=0
    #allocation2 [shape = 'u8[8192]{0}', space=vmem, size = 0x2000, scoped, tag = 'output window, operand 0']
    #allocation3 [shape = 's32[2]{0}', space=sflag, size = 0x8, scoped, tag = 'scoped memory for bert_forward.3']
    %23 = vsyncpa [#allocation3], 0
    %s24 = scalar_lea.sflag [#allocation3], 1
    %25 = vsyncpa %s24, 0
    loop: start=0, step=1, limit=4
    $region2: #{bert_forward.3} parent=1 // loop_pre_header
      _
    $region3: #{bert_forward.3} parent=1 // loop_header
      %s27 = sphi 0, %s31
      %p28 = scmp.ge.s32.totalorder %s27, 4
      %s34 = sphi 0, %s46
      %s35 = sphi 0, %s42
      %s36 = sphi 0, %s34
      %s37 = sphi 0, %s35
      %s38 = sphi 0, %s36
      %s39 = sphi 0, %s37
      %s49 = sphi 0, %s51
      %s52 = sphi 0, %s49
      %s53 = sphi 0, %s52
      %s69 = sphi 0, %s53
      %s75 = sphi 0, %s77
      %s78 = sphi 0, %s75
      %s79 = sphi 0, %s78
      %s95 = sphi 0, %s79
      %s99 = sphi 0, %s99
      %s101 = sphi 0, %s99
      %s102 = sphi 0, %s101
      %s116 = sphi 0, %s102
      %s120 = sphi 0, %s120
      %s122 = sphi 0, %s120
      %s123 = sphi 0, %s122
      %s137 = sphi 0, %s123
      %s141 = sphi 0, %s141
      %s143 = sphi 0, %s141
      %s144 = sphi 0, %s143
      %s158 = sphi 0, %s144
      %s162 = sphi 0, %s162
      %s164 = sphi 0, %s162
      %s165 = sphi 0, %s164
      %s179 = sphi 0, %s165
      %s183 = sphi 0, %s183
      %s185 = sphi 0, %s183
      %s186 = sphi 0, %s185
      %s200 = sphi 0, %s186
      %s204 = sphi 0, %s204
      %s206 = sphi 0, %s204
      %s207 = sphi 0, %s206
      %s221 = sphi 0, %s207
      %s225 = sphi 0, %s225
      %s227 = sphi 0, %s225
      %s228 = sphi 0, %s227
      %s242 = sphi 0, %s228
      %s246 = sphi 0, %s246
      %s248 = sphi 0, %s246
      %s249 = sphi 0, %s248
      %s263 = sphi 0, %s249
      %s267 = sphi 0, %s267
      %s269 = sphi 0, %s267
      %s270 = sphi 0, %s269
      %s284 = sphi 0, %s270
      %s288 = sphi 0, %s288
      %s290 = sphi 0, %s288
      %s291 = sphi 0, %s290
      %s305 = sphi 0, %s291
      %s309 = sphi 0, %s309
      %s311 = sphi 0, %s309
      %s312 = sphi 0, %s311
      %s326 = sphi 0, %s312
      %s330 = sphi 0, %s330
      %s332 = sphi 0, %s330
      %s333 = sphi 0, %s332
      %s347 = sphi 0, %s333
      %s351 = sphi 0, %s351
      %s353 = sphi 0, %s351
      %s354 = sphi 0, %s353
      %s368 = sphi 0, %s354
      %s372 = sphi 0, %s372
      %s374 = sphi 0, %s372
      %s375 = sphi 0, %s374
      %s389 = sphi 0, %s375
      %s393 = sphi 0, %s393
      %s395 = sphi 0, %s393
      %s396 = sphi 0, %s395
      %s410 = sphi 0, %s396
      %s414 = sphi 0, %s414
      %s416 = sphi 0, %s414
      %s417 = sphi 0, %s416
      %s431 = sphi 0, %s417
      %s439 = sphi 0, %s441
      %s442 = sphi 0, %s439
      %s443 = sphi 0, %s442
      %s459 = sphi 0, %s443
    $region4: #{bert_forward.3} parent=1 // loop_header_branch
      %30 = sbr.rel (%p28) target = $region8
    $region5: #{bert_forward.3} parent=1 // loop_body
      %s32 = ssub.s32 %s27, 1
      %s33 = ssub.s32 %s27, 2
      %s40 = sadd.s32 1, %s35
      %p41 = scmp.ge.s32.totalorder %s40, 1
      %s42 = scalar_select %p41, 0, %s40
      %s43 = sadd.s32 1, %s34
      %s44 = scalar_select %p41, %s43, %s34
      %p45 = scmp.ge.s32.totalorder %s44, 2
      %s46 = scalar_select %p45, 0, %s44
      %s47 = ssub.s32 %s34, %s46
      %p48 = scmp.eq.s32.totalorder %s47, 0
      %s50 = sadd.s32 %s49, 1
      %s51 = scalar_select %p48, %s49, %s50
      %p54 = pneg %p48
      %p55 = scmp.eq.s32.totalorder %s27, 1
      %p56 = por %p54, %p55
      %p57 = scmp.ne.s32.totalorder %s49, %s52
      %p58 = scmp.eq.s32.totalorder %s27, 0
      %p59 = por %p57, %p58
      %p60 = scmp.ne.s32.totalorder %s49, %s52
      %p61 = scmp.eq.s32.totalorder %s32, 1
      %p62 = por %p60, %p61
      %p63 = scmp.ne.s32.totalorder %s52, %s53
      %p64 = scmp.eq.s32.totalorder %s32, 0
      %p65 = por %p63, %p64
      %p66 = scmp.ne.s32.totalorder %s52, %s53
      %p67 = scmp.eq.s32.totalorder %s33, 1
      %p68 = por %p66, %p67
      %p70 = scmp.ne.s32.totalorder %s53, %s69
      %p71 = scmp.eq.s32.totalorder %s33, 0
      %p72 = por %p70, %p71
      %s73 = ssub.s32 %s34, %s46
      %p74 = scmp.eq.s32.totalorder %s73, 0
      %s76 = sadd.s32 %s75, 1
      %s77 = scalar_select %p74, %s75, %s76
      %p80 = pneg %p74
      %p81 = scmp.eq.s32.totalorder %s27, 1
      %p82 = por %p80, %p81
      %p83 = scmp.ne.s32.totalorder %s75, %s78
      %p84 = scmp.eq.s32.totalorder %s27, 0
      %p85 = por %p83, %p84
      %p86 = scmp.ne.s32.totalorder %s75, %s78
      %p87 = scmp.eq.s32.totalorder %s32, 1
      %p88 = por %p86, %p87
      %p89 = scmp.ne.s32.totalorder %s78, %s79
      %p90 = scmp.eq.s32.totalorder %s32, 0
      %p91 = por %p89, %p90
      %p92 = scmp.ne.s32.totalorder %s78, %s79
      %p93 = scmp.eq.s32.totalorder %s33, 1
      %p94 = por %p92, %p93
      %p96 = scmp.ne.s32.totalorder %s79, %s95
      %p97 = scmp.eq.s32.totalorder %s33, 0
      %p98 = por %p96, %p97
      %s100 = sadd.s32 %s99, 1
      %p103 = scmp.eq.s32.totalorder %s27, 1
      %p104 = scmp.ne.s32.totalorder %s99, %s101
      %p105 = scmp.eq.s32.totalorder %s27, 0
      %p106 = por %p104, %p105
      %p107 = scmp.ne.s32.totalorder %s99, %s101
      %p108 = scmp.eq.s32.totalorder %s32, 1
      %p109 = por %p107, %p108
      %p110 = scmp.ne.s32.totalorder %s101, %s102
      %p111 = scmp.eq.s32.totalorder %s32, 0
      %p112 = por %p110, %p111
      %p113 = scmp.ne.s32.totalorder %s101, %s102
      %p114 = scmp.eq.s32.totalorder %s33, 1
      %p115 = por %p113, %p114
      %p117 = scmp.ne.s32.totalorder %s102, %s116
      %p118 = scmp.eq.s32.totalorder %s33, 0
      %p119 = por %p117, %p118
      %s121 = sadd.s32 %s120, 1
      %p124 = scmp.eq.s32.totalorder %s27, 1
      %p125 = scmp.ne.s32.totalorder %s120, %s122
      %p126 = scmp.eq.s32.totalorder %s27, 0
      %p127 = por %p125, %p126
      %p128 = scmp.ne.s32.totalorder %s120, %s122
      %p129 = scmp.eq.s32.totalorder %s32, 1
      %p130 = por %p128, %p129
      %p131 = scmp.ne.s32.totalorder %s122, %s123
      %p132 = scmp.eq.s32.totalorder %s32, 0
      %p133 = por %p131, %p132
      %p134 = scmp.ne.s32.totalorder %s122, %s123
      %p135 = scmp.eq.s32.totalorder %s33, 1
      %p136 = por %p134, %p135
      %p138 = scmp.ne.s32.totalorder %s123, %s137
      %p139 = scmp.eq.s32.totalorder %s33, 0
      %p140 = por %p138, %p139
      %s142 = sadd.s32 %s141, 1
      %p145 = scmp.eq.s32.totalorder %s27, 1
      %p146 = scmp.ne.s32.totalorder %s141, %s143
      %p147 = scmp.eq.s32.totalorder %s27, 0
      %p148 = por %p146, %p147
      %p149 = scmp.ne.s32.totalorder %s141, %s143
      %p150 = scmp.eq.s32.totalorder %s32, 1
      %p151 = por %p149, %p150
      %p152 = scmp.ne.s32.totalorder %s143, %s144
      %p153 = scmp.eq.s32.totalorder %s32, 0
      %p154 = por %p152, %p153
      %p155 = scmp.ne.s32.totalorder %s143, %s144
      %p156 = scmp.eq.s32.totalorder %s33, 1
      %p157 = por %p155, %p156
      %p159 = scmp.ne.s32.totalorder %s144, %s158
      %p160 = scmp.eq.s32.totalorder %s33, 0
      %p161 = por %p159, %p160
      %s163 = sadd.s32 %s162, 1
      %p166 = scmp.eq.s32.totalorder %s27, 1
      %p167 = scmp.ne.s32.totalorder %s162, %s164
      %p168 = scmp.eq.s32.totalorder %s27, 0
      %p169 = por %p167, %p168
      %p170 = scmp.ne.s32.totalorder %s162, %s164
      %p171 = scmp.eq.s32.totalorder %s32, 1
      %p172 = por %p170, %p171
      %p173 = scmp.ne.s32.totalorder %s164, %s165
      %p174 = scmp.eq.s32.totalorder %s32, 0
      %p175 = por %p173, %p174
      %p176 = scmp.ne.s32.totalorder %s164, %s165
      %p177 = scmp.eq.s32.totalorder %s33, 1
      %p178 = por %p176, %p177
      %p180 = scmp.ne.s32.totalorder %s165, %s179
      %p181 = scmp.eq.s32.totalorder %s33, 0
      %p182 = por %p180, %p181
      %s184 = sadd.s32 %s183, 1
      %p187 = scmp.eq.s32.totalorder %s27, 1
      %p188 = scmp.ne.s32.totalorder %s183, %s185
      %p189 = scmp.eq.s32.totalorder %s27, 0
      %p190 = por %p188, %p189
      %p191 = scmp.ne.s32.totalorder %s183, %s185
      %p192 = scmp.eq.s32.totalorder %s32, 1
      %p193 = por %p191, %p192
      %p194 = scmp.ne.s32.totalorder %s185, %s186
      %p195 = scmp.eq.s32.totalorder %s32, 0
      %p196 = por %p194, %p195
      %p197 = scmp.ne.s32.totalorder %s185, %s186
      %p198 = scmp.eq.s32.totalorder %s33, 1
      %p199 = por %p197, %p198
      %p201 = scmp.ne.s32.totalorder %s186, %s200
      %p202 = scmp.eq.s32.totalorder %s33, 0
      %p203 = por %p201, %p202
      %s205 = sadd.s32 %s204, 1
      %p208 = scmp.eq.s32.totalorder %s27, 1
      %p209 = scmp.ne.s32.totalorder %s204, %s206
      %p210 = scmp.eq.s32.totalorder %s27, 0
      %p211 = por %p209, %p210
      %p212 = scmp.ne.s32.totalorder %s204, %s206
      %p213 = scmp.eq.s32.totalorder %s32, 1
      %p214 = por %p212, %p213
      %p215 = scmp.ne.s32.totalorder %s206, %s207
      %p216 = scmp.eq.s32.totalorder %s32, 0
      %p217 = por %p215, %p216
      %p218 = scmp.ne.s32.totalorder %s206, %s207
      %p219 = scmp.eq.s32.totalorder %s33, 1
      %p220 = por %p218, %p219
      %p222 = scmp.ne.s32.totalorder %s207, %s221
      %p223 = scmp.eq.s32.totalorder %s33, 0
      %p224 = por %p222, %p223
      %s226 = sadd.s32 %s225, 1
      %p229 = scmp.eq.s32.totalorder %s27, 1
      %p230 = scmp.ne.s32.totalorder %s225, %s227
      %p231 = scmp.eq.s32.totalorder %s27, 0
      %p232 = por %p230, %p231
      %p233 = scmp.ne.s32.totalorder %s225, %s227
      %p234 = scmp.eq.s32.totalorder %s32, 1
      %p235 = por %p233, %p234
      %p236 = scmp.ne.s32.totalorder %s227, %s228
      %p237 = scmp.eq.s32.totalorder %s32, 0
      %p238 = por %p236, %p237
      %p239 = scmp.ne.s32.totalorder %s227, %s228
      %p240 = scmp.eq.s32.totalorder %s33, 1
      %p241 = por %p239, %p240
      %p243 = scmp.ne.s32.totalorder %s228, %s242
      %p244 = scmp.eq.s32.totalorder %s33, 0
      %p245 = por %p243, %p244
      %s247 = sadd.s32 %s246, 1
      %p250 = scmp.eq.s32.totalorder %s27, 1
      %p251 = scmp.ne.s32.totalorder %s246, %s248
      %p252 = scmp.eq.s32.totalorder %s27, 0
      %p253 = por %p251, %p252
      %p254 = scmp.ne.s32.totalorder %s246, %s248
      %p255 = scmp.eq.s32.totalorder %s32, 1
      %p256 = por %p254, %p255
      %p257 = scmp.ne.s32.totalorder %s248, %s249
      %p258 = scmp.eq.s32.totalorder %s32, 0
      %p259 = por %p257, %p258
      %p260 = scmp.ne.s32.totalorder %s248, %s249
      %p261 = scmp.eq.s32.totalorder %s33, 1
      %p262 = por %p260, %p261
      %p264 = scmp.ne.s32.totalorder %s249, %s263
      %p265 = scmp.eq.s32.totalorder %s33, 0
      %p266 = por %p264, %p265
      %s268 = sadd.s32 %s267, 1
      %p271 = scmp.eq.s32.totalorder %s27, 1
      %p272 = scmp.ne.s32.totalorder %s267, %s269
      %p273 = scmp.eq.s32.totalorder %s27, 0
      %p274 = por %p272, %p273
      %p275 = scmp.ne.s32.totalorder %s267, %s269
      %p276 = scmp.eq.s32.totalorder %s32, 1
      %p277 = por %p275, %p276
      %p278 = scmp.ne.s32.totalorder %s269, %s270
      %p279 = scmp.eq.s32.totalorder %s32, 0
      %p280 = por %p278, %p279
      %p281 = scmp.ne.s32.totalorder %s269, %s270
      %p282 = scmp.eq.s32.totalorder %s33, 1
      %p283 = por %p281, %p282
      %p285 = scmp.ne.s32.totalorder %s270, %s284
      %p286 = scmp.eq.s32.totalorder %s33, 0
      %p287 = por %p285, %p286
      %s289 = sadd.s32 %s288, 1
      %p292 = scmp.eq.s32.totalorder %s27, 1
      %p293 = scmp.ne.s32.totalorder %s288, %s290
      %p294 = scmp.eq.s32.totalorder %s27, 0
      %p295 = por %p293, %p294
      %p296 = scmp.ne.s32.totalorder %s288, %s290
      %p297 = scmp.eq.s32.totalorder %s32, 1
      %p298 = por %p296, %p297
      %p299 = scmp.ne.s32.totalorder %s290, %s291
      %p300 = scmp.eq.s32.totalorder %s32, 0
      %p301 = por %p299, %p300
      %p302 = scmp.ne.s32.totalorder %s290, %s291
      %p303 = scmp.eq.s32.totalorder %s33, 1
      %p304 = por %p302, %p303
      %p306 = scmp.ne.s32.totalorder %s291, %s305
      %p307 = scmp.eq.s32.totalorder %s33, 0
      %p308 = por %p306, %p307
      %s310 = sadd.s32 %s309, 1
      %p313 = scmp.eq.s32.totalorder %s27, 1
      %p314 = scmp.ne.s32.totalorder %s309, %s311
      %p315 = scmp.eq.s32.totalorder %s27, 0
      %p316 = por %p314, %p315
      %p317 = scmp.ne.s32.totalorder %s309, %s311
      %p318 = scmp.eq.s32.totalorder %s32, 1
      %p319 = por %p317, %p318
      %p320 = scmp.ne.s32.totalorder %s311, %s312
      %p321 = scmp.eq.s32.totalorder %s32, 0
      %p322 = por %p320, %p321
      %p323 = scmp.ne.s32.totalorder %s311, %s312
      %p324 = scmp.eq.s32.totalorder %s33, 1
      %p325 = por %p323, %p324
      %p327 = scmp.ne.s32.totalorder %s312, %s326
      %p328 = scmp.eq.s32.totalorder %s33, 0
      %p329 = por %p327, %p328
      %s331 = sadd.s32 %s330, 1
      %p334 = scmp.eq.s32.totalorder %s27, 1
      %p335 = scmp.ne.s32.totalorder %s330, %s332
      %p336 = scmp.eq.s32.totalorder %s27, 0
      %p337 = por %p335, %p336
      %p338 = scmp.ne.s32.totalorder %s330, %s332
      %p339 = scmp.eq.s32.totalorder %s32, 1
      %p340 = por %p338, %p339
      %p341 = scmp.ne.s32.totalorder %s332, %s333
      %p342 = scmp.eq.s32.totalorder %s32, 0
      %p343 = por %p341, %p342
      %p344 = scmp.ne.s32.totalorder %s332, %s333
      %p345 = scmp.eq.s32.totalorder %s33, 1
      %p346 = por %p344, %p345
      %p348 = scmp.ne.s32.totalorder %s333, %s347
      %p349 = scmp.eq.s32.totalorder %s33, 0
      %p350 = por %p348, %p349
      %s352 = sadd.s32 %s351, 1
      %p355 = scmp.eq.s32.totalorder %s27, 1
      %p356 = scmp.ne.s32.totalorder %s351, %s353
      %p357 = scmp.eq.s32.totalorder %s27, 0
      %p358 = por %p356, %p357
      %p359 = scmp.ne.s32.totalorder %s351, %s353
      %p360 = scmp.eq.s32.totalorder %s32, 1
      %p361 = por %p359, %p360
      %p362 = scmp.ne.s32.totalorder %s353, %s354
      %p363 = scmp.eq.s32.totalorder %s32, 0
      %p364 = por %p362, %p363
      %p365 = scmp.ne.s32.totalorder %s353, %s354
      %p366 = scmp.eq.s32.totalorder %s33, 1
      %p367 = por %p365, %p366
      %p369 = scmp.ne.s32.totalorder %s354, %s368
      %p370 = scmp.eq.s32.totalorder %s33, 0
      %p371 = por %p369, %p370
      %s373 = sadd.s32 %s372, 1
      %p376 = scmp.eq.s32.totalorder %s27, 1
      %p377 = scmp.ne.s32.totalorder %s372, %s374
      %p378 = scmp.eq.s32.totalorder %s27, 0
      %p379 = por %p377, %p378
      %p380 = scmp.ne.s32.totalorder %s372, %s374
      %p381 = scmp.eq.s32.totalorder %s32, 1
      %p382 = por %p380, %p381
      %p383 = scmp.ne.s32.totalorder %s374, %s375
      %p384 = scmp.eq.s32.totalorder %s32, 0
      %p385 = por %p383, %p384
      %p386 = scmp.ne.s32.totalorder %s374, %s375
      %p387 = scmp.eq.s32.totalorder %s33, 1
      %p388 = por %p386, %p387
      %p390 = scmp.ne.s32.totalorder %s375, %s389
      %p391 = scmp.eq.s32.totalorder %s33, 0
      %p392 = por %p390, %p391
      %s394 = sadd.s32 %s393, 1
      %p397 = scmp.eq.s32.totalorder %s27, 1
      %p398 = scmp.ne.s32.totalorder %s393, %s395
      %p399 = scmp.eq.s32.totalorder %s27, 0
      %p400 = por %p398, %p399
      %p401 = scmp.ne.s32.totalorder %s393, %s395
      %p402 = scmp.eq.s32.totalorder %s32, 1
      %p403 = por %p401, %p402
      %p404 = scmp.ne.s32.totalorder %s395, %s396
      %p405 = scmp.eq.s32.totalorder %s32, 0
      %p406 = por %p404, %p405
      %p407 = scmp.ne.s32.totalorder %s395, %s396
      %p408 = scmp.eq.s32.totalorder %s33, 1
      %p409 = por %p407, %p408
      %p411 = scmp.ne.s32.totalorder %s396, %s410
      %p412 = scmp.eq.s32.totalorder %s33, 0
      %p413 = por %p411, %p412
      %s415 = sadd.s32 %s414, 1
      %p418 = scmp.eq.s32.totalorder %s27, 1
      %p419 = scmp.ne.s32.totalorder %s414, %s416
      %p420 = scmp.eq.s32.totalorder %s27, 0
      %p421 = por %p419, %p420
      %p422 = scmp.ne.s32.totalorder %s414, %s416
      %p423 = scmp.eq.s32.totalorder %s32, 1
      %p424 = por %p422, %p423
      %p425 = scmp.ne.s32.totalorder %s416, %s417
      %p426 = scmp.eq.s32.totalorder %s32, 0
      %p427 = por %p425, %p426
      %p428 = scmp.ne.s32.totalorder %s416, %s417
      %p429 = scmp.eq.s32.totalorder %s33, 1
      %p430 = por %p428, %p429
      %p432 = scmp.ne.s32.totalorder %s417, %s431
      %p433 = scmp.eq.s32.totalorder %s33, 0
      %p434 = por %p432, %p433
      %s435 = ssub.s32 %s34, %s46
      %s436 = ssub.s32 %s35, %s42
      %s437 = sor.u32 %s435, %s436
      %p438 = scmp.eq.s32.totalorder %s437, 0
      %s440 = sadd.s32 %s439, 1
      %s441 = scalar_select %p438, %s439, %s440
      %p444 = pneg %p438
      %p445 = scmp.eq.s32.totalorder %s27, 1
      %p446 = por %p444, %p445
      %p447 = scmp.ne.s32.totalorder %s439, %s442
      %p448 = scmp.eq.s32.totalorder %s27, 0
      %p449 = por %p447, %p448
      %p450 = scmp.ne.s32.totalorder %s439, %s442
      %p451 = scmp.eq.s32.totalorder %s32, 1
      %p452 = por %p450, %p451
      %p453 = scmp.ne.s32.totalorder %s442, %s443
      %p454 = scmp.eq.s32.totalorder %s32, 0
      %p455 = por %p453, %p454
      %p456 = scmp.ne.s32.totalorder %s442, %s443
      %p457 = scmp.eq.s32.totalorder %s33, 1
      %p458 = por %p456, %p457
      %p460 = scmp.ne.s32.totalorder %s443, %s459
      %p461 = scmp.eq.s32.totalorder %s33, 0
      %p462 = por %p460, %p461
      %p463 = scmp.le.s32.totalorder 1, %s27
      %p464 = scmp.lt.s32.totalorder %s27, 3
      %p465 = pnand %p463, %p464
      %p466 = pneg %p465
      // Predicated region
      $region9: #{bert_forward.3} parent=5 // pred_check
        _
      $region10: #{bert_forward.3} parent=5 // pred_check_branch
        %468 = sbr.rel (%p465) target = $region12
      $region11: #{bert_forward.3} parent=5 // pred_region
        %s469 = ssub.s32 %s27, 1
        // Predicated region
        $region13: #{bert_forward.3} parent=11 // pred_check
          %p470 = pneg %p112
        $region14: #{bert_forward.3} parent=11 // pred_check_branch
          %472 = sbr.rel (%p470) target = $region16
        $region15: #{bert_forward.3} parent=11 // pred_region
          _
        $region16: #{bert_forward.3} parent=11 // pred_fallthru
          _
        // Predicated region
        $region17: #{bert_forward.3} parent=11 // pred_check
          %p473 = pneg %p133
        $region18: #{bert_forward.3} parent=11 // pred_check_branch
          %475 = sbr.rel (%p473) target = $region20
        $region19: #{bert_forward.3} parent=11 // pred_region
          _
        $region20: #{bert_forward.3} parent=11 // pred_fallthru
          _
        // Predicated region
        $region21: #{bert_forward.3} parent=11 // pred_check
          %p476 = pneg %p154
        $region22: #{bert_forward.3} parent=11 // pred_check_branch
          %478 = sbr.rel (%p476) target = $region24
        $region23: #{bert_forward.3} parent=11 // pred_region
          _
        $region24: #{bert_forward.3} parent=11 // pred_fallthru
          _
        // Predicated region
        $region25: #{bert_forward.3} parent=11 // pred_check
          %p479 = pneg %p175
        $region26: #{bert_forward.3} parent=11 // pred_check_branch
          %481 = sbr.rel (%p479) target = $region28
        $region27: #{bert_forward.3} parent=11 // pred_region
          _
        $region28: #{bert_forward.3} parent=11 // pred_fallthru
          _
        // Predicated region
        $region29: #{bert_forward.3} parent=11 // pred_check
          %p482 = pneg %p196
        $region30: #{bert_forward.3} parent=11 // pred_check_branch
          %484 = sbr.rel (%p482) target = $region32
        $region31: #{bert_forward.3} parent=11 // pred_region
          _
        $region32: #{bert_forward.3} parent=11 // pred_fallthru
          _
        // Predicated region
        $region33: #{bert_forward.3} parent=11 // pred_check
          %p485 = pneg %p217
        $region34: #{bert_forward.3} parent=11 // pred_check_branch
          %487 = sbr.rel (%p485) target = $region36
        $region35: #{bert_forward.3} parent=11 // pred_region
          _
        $region36: #{bert_forward.3} parent=11 // pred_fallthru
          _
        // Predicated region
        $region37: #{bert_forward.3} parent=11 // pred_check
          %p488 = pneg %p238
        $region38: #{bert_forward.3} parent=11 // pred_check_branch
          %490 = sbr.rel (%p488) target = $region40
        $region39: #{bert_forward.3} parent=11 // pred_region
          _
        $region40: #{bert_forward.3} parent=11 // pred_fallthru
          _
        // Predicated region
        $region41: #{bert_forward.3} parent=11 // pred_check
          %p491 = pneg %p259
        $region42: #{bert_forward.3} parent=11 // pred_check_branch
          %493 = sbr.rel (%p491) target = $region44
        $region43: #{bert_forward.3} parent=11 // pred_region
          _
        $region44: #{bert_forward.3} parent=11 // pred_fallthru
          _
        // Predicated region
        $region45: #{bert_forward.3} parent=11 // pred_check
          %p494 = pneg %p280
        $region46: #{bert_forward.3} parent=11 // pred_check_branch
          %496 = sbr.rel (%p494) target = $region48
        $region47: #{bert_forward.3} parent=11 // pred_region
          _
        $region48: #{bert_forward.3} parent=11 // pred_fallthru
          _
        // Predicated region
        $region49: #{bert_forward.3} parent=11 // pred_check
          %p497 = pneg %p301
        $region50: #{bert_forward.3} parent=11 // pred_check_branch
          %499 = sbr.rel (%p497) target = $region52
        $region51: #{bert_forward.3} parent=11 // pred_region
          _
        $region52: #{bert_forward.3} parent=11 // pred_fallthru
          _
        // Predicated region
        $region53: #{bert_forward.3} parent=11 // pred_check
          %p500 = pneg %p322
        $region54: #{bert_forward.3} parent=11 // pred_check_branch
          %502 = sbr.rel (%p500) target = $region56
        $region55: #{bert_forward.3} parent=11 // pred_region
          _
        $region56: #{bert_forward.3} parent=11 // pred_fallthru
          _
        // Predicated region
        $region57: #{bert_forward.3} parent=11 // pred_check
          %p503 = pneg %p343
        $region58: #{bert_forward.3} parent=11 // pred_check_branch
          %505 = sbr.rel (%p503) target = $region60
        $region59: #{bert_forward.3} parent=11 // pred_region
          _
        $region60: #{bert_forward.3} parent=11 // pred_fallthru
          _
        // Predicated region
        $region61: #{bert_forward.3} parent=11 // pred_check
          %p506 = pneg %p364
        $region62: #{bert_forward.3} parent=11 // pred_check_branch
          %508 = sbr.rel (%p506) target = $region64
        $region63: #{bert_forward.3} parent=11 // pred_region
          _
        $region64: #{bert_forward.3} parent=11 // pred_fallthru
          _
        // Predicated region
        $region65: #{bert_forward.3} parent=11 // pred_check
          %p509 = pneg %p385
        $region66: #{bert_forward.3} parent=11 // pred_check_branch
          %511 = sbr.rel (%p509) target = $region68
        $region67: #{bert_forward.3} parent=11 // pred_region
          _
        $region68: #{bert_forward.3} parent=11 // pred_fallthru
          _
        // Predicated region
        $region69: #{bert_forward.3} parent=11 // pred_check
          %p512 = pneg %p406
        $region70: #{bert_forward.3} parent=11 // pred_check_branch
          %514 = sbr.rel (%p512) target = $region72
        $region71: #{bert_forward.3} parent=11 // pred_region
          _
        $region72: #{bert_forward.3} parent=11 // pred_fallthru
          _
        // Predicated region
        $region73: #{bert_forward.3} parent=11 // pred_check
          %p515 = pneg %p427
        $region74: #{bert_forward.3} parent=11 // pred_check_branch
          %517 = sbr.rel (%p515) target = $region76
        $region75: #{bert_forward.3} parent=11 // pred_region
          _
        $region76: #{bert_forward.3} parent=11 // pred_fallthru
          _
      $region12: #{bert_forward.3} parent=5 // pred_fallthru
        _
      %p518 = scmp.lt.s32.totalorder %s27, 2
      // Predicated region
      $region77: #{bert_forward.3} parent=5 // pred_check
        %p519 = pneg %p518
      $region78: #{bert_forward.3} parent=5 // pred_check_branch
        %521 = sbr.rel (%p519) target = $region80
      $region79: #{bert_forward.3} parent=5 // pred_region
        // Predicated region
        $region81: #{bert_forward.3} parent=79 // pred_check
          %p522 = pneg %p59
        $region82: #{bert_forward.3} parent=79 // pred_check_branch
          %524 = sbr.rel (%p522) target = $region84
        $region83: #{bert_forward.3} parent=79 // pred_region
          %p525 = scmp.lt.s32.totalorder %s34, 1
          %s526 = scalar_select %p525, %s34, 1
          %s527 = smul.addr %s526, 8
          %s528 = scalar_lea.vmem %s0, %s527
        $region84: #{bert_forward.3} parent=79 // pred_fallthru
          _
        // Predicated region
        $region85: #{bert_forward.3} parent=79 // pred_check
          %p529 = pneg %p85
        $region86: #{bert_forward.3} parent=79 // pred_check_branch
          %531 = sbr.rel (%p529) target = $region88
        $region87: #{bert_forward.3} parent=79 // pred_region
          %p532 = scmp.lt.s32.totalorder %s34, 1
          %s533 = scalar_select %p532, %s34, 1
          %s534 = scalar_lea.vmem %s1, %s533
        $region88: #{bert_forward.3} parent=79 // pred_fallthru
          _
      $region80: #{bert_forward.3} parent=5 // pred_fallthru
        _
      %p535 = scmp.le.s32.totalorder 1, %s27
      %p536 = scmp.lt.s32.totalorder %s27, 3
      %p537 = pnand %p535, %p536
      %p538 = pneg %p537
      // Predicated region
      $region89: #{bert_forward.3} parent=5 // pred_check
        _
      $region90: #{bert_forward.3} parent=5 // pred_check_branch
        %540 = sbr.rel (%p537) target = $region92
      $region91: #{bert_forward.3} parent=5 // pred_region
        %s541 = ssub.s32 %s27, 1
        %p542 = scmp.lt.s32.totalorder %s36, 1
        %s543 = scalar_select %p542, %s36, 1
        %s544 = smul.addr %s543, 8
        %s545 = scalar_lea.vmem %s0, %s544
        %p546 = pneg %p65
        %p547 = pneg %p62
        %p548 = scmp.lt.s32.totalorder %s36, 1
        %s549 = scalar_select %p548, %s36, 1
        %s550 = scalar_lea.vmem %s1, %s549
        %p551 = pneg %p91
        %p552 = pneg %p88
        %p553 = pneg %p112
        %p554 = pneg %p109
        %p555 = pneg %p133
        %p556 = pneg %p130
        %p557 = pneg %p154
        %p558 = pneg %p151
        %p559 = pneg %p175
        %p560 = pneg %p172
        %p561 = pneg %p196
        %p562 = pneg %p193
        %p563 = pneg %p217
        %p564 = pneg %p214
        %p565 = pneg %p238
        %p566 = pneg %p235
        %p567 = pneg %p259
        %p568 = pneg %p256
        %p569 = pneg %p280
        %p570 = pneg %p277
        %p571 = pneg %p301
        %p572 = pneg %p298
        %p573 = pneg %p322
        %p574 = pneg %p319
        %p575 = pneg %p343
        %p576 = pneg %p340
        %p577 = pneg %p364
        %p578 = pneg %p361
        %p579 = pneg %p385
        %p580 = pneg %p382
        %p581 = pneg %p406
        %p582 = pneg %p403
        %p583 = pneg %p427
        %p584 = pneg %p424
        %p585 = pneg %p455
        %p586 = pneg %p452
        %s587 = sand.u32 %s442, 1
        %s588 = scalar_lea.sflag [#allocation3], %s587
        %s589 = sand.u32 %s442, 1
        %s590 = smul.addr %s589, 8
        %s591 = scalar_lea.vmem [#allocation2], %s590
        %p592 = scmp.lt.s32.totalorder %s36, 1
        %s593 = scalar_select %p592, %s36, 1
        %s594 = smul.addr %s593, 8
        %s595 = scalar_lea.vmem %s0, %s594
        %p596 = scmp.lt.s32.totalorder %s36, 1
        %s597 = scalar_select %p596, %s36, 1
        %s598 = scalar_lea.vmem %s1, %s597
        %s600 = smul.u32 %s37, 8
        %s601 = scalar_lea.vmem %s595, %s600
        %v602 = vld [vmem:[%s601] sm:$0xff]
        %v603 = vld [vmem:[%s595] sm:$0xff]
        %v604 = vld [vmem:[%s598] sm:$0x1]
        %v605 = vpack.c.bf16 %v602, %v602
        %v606 = vpack.c.bf16 %v603, %v603
        %v607 = vld [vmem:[%s2] sm:$0xf]
        %v608 = vld [vmem:[%s2 + $0x4] sm:$0xf]
        %v609 = vld [vmem:[%s2 + $0x8] sm:$0xf]
        %v610 = vld [vmem:[%s2 + $0xc] sm:$0xf]
        %v611 = vld [vmem:[%s2 + $0x10] sm:$0xf]
        %v612 = vld [vmem:[%s2 + $0x14] sm:$0xf]
        %v613 = vld [vmem:[%s2 + $0x18] sm:$0xf]
        %v614 = vld [vmem:[%s2 + $0x1c] sm:$0xf]
        %v615 = vld [vmem:[%s2 + $0x20] sm:$0xf]
        %v616 = vld [vmem:[%s2 + $0x24] sm:$0xf]
        %v617 = vld [vmem:[%s2 + $0x28] sm:$0xf]
        %v618 = vld [vmem:[%s2 + $0x2c] sm:$0xf]
        %v619 = vld [vmem:[%s2 + $0x30] sm:$0xf]
        %v620 = vld [vmem:[%s2 + $0x34] sm:$0xf]
        %v621 = vld [vmem:[%s2 + $0x38] sm:$0xf]
        %v622 = vld [vmem:[%s2 + $0x3c] sm:$0xf]
        %v623 = vld [vmem:[%s3] sm:$0x1]
        %v625 = vlaneseq
        %v626 = vshrl.u32 %v625, 7
        %v627 = vsub.s32 0, %v626
        %v628 = vrot.slane %v623, %v627
        %v646 = vunpack.c.l.b16 %v607
        %v647 = vunpack.c.l.b16 %v608
        %v648 = vunpack.c.l.b16 %v609
        %v649 = vunpack.c.l.b16 %v610
        %v650 = vunpack.c.l.b16 %v611
        %v651 = vunpack.c.l.b16 %v612
        %v652 = vunpack.c.l.b16 %v613
        %v653 = vunpack.c.l.b16 %v614
        %v654 = vunpack.c.l.b16 %v615
        %v655 = vunpack.c.l.b16 %v616
        %v656 = vunpack.c.l.b16 %v617
        %v657 = vunpack.c.l.b16 %v618
        %v658 = vunpack.c.l.b16 %v619
        %v659 = vunpack.c.l.b16 %v620
        %v660 = vunpack.c.l.b16 %v621
        %v661 = vunpack.c.l.b16 %v622
        %v662 = vpack.c.b16 %v647, %v646
        %v663 = vpack.c.b16 %v649, %v648
        %v664 = vpack.c.b16 %v651, %v650
        %v665 = vpack.c.b16 %v653, %v652
        %v666 = vpack.c.b16 %v655, %v654
        %v667 = vpack.c.b16 %v657, %v656
        %v668 = vpack.c.b16 %v659, %v658
        %v669 = vpack.c.b16 %v661, %v660
        %678 = vmatprep.subr.bf16.mxu0 0
        %679 = vmatpush1.bf16.msra.mxu0 %v669
        %680 = vmatprep.subr.bf16.mxu0 0
        %681 = vmatpush1.bf16.msra.mxu0 %v668
        %682 = vmatprep.subr.bf16.mxu0 0
        %683 = vmatpush1.bf16.msra.mxu0 %v667
        %684 = vmatprep.subr.bf16.mxu0 0
        %685 = vmatpush1.bf16.msra.mxu0 %v666
        %686 = vmatprep.subr.bf16.mxu0 0
        %687 = vmatpush1.bf16.msra.mxu0 %v665
        %688 = vmatprep.subr.bf16.mxu0 0
        %689 = vmatpush1.bf16.msra.mxu0 %v664
        %690 = vmatprep.subr.bf16.mxu0 0
        %691 = vmatpush1.bf16.msra.mxu0 %v663
        %692 = vmatprep.subr.bf16.mxu0 0
        %693 = vmatpush1.bf16.msra.mxu0 %v662
        %694 = vmatprep.subr.bf16.mxu0 0
        %695 = vmatpush2.bf16.msra.mxu0 0
        %696 = vmatprep.subr.bf16.mxu0 0
        %697 = vmatpush2.bf16.msra.mxu0 0
        %698 = vmatprep.subr.bf16.mxu0 0
        %699 = vmatpush2.bf16.msra.mxu0 0
        %700 = vmatprep.subr.bf16.mxu0 0
        %701 = vmatpush2.bf16.msra.mxu0 0
        %702 = vmatprep.subr.bf16.mxu0 0
        %703 = vmatpush2.bf16.msra.mxu0 0
        %704 = vmatprep.subr.bf16.mxu0 0
        %705 = vmatpush2.bf16.msra.mxu0 0
        %706 = vmatprep.subr.bf16.mxu0 0
        %707 = vmatpush2.bf16.msra.mxu0 0
        %708 = vmatprep.subr.bf16.mxu0 0
        %709 = vmatpush2.bf16.msra.mxu0 0
        %710 = vmatprep.mubr.bf16.mxu0 0
        %711 = vmatmul.mubr.bf16.gmra.mxu0 %v605
        %v712 = vpop.f32.mrf.mxu0
        %v713 = vadd.f32 %v628, %v712
        %v714 = vpop.f32.mrf.mxu0
        %v715 = vpop.f32.mrf.mxu0
        %v716 = vpop.f32.mrf.mxu0
        %717 = vdwg.mxu0
        %v718 = vmul.f32 %v713, 0.17677669
        %v719 = vld [vmem:[%s4] sm:$0xf]
        %v720 = vld [vmem:[%s4 + $0x4] sm:$0xf]
        %v721 = vld [vmem:[%s4 + $0x8] sm:$0xf]
        %v722 = vld [vmem:[%s4 + $0xc] sm:$0xf]
        %v723 = vld [vmem:[%s4 + $0x10] sm:$0xf]
        %v724 = vld [vmem:[%s4 + $0x14] sm:$0xf]
        %v725 = vld [vmem:[%s4 + $0x18] sm:$0xf]
        %v726 = vld [vmem:[%s4 + $0x1c] sm:$0xf]
        %v727 = vld [vmem:[%s4 + $0x20] sm:$0xf]
        %v728 = vld [vmem:[%s4 + $0x24] sm:$0xf]
        %v729 = vld [vmem:[%s4 + $0x28] sm:$0xf]
        %v730 = vld [vmem:[%s4 + $0x2c] sm:$0xf]
        %v731 = vld [vmem:[%s4 + $0x30] sm:$0xf]
        %v732 = vld [vmem:[%s4 + $0x34] sm:$0xf]
        %v733 = vld [vmem:[%s4 + $0x38] sm:$0xf]
        %v734 = vld [vmem:[%s4 + $0x3c] sm:$0xf]
        %v735 = vld [vmem:[%s5] sm:$0x1]
        %v737 = vlaneseq
        %v738 = vshrl.u32 %v737, 7
        %v739 = vsub.s32 0, %v738
        %v740 = vrot.slane %v735, %v739
        %v758 = vunpack.c.l.b16 %v719
        %v759 = vunpack.c.l.b16 %v720
        %v760 = vunpack.c.l.b16 %v721
        %v761 = vunpack.c.l.b16 %v722
        %v762 = vunpack.c.l.b16 %v723
        %v763 = vunpack.c.l.b16 %v724
        %v764 = vunpack.c.l.b16 %v725
        %v765 = vunpack.c.l.b16 %v726
        %v766 = vunpack.c.l.b16 %v727
        %v767 = vunpack.c.l.b16 %v728
        %v768 = vunpack.c.l.b16 %v729
        %v769 = vunpack.c.l.b16 %v730
        %v770 = vunpack.c.l.b16 %v731
        %v771 = vunpack.c.l.b16 %v732
        %v772 = vunpack.c.l.b16 %v733
        %v773 = vunpack.c.l.b16 %v734
        %v774 = vpack.c.b16 %v759, %v758
        %v775 = vpack.c.b16 %v761, %v760
        %v776 = vpack.c.b16 %v763, %v762
        %v777 = vpack.c.b16 %v765, %v764
        %v778 = vpack.c.b16 %v767, %v766
        %v779 = vpack.c.b16 %v769, %v768
        %v780 = vpack.c.b16 %v771, %v770
        %v781 = vpack.c.b16 %v773, %v772
        %790 = vmatprep.subr.bf16.mxu0 0
        %791 = vmatpush1.bf16.msra.mxu0 %v781
        %792 = vmatprep.subr.bf16.mxu0 0
        %793 = vmatpush1.bf16.msra.mxu0 %v780
        %794 = vmatprep.subr.bf16.mxu0 0
        %795 = vmatpush1.bf16.msra.mxu0 %v779
        %796 = vmatprep.subr.bf16.mxu0 0
        %797 = vmatpush1.bf16.msra.mxu0 %v778
        %798 = vmatprep.subr.bf16.mxu0 0
        %799 = vmatpush1.bf16.msra.mxu0 %v777
        %800 = vmatprep.subr.bf16.mxu0 0
        %801 = vmatpush1.bf16.msra.mxu0 %v776
        %802 = vmatprep.subr.bf16.mxu0 0
        %803 = vmatpush1.bf16.msra.mxu0 %v775
        %804 = vmatprep.subr.bf16.mxu0 0
        %805 = vmatpush1.bf16.msra.mxu0 %v774
        %806 = vmatprep.subr.bf16.mxu0 0
        %807 = vmatpush2.bf16.msra.mxu0 0
        %808 = vmatprep.subr.bf16.mxu0 0
        %809 = vmatpush2.bf16.msra.mxu0 0
        %810 = vmatprep.subr.bf16.mxu0 0
        %811 = vmatpush2.bf16.msra.mxu0 0
        %812 = vmatprep.subr.bf16.mxu0 0
        %813 = vmatpush2.bf16.msra.mxu0 0
        %814 = vmatprep.subr.bf16.mxu0 0
        %815 = vmatpush2.bf16.msra.mxu0 0
        %816 = vmatprep.subr.bf16.mxu0 0
        %817 = vmatpush2.bf16.msra.mxu0 0
        %818 = vmatprep.subr.bf16.mxu0 0
        %819 = vmatpush2.bf16.msra.mxu0 0
        %820 = vmatprep.subr.bf16.mxu0 0
        %821 = vmatpush2.bf16.msra.mxu0 0
        %822 = vmatprep.mubr.bf16.mxu0 0
        %823 = vmatmul.mubr.bf16.gmra.mxu0 %v606
        %v824 = vpop.f32.mrf.mxu0
        %v825 = vadd.f32 %v740, %v824
        %v826 = vpop.f32.mrf.mxu0
        %v827 = vpop.f32.mrf.mxu0
        %v828 = vpop.f32.mrf.mxu0
        %829 = vdwg.mxu0
        %v830 = vld [vmem:[%s6] sm:$0xf]
        %v831 = vld [vmem:[%s6 + $0x4] sm:$0xf]
        %v832 = vld [vmem:[%s6 + $0x8] sm:$0xf]
        %v833 = vld [vmem:[%s6 + $0xc] sm:$0xf]
        %v834 = vld [vmem:[%s6 + $0x10] sm:$0xf]
        %v835 = vld [vmem:[%s6 + $0x14] sm:$0xf]
        %v836 = vld [vmem:[%s6 + $0x18] sm:$0xf]
        %v837 = vld [vmem:[%s6 + $0x1c] sm:$0xf]
        %v838 = vld [vmem:[%s6 + $0x20] sm:$0xf]
        %v839 = vld [vmem:[%s6 + $0x24] sm:$0xf]
        %v840 = vld [vmem:[%s6 + $0x28] sm:$0xf]
        %v841 = vld [vmem:[%s6 + $0x2c] sm:$0xf]
        %v842 = vld [vmem:[%s6 + $0x30] sm:$0xf]
        %v843 = vld [vmem:[%s6 + $0x34] sm:$0xf]
        %v844 = vld [vmem:[%s6 + $0x38] sm:$0xf]
        %v845 = vld [vmem:[%s6 + $0x3c] sm:$0xf]
        %v846 = vld [vmem:[%s7] sm:$0x1]
        %v848 = vlaneseq
        %v849 = vshrl.u32 %v848, 7
        %v850 = vsub.s32 0, %v849
        %v851 = vrot.slane %v846, %v850
        %v869 = vunpack.c.l.b16 %v830
        %v870 = vunpack.c.l.b16 %v831
        %v871 = vunpack.c.l.b16 %v832
        %v872 = vunpack.c.l.b16 %v833
        %v873 = vunpack.c.l.b16 %v834
        %v874 = vunpack.c.l.b16 %v835
        %v875 = vunpack.c.l.b16 %v836
        %v876 = vunpack.c.l.b16 %v837
        %v877 = vunpack.c.l.b16 %v838
        %v878 = vunpack.c.l.b16 %v839
        %v879 = vunpack.c.l.b16 %v840
        %v880 = vunpack.c.l.b16 %v841
        %v881 = vunpack.c.l.b16 %v842
        %v882 = vunpack.c.l.b16 %v843
        %v883 = vunpack.c.l.b16 %v844
        %v884 = vunpack.c.l.b16 %v845
        %v885 = vpack.c.b16 %v870, %v869
        %v886 = vpack.c.b16 %v872, %v871
        %v887 = vpack.c.b16 %v874, %v873
        %v888 = vpack.c.b16 %v876, %v875
        %v889 = vpack.c.b16 %v878, %v877
        %v890 = vpack.c.b16 %v880, %v879
        %v891 = vpack.c.b16 %v882, %v881
        %v892 = vpack.c.b16 %v884, %v883
        %901 = vmatprep.subr.bf16.mxu0 0
        %902 = vmatpush1.bf16.msra.mxu0 %v892
        %903 = vmatprep.subr.bf16.mxu0 0
        %904 = vmatpush1.bf16.msra.mxu0 %v891
        %905 = vmatprep.subr.bf16.mxu0 0
        %906 = vmatpush1.bf16.msra.mxu0 %v890
        %907 = vmatprep.subr.bf16.mxu0 0
        %908 = vmatpush1.bf16.msra.mxu0 %v889
        %909 = vmatprep.subr.bf16.mxu0 0
        %910 = vmatpush1.bf16.msra.mxu0 %v888
        %911 = vmatprep.subr.bf16.mxu0 0
        %912 = vmatpush1.bf16.msra.mxu0 %v887
        %913 = vmatprep.subr.bf16.mxu0 0
        %914 = vmatpush1.bf16.msra.mxu0 %v886
        %915 = vmatprep.subr.bf16.mxu0 0
        %916 = vmatpush1.bf16.msra.mxu0 %v885
        %917 = vmatprep.subr.bf16.mxu0 0
        %918 = vmatpush2.bf16.msra.mxu0 0
        %919 = vmatprep.subr.bf16.mxu0 0
        %920 = vmatpush2.bf16.msra.mxu0 0
        %921 = vmatprep.subr.bf16.mxu0 0
        %922 = vmatpush2.bf16.msra.mxu0 0
        %923 = vmatprep.subr.bf16.mxu0 0
        %924 = vmatpush2.bf16.msra.mxu0 0
        %925 = vmatprep.subr.bf16.mxu0 0
        %926 = vmatpush2.bf16.msra.mxu0 0
        %927 = vmatprep.subr.bf16.mxu0 0
        %928 = vmatpush2.bf16.msra.mxu0 0
        %929 = vmatprep.subr.bf16.mxu0 0
        %930 = vmatpush2.bf16.msra.mxu0 0
        %931 = vmatprep.subr.bf16.mxu0 0
        %932 = vmatpush2.bf16.msra.mxu0 0
        %933 = vmatprep.mubr.bf16.mxu0 0
        %934 = vmatmul.mubr.bf16.gmra.mxu0 %v606
        %v935 = vpop.f32.mrf.mxu0
        %v936 = vadd.f32 %v851, %v935
        %v937 = vpop.f32.mrf.mxu0
        %v938 = vpop.f32.mrf.mxu0
        %v939 = vpop.f32.mrf.mxu0
        %940 = vdwg.mxu0
        %v941 = vpack.c.bf16 %v718, %v718
        %943 = vrot.lane.b32.xlu0 %v941, 96
        %v944 = vpop.permute.xlu0 %943
        %945 = vrot.lane.b32.xlu0 %v941, 64
        %v946 = vpop.permute.xlu0 %945
        %947 = vrot.lane.b32.xlu0 %v941, 32
        %v948 = vpop.permute.xlu0 %947
        %v950 = vunpack.c.l.s4 1983009808
        %v951 = vunpack.c.0.s8 %v950
        %v952 = vlaneseq
        %v953 = vshrl.u32 %v952, 7
        %v954 = vsub.s32 %v951, %v953
        %v955 = vrot.slane %v941, %v954
        %v958 = vunpack.c.l.s4 1983009808
        %v959 = vunpack.c.0.s8 %v958
        %v960 = vlaneseq
        %v961 = vshrl.u32 %v960, 7
        %v962 = vsub.s32 %v959, %v961
        %v963 = vrot.slane %v946, %v962
        %v964 = vcombine.low %v955, %v963
        %v965 = vcombine.high %v955, %v963
        %v967 = vunpack.c.l.s4 1934713408
        %v968 = vunpack.c.0.s8 %v967
        %v969 = vlaneseq
        %v970 = vshrl.u32 %v969, 7
        %v971 = vsub.s32 %v968, %v970
        %v972 = vrot.slane %v964, %v971
        %v974 = vunpack.c.l.s4 1934713408
        %v975 = vunpack.c.0.s8 %v974
        %v976 = vlaneseq
        %v977 = vshrl.u32 %v976, 7
        %v978 = vsub.s32 %v975, %v977
        %v979 = vrot.slane %v965, %v978
        %v980 = vcombine.high %v972, 0
        %v981 = vcombine.high %v979, 0
        %v984 = vunpack.c.l.s4 1983009808
        %v985 = vunpack.c.0.s8 %v984
        %v986 = vlaneseq
        %v987 = vshrl.u32 %v986, 7
        %v988 = vsub.s32 %v985, %v987
        %v989 = vrot.slane %v944, %v988
        %v992 = vunpack.c.l.s4 1983009808
        %v993 = vunpack.c.0.s8 %v992
        %v994 = vlaneseq
        %v995 = vshrl.u32 %v994, 7
        %v996 = vsub.s32 %v993, %v995
        %v997 = vrot.slane %v948, %v996
        %v998 = vcombine.low %v989, %v997
        %v999 = vcombine.high %v989, %v997
        %v1001 = vunpack.c.l.s4 1934713408
        %v1002 = vunpack.c.0.s8 %v1001
        %v1003 = vlaneseq
        %v1004 = vshrl.u32 %v1003, 7
        %v1005 = vsub.s32 %v1002, %v1004
        %v1006 = vrot.slane %v998, %v1005
        %v1008 = vunpack.c.l.s4 1934713408
        %v1009 = vunpack.c.0.s8 %v1008
        %v1010 = vlaneseq
        %v1011 = vshrl.u32 %v1010, 7
        %v1012 = vsub.s32 %v1009, %v1011
        %v1013 = vrot.slane %v999, %v1012
        %v1014 = vcombine.high %v1006, 0
        %v1015 = vcombine.high %v1013, 0
        %v1018 = vpack.i.b16 %v1006, %v972
        %v1020 = vshrl.u32 %v972, 16
        %v1021 = vshrl.u32 %v1006, 16
        %v1022 = vpack.i.b16 %v1021, %v1020
        %v1026 = vpack.i.b16 %v1014, %v980
        %v1028 = vshrl.u32 %v980, 16
        %v1029 = vshrl.u32 %v1014, 16
        %v1030 = vpack.i.b16 %v1029, %v1028
        %v1034 = vpack.i.b16 %v1013, %v979
        %v1036 = vshrl.u32 %v979, 16
        %v1037 = vshrl.u32 %v1013, 16
        %v1038 = vpack.i.b16 %v1037, %v1036
        %v1042 = vpack.i.b16 %v1015, %v981
        %v1044 = vshrl.u32 %v981, 16
        %v1045 = vshrl.u32 %v1015, 16
        %v1046 = vpack.i.b16 %v1045, %v1044
        %v1048 = vcombine.low %v1018, %v1034
        %v1050 = vunpack.c.l.s4 1983009808
        %v1051 = vunpack.c.0.s8 %v1050
        %v1052 = vlaneseq
        %v1053 = vshrl.u32 %v1052, 7
        %v1054 = vsub.s32 %v1051, %v1053
        %v1055 = vrot.slane %v1048, %v1054
        %v1056 = vcombine.low %v1026, %v1042
        %v1058 = vunpack.c.l.s4 1983009808
        %v1059 = vunpack.c.0.s8 %v1058
        %v1060 = vlaneseq
        %v1061 = vshrl.u32 %v1060, 7
        %v1062 = vsub.s32 %v1059, %v1061
        %v1063 = vrot.slane %v1056, %v1062
        %v1064 = vcombine.low %v1055, %v1063
        %v1066 = vunpack.c.l.s4 1934713408
        %v1067 = vunpack.c.0.s8 %v1066
        %v1068 = vlaneseq
        %v1069 = vshrl.u32 %v1068, 7
        %v1070 = vsub.s32 %v1067, %v1069
        %v1071 = vrot.slane %v1064, %v1070
        %v1072 = vcombine.high %v1071, 0
        %v1073 = vcombine.low %v1022, %v1038
        %v1075 = vunpack.c.l.s4 1983009808
        %v1076 = vunpack.c.0.s8 %v1075
        %v1077 = vlaneseq
        %v1078 = vshrl.u32 %v1077, 7
        %v1079 = vsub.s32 %v1076, %v1078
        %v1080 = vrot.slane %v1073, %v1079
        %v1081 = vcombine.low %v1030, %v1046
        %v1083 = vunpack.c.l.s4 1983009808
        %v1084 = vunpack.c.0.s8 %v1083
        %v1085 = vlaneseq
        %v1086 = vshrl.u32 %v1085, 7
        %v1087 = vsub.s32 %v1084, %v1086
        %v1088 = vrot.slane %v1081, %v1087
        %v1089 = vcombine.low %v1080, %v1088
        %v1091 = vunpack.c.l.s4 1934713408
        %v1092 = vunpack.c.0.s8 %v1091
        %v1093 = vlaneseq
        %v1094 = vshrl.u32 %v1093, 7
        %v1095 = vsub.s32 %v1092, %v1094
        %v1096 = vrot.slane %v1089, %v1095
        %v1097 = vcombine.high %v1096, 0
        %v1100 = vpack.i.b16 %v1096, %v1071
        %v1101 = vshrl.u32 %v1071, 16
        %v1102 = vshrl.u32 %v1096, 16
        %v1103 = vpack.i.b16 %v1102, %v1101
        %v1106 = vpack.i.b16 %v1097, %v1072
        %v1107 = vshrl.u32 %v1072, 16
        %v1108 = vshrl.u32 %v1097, 16
        %v1109 = vpack.i.b16 %v1108, %v1107
        %v1110 = vpack.c.bf16 %v825, %v825
        %1112 = vrot.lane.b32.xlu0 %v1110, 96
        %v1113 = vpop.permute.xlu0 %1112
        %1114 = vrot.lane.b32.xlu0 %v1110, 64
        %v1115 = vpop.permute.xlu0 %1114
        %1116 = vrot.lane.b32.xlu0 %v1110, 32
        %v1117 = vpop.permute.xlu0 %1116
        %v1119 = vunpack.c.l.s4 1983009808
        %v1120 = vunpack.c.0.s8 %v1119
        %v1121 = vlaneseq
        %v1122 = vshrl.u32 %v1121, 7
        %v1123 = vsub.s32 %v1120, %v1122
        %v1124 = vrot.slane %v1110, %v1123
        %v1127 = vunpack.c.l.s4 1983009808
        %v1128 = vunpack.c.0.s8 %v1127
        %v1129 = vlaneseq
        %v1130 = vshrl.u32 %v1129, 7
        %v1131 = vsub.s32 %v1128, %v1130
        %v1132 = vrot.slane %v1115, %v1131
        %v1133 = vcombine.low %v1124, %v1132
        %v1134 = vcombine.high %v1124, %v1132
        %v1136 = vunpack.c.l.s4 1934713408
        %v1137 = vunpack.c.0.s8 %v1136
        %v1138 = vlaneseq
        %v1139 = vshrl.u32 %v1138, 7
        %v1140 = vsub.s32 %v1137, %v1139
        %v1141 = vrot.slane %v1133, %v1140
        %v1143 = vunpack.c.l.s4 1934713408
        %v1144 = vunpack.c.0.s8 %v1143
        %v1145 = vlaneseq
        %v1146 = vshrl.u32 %v1145, 7
        %v1147 = vsub.s32 %v1144, %v1146
        %v1148 = vrot.slane %v1134, %v1147
        %v1149 = vcombine.high %v1141, 0
        %v1150 = vcombine.high %v1148, 0
        %v1153 = vunpack.c.l.s4 1983009808
        %v1154 = vunpack.c.0.s8 %v1153
        %v1155 = vlaneseq
        %v1156 = vshrl.u32 %v1155, 7
        %v1157 = vsub.s32 %v1154, %v1156
        %v1158 = vrot.slane %v1113, %v1157
        %v1161 = vunpack.c.l.s4 1983009808
        %v1162 = vunpack.c.0.s8 %v1161
        %v1163 = vlaneseq
        %v1164 = vshrl.u32 %v1163, 7
        %v1165 = vsub.s32 %v1162, %v1164
        %v1166 = vrot.slane %v1117, %v1165
        %v1167 = vcombine.low %v1158, %v1166
        %v1168 = vcombine.high %v1158, %v1166
        %v1170 = vunpack.c.l.s4 1934713408
        %v1171 = vunpack.c.0.s8 %v1170
        %v1172 = vlaneseq
        %v1173 = vshrl.u32 %v1172, 7
        %v1174 = vsub.s32 %v1171, %v1173
        %v1175 = vrot.slane %v1167, %v1174
        %v1177 = vunpack.c.l.s4 1934713408
        %v1178 = vunpack.c.0.s8 %v1177
        %v1179 = vlaneseq
        %v1180 = vshrl.u32 %v1179, 7
        %v1181 = vsub.s32 %v1178, %v1180
        %v1182 = vrot.slane %v1168, %v1181
        %v1183 = vcombine.high %v1175, 0
        %v1184 = vcombine.high %v1182, 0
        %v1187 = vpack.i.b16 %v1175, %v1141
        %v1189 = vshrl.u32 %v1141, 16
        %v1190 = vshrl.u32 %v1175, 16
        %v1191 = vpack.i.b16 %v1190, %v1189
        %v1195 = vpack.i.b16 %v1183, %v1149
        %v1197 = vshrl.u32 %v1149, 16
        %v1198 = vshrl.u32 %v1183, 16
        %v1199 = vpack.i.b16 %v1198, %v1197
        %v1203 = vpack.i.b16 %v1182, %v1148
        %v1205 = vshrl.u32 %v1148, 16
        %v1206 = vshrl.u32 %v1182, 16
        %v1207 = vpack.i.b16 %v1206, %v1205
        %v1211 = vpack.i.b16 %v1184, %v1150
        %v1213 = vshrl.u32 %v1150, 16
        %v1214 = vshrl.u32 %v1184, 16
        %v1215 = vpack.i.b16 %v1214, %v1213
        %v1217 = vcombine.low %v1187, %v1203
        %v1219 = vunpack.c.l.s4 1983009808
        %v1220 = vunpack.c.0.s8 %v1219
        %v1221 = vlaneseq
        %v1222 = vshrl.u32 %v1221, 7
        %v1223 = vsub.s32 %v1220, %v1222
        %v1224 = vrot.slane %v1217, %v1223
        %v1225 = vcombine.low %v1195, %v1211
        %v1227 = vunpack.c.l.s4 1983009808
        %v1228 = vunpack.c.0.s8 %v1227
        %v1229 = vlaneseq
        %v1230 = vshrl.u32 %v1229, 7
        %v1231 = vsub.s32 %v1228, %v1230
        %v1232 = vrot.slane %v1225, %v1231
        %v1233 = vcombine.low %v1224, %v1232
        %v1235 = vunpack.c.l.s4 1934713408
        %v1236 = vunpack.c.0.s8 %v1235
        %v1237 = vlaneseq
        %v1238 = vshrl.u32 %v1237, 7
        %v1239 = vsub.s32 %v1236, %v1238
        %v1240 = vrot.slane %v1233, %v1239
        %v1241 = vcombine.high %v1240, 0
        %v1242 = vcombine.low %v1191, %v1207
        %v1244 = vunpack.c.l.s4 1983009808
        %v1245 = vunpack.c.0.s8 %v1244
        %v1246 = vlaneseq
        %v1247 = vshrl.u32 %v1246, 7
        %v1248 = vsub.s32 %v1245, %v1247
        %v1249 = vrot.slane %v1242, %v1248
        %v1250 = vcombine.low %v1199, %v1215
        %v1252 = vunpack.c.l.s4 1983009808
        %v1253 = vunpack.c.0.s8 %v1252
        %v1254 = vlaneseq
        %v1255 = vshrl.u32 %v1254, 7
        %v1256 = vsub.s32 %v1253, %v1255
        %v1257 = vrot.slane %v1250, %v1256
        %v1258 = vcombine.low %v1249, %v1257
        %v1260 = vunpack.c.l.s4 1934713408
        %v1261 = vunpack.c.0.s8 %v1260
        %v1262 = vlaneseq
        %v1263 = vshrl.u32 %v1262, 7
        %v1264 = vsub.s32 %v1261, %v1263
        %v1265 = vrot.slane %v1258, %v1264
        %v1266 = vcombine.high %v1265, 0
        %v1269 = vpack.i.b16 %v1265, %v1240
        %v1270 = vshrl.u32 %v1240, 16
        %v1271 = vshrl.u32 %v1265, 16
        %v1272 = vpack.i.b16 %v1271, %v1270
        %v1275 = vpack.i.b16 %v1266, %v1241
        %v1276 = vshrl.u32 %v1241, 16
        %v1277 = vshrl.u32 %v1266, 16
        %v1278 = vpack.i.b16 %v1277, %v1276
        %v1279 = vpack.c.bf16 %v936, %v936
        %1281 = vrot.lane.b32.xlu0 %v1279, 96
        %v1282 = vpop.permute.xlu0 %1281
        %1283 = vrot.lane.b32.xlu0 %v1279, 64
        %v1284 = vpop.permute.xlu0 %1283
        %1285 = vrot.lane.b32.xlu0 %v1279, 32
        %v1286 = vpop.permute.xlu0 %1285
        %v1288 = vunpack.c.l.s4 1983009808
        %v1289 = vunpack.c.0.s8 %v1288
        %v1290 = vlaneseq
        %v1291 = vshrl.u32 %v1290, 7
        %v1292 = vsub.s32 %v1289, %v1291
        %v1293 = vrot.slane %v1279, %v1292
        %v1296 = vunpack.c.l.s4 1983009808
        %v1297 = vunpack.c.0.s8 %v1296
        %v1298 = vlaneseq
        %v1299 = vshrl.u32 %v1298, 7
        %v1300 = vsub.s32 %v1297, %v1299
        %v1301 = vrot.slane %v1284, %v1300
        %v1302 = vcombine.low %v1293, %v1301
        %v1303 = vcombine.high %v1293, %v1301
        %v1305 = vunpack.c.l.s4 1934713408
        %v1306 = vunpack.c.0.s8 %v1305
        %v1307 = vlaneseq
        %v1308 = vshrl.u32 %v1307, 7
        %v1309 = vsub.s32 %v1306, %v1308
        %v1310 = vrot.slane %v1302, %v1309
        %v1312 = vunpack.c.l.s4 1934713408
        %v1313 = vunpack.c.0.s8 %v1312
        %v1314 = vlaneseq
        %v1315 = vshrl.u32 %v1314, 7
        %v1316 = vsub.s32 %v1313, %v1315
        %v1317 = vrot.slane %v1303, %v1316
        %v1318 = vcombine.high %v1310, 0
        %v1319 = vcombine.high %v1317, 0
        %v1322 = vunpack.c.l.s4 1983009808
        %v1323 = vunpack.c.0.s8 %v1322
        %v1324 = vlaneseq
        %v1325 = vshrl.u32 %v1324, 7
        %v1326 = vsub.s32 %v1323, %v1325
        %v1327 = vrot.slane %v1282, %v1326
        %v1330 = vunpack.c.l.s4 1983009808
        %v1331 = vunpack.c.0.s8 %v1330
        %v1332 = vlaneseq
        %v1333 = vshrl.u32 %v1332, 7
        %v1334 = vsub.s32 %v1331, %v1333
        %v1335 = vrot.slane %v1286, %v1334
        %v1336 = vcombine.low %v1327, %v1335
        %v1337 = vcombine.high %v1327, %v1335
        %v1339 = vunpack.c.l.s4 1934713408
        %v1340 = vunpack.c.0.s8 %v1339
        %v1341 = vlaneseq
        %v1342 = vshrl.u32 %v1341, 7
        %v1343 = vsub.s32 %v1340, %v1342
        %v1344 = vrot.slane %v1336, %v1343
        %v1346 = vunpack.c.l.s4 1934713408
        %v1347 = vunpack.c.0.s8 %v1346
        %v1348 = vlaneseq
        %v1349 = vshrl.u32 %v1348, 7
        %v1350 = vsub.s32 %v1347, %v1349
        %v1351 = vrot.slane %v1337, %v1350
        %v1352 = vcombine.high %v1344, 0
        %v1353 = vcombine.high %v1351, 0
        %v1356 = vpack.i.b16 %v1344, %v1310
        %v1358 = vshrl.u32 %v1310, 16
        %v1359 = vshrl.u32 %v1344, 16
        %v1360 = vpack.i.b16 %v1359, %v1358
        %v1364 = vpack.i.b16 %v1352, %v1318
        %v1366 = vshrl.u32 %v1318, 16
        %v1367 = vshrl.u32 %v1352, 16
        %v1368 = vpack.i.b16 %v1367, %v1366
        %v1372 = vpack.i.b16 %v1351, %v1317
        %v1374 = vshrl.u32 %v1317, 16
        %v1375 = vshrl.u32 %v1351, 16
        %v1376 = vpack.i.b16 %v1375, %v1374
        %v1380 = vpack.i.b16 %v1353, %v1319
        %v1382 = vshrl.u32 %v1319, 16
        %v1383 = vshrl.u32 %v1353, 16
        %v1384 = vpack.i.b16 %v1383, %v1382
        %v1386 = vcombine.low %v1356, %v1372
        %v1388 = vunpack.c.l.s4 1983009808
        %v1389 = vunpack.c.0.s8 %v1388
        %v1390 = vlaneseq
        %v1391 = vshrl.u32 %v1390, 7
        %v1392 = vsub.s32 %v1389, %v1391
        %v1393 = vrot.slane %v1386, %v1392
        %v1394 = vcombine.low %v1364, %v1380
        %v1396 = vunpack.c.l.s4 1983009808
        %v1397 = vunpack.c.0.s8 %v1396
        %v1398 = vlaneseq
        %v1399 = vshrl.u32 %v1398, 7
        %v1400 = vsub.s32 %v1397, %v1399
        %v1401 = vrot.slane %v1394, %v1400
        %v1402 = vcombine.low %v1393, %v1401
        %v1404 = vunpack.c.l.s4 1934713408
        %v1405 = vunpack.c.0.s8 %v1404
        %v1406 = vlaneseq
        %v1407 = vshrl.u32 %v1406, 7
        %v1408 = vsub.s32 %v1405, %v1407
        %v1409 = vrot.slane %v1402, %v1408
        %v1410 = vcombine.high %v1409, 0
        %v1411 = vcombine.low %v1360, %v1376
        %v1413 = vunpack.c.l.s4 1983009808
        %v1414 = vunpack.c.0.s8 %v1413
        %v1415 = vlaneseq
        %v1416 = vshrl.u32 %v1415, 7
        %v1417 = vsub.s32 %v1414, %v1416
        %v1418 = vrot.slane %v1411, %v1417
        %v1419 = vcombine.low %v1368, %v1384
        %v1421 = vunpack.c.l.s4 1983009808
        %v1422 = vunpack.c.0.s8 %v1421
        %v1423 = vlaneseq
        %v1424 = vshrl.u32 %v1423, 7
        %v1425 = vsub.s32 %v1422, %v1424
        %v1426 = vrot.slane %v1419, %v1425
        %v1427 = vcombine.low %v1418, %v1426
        %v1429 = vunpack.c.l.s4 1934713408
        %v1430 = vunpack.c.0.s8 %v1429
        %v1431 = vlaneseq
        %v1432 = vshrl.u32 %v1431, 7
        %v1433 = vsub.s32 %v1430, %v1432
        %v1434 = vrot.slane %v1427, %v1433
        %v1435 = vcombine.high %v1434, 0
        %v1438 = vpack.i.b16 %v1434, %v1409
        %v1439 = vshrl.u32 %v1409, 16
        %v1440 = vshrl.u32 %v1434, 16
        %v1441 = vpack.i.b16 %v1440, %v1439
        %v1444 = vpack.i.b16 %v1435, %v1410
        %v1445 = vshrl.u32 %v1410, 16
        %v1446 = vshrl.u32 %v1435, 16
        %v1447 = vpack.i.b16 %v1446, %v1445
        %vm1448 = vcmask 261120
        %v1450 = vsel %vm1448, %v1100, 0
        %v1453 = vsel %vm1448, %v1269, 0
        %1455 = vmatprep.subr.bf16.mxu0 0
        %1456 = vmatpush1.bf16.xpose.msra.mxu0 0
        %1457 = vmatprep.subr.bf16.mxu0 0
        %1458 = vmatpush1.bf16.xpose.msra.mxu0 0
        %1459 = vmatprep.subr.bf16.mxu0 0
        %1460 = vmatpush1.bf16.xpose.msra.mxu0 0
        %1461 = vmatprep.subr.bf16.mxu0 0
        %1462 = vmatpush1.bf16.xpose.msra.mxu0 0
        %1463 = vmatprep.subr.bf16.mxu0 0
        %1464 = vmatpush1.bf16.xpose.msra.mxu0 0
        %1465 = vmatprep.subr.bf16.mxu0 0
        %1466 = vmatpush1.bf16.xpose.msra.mxu0 0
        %1467 = vmatprep.subr.bf16.mxu0 0
        %1468 = vmatpush1.bf16.xpose.msra.mxu0 0
        %1469 = vmatprep.subr.bf16.mxu0 0
        %1470 = vmatpush1.bf16.xpose.msra.mxu0 %v1453
        %1471 = vmatprep.subr.bf16.mxu0 0
        %1472 = vmatpush2.bf16.xpose.msra.mxu0 0
        %1473 = vmatprep.subr.bf16.mxu0 0
        %1474 = vmatpush2.bf16.xpose.msra.mxu0 0
        %1475 = vmatprep.subr.bf16.mxu0 0
        %1476 = vmatpush2.bf16.xpose.msra.mxu0 0
        %1477 = vmatprep.subr.bf16.mxu0 0
        %1478 = vmatpush2.bf16.xpose.msra.mxu0 0
        %1479 = vmatprep.subr.bf16.mxu0 0
        %1480 = vmatpush2.bf16.xpose.msra.mxu0 0
        %1481 = vmatprep.subr.bf16.mxu0 0
        %1482 = vmatpush2.bf16.xpose.msra.mxu0 0
        %1483 = vmatprep.subr.bf16.mxu0 0
        %1484 = vmatpush2.bf16.xpose.msra.mxu0 0
        %1485 = vmatprep.subr.bf16.mxu0 0
        %1486 = vmatpush2.bf16.xpose.msra.mxu0 0
        %1487 = vmatprep.mubr.bf16.mxu0 0
        %1488 = vmatmul.mubr.bf16.gmra.mxu0 %v1450
        %v1489 = vpop.f32.mrf.mxu0
        %v1490 = vadd.f32 0.0, %v1489
        %v1491 = vpop.f32.mrf.mxu0
        %v1492 = vpop.f32.mrf.mxu0
        %v1493 = vpop.f32.mrf.mxu0
        %1494 = vdwg.mxu0
        %v1496 = vsel %vm1448, %v1103, 0
        %v1499 = vsel %vm1448, %v1272, 0
        %1501 = vmatprep.subr.bf16.mxu0 0
        %1502 = vmatpush1.bf16.xpose.msra.mxu0 0
        %1503 = vmatprep.subr.bf16.mxu0 0
        %1504 = vmatpush1.bf16.xpose.msra.mxu0 0
        %1505 = vmatprep.subr.bf16.mxu0 0
        %1506 = vmatpush1.bf16.xpose.msra.mxu0 0
        %1507 = vmatprep.subr.bf16.mxu0 0
        %1508 = vmatpush1.bf16.xpose.msra.mxu0 0
        %1509 = vmatprep.subr.bf16.mxu0 0
        %1510 = vmatpush1.bf16.xpose.msra.mxu0 0
        %1511 = vmatprep.subr.bf16.mxu0 0
        %1512 = vmatpush1.bf16.xpose.msra.mxu0 0
        %1513 = vmatprep.subr.bf16.mxu0 0
        %1514 = vmatpush1.bf16.xpose.msra.mxu0 0
        %1515 = vmatprep.subr.bf16.mxu0 0
        %1516 = vmatpush1.bf16.xpose.msra.mxu0 %v1499
        %1517 = vmatprep.subr.bf16.mxu0 0
        %1518 = vmatpush2.bf16.xpose.msra.mxu0 0
        %1519 = vmatprep.subr.bf16.mxu0 0
        %1520 = vmatpush2.bf16.xpose.msra.mxu0 0
        %1521 = vmatprep.subr.bf16.mxu0 0
        %1522 = vmatpush2.bf16.xpose.msra.mxu0 0
        %1523 = vmatprep.subr.bf16.mxu0 0
        %1524 = vmatpush2.bf16.xpose.msra.mxu0 0
        %1525 = vmatprep.subr.bf16.mxu0 0
        %1526 = vmatpush2.bf16.xpose.msra.mxu0 0
        %1527 = vmatprep.subr.bf16.mxu0 0
        %1528 = vmatpush2.bf16.xpose.msra.mxu0 0
        %1529 = vmatprep.subr.bf16.mxu0 0
        %1530 = vmatpush2.bf16.xpose.msra.mxu0 0
        %1531 = vmatprep.subr.bf16.mxu0 0
        %1532 = vmatpush2.bf16.xpose.msra.mxu0 0
        %1533 = vmatprep.mubr.bf16.mxu0 0
        %1534 = vmatmul.mubr.bf16.gmra.mxu0 %v1496
        %v1535 = vpop.f32.mrf.mxu0
        %v1536 = vadd.f32 0.0, %v1535
        %v1537 = vpop.f32.mrf.mxu0
        %v1538 = vpop.f32.mrf.mxu0
        %v1539 = vpop.f32.mrf.mxu0
        %1540 = vdwg.mxu0
        %v1542 = vsel %vm1448, %v1106, 0
        %v1545 = vsel %vm1448, %v1275, 0
        %1547 = vmatprep.subr.bf16.mxu0 0
        %1548 = vmatpush1.bf16.xpose.msra.mxu0 0
        %1549 = vmatprep.subr.bf16.mxu0 0
        %1550 = vmatpush1.bf16.xpose.msra.mxu0 0
        %1551 = vmatprep.subr.bf16.mxu0 0
        %1552 = vmatpush1.bf16.xpose.msra.mxu0 0
        %1553 = vmatprep.subr.bf16.mxu0 0
        %1554 = vmatpush1.bf16.xpose.msra.mxu0 0
        %1555 = vmatprep.subr.bf16.mxu0 0
        %1556 = vmatpush1.bf16.xpose.msra.mxu0 0
        %1557 = vmatprep.subr.bf16.mxu0 0
        %1558 = vmatpush1.bf16.xpose.msra.mxu0 0
        %1559 = vmatprep.subr.bf16.mxu0 0
        %1560 = vmatpush1.bf16.xpose.msra.mxu0 0
        %1561 = vmatprep.subr.bf16.mxu0 0
        %1562 = vmatpush1.bf16.xpose.msra.mxu0 %v1545
        %1563 = vmatprep.subr.bf16.mxu0 0
        %1564 = vmatpush2.bf16.xpose.msra.mxu0 0
        %1565 = vmatprep.subr.bf16.mxu0 0
        %1566 = vmatpush2.bf16.xpose.msra.mxu0 0
        %1567 = vmatprep.subr.bf16.mxu0 0
        %1568 = vmatpush2.bf16.xpose.msra.mxu0 0
        %1569 = vmatprep.subr.bf16.mxu0 0
        %1570 = vmatpush2.bf16.xpose.msra.mxu0 0
        %1571 = vmatprep.subr.bf16.mxu0 0
        %1572 = vmatpush2.bf16.xpose.msra.mxu0 0
        %1573 = vmatprep.subr.bf16.mxu0 0
        %1574 = vmatpush2.bf16.xpose.msra.mxu0 0
        %1575 = vmatprep.subr.bf16.mxu0 0
        %1576 = vmatpush2.bf16.xpose.msra.mxu0 0
        %1577 = vmatprep.subr.bf16.mxu0 0
        %1578 = vmatpush2.bf16.xpose.msra.mxu0 0
        %1579 = vmatprep.mubr.bf16.mxu0 0
        %1580 = vmatmul.mubr.bf16.gmra.mxu0 %v1542
        %v1581 = vpop.f32.mrf.mxu0
        %v1582 = vadd.f32 0.0, %v1581
        %v1583 = vpop.f32.mrf.mxu0
        %v1584 = vpop.f32.mrf.mxu0
        %v1585 = vpop.f32.mrf.mxu0
        %1586 = vdwg.mxu0
        %v1588 = vsel %vm1448, %v1109, 0
        %v1591 = vsel %vm1448, %v1278, 0
        %1593 = vmatprep.subr.bf16.mxu0 0
        %1594 = vmatpush1.bf16.xpose.msra.mxu0 0
        %1595 = vmatprep.subr.bf16.mxu0 0
        %1596 = vmatpush1.bf16.xpose.msra.mxu0 0
        %1597 = vmatprep.subr.bf16.mxu0 0
        %1598 = vmatpush1.bf16.xpose.msra.mxu0 0
        %1599 = vmatprep.subr.bf16.mxu0 0
        %1600 = vmatpush1.bf16.xpose.msra.mxu0 0
        %1601 = vmatprep.subr.bf16.mxu0 0
        %1602 = vmatpush1.bf16.xpose.msra.mxu0 0
        %1603 = vmatprep.subr.bf16.mxu0 0
        %1604 = vmatpush1.bf16.xpose.msra.mxu0 0
        %1605 = vmatprep.subr.bf16.mxu0 0
        %1606 = vmatpush1.bf16.xpose.msra.mxu0 0
        %1607 = vmatprep.subr.bf16.mxu0 0
        %1608 = vmatpush1.bf16.xpose.msra.mxu0 %v1591
        %1609 = vmatprep.subr.bf16.mxu0 0
        %1610 = vmatpush2.bf16.xpose.msra.mxu0 0
        %1611 = vmatprep.subr.bf16.mxu0 0
        %1612 = vmatpush2.bf16.xpose.msra.mxu0 0
        %1613 = vmatprep.subr.bf16.mxu0 0
        %1614 = vmatpush2.bf16.xpose.msra.mxu0 0
        %1615 = vmatprep.subr.bf16.mxu0 0
        %1616 = vmatpush2.bf16.xpose.msra.mxu0 0
        %1617 = vmatprep.subr.bf16.mxu0 0
        %1618 = vmatpush2.bf16.xpose.msra.mxu0 0
        %1619 = vmatprep.subr.bf16.mxu0 0
        %1620 = vmatpush2.bf16.xpose.msra.mxu0 0
        %1621 = vmatprep.subr.bf16.mxu0 0
        %1622 = vmatpush2.bf16.xpose.msra.mxu0 0
        %1623 = vmatprep.subr.bf16.mxu0 0
        %1624 = vmatpush2.bf16.xpose.msra.mxu0 0
        %1625 = vmatprep.mubr.bf16.mxu0 0
        %1626 = vmatmul.mubr.bf16.gmra.mxu0 %v1588
        %v1627 = vpop.f32.mrf.mxu0
        %v1628 = vadd.f32 0.0, %v1627
        %v1629 = vpop.f32.mrf.mxu0
        %v1630 = vpop.f32.mrf.mxu0
        %v1631 = vpop.f32.mrf.mxu0
        %1632 = vdwg.mxu0
        %v1634 = vlaneseq
        %v1635 = vshrl.u32 %v1634, 7
        %v1636 = vsub.s32 0, %v1635
        %v1637 = vrot.slane %v604, %v1636
        %v1639 = vmul.f32 %v1490, %v1637
        %v1640 = vmul.f32 %v1536, %v1637
        %v1641 = vmul.f32 %v1582, %v1637
        %v1642 = vmul.f32 %v1628, %v1637
        %vm1643 = vcmask 64512
        %v1644 = vsel %vm1643, %v1639, -inf
        %1645 = vmax.xlane.f32.xlu0 %v1644
        %v1646 = vpop.xlane.xlu0 %1645
        %v1647 = vsel %vm1643, %v1640, -inf
        %1648 = vmax.xlane.f32.xlu0 %v1647
        %v1649 = vpop.xlane.xlu0 %1648
        %v1650 = vsel %vm1643, %v1641, -inf
        %1651 = vmax.xlane.f32.xlu0 %v1650
        %v1652 = vpop.xlane.xlu0 %1651
        %v1653 = vsel %vm1643, %v1642, -inf
        %1654 = vmax.xlane.f32.xlu0 %v1653
        %v1655 = vpop.xlane.xlu0 %1654
        %v1656 = vsub.f32 %v1639, %v1646
        %v1657 = vsub.f32 %v1640, %v1649
        %v1658 = vsub.f32 %v1641, %v1652
        %v1659 = vsub.f32 %v1642, %v1655
        %v1660 = vmul.f32 %v1656, 1.442695
        %v1661 = vpow.pop %v1660
        %v1662 = vmul.f32 %v1657, 1.442695
        %v1663 = vpow.pop %v1662
        %v1664 = vmul.f32 %v1658, 1.442695
        %v1665 = vpow.pop %v1664
        %v1666 = vmul.f32 %v1659, 1.442695
        %v1667 = vpow.pop %v1666
        %v1668 = vmul.f32 %v1661, %v1637
        %v1669 = vmul.f32 %v1663, %v1637
        %v1670 = vmul.f32 %v1665, %v1637
        %v1671 = vmul.f32 %v1667, %v1637
        %v1672 = vsel %vm1643, %v1668, 0.0
        %1673 = vadd.xlane.f32.xlu0 %v1672
        %v1674 = vpop.xlane.xlu0 %1673
        %v1675 = vsel %vm1643, %v1669, 0.0
        %1676 = vadd.xlane.f32.xlu0 %v1675
        %v1677 = vpop.xlane.xlu0 %1676
        %v1678 = vsel %vm1643, %v1670, 0.0
        %1679 = vadd.xlane.f32.xlu0 %v1678
        %v1680 = vpop.xlane.xlu0 %1679
        %v1681 = vsel %vm1643, %v1671, 0.0
        %1682 = vadd.xlane.f32.xlu0 %v1681
        %v1683 = vpop.xlane.xlu0 %1682
        %vm1684 = vcmp.eq.f32.partialorder %v1674, 0.0
        %vm1685 = vcmp.eq.f32.partialorder %v1677, 0.0
        %vm1686 = vcmp.eq.f32.partialorder %v1680, 0.0
        %vm1687 = vcmp.eq.f32.partialorder %v1683, 0.0
        %v1688 = vsel %vm1684, 1, 0
        %v1689 = vsel %vm1685, 1, 0
        %v1690 = vsel %vm1686, 1, 0
        %v1691 = vsel %vm1687, 1, 0
        %v1692 = vcvt.s32.f32 %v1688
        %v1693 = vcvt.s32.f32 %v1689
        %v1694 = vcvt.s32.f32 %v1690
        %v1695 = vcvt.s32.f32 %v1691
        %v1696 = vadd.f32 %v1674, %v1692
        %v1697 = vadd.f32 %v1677, %v1693
        %v1698 = vadd.f32 %v1680, %v1694
        %v1699 = vadd.f32 %v1683, %v1695
        %v1700 = vrcp.pop %v1696
        %v1701 = vrcp.pop %v1697
        %v1702 = vrcp.pop %v1698
        %v1703 = vrcp.pop %v1699
        %v1704 = vmul.f32 %v1668, %v1700
        %v1705 = vmul.f32 %v1669, %v1701
        %v1706 = vmul.f32 %v1670, %v1702
        %v1707 = vmul.f32 %v1671, %v1703
        %v1708 = vpack.c.bf16 %v1704, %v1704
        %v1709 = vpack.c.bf16 %v1705, %v1705
        %v1710 = vpack.c.bf16 %v1706, %v1706
        %v1711 = vpack.c.bf16 %v1707, %v1707
        %v1713 = vsel %vm1643, %v1708, 0
        %vm1715 = vcmask 1043456
        %v1717 = vsel %vm1715, %v1438, 0
        %1719 = vmatprep.subr.bf16.mxu0 0
        %1720 = vmatpush1.bf16.msra.mxu0 0
        %1721 = vmatprep.subr.bf16.mxu0 0
        %1722 = vmatpush1.bf16.msra.mxu0 0
        %1723 = vmatprep.subr.bf16.mxu0 0
        %1724 = vmatpush1.bf16.msra.mxu0 0
        %1725 = vmatprep.subr.bf16.mxu0 0
        %1726 = vmatpush1.bf16.msra.mxu0 0
        %1727 = vmatprep.subr.bf16.mxu0 0
        %1728 = vmatpush1.bf16.msra.mxu0 0
        %1729 = vmatprep.subr.bf16.mxu0 0
        %1730 = vmatpush1.bf16.msra.mxu0 0
        %1731 = vmatprep.subr.bf16.mxu0 0
        %1732 = vmatpush1.bf16.msra.mxu0 0
        %1733 = vmatprep.subr.bf16.mxu0 0
        %1734 = vmatpush1.bf16.msra.mxu0 %v1717
        %1735 = vmatprep.subr.bf16.mxu0 0
        %1736 = vmatpush2.bf16.msra.mxu0 0
        %1737 = vmatprep.subr.bf16.mxu0 0
        %1738 = vmatpush2.bf16.msra.mxu0 0
        %1739 = vmatprep.subr.bf16.mxu0 0
        %1740 = vmatpush2.bf16.msra.mxu0 0
        %1741 = vmatprep.subr.bf16.mxu0 0
        %1742 = vmatpush2.bf16.msra.mxu0 0
        %1743 = vmatprep.subr.bf16.mxu0 0
        %1744 = vmatpush2.bf16.msra.mxu0 0
        %1745 = vmatprep.subr.bf16.mxu0 0
        %1746 = vmatpush2.bf16.msra.mxu0 0
        %1747 = vmatprep.subr.bf16.mxu0 0
        %1748 = vmatpush2.bf16.msra.mxu0 0
        %1749 = vmatprep.subr.bf16.mxu0 0
        %1750 = vmatpush2.bf16.msra.mxu0 0
        %1751 = vmatprep.mubr.bf16.mxu0 0
        %1752 = vmatmul.mubr.bf16.gmra.mxu0 %v1713
        %v1753 = vpop.f32.mrf.mxu0
        %v1754 = vadd.f32 0.0, %v1753
        %v1755 = vpop.f32.mrf.mxu0
        %v1756 = vpop.f32.mrf.mxu0
        %v1757 = vpop.f32.mrf.mxu0
        %1758 = vdwg.mxu0
        %v1760 = vsel %vm1643, %v1709, 0
        %v1763 = vsel %vm1715, %v1441, 0
        %1765 = vmatprep.subr.bf16.mxu0 0
        %1766 = vmatpush1.bf16.msra.mxu0 0
        %1767 = vmatprep.subr.bf16.mxu0 0
        %1768 = vmatpush1.bf16.msra.mxu0 0
        %1769 = vmatprep.subr.bf16.mxu0 0
        %1770 = vmatpush1.bf16.msra.mxu0 0
        %1771 = vmatprep.subr.bf16.mxu0 0
        %1772 = vmatpush1.bf16.msra.mxu0 0
        %1773 = vmatprep.subr.bf16.mxu0 0
        %1774 = vmatpush1.bf16.msra.mxu0 0
        %1775 = vmatprep.subr.bf16.mxu0 0
        %1776 = vmatpush1.bf16.msra.mxu0 0
        %1777 = vmatprep.subr.bf16.mxu0 0
        %1778 = vmatpush1.bf16.msra.mxu0 0
        %1779 = vmatprep.subr.bf16.mxu0 0
        %1780 = vmatpush1.bf16.msra.mxu0 %v1763
        %1781 = vmatprep.subr.bf16.mxu0 0
        %1782 = vmatpush2.bf16.msra.mxu0 0
        %1783 = vmatprep.subr.bf16.mxu0 0
        %1784 = vmatpush2.bf16.msra.mxu0 0
        %1785 = vmatprep.subr.bf16.mxu0 0
        %1786 = vmatpush2.bf16.msra.mxu0 0
        %1787 = vmatprep.subr.bf16.mxu0 0
        %1788 = vmatpush2.bf16.msra.mxu0 0
        %1789 = vmatprep.subr.bf16.mxu0 0
        %1790 = vmatpush2.bf16.msra.mxu0 0
        %1791 = vmatprep.subr.bf16.mxu0 0
        %1792 = vmatpush2.bf16.msra.mxu0 0
        %1793 = vmatprep.subr.bf16.mxu0 0
        %1794 = vmatpush2.bf16.msra.mxu0 0
        %1795 = vmatprep.subr.bf16.mxu0 0
        %1796 = vmatpush2.bf16.msra.mxu0 0
        %1797 = vmatprep.mubr.bf16.mxu0 0
        %1798 = vmatmul.mubr.bf16.gmra.mxu0 %v1760
        %v1799 = vpop.f32.mrf.mxu0
        %v1800 = vadd.f32 0.0, %v1799
        %v1801 = vpop.f32.mrf.mxu0
        %v1802 = vpop.f32.mrf.mxu0
        %v1803 = vpop.f32.mrf.mxu0
        %1804 = vdwg.mxu0
        %v1806 = vsel %vm1643, %v1710, 0
        %v1809 = vsel %vm1715, %v1444, 0
        %1811 = vmatprep.subr.bf16.mxu0 0
        %1812 = vmatpush1.bf16.msra.mxu0 0
        %1813 = vmatprep.subr.bf16.mxu0 0
        %1814 = vmatpush1.bf16.msra.mxu0 0
        %1815 = vmatprep.subr.bf16.mxu0 0
        %1816 = vmatpush1.bf16.msra.mxu0 0
        %1817 = vmatprep.subr.bf16.mxu0 0
        %1818 = vmatpush1.bf16.msra.mxu0 0
        %1819 = vmatprep.subr.bf16.mxu0 0
        %1820 = vmatpush1.bf16.msra.mxu0 0
        %1821 = vmatprep.subr.bf16.mxu0 0
        %1822 = vmatpush1.bf16.msra.mxu0 0
        %1823 = vmatprep.subr.bf16.mxu0 0
        %1824 = vmatpush1.bf16.msra.mxu0 0
        %1825 = vmatprep.subr.bf16.mxu0 0
        %1826 = vmatpush1.bf16.msra.mxu0 %v1809
        %1827 = vmatprep.subr.bf16.mxu0 0
        %1828 = vmatpush2.bf16.msra.mxu0 0
        %1829 = vmatprep.subr.bf16.mxu0 0
        %1830 = vmatpush2.bf16.msra.mxu0 0
        %1831 = vmatprep.subr.bf16.mxu0 0
        %1832 = vmatpush2.bf16.msra.mxu0 0
        %1833 = vmatprep.subr.bf16.mxu0 0
        %1834 = vmatpush2.bf16.msra.mxu0 0
        %1835 = vmatprep.subr.bf16.mxu0 0
        %1836 = vmatpush2.bf16.msra.mxu0 0
        %1837 = vmatprep.subr.bf16.mxu0 0
        %1838 = vmatpush2.bf16.msra.mxu0 0
        %1839 = vmatprep.subr.bf16.mxu0 0
        %1840 = vmatpush2.bf16.msra.mxu0 0
        %1841 = vmatprep.subr.bf16.mxu0 0
        %1842 = vmatpush2.bf16.msra.mxu0 0
        %1843 = vmatprep.mubr.bf16.mxu0 0
        %1844 = vmatmul.mubr.bf16.gmra.mxu0 %v1806
        %v1845 = vpop.f32.mrf.mxu0
        %v1846 = vadd.f32 0.0, %v1845
        %v1847 = vpop.f32.mrf.mxu0
        %v1848 = vpop.f32.mrf.mxu0
        %v1849 = vpop.f32.mrf.mxu0
        %1850 = vdwg.mxu0
        %v1852 = vsel %vm1643, %v1711, 0
        %v1855 = vsel %vm1715, %v1447, 0
        %1857 = vmatprep.subr.bf16.mxu0 0
        %1858 = vmatpush1.bf16.msra.mxu0 0
        %1859 = vmatprep.subr.bf16.mxu0 0
        %1860 = vmatpush1.bf16.msra.mxu0 0
        %1861 = vmatprep.subr.bf16.mxu0 0
        %1862 = vmatpush1.bf16.msra.mxu0 0
        %1863 = vmatprep.subr.bf16.mxu0 0
        %1864 = vmatpush1.bf16.msra.mxu0 0
        %1865 = vmatprep.subr.bf16.mxu0 0
        %1866 = vmatpush1.bf16.msra.mxu0 0
        %1867 = vmatprep.subr.bf16.mxu0 0
        %1868 = vmatpush1.bf16.msra.mxu0 0
        %1869 = vmatprep.subr.bf16.mxu0 0
        %1870 = vmatpush1.bf16.msra.mxu0 0
        %1871 = vmatprep.subr.bf16.mxu0 0
        %1872 = vmatpush1.bf16.msra.mxu0 %v1855
        %1873 = vmatprep.subr.bf16.mxu0 0
        %1874 = vmatpush2.bf16.msra.mxu0 0
        %1875 = vmatprep.subr.bf16.mxu0 0
        %1876 = vmatpush2.bf16.msra.mxu0 0
        %1877 = vmatprep.subr.bf16.mxu0 0
        %1878 = vmatpush2.bf16.msra.mxu0 0
        %1879 = vmatprep.subr.bf16.mxu0 0
        %1880 = vmatpush2.bf16.msra.mxu0 0
        %1881 = vmatprep.subr.bf16.mxu0 0
        %1882 = vmatpush2.bf16.msra.mxu0 0
        %1883 = vmatprep.subr.bf16.mxu0 0
        %1884 = vmatpush2.bf16.msra.mxu0 0
        %1885 = vmatprep.subr.bf16.mxu0 0
        %1886 = vmatpush2.bf16.msra.mxu0 0
        %1887 = vmatprep.subr.bf16.mxu0 0
        %1888 = vmatpush2.bf16.msra.mxu0 0
        %1889 = vmatprep.mubr.bf16.mxu0 0
        %1890 = vmatmul.mubr.bf16.gmra.mxu0 %v1852
        %v1891 = vpop.f32.mrf.mxu0
        %v1892 = vadd.f32 0.0, %v1891
        %v1893 = vpop.f32.mrf.mxu0
        %v1894 = vpop.f32.mrf.mxu0
        %v1895 = vpop.f32.mrf.mxu0
        %1896 = vdwg.mxu0
        %v1897 = vpack.c.bf16 %v1754, %v1754
        %v1899 = vunpack.c.l.s4 1983009808
        %v1900 = vunpack.c.0.s8 %v1899
        %v1901 = vlaneseq
        %v1902 = vshrl.u32 %v1901, 7
        %v1903 = vsub.s32 %v1900, %v1902
        %v1904 = vrot.slane %v1897, %v1903
        %v1905 = vpack.c.bf16 %v1846, %v1846
        %v1907 = vunpack.c.l.s4 1983009808
        %v1908 = vunpack.c.0.s8 %v1907
        %v1909 = vlaneseq
        %v1910 = vshrl.u32 %v1909, 7
        %v1911 = vsub.s32 %v1908, %v1910
        %v1912 = vrot.slane %v1905, %v1911
        %v1913 = vcombine.low %v1904, %v1912
        %v1914 = vcombine.high %v1904, %v1912
        %v1916 = vunpack.c.l.s4 1934713408
        %v1917 = vunpack.c.0.s8 %v1916
        %v1918 = vlaneseq
        %v1919 = vshrl.u32 %v1918, 7
        %v1920 = vsub.s32 %v1917, %v1919
        %v1921 = vrot.slane %v1913, %v1920
        %v1923 = vunpack.c.l.s4 1934713408
        %v1924 = vunpack.c.0.s8 %v1923
        %v1925 = vlaneseq
        %v1926 = vshrl.u32 %v1925, 7
        %v1927 = vsub.s32 %v1924, %v1926
        %v1928 = vrot.slane %v1914, %v1927
        %v1929 = vcombine.high %v1921, 0
        %v1930 = vcombine.high %v1928, 0
        %v1931 = vpack.c.bf16 %v1800, %v1800
        %v1933 = vunpack.c.l.s4 1983009808
        %v1934 = vunpack.c.0.s8 %v1933
        %v1935 = vlaneseq
        %v1936 = vshrl.u32 %v1935, 7
        %v1937 = vsub.s32 %v1934, %v1936
        %v1938 = vrot.slane %v1931, %v1937
        %v1939 = vpack.c.bf16 %v1892, %v1892
        %v1941 = vunpack.c.l.s4 1983009808
        %v1942 = vunpack.c.0.s8 %v1941
        %v1943 = vlaneseq
        %v1944 = vshrl.u32 %v1943, 7
        %v1945 = vsub.s32 %v1942, %v1944
        %v1946 = vrot.slane %v1939, %v1945
        %v1947 = vcombine.low %v1938, %v1946
        %v1948 = vcombine.high %v1938, %v1946
        %v1950 = vunpack.c.l.s4 1934713408
        %v1951 = vunpack.c.0.s8 %v1950
        %v1952 = vlaneseq
        %v1953 = vshrl.u32 %v1952, 7
        %v1954 = vsub.s32 %v1951, %v1953
        %v1955 = vrot.slane %v1947, %v1954
        %v1957 = vunpack.c.l.s4 1934713408
        %v1958 = vunpack.c.0.s8 %v1957
        %v1959 = vlaneseq
        %v1960 = vshrl.u32 %v1959, 7
        %v1961 = vsub.s32 %v1958, %v1960
        %v1962 = vrot.slane %v1948, %v1961
        %v1963 = vcombine.high %v1955, 0
        %v1964 = vcombine.high %v1962, 0
        %v1967 = vpack.i.b16 %v1955, %v1921
        %v1969 = vshrl.u32 %v1921, 16
        %v1970 = vshrl.u32 %v1955, 16
        %v1971 = vpack.i.b16 %v1970, %v1969
        %v1975 = vpack.i.b16 %v1963, %v1929
        %v1977 = vshrl.u32 %v1929, 16
        %v1978 = vshrl.u32 %v1963, 16
        %v1979 = vpack.i.b16 %v1978, %v1977
        %v1983 = vpack.i.b16 %v1962, %v1928
        %v1985 = vshrl.u32 %v1928, 16
        %v1986 = vshrl.u32 %v1962, 16
        %v1987 = vpack.i.b16 %v1986, %v1985
        %v1991 = vpack.i.b16 %v1964, %v1930
        %v1993 = vshrl.u32 %v1930, 16
        %v1994 = vshrl.u32 %v1964, 16
        %v1995 = vpack.i.b16 %v1994, %v1993
        %v1997 = vcombine.low %v1967, %v1983
        %v1999 = vunpack.c.l.s4 1983009808
        %v2000 = vunpack.c.0.s8 %v1999
        %v2001 = vlaneseq
        %v2002 = vshrl.u32 %v2001, 7
        %v2003 = vsub.s32 %v2000, %v2002
        %v2004 = vrot.slane %v1997, %v2003
        %v2005 = vcombine.low %v1975, %v1991
        %v2007 = vunpack.c.l.s4 1983009808
        %v2008 = vunpack.c.0.s8 %v2007
        %v2009 = vlaneseq
        %v2010 = vshrl.u32 %v2009, 7
        %v2011 = vsub.s32 %v2008, %v2010
        %v2012 = vrot.slane %v2005, %v2011
        %v2013 = vcombine.low %v2004, %v2012
        %v2015 = vunpack.c.l.s4 1934713408
        %v2016 = vunpack.c.0.s8 %v2015
        %v2017 = vlaneseq
        %v2018 = vshrl.u32 %v2017, 7
        %v2019 = vsub.s32 %v2016, %v2018
        %v2020 = vrot.slane %v2013, %v2019
        %v2021 = vcombine.high %v2020, 0
        %v2022 = vcombine.low %v1971, %v1987
        %v2024 = vunpack.c.l.s4 1983009808
        %v2025 = vunpack.c.0.s8 %v2024
        %v2026 = vlaneseq
        %v2027 = vshrl.u32 %v2026, 7
        %v2028 = vsub.s32 %v2025, %v2027
        %v2029 = vrot.slane %v2022, %v2028
        %v2030 = vcombine.low %v1979, %v1995
        %v2032 = vunpack.c.l.s4 1983009808
        %v2033 = vunpack.c.0.s8 %v2032
        %v2034 = vlaneseq
        %v2035 = vshrl.u32 %v2034, 7
        %v2036 = vsub.s32 %v2033, %v2035
        %v2037 = vrot.slane %v2030, %v2036
        %v2038 = vcombine.low %v2029, %v2037
        %v2040 = vunpack.c.l.s4 1934713408
        %v2041 = vunpack.c.0.s8 %v2040
        %v2042 = vlaneseq
        %v2043 = vshrl.u32 %v2042, 7
        %v2044 = vsub.s32 %v2041, %v2043
        %v2045 = vrot.slane %v2038, %v2044
        %v2046 = vcombine.high %v2045, 0
        %v2049 = vpack.i.b16 %v2045, %v2020
        %v2050 = vshrl.u32 %v2020, 16
        %v2051 = vshrl.u32 %v2045, 16
        %v2052 = vpack.i.b16 %v2051, %v2050
        %v2055 = vpack.i.b16 %v2046, %v2021
        %v2056 = vshrl.u32 %v2021, 16
        %v2057 = vshrl.u32 %v2046, 16
        %v2058 = vpack.i.b16 %v2057, %v2056
        %2059 = vrot.lane.b32.xlu0 %v2052, 32
        %v2060 = vpop.permute.xlu0 %2059
        %2061 = vrot.lane.b32.xlu0 %v2055, 64
        %v2062 = vpop.permute.xlu0 %2061
        %2063 = vrot.lane.b32.xlu0 %v2058, 96
        %v2064 = vpop.permute.xlu0 %2063
        %v2067 = vsel %vm1448, %v2049, %v2060
        %vm2068 = vcmask 523264
        %v2070 = vsel %vm2068, %v2067, %v2062
        %vm2071 = vcmask 785408
        %v2073 = vsel %vm2071, %v2070, %v2064
        %v2075 = vld [vmem:[%s8] sm:$0xf]
        %v2076 = vld [vmem:[%s8 + $0x4] sm:$0xf]
        %v2077 = vld [vmem:[%s8 + $0x8] sm:$0xf]
        %v2078 = vld [vmem:[%s8 + $0xc] sm:$0xf]
        %v2079 = vld [vmem:[%s8 + $0x10] sm:$0xf]
        %v2080 = vld [vmem:[%s8 + $0x14] sm:$0xf]
        %v2081 = vld [vmem:[%s8 + $0x18] sm:$0xf]
        %v2082 = vld [vmem:[%s8 + $0x1c] sm:$0xf]
        %v2083 = vld [vmem:[%s8 + $0x20] sm:$0xf]
        %v2084 = vld [vmem:[%s8 + $0x24] sm:$0xf]
        %v2085 = vld [vmem:[%s8 + $0x28] sm:$0xf]
        %v2086 = vld [vmem:[%s8 + $0x2c] sm:$0xf]
        %v2087 = vld [vmem:[%s8 + $0x30] sm:$0xf]
        %v2088 = vld [vmem:[%s8 + $0x34] sm:$0xf]
        %v2089 = vld [vmem:[%s8 + $0x38] sm:$0xf]
        %v2090 = vld [vmem:[%s8 + $0x3c] sm:$0xf]
        %v2091 = vld [vmem:[%s9] sm:$0x1]
        %v2093 = vlaneseq
        %v2094 = vshrl.u32 %v2093, 7
        %v2095 = vsub.s32 0, %v2094
        %v2096 = vrot.slane %v2091, %v2095
        %v2114 = vunpack.c.l.b16 %v2075
        %v2115 = vunpack.c.l.b16 %v2076
        %v2116 = vunpack.c.l.b16 %v2077
        %v2117 = vunpack.c.l.b16 %v2078
        %v2118 = vunpack.c.l.b16 %v2079
        %v2119 = vunpack.c.l.b16 %v2080
        %v2120 = vunpack.c.l.b16 %v2081
        %v2121 = vunpack.c.l.b16 %v2082
        %v2122 = vunpack.c.l.b16 %v2083
        %v2123 = vunpack.c.l.b16 %v2084
        %v2124 = vunpack.c.l.b16 %v2085
        %v2125 = vunpack.c.l.b16 %v2086
        %v2126 = vunpack.c.l.b16 %v2087
        %v2127 = vunpack.c.l.b16 %v2088
        %v2128 = vunpack.c.l.b16 %v2089
        %v2129 = vunpack.c.l.b16 %v2090
        %v2130 = vpack.c.b16 %v2115, %v2114
        %v2131 = vpack.c.b16 %v2117, %v2116
        %v2132 = vpack.c.b16 %v2119, %v2118
        %v2133 = vpack.c.b16 %v2121, %v2120
        %v2134 = vpack.c.b16 %v2123, %v2122
        %v2135 = vpack.c.b16 %v2125, %v2124
        %v2136 = vpack.c.b16 %v2127, %v2126
        %v2137 = vpack.c.b16 %v2129, %v2128
        %2146 = vmatprep.subr.bf16.mxu0 0
        %2147 = vmatpush1.bf16.msra.mxu0 %v2137
        %2148 = vmatprep.subr.bf16.mxu0 0
        %2149 = vmatpush1.bf16.msra.mxu0 %v2136
        %2150 = vmatprep.subr.bf16.mxu0 0
        %2151 = vmatpush1.bf16.msra.mxu0 %v2135
        %2152 = vmatprep.subr.bf16.mxu0 0
        %2153 = vmatpush1.bf16.msra.mxu0 %v2134
        %2154 = vmatprep.subr.bf16.mxu0 0
        %2155 = vmatpush1.bf16.msra.mxu0 %v2133
        %2156 = vmatprep.subr.bf16.mxu0 0
        %2157 = vmatpush1.bf16.msra.mxu0 %v2132
        %2158 = vmatprep.subr.bf16.mxu0 0
        %2159 = vmatpush1.bf16.msra.mxu0 %v2131
        %2160 = vmatprep.subr.bf16.mxu0 0
        %2161 = vmatpush1.bf16.msra.mxu0 %v2130
        %2162 = vmatprep.subr.bf16.mxu0 0
        %2163 = vmatpush2.bf16.msra.mxu0 0
        %2164 = vmatprep.subr.bf16.mxu0 0
        %2165 = vmatpush2.bf16.msra.mxu0 0
        %2166 = vmatprep.subr.bf16.mxu0 0
        %2167 = vmatpush2.bf16.msra.mxu0 0
        %2168 = vmatprep.subr.bf16.mxu0 0
        %2169 = vmatpush2.bf16.msra.mxu0 0
        %2170 = vmatprep.subr.bf16.mxu0 0
        %2171 = vmatpush2.bf16.msra.mxu0 0
        %2172 = vmatprep.subr.bf16.mxu0 0
        %2173 = vmatpush2.bf16.msra.mxu0 0
        %2174 = vmatprep.subr.bf16.mxu0 0
        %2175 = vmatpush2.bf16.msra.mxu0 0
        %2176 = vmatprep.subr.bf16.mxu0 0
        %2177 = vmatpush2.bf16.msra.mxu0 0
        %2178 = vmatprep.mubr.bf16.mxu0 0
        %2179 = vmatmul.mubr.bf16.gmra.mxu0 %v2073
        %v2180 = vpop.f32.mrf.mxu0
        %v2181 = vadd.f32 %v2096, %v2180
        %v2182 = vpop.f32.mrf.mxu0
        %v2183 = vpop.f32.mrf.mxu0
        %v2184 = vpop.f32.mrf.mxu0
        %2185 = vdwg.mxu0
        %v2186 = vadd.f32 %v602, %v2181
        %v2187 = vld [vmem:[%s10] sm:$0x1]
        %v2188 = vld [vmem:[%s11] sm:$0x1]
        %2189 = vadd.xlane.f32.xlu0 %v2186
        %v2190 = vpop.xlane.xlu0 %2189
        %v2191 = vrcp.pop 128.0
        %v2192 = vmul.f32 %v2190, %v2191
        %v2193 = vsub.f32 %v2186, %v2192
        %v2194 = vmul.f32 %v2193, %v2193
        %2195 = vadd.xlane.f32.xlu0 %v2194
        %v2196 = vpop.xlane.xlu0 %2195
        %v2197 = vmul.f32 %v2196, %v2191
        %v2198 = vadd.f32 %v2197, 1e-12
        %v2199 = vrsqrt.pop %v2198
        %v2200 = vmul.f32 %v2193, %v2199
        %v2202 = vlaneseq
        %v2203 = vshrl.u32 %v2202, 7
        %v2204 = vsub.s32 0, %v2203
        %v2205 = vrot.slane %v2187, %v2204
        %v2207 = vmul.f32 %v2200, %v2205
        %v2209 = vlaneseq
        %v2210 = vshrl.u32 %v2209, 7
        %v2211 = vsub.s32 0, %v2210
        %v2212 = vrot.slane %v2188, %v2211
        %v2214 = vadd.f32 %v2207, %v2212
        %v2215 = vpack.c.bf16 %v2214, %v2214
        %v2216 = vld [vmem:[%s12] sm:$0xff]
        %v2217 = vld [vmem:[%s12 + $0x8] sm:$0xff]
        %v2218 = vld [vmem:[%s12 + $0x10] sm:$0xff]
        %v2219 = vld [vmem:[%s12 + $0x18] sm:$0xff]
        %v2220 = vld [vmem:[%s12 + $0x20] sm:$0xff]
        %v2221 = vld [vmem:[%s12 + $0x28] sm:$0xff]
        %v2222 = vld [vmem:[%s12 + $0x30] sm:$0xff]
        %v2223 = vld [vmem:[%s12 + $0x38] sm:$0xff]
        %v2224 = vld [vmem:[%s12 + $0x40] sm:$0xff]
        %v2225 = vld [vmem:[%s12 + $0x48] sm:$0xff]
        %v2226 = vld [vmem:[%s12 + $0x50] sm:$0xff]
        %v2227 = vld [vmem:[%s12 + $0x58] sm:$0xff]
        %v2228 = vld [vmem:[%s12 + $0x60] sm:$0xff]
        %v2229 = vld [vmem:[%s12 + $0x68] sm:$0xff]
        %v2230 = vld [vmem:[%s12 + $0x70] sm:$0xff]
        %v2231 = vld [vmem:[%s12 + $0x78] sm:$0xff]
        %v2232 = vld [vmem:[%s13] sm:$0x3]
        %v2234 = vlaneseq
        %v2235 = vshrl.u32 %v2234, 7
        %v2236 = vsub.s32 0, %v2235
        %v2237 = vrot.slane %v2232, %v2236
        %v2238 = vlaneseq
        %v2239 = vshrl.u32 %v2238, 7
        %v2240 = vsub.s32 1, %v2239
        %v2241 = vrot.slane %v2232, %v2240
        %v2260 = vunpack.c.l.b16 %v2216
        %v2261 = vunpack.c.h.b16 %v2216
        %v2262 = vunpack.c.l.b16 %v2217
        %v2263 = vunpack.c.h.b16 %v2217
        %v2264 = vunpack.c.l.b16 %v2218
        %v2265 = vunpack.c.h.b16 %v2218
        %v2266 = vunpack.c.l.b16 %v2219
        %v2267 = vunpack.c.h.b16 %v2219
        %v2268 = vunpack.c.l.b16 %v2220
        %v2269 = vunpack.c.h.b16 %v2220
        %v2270 = vunpack.c.l.b16 %v2221
        %v2271 = vunpack.c.h.b16 %v2221
        %v2272 = vunpack.c.l.b16 %v2222
        %v2273 = vunpack.c.h.b16 %v2222
        %v2274 = vunpack.c.l.b16 %v2223
        %v2275 = vunpack.c.h.b16 %v2223
        %v2276 = vunpack.c.l.b16 %v2224
        %v2277 = vunpack.c.h.b16 %v2224
        %v2278 = vunpack.c.l.b16 %v2225
        %v2279 = vunpack.c.h.b16 %v2225
        %v2280 = vunpack.c.l.b16 %v2226
        %v2281 = vunpack.c.h.b16 %v2226
        %v2282 = vunpack.c.l.b16 %v2227
        %v2283 = vunpack.c.h.b16 %v2227
        %v2284 = vunpack.c.l.b16 %v2228
        %v2285 = vunpack.c.h.b16 %v2228
        %v2286 = vunpack.c.l.b16 %v2229
        %v2287 = vunpack.c.h.b16 %v2229
        %v2288 = vunpack.c.l.b16 %v2230
        %v2289 = vunpack.c.h.b16 %v2230
        %v2290 = vunpack.c.l.b16 %v2231
        %v2291 = vunpack.c.h.b16 %v2231
        %v2292 = vpack.c.b16 %v2262, %v2260
        %v2293 = vpack.c.b16 %v2263, %v2261
        %v2294 = vpack.c.b16 %v2266, %v2264
        %v2295 = vpack.c.b16 %v2267, %v2265
        %v2296 = vpack.c.b16 %v2270, %v2268
        %v2297 = vpack.c.b16 %v2271, %v2269
        %v2298 = vpack.c.b16 %v2274, %v2272
        %v2299 = vpack.c.b16 %v2275, %v2273
        %v2300 = vpack.c.b16 %v2278, %v2276
        %v2301 = vpack.c.b16 %v2279, %v2277
        %v2302 = vpack.c.b16 %v2282, %v2280
        %v2303 = vpack.c.b16 %v2283, %v2281
        %v2304 = vpack.c.b16 %v2286, %v2284
        %v2305 = vpack.c.b16 %v2287, %v2285
        %v2306 = vpack.c.b16 %v2290, %v2288
        %v2307 = vpack.c.b16 %v2291, %v2289
        %2324 = vmatprep.subr.bf16.mxu0 %v2307
        %2325 = vmatpush1.bf16.msra.mxu0 %v2306
        %2326 = vmatprep.subr.bf16.mxu0 %v2305
        %2327 = vmatpush1.bf16.msra.mxu0 %v2304
        %2328 = vmatprep.subr.bf16.mxu0 %v2303
        %2329 = vmatpush1.bf16.msra.mxu0 %v2302
        %2330 = vmatprep.subr.bf16.mxu0 %v2301
        %2331 = vmatpush1.bf16.msra.mxu0 %v2300
        %2332 = vmatprep.subr.bf16.mxu0 %v2299
        %2333 = vmatpush1.bf16.msra.mxu0 %v2298
        %2334 = vmatprep.subr.bf16.mxu0 %v2297
        %2335 = vmatpush1.bf16.msra.mxu0 %v2296
        %2336 = vmatprep.subr.bf16.mxu0 %v2295
        %2337 = vmatpush1.bf16.msra.mxu0 %v2294
        %2338 = vmatprep.subr.bf16.mxu0 %v2293
        %2339 = vmatpush1.bf16.msra.mxu0 %v2292
        %2340 = vmatprep.subr.bf16.mxu0 0
        %2341 = vmatpush2.bf16.msra.mxu0 0
        %2342 = vmatprep.subr.bf16.mxu0 0
        %2343 = vmatpush2.bf16.msra.mxu0 0
        %2344 = vmatprep.subr.bf16.mxu0 0
        %2345 = vmatpush2.bf16.msra.mxu0 0
        %2346 = vmatprep.subr.bf16.mxu0 0
        %2347 = vmatpush2.bf16.msra.mxu0 0
        %2348 = vmatprep.subr.bf16.mxu0 0
        %2349 = vmatpush2.bf16.msra.mxu0 0
        %2350 = vmatprep.subr.bf16.mxu0 0
        %2351 = vmatpush2.bf16.msra.mxu0 0
        %2352 = vmatprep.subr.bf16.mxu0 0
        %2353 = vmatpush2.bf16.msra.mxu0 0
        %2354 = vmatprep.subr.bf16.mxu0 0
        %2355 = vmatpush2.bf16.msra.mxu0 0
        %2356 = vmatprep.mubr.bf16.mxu0 0
        %2357 = vmatmul.mubr.bf16.gmra.mxu0 %v2215
        %v2358 = vpop.f32.mrf.mxu0
        %v2359 = vadd.f32 %v2237, %v2358
        %v2360 = vpop.f32.mrf.mxu0
        %v2361 = vadd.f32 %v2241, %v2360
        %v2362 = vpop.f32.mrf.mxu0
        %v2363 = vpop.f32.mrf.mxu0
        %2364 = vdwg.mxu0
        %v2365 = vmul.f32 %v2359, 0.5
        %v2366 = vmul.f32 %v2361, 0.5
        %v2367 = vrcp.pop 1.4142135
        %v2368 = vmul.f32 %v2359, %v2367
        %v2369 = vmul.f32 %v2361, %v2367
        %v2370 = verf.f32.pop %v2368
        %v2371 = verf.f32.pop %v2369
        %v2372 = vadd.f32 %v2370, 1.0
        %v2373 = vadd.f32 %v2371, 1.0
        %v2374 = vmul.f32 %v2365, %v2372
        %v2375 = vmul.f32 %v2366, %v2373
        %v2376 = vpack.c.bf16 %v2374, %v2374
        %v2377 = vpack.c.bf16 %v2375, %v2375
        %v2378 = vld [vmem:[%s14] sm:$0xf]
        %v2379 = vld [vmem:[%s14 + $0x4] sm:$0xf]
        %v2380 = vld [vmem:[%s14 + $0x8] sm:$0xf]
        %v2381 = vld [vmem:[%s14 + $0xc] sm:$0xf]
        %v2382 = vld [vmem:[%s14 + $0x10] sm:$0xf]
        %v2383 = vld [vmem:[%s14 + $0x14] sm:$0xf]
        %v2384 = vld [vmem:[%s14 + $0x18] sm:$0xf]
        %v2385 = vld [vmem:[%s14 + $0x1c] sm:$0xf]
        %v2386 = vld [vmem:[%s14 + $0x20] sm:$0xf]
        %v2387 = vld [vmem:[%s14 + $0x24] sm:$0xf]
        %v2388 = vld [vmem:[%s14 + $0x28] sm:$0xf]
        %v2389 = vld [vmem:[%s14 + $0x2c] sm:$0xf]
        %v2390 = vld [vmem:[%s14 + $0x30] sm:$0xf]
        %v2391 = vld [vmem:[%s14 + $0x34] sm:$0xf]
        %v2392 = vld [vmem:[%s14 + $0x38] sm:$0xf]
        %v2393 = vld [vmem:[%s14 + $0x3c] sm:$0xf]
        %v2394 = vld [vmem:[%s14 + $0x40] sm:$0xf]
        %v2395 = vld [vmem:[%s14 + $0x44] sm:$0xf]
        %v2396 = vld [vmem:[%s14 + $0x48] sm:$0xf]
        %v2397 = vld [vmem:[%s14 + $0x4c] sm:$0xf]
        %v2398 = vld [vmem:[%s14 + $0x50] sm:$0xf]
        %v2399 = vld [vmem:[%s14 + $0x54] sm:$0xf]
        %v2400 = vld [vmem:[%s14 + $0x58] sm:$0xf]
        %v2401 = vld [vmem:[%s14 + $0x5c] sm:$0xf]
        %v2402 = vld [vmem:[%s14 + $0x60] sm:$0xf]
        %v2403 = vld [vmem:[%s14 + $0x64] sm:$0xf]
        %v2404 = vld [vmem:[%s14 + $0x68] sm:$0xf]
        %v2405 = vld [vmem:[%s14 + $0x6c] sm:$0xf]
        %v2406 = vld [vmem:[%s14 + $0x70] sm:$0xf]
        %v2407 = vld [vmem:[%s14 + $0x74] sm:$0xf]
        %v2408 = vld [vmem:[%s14 + $0x78] sm:$0xf]
        %v2409 = vld [vmem:[%s14 + $0x7c] sm:$0xf]
        %v2410 = vld [vmem:[%s15] sm:$0x1]
        %v2412 = vlaneseq
        %v2413 = vshrl.u32 %v2412, 7
        %v2414 = vsub.s32 0, %v2413
        %v2415 = vrot.slane %v2410, %v2414
        %v2449 = vunpack.c.l.b16 %v2378
        %v2450 = vunpack.c.l.b16 %v2379
        %v2451 = vunpack.c.l.b16 %v2380
        %v2452 = vunpack.c.l.b16 %v2381
        %v2453 = vunpack.c.l.b16 %v2382
        %v2454 = vunpack.c.l.b16 %v2383
        %v2455 = vunpack.c.l.b16 %v2384
        %v2456 = vunpack.c.l.b16 %v2385
        %v2457 = vunpack.c.l.b16 %v2386
        %v2458 = vunpack.c.l.b16 %v2387
        %v2459 = vunpack.c.l.b16 %v2388
        %v2460 = vunpack.c.l.b16 %v2389
        %v2461 = vunpack.c.l.b16 %v2390
        %v2462 = vunpack.c.l.b16 %v2391
        %v2463 = vunpack.c.l.b16 %v2392
        %v2464 = vunpack.c.l.b16 %v2393
        %v2465 = vunpack.c.l.b16 %v2394
        %v2466 = vunpack.c.l.b16 %v2395
        %v2467 = vunpack.c.l.b16 %v2396
        %v2468 = vunpack.c.l.b16 %v2397
        %v2469 = vunpack.c.l.b16 %v2398
        %v2470 = vunpack.c.l.b16 %v2399
        %v2471 = vunpack.c.l.b16 %v2400
        %v2472 = vunpack.c.l.b16 %v2401
        %v2473 = vunpack.c.l.b16 %v2402
        %v2474 = vunpack.c.l.b16 %v2403
        %v2475 = vunpack.c.l.b16 %v2404
        %v2476 = vunpack.c.l.b16 %v2405
        %v2477 = vunpack.c.l.b16 %v2406
        %v2478 = vunpack.c.l.b16 %v2407
        %v2479 = vunpack.c.l.b16 %v2408
        %v2480 = vunpack.c.l.b16 %v2409
        %v2481 = vpack.c.b16 %v2450, %v2449
        %v2482 = vpack.c.b16 %v2452, %v2451
        %v2483 = vpack.c.b16 %v2454, %v2453
        %v2484 = vpack.c.b16 %v2456, %v2455
        %v2485 = vpack.c.b16 %v2458, %v2457
        %v2486 = vpack.c.b16 %v2460, %v2459
        %v2487 = vpack.c.b16 %v2462, %v2461
        %v2488 = vpack.c.b16 %v2464, %v2463
        %v2489 = vpack.c.b16 %v2466, %v2465
        %v2490 = vpack.c.b16 %v2468, %v2467
        %v2491 = vpack.c.b16 %v2470, %v2469
        %v2492 = vpack.c.b16 %v2472, %v2471
        %v2493 = vpack.c.b16 %v2474, %v2473
        %v2494 = vpack.c.b16 %v2476, %v2475
        %v2495 = vpack.c.b16 %v2478, %v2477
        %v2496 = vpack.c.b16 %v2480, %v2479
        %2513 = vmatprep.subr.bf16.mxu0 0
        %2514 = vmatpush1.bf16.msra.mxu0 %v2488
        %2515 = vmatprep.subr.bf16.mxu0 0
        %2516 = vmatpush1.bf16.msra.mxu0 %v2487
        %2517 = vmatprep.subr.bf16.mxu0 0
        %2518 = vmatpush1.bf16.msra.mxu0 %v2486
        %2519 = vmatprep.subr.bf16.mxu0 0
        %2520 = vmatpush1.bf16.msra.mxu0 %v2485
        %2521 = vmatprep.subr.bf16.mxu0 0
        %2522 = vmatpush1.bf16.msra.mxu0 %v2484
        %2523 = vmatprep.subr.bf16.mxu0 0
        %2524 = vmatpush1.bf16.msra.mxu0 %v2483
        %2525 = vmatprep.subr.bf16.mxu0 0
        %2526 = vmatpush1.bf16.msra.mxu0 %v2482
        %2527 = vmatprep.subr.bf16.mxu0 0
        %2528 = vmatpush1.bf16.msra.mxu0 %v2481
        %2529 = vmatprep.subr.bf16.mxu0 0
        %2530 = vmatpush2.bf16.msra.mxu0 %v2496
        %2531 = vmatprep.subr.bf16.mxu0 0
        %2532 = vmatpush2.bf16.msra.mxu0 %v2495
        %2533 = vmatprep.subr.bf16.mxu0 0
        %2534 = vmatpush2.bf16.msra.mxu0 %v2494
        %2535 = vmatprep.subr.bf16.mxu0 0
        %2536 = vmatpush2.bf16.msra.mxu0 %v2493
        %2537 = vmatprep.subr.bf16.mxu0 0
        %2538 = vmatpush2.bf16.msra.mxu0 %v2492
        %2539 = vmatprep.subr.bf16.mxu0 0
        %2540 = vmatpush2.bf16.msra.mxu0 %v2491
        %2541 = vmatprep.subr.bf16.mxu0 0
        %2542 = vmatpush2.bf16.msra.mxu0 %v2490
        %2543 = vmatprep.subr.bf16.mxu0 0
        %2544 = vmatpush2.bf16.msra.mxu0 %v2489
        %2545 = vmatprep.mubr.bf16.mxu0 %v2377
        %2546 = vmatmul.mubr.bf16.gmra.mxu0 %v2376
        %v2547 = vpop.f32.mrf.mxu0
        %v2548 = vadd.f32 %v2415, %v2547
        %v2549 = vpop.f32.mrf.mxu0
        %v2550 = vpop.f32.mrf.mxu0
        %v2551 = vpop.f32.mrf.mxu0
        %2552 = vdwg.mxu0
        %v2553 = vadd.f32 %v2214, %v2548
        %v2554 = vld [vmem:[%s16] sm:$0x1]
        %v2555 = vld [vmem:[%s17] sm:$0x1]
        %2556 = vadd.xlane.f32.xlu0 %v2553
        %v2557 = vpop.xlane.xlu0 %2556
        %v2558 = vmul.f32 %v2557, %v2191
        %v2559 = vsub.f32 %v2553, %v2558
        %v2560 = vmul.f32 %v2559, %v2559
        %2561 = vadd.xlane.f32.xlu0 %v2560
        %v2562 = vpop.xlane.xlu0 %2561
        %v2563 = vmul.f32 %v2562, %v2191
        %v2564 = vadd.f32 %v2563, 1e-12
        %v2565 = vrsqrt.pop %v2564
        %v2566 = vmul.f32 %v2559, %v2565
        %v2568 = vlaneseq
        %v2569 = vshrl.u32 %v2568, 7
        %v2570 = vsub.s32 0, %v2569
        %v2571 = vrot.slane %v2554, %v2570
        %v2573 = vmul.f32 %v2566, %v2571
        %v2575 = vlaneseq
        %v2576 = vshrl.u32 %v2575, 7
        %v2577 = vsub.s32 0, %v2576
        %v2578 = vrot.slane %v2555, %v2577
        %v2580 = vadd.f32 %v2573, %v2578
        %2581 = vst [vmem:[%s591] sm:$0xff] %v2580
        %s2582 = sand.u32 %s442, 1
        %s2583 = scalar_lea.sflag [#allocation3], %s2582
        %s2584 = sand.u32 %s442, 1
        %s2585 = smul.addr %s2584, 8
        %s2586 = scalar_lea.vmem [#allocation2], %s2585
        // Predicated region
        $region93: #{bert_forward.3} parent=91 // pred_check
          %p2587 = pneg %p452
        $region94: #{bert_forward.3} parent=91 // pred_check_branch
          %2589 = sbr.rel (%p2587) target = $region96
        $region95: #{bert_forward.3} parent=91 // pred_region
          %s2591 = ssub.s32 128, 128
          %2592 = vsyncadd %s2583, %s2591
          %s2593 = sadd.s32 %s37, %s36
          %s2594 = smul.addr %s2593, 128
          %s2595 = scalar_lea.hbm %s18, %s2594
          %s2597 = sshll.u32 %s2586, 4
          %s2598 = int_to_ptr.vmem [resolvable:$true] %s2597
          %2600 = dma.vmem_to_hbm [thread:$0]  %s2598, 128, %s2595, %s2583
        $region96: #{bert_forward.3} parent=91 // pred_fallthru
          _
      $region92: #{bert_forward.3} parent=5 // pred_fallthru
        _
      %p2601 = scmp.le.s32.totalorder 2, %s27
      // Predicated region
      $region97: #{bert_forward.3} parent=5 // pred_check
        %p2602 = pneg %p2601
      $region98: #{bert_forward.3} parent=5 // pred_check_branch
        %2604 = sbr.rel (%p2602) target = $region100
      $region99: #{bert_forward.3} parent=5 // pred_region
        %s2605 = ssub.s32 %s27, 2
        // Predicated region
        $region101: #{bert_forward.3} parent=99 // pred_check
          %p2606 = pneg %p458
        $region102: #{bert_forward.3} parent=99 // pred_check_branch
          %2608 = sbr.rel (%p2606) target = $region104
        $region103: #{bert_forward.3} parent=99 // pred_region
          %s2609 = sand.u32 %s443, 1
          %s2610 = scalar_lea.sflag [#allocation3], %s2609
          %s2611 = sand.u32 %s443, 1
          %s2612 = smul.addr %s2611, 8
          %s2613 = scalar_lea.vmem [#allocation2], %s2612
          %2614 = dma.done %s2610, 128
        $region104: #{bert_forward.3} parent=99 // pred_fallthru
          _
      $region100: #{bert_forward.3} parent=5 // pred_fallthru
        _
    $region6: #{bert_forward.3} parent=1 // loop_footer
      %s31 = sadd.s32 1, %s27
    $region7: #{bert_forward.3} parent=1 // loop_footer_branch
      %26 = sbr.rel target = $region3
    $region8: #{bert_forward.3} parent=1 // loop_exit
      _
    %2615 = vsyncpa [#allocation3], 1
    %s2616 = scalar_lea.sflag [#allocation3], 1
    %2617 = vsyncpa %s2616, 1

// kernel: bert_forward.2
$region0: #{bert_forward.2}
  #allocation0 [shape = 'u32[]', space=smem, size = 0x4, offset = 0x4, fixed_abs, tag = 'smem constant byte address 0x4 - core index']
  #allocation1 [shape = 'u32[144,128]{1,0:T(1,128)}', space=vmem, size = 0x12000, scoped, tag = 'internal scratch']
  %s0 = inlined_call_operand.vmem [shape: f32[2,8,128], index: 0, kind: input, shape index: {}]
  %s1 = inlined_call_operand.vmem [shape: f32[2,1,8], index: 1, kind: input, shape index: {}]
  %s2 = inlined_call_operand.vmem [shape: bf16[128,128], index: 2, kind: input, shape index: {}]
  %s3 = inlined_call_operand.vmem [shape: f32[1,128], index: 3, kind: input, shape index: {}]
  %s4 = inlined_call_operand.vmem [shape: bf16[128,128], index: 4, kind: input, shape index: {}]
  %s5 = inlined_call_operand.vmem [shape: f32[1,128], index: 5, kind: input, shape index: {}]
  %s6 = inlined_call_operand.vmem [shape: bf16[128,128], index: 6, kind: input, shape index: {}]
  %s7 = inlined_call_operand.vmem [shape: f32[1,128], index: 7, kind: input, shape index: {}]
  %s8 = inlined_call_operand.vmem [shape: bf16[128,128], index: 8, kind: input, shape index: {}]
  %s9 = inlined_call_operand.vmem [shape: f32[1,128], index: 9, kind: input, shape index: {}]
  %s10 = inlined_call_operand.vmem [shape: f32[1,128], index: 10, kind: input, shape index: {}]
  %s11 = inlined_call_operand.vmem [shape: f32[1,128], index: 11, kind: input, shape index: {}]
  %s12 = inlined_call_operand.vmem [shape: bf16[128,256], index: 12, kind: input, shape index: {}]
  %s13 = inlined_call_operand.vmem [shape: f32[1,256], index: 13, kind: input, shape index: {}]
  %s14 = inlined_call_operand.vmem [shape: bf16[256,128], index: 14, kind: input, shape index: {}]
  %s15 = inlined_call_operand.vmem [shape: f32[1,128], index: 15, kind: input, shape index: {}]
  %s16 = inlined_call_operand.vmem [shape: f32[1,128], index: 16, kind: input, shape index: {}]
  %s17 = inlined_call_operand.vmem [shape: f32[1,128], index: 17, kind: input, shape index: {}]
  %s18 = inlined_call_operand.vmem [shape: f32[2,8,128], index: 18, kind: output, shape index: {}]
  %s19 = sld [smem:[#allocation0]]
  $region105: #{bert_forward.2} parent=0
    _
  %s21 = ssub.s32 1, %s19
  %s22 = scalar_select 0, %s21, %s19
  loop: start=0, step=1, limit=4
  $region2: #{bert_forward.2} parent=0 // loop_pre_header
    _
  $region3: #{bert_forward.2} parent=0 // loop_header
    %s24 = sphi 0, %s28
    %p25 = scmp.ge.s32.totalorder %s24, 4
    %s31 = sphi 0, %s43
    %s32 = sphi 0, %s39
    %s33 = sphi 0, %s31
    %s34 = sphi 0, %s32
    %s35 = sphi 0, %s33
    %s36 = sphi 0, %s34
    %s46 = sphi 0, %s48
    %s49 = sphi 0, %s46
    %s50 = sphi 0, %s49
    %s66 = sphi 0, %s50
    %s72 = sphi 0, %s74
    %s75 = sphi 0, %s72
    %s76 = sphi 0, %s75
    %s92 = sphi 0, %s76
    %s96 = sphi 0, %s96
    %s98 = sphi 0, %s96
    %s99 = sphi 0, %s98
    %s113 = sphi 0, %s99
    %s117 = sphi 0, %s117
    %s119 = sphi 0, %s117
    %s120 = sphi 0, %s119
    %s134 = sphi 0, %s120
    %s138 = sphi 0, %s138
    %s140 = sphi 0, %s138
    %s141 = sphi 0, %s140
    %s155 = sphi 0, %s141
    %s159 = sphi 0, %s159
    %s161 = sphi 0, %s159
    %s162 = sphi 0, %s161
    %s176 = sphi 0, %s162
    %s180 = sphi 0, %s180
    %s182 = sphi 0, %s180
    %s183 = sphi 0, %s182
    %s197 = sphi 0, %s183
    %s201 = sphi 0, %s201
    %s203 = sphi 0, %s201
    %s204 = sphi 0, %s203
    %s218 = sphi 0, %s204
    %s222 = sphi 0, %s222
    %s224 = sphi 0, %s222
    %s225 = sphi 0, %s224
    %s239 = sphi 0, %s225
    %s243 = sphi 0, %s243
    %s245 = sphi 0, %s243
    %s246 = sphi 0, %s245
    %s260 = sphi 0, %s246
    %s264 = sphi 0, %s264
    %s266 = sphi 0, %s264
    %s267 = sphi 0, %s266
    %s281 = sphi 0, %s267
    %s285 = sphi 0, %s285
    %s287 = sphi 0, %s285
    %s288 = sphi 0, %s287
    %s302 = sphi 0, %s288
    %s306 = sphi 0, %s306
    %s308 = sphi 0, %s306
    %s309 = sphi 0, %s308
    %s323 = sphi 0, %s309
    %s327 = sphi 0, %s327
    %s329 = sphi 0, %s327
    %s330 = sphi 0, %s329
    %s344 = sphi 0, %s330
    %s348 = sphi 0, %s348
    %s350 = sphi 0, %s348
    %s351 = sphi 0, %s350
    %s365 = sphi 0, %s351
    %s369 = sphi 0, %s369
    %s371 = sphi 0, %s369
    %s372 = sphi 0, %s371
    %s386 = sphi 0, %s372
    %s390 = sphi 0, %s390
    %s392 = sphi 0, %s390
    %s393 = sphi 0, %s392
    %s407 = sphi 0, %s393
    %s411 = sphi 0, %s411
    %s413 = sphi 0, %s411
    %s414 = sphi 0, %s413
    %s428 = sphi 0, %s414
    %s436 = sphi 0, %s438
    %s439 = sphi 0, %s436
    %s440 = sphi 0, %s439
    %s456 = sphi 0, %s440
  $region4: #{bert_forward.2} parent=0 // loop_header_branch
    %27 = sbr.rel (%p25) target = $region8
  $region5: #{bert_forward.2} parent=0 // loop_body
    %s29 = ssub.s32 %s24, 1
    %s30 = ssub.s32 %s24, 2
    %s37 = sadd.s32 1, %s32
    %p38 = scmp.ge.s32.totalorder %s37, 1
    %s39 = scalar_select %p38, 0, %s37
    %s40 = sadd.s32 1, %s31
    %s41 = scalar_select %p38, %s40, %s31
    %p42 = scmp.ge.s32.totalorder %s41, 2
    %s43 = scalar_select %p42, 0, %s41
    %s44 = ssub.s32 %s31, %s43
    %p45 = scmp.eq.s32.totalorder %s44, 0
    %s47 = sadd.s32 %s46, 1
    %s48 = scalar_select %p45, %s46, %s47
    %p51 = pneg %p45
    %p52 = scmp.eq.s32.totalorder %s24, 1
    %p53 = por %p51, %p52
    %p54 = scmp.ne.s32.totalorder %s46, %s49
    %p55 = scmp.eq.s32.totalorder %s24, 0
    %p56 = por %p54, %p55
    %p57 = scmp.ne.s32.totalorder %s46, %s49
    %p58 = scmp.eq.s32.totalorder %s29, 1
    %p59 = por %p57, %p58
    %p60 = scmp.ne.s32.totalorder %s49, %s50
    %p61 = scmp.eq.s32.totalorder %s29, 0
    %p62 = por %p60, %p61
    %p63 = scmp.ne.s32.totalorder %s49, %s50
    %p64 = scmp.eq.s32.totalorder %s30, 1
    %p65 = por %p63, %p64
    %p67 = scmp.ne.s32.totalorder %s50, %s66
    %p68 = scmp.eq.s32.totalorder %s30, 0
    %p69 = por %p67, %p68
    %s70 = ssub.s32 %s31, %s43
    %p71 = scmp.eq.s32.totalorder %s70, 0
    %s73 = sadd.s32 %s72, 1
    %s74 = scalar_select %p71, %s72, %s73
    %p77 = pneg %p71
    %p78 = scmp.eq.s32.totalorder %s24, 1
    %p79 = por %p77, %p78
    %p80 = scmp.ne.s32.totalorder %s72, %s75
    %p81 = scmp.eq.s32.totalorder %s24, 0
    %p82 = por %p80, %p81
    %p83 = scmp.ne.s32.totalorder %s72, %s75
    %p84 = scmp.eq.s32.totalorder %s29, 1
    %p85 = por %p83, %p84
    %p86 = scmp.ne.s32.totalorder %s75, %s76
    %p87 = scmp.eq.s32.totalorder %s29, 0
    %p88 = por %p86, %p87
    %p89 = scmp.ne.s32.totalorder %s75, %s76
    %p90 = scmp.eq.s32.totalorder %s30, 1
    %p91 = por %p89, %p90
    %p93 = scmp.ne.s32.totalorder %s76, %s92
    %p94 = scmp.eq.s32.totalorder %s30, 0
    %p95 = por %p93, %p94
    %s97 = sadd.s32 %s96, 1
    %p100 = scmp.eq.s32.totalorder %s24, 1
    %p101 = scmp.ne.s32.totalorder %s96, %s98
    %p102 = scmp.eq.s32.totalorder %s24, 0
    %p103 = por %p101, %p102
    %p104 = scmp.ne.s32.totalorder %s96, %s98
    %p105 = scmp.eq.s32.totalorder %s29, 1
    %p106 = por %p104, %p105
    %p107 = scmp.ne.s32.totalorder %s98, %s99
    %p108 = scmp.eq.s32.totalorder %s29, 0
    %p109 = por %p107, %p108
    %p110 = scmp.ne.s32.totalorder %s98, %s99
    %p111 = scmp.eq.s32.totalorder %s30, 1
    %p112 = por %p110, %p111
    %p114 = scmp.ne.s32.totalorder %s99, %s113
    %p115 = scmp.eq.s32.totalorder %s30, 0
    %p116 = por %p114, %p115
    %s118 = sadd.s32 %s117, 1
    %p121 = scmp.eq.s32.totalorder %s24, 1
    %p122 = scmp.ne.s32.totalorder %s117, %s119
    %p123 = scmp.eq.s32.totalorder %s24, 0
    %p124 = por %p122, %p123
    %p125 = scmp.ne.s32.totalorder %s117, %s119
    %p126 = scmp.eq.s32.totalorder %s29, 1
    %p127 = por %p125, %p126
    %p128 = scmp.ne.s32.totalorder %s119, %s120
    %p129 = scmp.eq.s32.totalorder %s29, 0
    %p130 = por %p128, %p129
    %p131 = scmp.ne.s32.totalorder %s119, %s120
    %p132 = scmp.eq.s32.totalorder %s30, 1
    %p133 = por %p131, %p132
    %p135 = scmp.ne.s32.totalorder %s120, %s134
    %p136 = scmp.eq.s32.totalorder %s30, 0
    %p137 = por %p135, %p136
    %s139 = sadd.s32 %s138, 1
    %p142 = scmp.eq.s32.totalorder %s24, 1
    %p143 = scmp.ne.s32.totalorder %s138, %s140
    %p144 = scmp.eq.s32.totalorder %s24, 0
    %p145 = por %p143, %p144
    %p146 = scmp.ne.s32.totalorder %s138, %s140
    %p147 = scmp.eq.s32.totalorder %s29, 1
    %p148 = por %p146, %p147
    %p149 = scmp.ne.s32.totalorder %s140, %s141
    %p150 = scmp.eq.s32.totalorder %s29, 0
    %p151 = por %p149, %p150
    %p152 = scmp.ne.s32.totalorder %s140, %s141
    %p153 = scmp.eq.s32.totalorder %s30, 1
    %p154 = por %p152, %p153
    %p156 = scmp.ne.s32.totalorder %s141, %s155
    %p157 = scmp.eq.s32.totalorder %s30, 0
    %p158 = por %p156, %p157
    %s160 = sadd.s32 %s159, 1
    %p163 = scmp.eq.s32.totalorder %s24, 1
    %p164 = scmp.ne.s32.totalorder %s159, %s161
    %p165 = scmp.eq.s32.totalorder %s24, 0
    %p166 = por %p164, %p165
    %p167 = scmp.ne.s32.totalorder %s159, %s161
    %p168 = scmp.eq.s32.totalorder %s29, 1
    %p169 = por %p167, %p168
    %p170 = scmp.ne.s32.totalorder %s161, %s162
    %p171 = scmp.eq.s32.totalorder %s29, 0
    %p172 = por %p170, %p171
    %p173 = scmp.ne.s32.totalorder %s161, %s162
    %p174 = scmp.eq.s32.totalorder %s30, 1
    %p175 = por %p173, %p174
    %p177 = scmp.ne.s32.totalorder %s162, %s176
    %p178 = scmp.eq.s32.totalorder %s30, 0
    %p179 = por %p177, %p178
    %s181 = sadd.s32 %s180, 1
    %p184 = scmp.eq.s32.totalorder %s24, 1
    %p185 = scmp.ne.s32.totalorder %s180, %s182
    %p186 = scmp.eq.s32.totalorder %s24, 0
    %p187 = por %p185, %p186
    %p188 = scmp.ne.s32.totalorder %s180, %s182
    %p189 = scmp.eq.s32.totalorder %s29, 1
    %p190 = por %p188, %p189
    %p191 = scmp.ne.s32.totalorder %s182, %s183
    %p192 = scmp.eq.s32.totalorder %s29, 0
    %p193 = por %p191, %p192
    %p194 = scmp.ne.s32.totalorder %s182, %s183
    %p195 = scmp.eq.s32.totalorder %s30, 1
    %p196 = por %p194, %p195
    %p198 = scmp.ne.s32.totalorder %s183, %s197
    %p199 = scmp.eq.s32.totalorder %s30, 0
    %p200 = por %p198, %p199
    %s202 = sadd.s32 %s201, 1
    %p205 = scmp.eq.s32.totalorder %s24, 1
    %p206 = scmp.ne.s32.totalorder %s201, %s203
    %p207 = scmp.eq.s32.totalorder %s24, 0
    %p208 = por %p206, %p207
    %p209 = scmp.ne.s32.totalorder %s201, %s203
    %p210 = scmp.eq.s32.totalorder %s29, 1
    %p211 = por %p209, %p210
    %p212 = scmp.ne.s32.totalorder %s203, %s204
    %p213 = scmp.eq.s32.totalorder %s29, 0
    %p214 = por %p212, %p213
    %p215 = scmp.ne.s32.totalorder %s203, %s204
    %p216 = scmp.eq.s32.totalorder %s30, 1
    %p217 = por %p215, %p216
    %p219 = scmp.ne.s32.totalorder %s204, %s218
    %p220 = scmp.eq.s32.totalorder %s30, 0
    %p221 = por %p219, %p220
    %s223 = sadd.s32 %s222, 1
    %p226 = scmp.eq.s32.totalorder %s24, 1
    %p227 = scmp.ne.s32.totalorder %s222, %s224
    %p228 = scmp.eq.s32.totalorder %s24, 0
    %p229 = por %p227, %p228
    %p230 = scmp.ne.s32.totalorder %s222, %s224
    %p231 = scmp.eq.s32.totalorder %s29, 1
    %p232 = por %p230, %p231
    %p233 = scmp.ne.s32.totalorder %s224, %s225
    %p234 = scmp.eq.s32.totalorder %s29, 0
    %p235 = por %p233, %p234
    %p236 = scmp.ne.s32.totalorder %s224, %s225
    %p237 = scmp.eq.s32.totalorder %s30, 1
    %p238 = por %p236, %p237
    %p240 = scmp.ne.s32.totalorder %s225, %s239
    %p241 = scmp.eq.s32.totalorder %s30, 0
    %p242 = por %p240, %p241
    %s244 = sadd.s32 %s243, 1
    %p247 = scmp.eq.s32.totalorder %s24, 1
    %p248 = scmp.ne.s32.totalorder %s243, %s245
    %p249 = scmp.eq.s32.totalorder %s24, 0
    %p250 = por %p248, %p249
    %p251 = scmp.ne.s32.totalorder %s243, %s245
    %p252 = scmp.eq.s32.totalorder %s29, 1
    %p253 = por %p251, %p252
    %p254 = scmp.ne.s32.totalorder %s245, %s246
    %p255 = scmp.eq.s32.totalorder %s29, 0
    %p256 = por %p254, %p255
    %p257 = scmp.ne.s32.totalorder %s245, %s246
    %p258 = scmp.eq.s32.totalorder %s30, 1
    %p259 = por %p257, %p258
    %p261 = scmp.ne.s32.totalorder %s246, %s260
    %p262 = scmp.eq.s32.totalorder %s30, 0
    %p263 = por %p261, %p262
    %s265 = sadd.s32 %s264, 1
    %p268 = scmp.eq.s32.totalorder %s24, 1
    %p269 = scmp.ne.s32.totalorder %s264, %s266
    %p270 = scmp.eq.s32.totalorder %s24, 0
    %p271 = por %p269, %p270
    %p272 = scmp.ne.s32.totalorder %s264, %s266
    %p273 = scmp.eq.s32.totalorder %s29, 1
    %p274 = por %p272, %p273
    %p275 = scmp.ne.s32.totalorder %s266, %s267
    %p276 = scmp.eq.s32.totalorder %s29, 0
    %p277 = por %p275, %p276
    %p278 = scmp.ne.s32.totalorder %s266, %s267
    %p279 = scmp.eq.s32.totalorder %s30, 1
    %p280 = por %p278, %p279
    %p282 = scmp.ne.s32.totalorder %s267, %s281
    %p283 = scmp.eq.s32.totalorder %s30, 0
    %p284 = por %p282, %p283
    %s286 = sadd.s32 %s285, 1
    %p289 = scmp.eq.s32.totalorder %s24, 1
    %p290 = scmp.ne.s32.totalorder %s285, %s287
    %p291 = scmp.eq.s32.totalorder %s24, 0
    %p292 = por %p290, %p291
    %p293 = scmp.ne.s32.totalorder %s285, %s287
    %p294 = scmp.eq.s32.totalorder %s29, 1
    %p295 = por %p293, %p294
    %p296 = scmp.ne.s32.totalorder %s287, %s288
    %p297 = scmp.eq.s32.totalorder %s29, 0
    %p298 = por %p296, %p297
    %p299 = scmp.ne.s32.totalorder %s287, %s288
    %p300 = scmp.eq.s32.totalorder %s30, 1
    %p301 = por %p299, %p300
    %p303 = scmp.ne.s32.totalorder %s288, %s302
    %p304 = scmp.eq.s32.totalorder %s30, 0
    %p305 = por %p303, %p304
    %s307 = sadd.s32 %s306, 1
    %p310 = scmp.eq.s32.totalorder %s24, 1
    %p311 = scmp.ne.s32.totalorder %s306, %s308
    %p312 = scmp.eq.s32.totalorder %s24, 0
    %p313 = por %p311, %p312
    %p314 = scmp.ne.s32.totalorder %s306, %s308
    %p315 = scmp.eq.s32.totalorder %s29, 1
    %p316 = por %p314, %p315
    %p317 = scmp.ne.s32.totalorder %s308, %s309
    %p318 = scmp.eq.s32.totalorder %s29, 0
    %p319 = por %p317, %p318
    %p320 = scmp.ne.s32.totalorder %s308, %s309
    %p321 = scmp.eq.s32.totalorder %s30, 1
    %p322 = por %p320, %p321
    %p324 = scmp.ne.s32.totalorder %s309, %s323
    %p325 = scmp.eq.s32.totalorder %s30, 0
    %p326 = por %p324, %p325
    %s328 = sadd.s32 %s327, 1
    %p331 = scmp.eq.s32.totalorder %s24, 1
    %p332 = scmp.ne.s32.totalorder %s327, %s329
    %p333 = scmp.eq.s32.totalorder %s24, 0
    %p334 = por %p332, %p333
    %p335 = scmp.ne.s32.totalorder %s327, %s329
    %p336 = scmp.eq.s32.totalorder %s29, 1
    %p337 = por %p335, %p336
    %p338 = scmp.ne.s32.totalorder %s329, %s330
    %p339 = scmp.eq.s32.totalorder %s29, 0
    %p340 = por %p338, %p339
    %p341 = scmp.ne.s32.totalorder %s329, %s330
    %p342 = scmp.eq.s32.totalorder %s30, 1
    %p343 = por %p341, %p342
    %p345 = scmp.ne.s32.totalorder %s330, %s344
    %p346 = scmp.eq.s32.totalorder %s30, 0
    %p347 = por %p345, %p346
    %s349 = sadd.s32 %s348, 1
    %p352 = scmp.eq.s32.totalorder %s24, 1
    %p353 = scmp.ne.s32.totalorder %s348, %s350
    %p354 = scmp.eq.s32.totalorder %s24, 0
    %p355 = por %p353, %p354
    %p356 = scmp.ne.s32.totalorder %s348, %s350
    %p357 = scmp.eq.s32.totalorder %s29, 1
    %p358 = por %p356, %p357
    %p359 = scmp.ne.s32.totalorder %s350, %s351
    %p360 = scmp.eq.s32.totalorder %s29, 0
    %p361 = por %p359, %p360
    %p362 = scmp.ne.s32.totalorder %s350, %s351
    %p363 = scmp.eq.s32.totalorder %s30, 1
    %p364 = por %p362, %p363
    %p366 = scmp.ne.s32.totalorder %s351, %s365
    %p367 = scmp.eq.s32.totalorder %s30, 0
    %p368 = por %p366, %p367
    %s370 = sadd.s32 %s369, 1
    %p373 = scmp.eq.s32.totalorder %s24, 1
    %p374 = scmp.ne.s32.totalorder %s369, %s371
    %p375 = scmp.eq.s32.totalorder %s24, 0
    %p376 = por %p374, %p375
    %p377 = scmp.ne.s32.totalorder %s369, %s371
    %p378 = scmp.eq.s32.totalorder %s29, 1
    %p379 = por %p377, %p378
    %p380 = scmp.ne.s32.totalorder %s371, %s372
    %p381 = scmp.eq.s32.totalorder %s29, 0
    %p382 = por %p380, %p381
    %p383 = scmp.ne.s32.totalorder %s371, %s372
    %p384 = scmp.eq.s32.totalorder %s30, 1
    %p385 = por %p383, %p384
    %p387 = scmp.ne.s32.totalorder %s372, %s386
    %p388 = scmp.eq.s32.totalorder %s30, 0
    %p389 = por %p387, %p388
    %s391 = sadd.s32 %s390, 1
    %p394 = scmp.eq.s32.totalorder %s24, 1
    %p395 = scmp.ne.s32.totalorder %s390, %s392
    %p396 = scmp.eq.s32.totalorder %s24, 0
    %p397 = por %p395, %p396
    %p398 = scmp.ne.s32.totalorder %s390, %s392
    %p399 = scmp.eq.s32.totalorder %s29, 1
    %p400 = por %p398, %p399
    %p401 = scmp.ne.s32.totalorder %s392, %s393
    %p402 = scmp.eq.s32.totalorder %s29, 0
    %p403 = por %p401, %p402
    %p404 = scmp.ne.s32.totalorder %s392, %s393
    %p405 = scmp.eq.s32.totalorder %s30, 1
    %p406 = por %p404, %p405
    %p408 = scmp.ne.s32.totalorder %s393, %s407
    %p409 = scmp.eq.s32.totalorder %s30, 0
    %p410 = por %p408, %p409
    %s412 = sadd.s32 %s411, 1
    %p415 = scmp.eq.s32.totalorder %s24, 1
    %p416 = scmp.ne.s32.totalorder %s411, %s413
    %p417 = scmp.eq.s32.totalorder %s24, 0
    %p418 = por %p416, %p417
    %p419 = scmp.ne.s32.totalorder %s411, %s413
    %p420 = scmp.eq.s32.totalorder %s29, 1
    %p421 = por %p419, %p420
    %p422 = scmp.ne.s32.totalorder %s413, %s414
    %p423 = scmp.eq.s32.totalorder %s29, 0
    %p424 = por %p422, %p423
    %p425 = scmp.ne.s32.totalorder %s413, %s414
    %p426 = scmp.eq.s32.totalorder %s30, 1
    %p427 = por %p425, %p426
    %p429 = scmp.ne.s32.totalorder %s414, %s428
    %p430 = scmp.eq.s32.totalorder %s30, 0
    %p431 = por %p429, %p430
    %s432 = ssub.s32 %s31, %s43
    %s433 = ssub.s32 %s32, %s39
    %s434 = sor.u32 %s432, %s433
    %p435 = scmp.eq.s32.totalorder %s434, 0
    %s437 = sadd.s32 %s436, 1
    %s438 = scalar_select %p435, %s436, %s437
    %p441 = pneg %p435
    %p442 = scmp.eq.s32.totalorder %s24, 1
    %p443 = por %p441, %p442
    %p444 = scmp.ne.s32.totalorder %s436, %s439
    %p445 = scmp.eq.s32.totalorder %s24, 0
    %p446 = por %p444, %p445
    %p447 = scmp.ne.s32.totalorder %s436, %s439
    %p448 = scmp.eq.s32.totalorder %s29, 1
    %p449 = por %p447, %p448
    %p450 = scmp.ne.s32.totalorder %s439, %s440
    %p451 = scmp.eq.s32.totalorder %s29, 0
    %p452 = por %p450, %p451
    %p453 = scmp.ne.s32.totalorder %s439, %s440
    %p454 = scmp.eq.s32.totalorder %s30, 1
    %p455 = por %p453, %p454
    %p457 = scmp.ne.s32.totalorder %s440, %s456
    %p458 = scmp.eq.s32.totalorder %s30, 0
    %p459 = por %p457, %p458
    %p460 = scmp.le.s32.totalorder 1, %s24
    %p461 = scmp.lt.s32.totalorder %s24, 3
    %p462 = pnand %p460, %p461
    %p463 = pneg %p462
    // Predicated region
    $region9: #{bert_forward.2} parent=5 // pred_check
      _
    $region10: #{bert_forward.2} parent=5 // pred_check_branch
      %465 = sbr.rel (%p462) target = $region12
    $region11: #{bert_forward.2} parent=5 // pred_region
      %s466 = ssub.s32 %s24, 1
      // Predicated region
      $region13: #{bert_forward.2} parent=11 // pred_check
        %p467 = pneg %p109
      $region14: #{bert_forward.2} parent=11 // pred_check_branch
        %469 = sbr.rel (%p467) target = $region16
      $region15: #{bert_forward.2} parent=11 // pred_region
        _
      $region16: #{bert_forward.2} parent=11 // pred_fallthru
        _
      // Predicated region
      $region17: #{bert_forward.2} parent=11 // pred_check
        %p470 = pneg %p130
      $region18: #{bert_forward.2} parent=11 // pred_check_branch
        %472 = sbr.rel (%p470) target = $region20
      $region19: #{bert_forward.2} parent=11 // pred_region
        _
      $region20: #{bert_forward.2} parent=11 // pred_fallthru
        _
      // Predicated region
      $region21: #{bert_forward.2} parent=11 // pred_check
        %p473 = pneg %p151
      $region22: #{bert_forward.2} parent=11 // pred_check_branch
        %475 = sbr.rel (%p473) target = $region24
      $region23: #{bert_forward.2} parent=11 // pred_region
        _
      $region24: #{bert_forward.2} parent=11 // pred_fallthru
        _
      // Predicated region
      $region25: #{bert_forward.2} parent=11 // pred_check
        %p476 = pneg %p172
      $region26: #{bert_forward.2} parent=11 // pred_check_branch
        %478 = sbr.rel (%p476) target = $region28
      $region27: #{bert_forward.2} parent=11 // pred_region
        _
      $region28: #{bert_forward.2} parent=11 // pred_fallthru
        _
      // Predicated region
      $region29: #{bert_forward.2} parent=11 // pred_check
        %p479 = pneg %p193
      $region30: #{bert_forward.2} parent=11 // pred_check_branch
        %481 = sbr.rel (%p479) target = $region32
      $region31: #{bert_forward.2} parent=11 // pred_region
        _
      $region32: #{bert_forward.2} parent=11 // pred_fallthru
        _
      // Predicated region
      $region33: #{bert_forward.2} parent=11 // pred_check
        %p482 = pneg %p214
      $region34: #{bert_forward.2} parent=11 // pred_check_branch
        %484 = sbr.rel (%p482) target = $region36
      $region35: #{bert_forward.2} parent=11 // pred_region
        _
      $region36: #{bert_forward.2} parent=11 // pred_fallthru
        _
      // Predicated region
      $region37: #{bert_forward.2} parent=11 // pred_check
        %p485 = pneg %p235
      $region38: #{bert_forward.2} parent=11 // pred_check_branch
        %487 = sbr.rel (%p485) target = $region40
      $region39: #{bert_forward.2} parent=11 // pred_region
        _
      $region40: #{bert_forward.2} parent=11 // pred_fallthru
        _
      // Predicated region
      $region41: #{bert_forward.2} parent=11 // pred_check
        %p488 = pneg %p256
      $region42: #{bert_forward.2} parent=11 // pred_check_branch
        %490 = sbr.rel (%p488) target = $region44
      $region43: #{bert_forward.2} parent=11 // pred_region
        _
      $region44: #{bert_forward.2} parent=11 // pred_fallthru
        _
      // Predicated region
      $region45: #{bert_forward.2} parent=11 // pred_check
        %p491 = pneg %p277
      $region46: #{bert_forward.2} parent=11 // pred_check_branch
        %493 = sbr.rel (%p491) target = $region48
      $region47: #{bert_forward.2} parent=11 // pred_region
        _
      $region48: #{bert_forward.2} parent=11 // pred_fallthru
        _
      // Predicated region
      $region49: #{bert_forward.2} parent=11 // pred_check
        %p494 = pneg %p298
      $region50: #{bert_forward.2} parent=11 // pred_check_branch
        %496 = sbr.rel (%p494) target = $region52
      $region51: #{bert_forward.2} parent=11 // pred_region
        _
      $region52: #{bert_forward.2} parent=11 // pred_fallthru
        _
      // Predicated region
      $region53: #{bert_forward.2} parent=11 // pred_check
        %p497 = pneg %p319
      $region54: #{bert_forward.2} parent=11 // pred_check_branch
        %499 = sbr.rel (%p497) target = $region56
      $region55: #{bert_forward.2} parent=11 // pred_region
        _
      $region56: #{bert_forward.2} parent=11 // pred_fallthru
        _
      // Predicated region
      $region57: #{bert_forward.2} parent=11 // pred_check
        %p500 = pneg %p340
      $region58: #{bert_forward.2} parent=11 // pred_check_branch
        %502 = sbr.rel (%p500) target = $region60
      $region59: #{bert_forward.2} parent=11 // pred_region
        _
      $region60: #{bert_forward.2} parent=11 // pred_fallthru
        _
      // Predicated region
      $region61: #{bert_forward.2} parent=11 // pred_check
        %p503 = pneg %p361
      $region62: #{bert_forward.2} parent=11 // pred_check_branch
        %505 = sbr.rel (%p503) target = $region64
      $region63: #{bert_forward.2} parent=11 // pred_region
        _
      $region64: #{bert_forward.2} parent=11 // pred_fallthru
        _
      // Predicated region
      $region65: #{bert_forward.2} parent=11 // pred_check
        %p506 = pneg %p382
      $region66: #{bert_forward.2} parent=11 // pred_check_branch
        %508 = sbr.rel (%p506) target = $region68
      $region67: #{bert_forward.2} parent=11 // pred_region
        _
      $region68: #{bert_forward.2} parent=11 // pred_fallthru
        _
      // Predicated region
      $region69: #{bert_forward.2} parent=11 // pred_check
        %p509 = pneg %p403
      $region70: #{bert_forward.2} parent=11 // pred_check_branch
        %511 = sbr.rel (%p509) target = $region72
      $region71: #{bert_forward.2} parent=11 // pred_region
        _
      $region72: #{bert_forward.2} parent=11 // pred_fallthru
        _
      // Predicated region
      $region73: #{bert_forward.2} parent=11 // pred_check
        %p512 = pneg %p424
      $region74: #{bert_forward.2} parent=11 // pred_check_branch
        %514 = sbr.rel (%p512) target = $region76
      $region75: #{bert_forward.2} parent=11 // pred_region
        _
      $region76: #{bert_forward.2} parent=11 // pred_fallthru
        _
    $region12: #{bert_forward.2} parent=5 // pred_fallthru
      _
    %p515 = scmp.lt.s32.totalorder %s24, 2
    // Predicated region
    $region77: #{bert_forward.2} parent=5 // pred_check
      %p516 = pneg %p515
    $region78: #{bert_forward.2} parent=5 // pred_check_branch
      %518 = sbr.rel (%p516) target = $region80
    $region79: #{bert_forward.2} parent=5 // pred_region
      // Predicated region
      $region81: #{bert_forward.2} parent=79 // pred_check
        %p519 = pneg %p56
      $region82: #{bert_forward.2} parent=79 // pred_check_branch
        %521 = sbr.rel (%p519) target = $region84
      $region83: #{bert_forward.2} parent=79 // pred_region
        %p522 = scmp.lt.s32.totalorder %s31, 1
        %s523 = scalar_select %p522, %s31, 1
        %s524 = smul.addr %s523, 8
        %s525 = scalar_lea.vmem %s0, %s524
      $region84: #{bert_forward.2} parent=79 // pred_fallthru
        _
      // Predicated region
      $region85: #{bert_forward.2} parent=79 // pred_check
        %p526 = pneg %p82
      $region86: #{bert_forward.2} parent=79 // pred_check_branch
        %528 = sbr.rel (%p526) target = $region88
      $region87: #{bert_forward.2} parent=79 // pred_region
        %p529 = scmp.lt.s32.totalorder %s31, 1
        %s530 = scalar_select %p529, %s31, 1
        %s531 = scalar_lea.vmem %s1, %s530
      $region88: #{bert_forward.2} parent=79 // pred_fallthru
        _
    $region80: #{bert_forward.2} parent=5 // pred_fallthru
      _
    %p532 = scmp.le.s32.totalorder 1, %s24
    %p533 = scmp.lt.s32.totalorder %s24, 3
    %p534 = pnand %p532, %p533
    %p535 = pneg %p534
    // Predicated region
    $region89: #{bert_forward.2} parent=5 // pred_check
      _
    $region90: #{bert_forward.2} parent=5 // pred_check_branch
      %537 = sbr.rel (%p534) target = $region92
    $region91: #{bert_forward.2} parent=5 // pred_region
      %s538 = ssub.s32 %s24, 1
      %p539 = scmp.lt.s32.totalorder %s33, 1
      %s540 = scalar_select %p539, %s33, 1
      %s541 = smul.addr %s540, 8
      %s542 = scalar_lea.vmem %s0, %s541
      %p543 = pneg %p62
      %p544 = pneg %p59
      %p545 = scmp.lt.s32.totalorder %s33, 1
      %s546 = scalar_select %p545, %s33, 1
      %s547 = scalar_lea.vmem %s1, %s546
      %p548 = pneg %p88
      %p549 = pneg %p85
      %p550 = pneg %p109
      %p551 = pneg %p106
      %p552 = pneg %p130
      %p553 = pneg %p127
      %p554 = pneg %p151
      %p555 = pneg %p148
      %p556 = pneg %p172
      %p557 = pneg %p169
      %p558 = pneg %p193
      %p559 = pneg %p190
      %p560 = pneg %p214
      %p561 = pneg %p211
      %p562 = pneg %p235
      %p563 = pneg %p232
      %p564 = pneg %p256
      %p565 = pneg %p253
      %p566 = pneg %p277
      %p567 = pneg %p274
      %p568 = pneg %p298
      %p569 = pneg %p295
      %p570 = pneg %p319
      %p571 = pneg %p316
      %p572 = pneg %p340
      %p573 = pneg %p337
      %p574 = pneg %p361
      %p575 = pneg %p358
      %p576 = pneg %p382
      %p577 = pneg %p379
      %p578 = pneg %p403
      %p579 = pneg %p400
      %p580 = pneg %p424
      %p581 = pneg %p421
      %p582 = pneg %p452
      %p583 = pneg %p449
      %p584 = scmp.lt.s32.totalorder %s33, 1
      %s585 = scalar_select %p584, %s33, 1
      %p586 = scmp.lt.s32.totalorder %s34, 0
      %s587 = scalar_select %p586, %s34, 0
      %s588 = sadd.s32 %s587, %s585
      %s589 = smul.addr %s588, 8
      %s590 = scalar_lea.vmem %s18, %s589
      %p591 = scmp.lt.s32.totalorder %s33, 1
      %s592 = scalar_select %p591, %s33, 1
      %s593 = smul.addr %s592, 8
      %s594 = scalar_lea.vmem %s0, %s593
      %p595 = scmp.lt.s32.totalorder %s33, 1
      %s596 = scalar_select %p595, %s33, 1
      %s597 = scalar_lea.vmem %s1, %s596
      %p598 = scmp.lt.s32.totalorder %s33, 1
      %s599 = scalar_select %p598, %s33, 1
      %p600 = scmp.lt.s32.totalorder %s34, 0
      %s601 = scalar_select %p600, %s34, 0
      %s602 = sadd.s32 %s601, %s599
      %s603 = smul.addr %s602, 8
      %s604 = scalar_lea.vmem %s18, %s603
      %s606 = smul.u32 %s34, 8
      %s607 = scalar_lea.vmem %s594, %s606
      %v608 = vld [vmem:[%s607] sm:$0xff]
      %v609 = vld [vmem:[%s594] sm:$0xff]
      %v610 = vld [vmem:[%s597] sm:$0x1]
      %v611 = vpack.c.bf16 %v608, %v608
      %v612 = vpack.c.bf16 %v609, %v609
      %v613 = vld [vmem:[%s2] sm:$0xf]
      %v614 = vld [vmem:[%s2 + $0x4] sm:$0xf]
      %v615 = vld [vmem:[%s2 + $0x8] sm:$0xf]
      %v616 = vld [vmem:[%s2 + $0xc] sm:$0xf]
      %v617 = vld [vmem:[%s2 + $0x10] sm:$0xf]
      %v618 = vld [vmem:[%s2 + $0x14] sm:$0xf]
      %v619 = vld [vmem:[%s2 + $0x18] sm:$0xf]
      %v620 = vld [vmem:[%s2 + $0x1c] sm:$0xf]
      %v621 = vld [vmem:[%s2 + $0x20] sm:$0xf]
      %v622 = vld [vmem:[%s2 + $0x24] sm:$0xf]
      %v623 = vld [vmem:[%s2 + $0x28] sm:$0xf]
      %v624 = vld [vmem:[%s2 + $0x2c] sm:$0xf]
      %v625 = vld [vmem:[%s2 + $0x30] sm:$0xf]
      %v626 = vld [vmem:[%s2 + $0x34] sm:$0xf]
      %v627 = vld [vmem:[%s2 + $0x38] sm:$0xf]
      %v628 = vld [vmem:[%s2 + $0x3c] sm:$0xf]
      %v629 = vld [vmem:[%s3] sm:$0x1]
      %v631 = vlaneseq
      %v632 = vshrl.u32 %v631, 7
      %v633 = vsub.s32 0, %v632
      %v634 = vrot.slane %v629, %v633
      %v652 = vunpack.c.l.b16 %v613
      %v653 = vunpack.c.l.b16 %v614
      %v654 = vunpack.c.l.b16 %v615
      %v655 = vunpack.c.l.b16 %v616
      %v656 = vunpack.c.l.b16 %v617
      %v657 = vunpack.c.l.b16 %v618
      %v658 = vunpack.c.l.b16 %v619
      %v659 = vunpack.c.l.b16 %v620
      %v660 = vunpack.c.l.b16 %v621
      %v661 = vunpack.c.l.b16 %v622
      %v662 = vunpack.c.l.b16 %v623
      %v663 = vunpack.c.l.b16 %v624
      %v664 = vunpack.c.l.b16 %v625
      %v665 = vunpack.c.l.b16 %v626
      %v666 = vunpack.c.l.b16 %v627
      %v667 = vunpack.c.l.b16 %v628
      %v668 = vpack.c.b16 %v653, %v652
      %v669 = vpack.c.b16 %v655, %v654
      %v670 = vpack.c.b16 %v657, %v656
      %v671 = vpack.c.b16 %v659, %v658
      %v672 = vpack.c.b16 %v661, %v660
      %v673 = vpack.c.b16 %v663, %v662
      %v674 = vpack.c.b16 %v665, %v664
      %v675 = vpack.c.b16 %v667, %v666
      %684 = vmatprep.subr.bf16.mxu0 0
      %685 = vmatpush1.bf16.msra.mxu0 %v675
      %686 = vmatprep.subr.bf16.mxu0 0
      %687 = vmatpush1.bf16.msra.mxu0 %v674
      %688 = vmatprep.subr.bf16.mxu0 0
      %689 = vmatpush1.bf16.msra.mxu0 %v673
      %690 = vmatprep.subr.bf16.mxu0 0
      %691 = vmatpush1.bf16.msra.mxu0 %v672
      %692 = vmatprep.subr.bf16.mxu0 0
      %693 = vmatpush1.bf16.msra.mxu0 %v671
      %694 = vmatprep.subr.bf16.mxu0 0
      %695 = vmatpush1.bf16.msra.mxu0 %v670
      %696 = vmatprep.subr.bf16.mxu0 0
      %697 = vmatpush1.bf16.msra.mxu0 %v669
      %698 = vmatprep.subr.bf16.mxu0 0
      %699 = vmatpush1.bf16.msra.mxu0 %v668
      %700 = vmatprep.subr.bf16.mxu0 0
      %701 = vmatpush2.bf16.msra.mxu0 0
      %702 = vmatprep.subr.bf16.mxu0 0
      %703 = vmatpush2.bf16.msra.mxu0 0
      %704 = vmatprep.subr.bf16.mxu0 0
      %705 = vmatpush2.bf16.msra.mxu0 0
      %706 = vmatprep.subr.bf16.mxu0 0
      %707 = vmatpush2.bf16.msra.mxu0 0
      %708 = vmatprep.subr.bf16.mxu0 0
      %709 = vmatpush2.bf16.msra.mxu0 0
      %710 = vmatprep.subr.bf16.mxu0 0
      %711 = vmatpush2.bf16.msra.mxu0 0
      %712 = vmatprep.subr.bf16.mxu0 0
      %713 = vmatpush2.bf16.msra.mxu0 0
      %714 = vmatprep.subr.bf16.mxu0 0
      %715 = vmatpush2.bf16.msra.mxu0 0
      %716 = vmatprep.mubr.bf16.mxu0 0
      %717 = vmatmul.mubr.bf16.gmra.mxu0 %v611
      %v718 = vpop.f32.mrf.mxu0
      %v719 = vadd.f32 %v634, %v718
      %v720 = vpop.f32.mrf.mxu0
      %v721 = vpop.f32.mrf.mxu0
      %v722 = vpop.f32.mrf.mxu0
      %723 = vdwg.mxu0
      %v724 = vmul.f32 %v719, 0.17677669
      %v725 = vld [vmem:[%s4] sm:$0xf]
      %v726 = vld [vmem:[%s4 + $0x4] sm:$0xf]
      %v727 = vld [vmem:[%s4 + $0x8] sm:$0xf]
      %v728 = vld [vmem:[%s4 + $0xc] sm:$0xf]
      %v729 = vld [vmem:[%s4 + $0x10] sm:$0xf]
      %v730 = vld [vmem:[%s4 + $0x14] sm:$0xf]
      %v731 = vld [vmem:[%s4 + $0x18] sm:$0xf]
      %v732 = vld [vmem:[%s4 + $0x1c] sm:$0xf]
      %v733 = vld [vmem:[%s4 + $0x20] sm:$0xf]
      %v734 = vld [vmem:[%s4 + $0x24] sm:$0xf]
      %v735 = vld [vmem:[%s4 + $0x28] sm:$0xf]
      %v736 = vld [vmem:[%s4 + $0x2c] sm:$0xf]
      %v737 = vld [vmem:[%s4 + $0x30] sm:$0xf]
      %v738 = vld [vmem:[%s4 + $0x34] sm:$0xf]
      %v739 = vld [vmem:[%s4 + $0x38] sm:$0xf]
      %v740 = vld [vmem:[%s4 + $0x3c] sm:$0xf]
      %v741 = vld [vmem:[%s5] sm:$0x1]
      %v743 = vlaneseq
      %v744 = vshrl.u32 %v743, 7
      %v745 = vsub.s32 0, %v744
      %v746 = vrot.slane %v741, %v745
      %v764 = vunpack.c.l.b16 %v725
      %v765 = vunpack.c.l.b16 %v726
      %v766 = vunpack.c.l.b16 %v727
      %v767 = vunpack.c.l.b16 %v728
      %v768 = vunpack.c.l.b16 %v729
      %v769 = vunpack.c.l.b16 %v730
      %v770 = vunpack.c.l.b16 %v731
      %v771 = vunpack.c.l.b16 %v732
      %v772 = vunpack.c.l.b16 %v733
      %v773 = vunpack.c.l.b16 %v734
      %v774 = vunpack.c.l.b16 %v735
      %v775 = vunpack.c.l.b16 %v736
      %v776 = vunpack.c.l.b16 %v737
      %v777 = vunpack.c.l.b16 %v738
      %v778 = vunpack.c.l.b16 %v739
      %v779 = vunpack.c.l.b16 %v740
      %v780 = vpack.c.b16 %v765, %v764
      %v781 = vpack.c.b16 %v767, %v766
      %v782 = vpack.c.b16 %v769, %v768
      %v783 = vpack.c.b16 %v771, %v770
      %v784 = vpack.c.b16 %v773, %v772
      %v785 = vpack.c.b16 %v775, %v774
      %v786 = vpack.c.b16 %v777, %v776
      %v787 = vpack.c.b16 %v779, %v778
      %796 = vmatprep.subr.bf16.mxu0 0
      %797 = vmatpush1.bf16.msra.mxu0 %v787
      %798 = vmatprep.subr.bf16.mxu0 0
      %799 = vmatpush1.bf16.msra.mxu0 %v786
      %800 = vmatprep.subr.bf16.mxu0 0
      %801 = vmatpush1.bf16.msra.mxu0 %v785
      %802 = vmatprep.subr.bf16.mxu0 0
      %803 = vmatpush1.bf16.msra.mxu0 %v784
      %804 = vmatprep.subr.bf16.mxu0 0
      %805 = vmatpush1.bf16.msra.mxu0 %v783
      %806 = vmatprep.subr.bf16.mxu0 0
      %807 = vmatpush1.bf16.msra.mxu0 %v782
      %808 = vmatprep.subr.bf16.mxu0 0
      %809 = vmatpush1.bf16.msra.mxu0 %v781
      %810 = vmatprep.subr.bf16.mxu0 0
      %811 = vmatpush1.bf16.msra.mxu0 %v780
      %812 = vmatprep.subr.bf16.mxu0 0
      %813 = vmatpush2.bf16.msra.mxu0 0
      %814 = vmatprep.subr.bf16.mxu0 0
      %815 = vmatpush2.bf16.msra.mxu0 0
      %816 = vmatprep.subr.bf16.mxu0 0
      %817 = vmatpush2.bf16.msra.mxu0 0
      %818 = vmatprep.subr.bf16.mxu0 0
      %819 = vmatpush2.bf16.msra.mxu0 0
      %820 = vmatprep.subr.bf16.mxu0 0
      %821 = vmatpush2.bf16.msra.mxu0 0
      %822 = vmatprep.subr.bf16.mxu0 0
      %823 = vmatpush2.bf16.msra.mxu0 0
      %824 = vmatprep.subr.bf16.mxu0 0
      %825 = vmatpush2.bf16.msra.mxu0 0
      %826 = vmatprep.subr.bf16.mxu0 0
      %827 = vmatpush2.bf16.msra.mxu0 0
      %828 = vmatprep.mubr.bf16.mxu0 0
      %829 = vmatmul.mubr.bf16.gmra.mxu0 %v612
      %v830 = vpop.f32.mrf.mxu0
      %v831 = vadd.f32 %v746, %v830
      %v832 = vpop.f32.mrf.mxu0
      %v833 = vpop.f32.mrf.mxu0
      %v834 = vpop.f32.mrf.mxu0
      %835 = vdwg.mxu0
      %v836 = vld [vmem:[%s6] sm:$0xf]
      %v837 = vld [vmem:[%s6 + $0x4] sm:$0xf]
      %v838 = vld [vmem:[%s6 + $0x8] sm:$0xf]
      %v839 = vld [vmem:[%s6 + $0xc] sm:$0xf]
      %v840 = vld [vmem:[%s6 + $0x10] sm:$0xf]
      %v841 = vld [vmem:[%s6 + $0x14] sm:$0xf]
      %v842 = vld [vmem:[%s6 + $0x18] sm:$0xf]
      %v843 = vld [vmem:[%s6 + $0x1c] sm:$0xf]
      %v844 = vld [vmem:[%s6 + $0x20] sm:$0xf]
      %v845 = vld [vmem:[%s6 + $0x24] sm:$0xf]
      %v846 = vld [vmem:[%s6 + $0x28] sm:$0xf]
      %v847 = vld [vmem:[%s6 + $0x2c] sm:$0xf]
      %v848 = vld [vmem:[%s6 + $0x30] sm:$0xf]
      %v849 = vld [vmem:[%s6 + $0x34] sm:$0xf]
      %v850 = vld [vmem:[%s6 + $0x38] sm:$0xf]
      %v851 = vld [vmem:[%s6 + $0x3c] sm:$0xf]
      %v852 = vld [vmem:[%s7] sm:$0x1]
      %v854 = vlaneseq
      %v855 = vshrl.u32 %v854, 7
      %v856 = vsub.s32 0, %v855
      %v857 = vrot.slane %v852, %v856
      %v875 = vunpack.c.l.b16 %v836
      %v876 = vunpack.c.l.b16 %v837
      %v877 = vunpack.c.l.b16 %v838
      %v878 = vunpack.c.l.b16 %v839
      %v879 = vunpack.c.l.b16 %v840
      %v880 = vunpack.c.l.b16 %v841
      %v881 = vunpack.c.l.b16 %v842
      %v882 = vunpack.c.l.b16 %v843
      %v883 = vunpack.c.l.b16 %v844
      %v884 = vunpack.c.l.b16 %v845
      %v885 = vunpack.c.l.b16 %v846
      %v886 = vunpack.c.l.b16 %v847
      %v887 = vunpack.c.l.b16 %v848
      %v888 = vunpack.c.l.b16 %v849
      %v889 = vunpack.c.l.b16 %v850
      %v890 = vunpack.c.l.b16 %v851
      %v891 = vpack.c.b16 %v876, %v875
      %v892 = vpack.c.b16 %v878, %v877
      %v893 = vpack.c.b16 %v880, %v879
      %v894 = vpack.c.b16 %v882, %v881
      %v895 = vpack.c.b16 %v884, %v883
      %v896 = vpack.c.b16 %v886, %v885
      %v897 = vpack.c.b16 %v888, %v887
      %v898 = vpack.c.b16 %v890, %v889
      %907 = vmatprep.subr.bf16.mxu0 0
      %908 = vmatpush1.bf16.msra.mxu0 %v898
      %909 = vmatprep.subr.bf16.mxu0 0
      %910 = vmatpush1.bf16.msra.mxu0 %v897
      %911 = vmatprep.subr.bf16.mxu0 0
      %912 = vmatpush1.bf16.msra.mxu0 %v896
      %913 = vmatprep.subr.bf16.mxu0 0
      %914 = vmatpush1.bf16.msra.mxu0 %v895
      %915 = vmatprep.subr.bf16.mxu0 0
      %916 = vmatpush1.bf16.msra.mxu0 %v894
      %917 = vmatprep.subr.bf16.mxu0 0
      %918 = vmatpush1.bf16.msra.mxu0 %v893
      %919 = vmatprep.subr.bf16.mxu0 0
      %920 = vmatpush1.bf16.msra.mxu0 %v892
      %921 = vmatprep.subr.bf16.mxu0 0
      %922 = vmatpush1.bf16.msra.mxu0 %v891
      %923 = vmatprep.subr.bf16.mxu0 0
      %924 = vmatpush2.bf16.msra.mxu0 0
      %925 = vmatprep.subr.bf16.mxu0 0
      %926 = vmatpush2.bf16.msra.mxu0 0
      %927 = vmatprep.subr.bf16.mxu0 0
      %928 = vmatpush2.bf16.msra.mxu0 0
      %929 = vmatprep.subr.bf16.mxu0 0
      %930 = vmatpush2.bf16.msra.mxu0 0
      %931 = vmatprep.subr.bf16.mxu0 0
      %932 = vmatpush2.bf16.msra.mxu0 0
      %933 = vmatprep.subr.bf16.mxu0 0
      %934 = vmatpush2.bf16.msra.mxu0 0
      %935 = vmatprep.subr.bf16.mxu0 0
      %936 = vmatpush2.bf16.msra.mxu0 0
      %937 = vmatprep.subr.bf16.mxu0 0
      %938 = vmatpush2.bf16.msra.mxu0 0
      %939 = vmatprep.mubr.bf16.mxu0 0
      %940 = vmatmul.mubr.bf16.gmra.mxu0 %v612
      %v941 = vpop.f32.mrf.mxu0
      %v942 = vadd.f32 %v857, %v941
      %v943 = vpop.f32.mrf.mxu0
      %v944 = vpop.f32.mrf.mxu0
      %v945 = vpop.f32.mrf.mxu0
      %946 = vdwg.mxu0
      %v947 = vpack.c.bf16 %v724, %v724
      %949 = vrot.lane.b32.xlu0 %v947, 96
      %v950 = vpop.permute.xlu0 %949
      %951 = vrot.lane.b32.xlu0 %v947, 64
      %v952 = vpop.permute.xlu0 %951
      %953 = vrot.lane.b32.xlu0 %v947, 32
      %v954 = vpop.permute.xlu0 %953
      %v956 = vunpack.c.l.s4 1983009808
      %v957 = vunpack.c.0.s8 %v956
      %v958 = vlaneseq
      %v959 = vshrl.u32 %v958, 7
      %v960 = vsub.s32 %v957, %v959
      %v961 = vrot.slane %v947, %v960
      %v964 = vunpack.c.l.s4 1983009808
      %v965 = vunpack.c.0.s8 %v964
      %v966 = vlaneseq
      %v967 = vshrl.u32 %v966, 7
      %v968 = vsub.s32 %v965, %v967
      %v969 = vrot.slane %v952, %v968
      %v970 = vcombine.low %v961, %v969
      %v971 = vcombine.high %v961, %v969
      %v973 = vunpack.c.l.s4 1934713408
      %v974 = vunpack.c.0.s8 %v973
      %v975 = vlaneseq
      %v976 = vshrl.u32 %v975, 7
      %v977 = vsub.s32 %v974, %v976
      %v978 = vrot.slane %v970, %v977
      %v980 = vunpack.c.l.s4 1934713408
      %v981 = vunpack.c.0.s8 %v980
      %v982 = vlaneseq
      %v983 = vshrl.u32 %v982, 7
      %v984 = vsub.s32 %v981, %v983
      %v985 = vrot.slane %v971, %v984
      %v986 = vcombine.high %v978, 0
      %v987 = vcombine.high %v985, 0
      %v990 = vunpack.c.l.s4 1983009808
      %v991 = vunpack.c.0.s8 %v990
      %v992 = vlaneseq
      %v993 = vshrl.u32 %v992, 7
      %v994 = vsub.s32 %v991, %v993
      %v995 = vrot.slane %v950, %v994
      %v998 = vunpack.c.l.s4 1983009808
      %v999 = vunpack.c.0.s8 %v998
      %v1000 = vlaneseq
      %v1001 = vshrl.u32 %v1000, 7
      %v1002 = vsub.s32 %v999, %v1001
      %v1003 = vrot.slane %v954, %v1002
      %v1004 = vcombine.low %v995, %v1003
      %v1005 = vcombine.high %v995, %v1003
      %v1007 = vunpack.c.l.s4 1934713408
      %v1008 = vunpack.c.0.s8 %v1007
      %v1009 = vlaneseq
      %v1010 = vshrl.u32 %v1009, 7
      %v1011 = vsub.s32 %v1008, %v1010
      %v1012 = vrot.slane %v1004, %v1011
      %v1014 = vunpack.c.l.s4 1934713408
      %v1015 = vunpack.c.0.s8 %v1014
      %v1016 = vlaneseq
      %v1017 = vshrl.u32 %v1016, 7
      %v1018 = vsub.s32 %v1015, %v1017
      %v1019 = vrot.slane %v1005, %v1018
      %v1020 = vcombine.high %v1012, 0
      %v1021 = vcombine.high %v1019, 0
      %v1024 = vpack.i.b16 %v1012, %v978
      %v1026 = vshrl.u32 %v978, 16
      %v1027 = vshrl.u32 %v1012, 16
      %v1028 = vpack.i.b16 %v1027, %v1026
      %v1032 = vpack.i.b16 %v1020, %v986
      %v1034 = vshrl.u32 %v986, 16
      %v1035 = vshrl.u32 %v1020, 16
      %v1036 = vpack.i.b16 %v1035, %v1034
      %v1040 = vpack.i.b16 %v1019, %v985
      %v1042 = vshrl.u32 %v985, 16
      %v1043 = vshrl.u32 %v1019, 16
      %v1044 = vpack.i.b16 %v1043, %v1042
      %v1048 = vpack.i.b16 %v1021, %v987
      %v1050 = vshrl.u32 %v987, 16
      %v1051 = vshrl.u32 %v1021, 16
      %v1052 = vpack.i.b16 %v1051, %v1050
      %v1054 = vcombine.low %v1024, %v1040
      %v1056 = vunpack.c.l.s4 1983009808
      %v1057 = vunpack.c.0.s8 %v1056
      %v1058 = vlaneseq
      %v1059 = vshrl.u32 %v1058, 7
      %v1060 = vsub.s32 %v1057, %v1059
      %v1061 = vrot.slane %v1054, %v1060
      %v1062 = vcombine.low %v1032, %v1048
      %v1064 = vunpack.c.l.s4 1983009808
      %v1065 = vunpack.c.0.s8 %v1064
      %v1066 = vlaneseq
      %v1067 = vshrl.u32 %v1066, 7
      %v1068 = vsub.s32 %v1065, %v1067
      %v1069 = vrot.slane %v1062, %v1068
      %v1070 = vcombine.low %v1061, %v1069
      %v1072 = vunpack.c.l.s4 1934713408
      %v1073 = vunpack.c.0.s8 %v1072
      %v1074 = vlaneseq
      %v1075 = vshrl.u32 %v1074, 7
      %v1076 = vsub.s32 %v1073, %v1075
      %v1077 = vrot.slane %v1070, %v1076
      %v1078 = vcombine.high %v1077, 0
      %v1079 = vcombine.low %v1028, %v1044
      %v1081 = vunpack.c.l.s4 1983009808
      %v1082 = vunpack.c.0.s8 %v1081
      %v1083 = vlaneseq
      %v1084 = vshrl.u32 %v1083, 7
      %v1085 = vsub.s32 %v1082, %v1084
      %v1086 = vrot.slane %v1079, %v1085
      %v1087 = vcombine.low %v1036, %v1052
      %v1089 = vunpack.c.l.s4 1983009808
      %v1090 = vunpack.c.0.s8 %v1089
      %v1091 = vlaneseq
      %v1092 = vshrl.u32 %v1091, 7
      %v1093 = vsub.s32 %v1090, %v1092
      %v1094 = vrot.slane %v1087, %v1093
      %v1095 = vcombine.low %v1086, %v1094
      %v1097 = vunpack.c.l.s4 1934713408
      %v1098 = vunpack.c.0.s8 %v1097
      %v1099 = vlaneseq
      %v1100 = vshrl.u32 %v1099, 7
      %v1101 = vsub.s32 %v1098, %v1100
      %v1102 = vrot.slane %v1095, %v1101
      %v1103 = vcombine.high %v1102, 0
      %v1106 = vpack.i.b16 %v1102, %v1077
      %v1107 = vshrl.u32 %v1077, 16
      %v1108 = vshrl.u32 %v1102, 16
      %v1109 = vpack.i.b16 %v1108, %v1107
      %v1112 = vpack.i.b16 %v1103, %v1078
      %v1113 = vshrl.u32 %v1078, 16
      %v1114 = vshrl.u32 %v1103, 16
      %v1115 = vpack.i.b16 %v1114, %v1113
      %v1116 = vpack.c.bf16 %v831, %v831
      %1118 = vrot.lane.b32.xlu0 %v1116, 96
      %v1119 = vpop.permute.xlu0 %1118
      %1120 = vrot.lane.b32.xlu0 %v1116, 64
      %v1121 = vpop.permute.xlu0 %1120
      %1122 = vrot.lane.b32.xlu0 %v1116, 32
      %v1123 = vpop.permute.xlu0 %1122
      %v1125 = vunpack.c.l.s4 1983009808
      %v1126 = vunpack.c.0.s8 %v1125
      %v1127 = vlaneseq
      %v1128 = vshrl.u32 %v1127, 7
      %v1129 = vsub.s32 %v1126, %v1128
      %v1130 = vrot.slane %v1116, %v1129
      %v1133 = vunpack.c.l.s4 1983009808
      %v1134 = vunpack.c.0.s8 %v1133
      %v1135 = vlaneseq
      %v1136 = vshrl.u32 %v1135, 7
      %v1137 = vsub.s32 %v1134, %v1136
      %v1138 = vrot.slane %v1121, %v1137
      %v1139 = vcombine.low %v1130, %v1138
      %v1140 = vcombine.high %v1130, %v1138
      %v1142 = vunpack.c.l.s4 1934713408
      %v1143 = vunpack.c.0.s8 %v1142
      %v1144 = vlaneseq
      %v1145 = vshrl.u32 %v1144, 7
      %v1146 = vsub.s32 %v1143, %v1145
      %v1147 = vrot.slane %v1139, %v1146
      %v1149 = vunpack.c.l.s4 1934713408
      %v1150 = vunpack.c.0.s8 %v1149
      %v1151 = vlaneseq
      %v1152 = vshrl.u32 %v1151, 7
      %v1153 = vsub.s32 %v1150, %v1152
      %v1154 = vrot.slane %v1140, %v1153
      %v1155 = vcombine.high %v1147, 0
      %v1156 = vcombine.high %v1154, 0
      %v1159 = vunpack.c.l.s4 1983009808
      %v1160 = vunpack.c.0.s8 %v1159
      %v1161 = vlaneseq
      %v1162 = vshrl.u32 %v1161, 7
      %v1163 = vsub.s32 %v1160, %v1162
      %v1164 = vrot.slane %v1119, %v1163
      %v1167 = vunpack.c.l.s4 1983009808
      %v1168 = vunpack.c.0.s8 %v1167
      %v1169 = vlaneseq
      %v1170 = vshrl.u32 %v1169, 7
      %v1171 = vsub.s32 %v1168, %v1170
      %v1172 = vrot.slane %v1123, %v1171
      %v1173 = vcombine.low %v1164, %v1172
      %v1174 = vcombine.high %v1164, %v1172
      %v1176 = vunpack.c.l.s4 1934713408
      %v1177 = vunpack.c.0.s8 %v1176
      %v1178 = vlaneseq
      %v1179 = vshrl.u32 %v1178, 7
      %v1180 = vsub.s32 %v1177, %v1179
      %v1181 = vrot.slane %v1173, %v1180
      %v1183 = vunpack.c.l.s4 1934713408
      %v1184 = vunpack.c.0.s8 %v1183
      %v1185 = vlaneseq
      %v1186 = vshrl.u32 %v1185, 7
      %v1187 = vsub.s32 %v1184, %v1186
      %v1188 = vrot.slane %v1174, %v1187
      %v1189 = vcombine.high %v1181, 0
      %v1190 = vcombine.high %v1188, 0
      %v1193 = vpack.i.b16 %v1181, %v1147
      %v1195 = vshrl.u32 %v1147, 16
      %v1196 = vshrl.u32 %v1181, 16
      %v1197 = vpack.i.b16 %v1196, %v1195
      %v1201 = vpack.i.b16 %v1189, %v1155
      %v1203 = vshrl.u32 %v1155, 16
      %v1204 = vshrl.u32 %v1189, 16
      %v1205 = vpack.i.b16 %v1204, %v1203
      %v1209 = vpack.i.b16 %v1188, %v1154
      %v1211 = vshrl.u32 %v1154, 16
      %v1212 = vshrl.u32 %v1188, 16
      %v1213 = vpack.i.b16 %v1212, %v1211
      %v1217 = vpack.i.b16 %v1190, %v1156
      %v1219 = vshrl.u32 %v1156, 16
      %v1220 = vshrl.u32 %v1190, 16
      %v1221 = vpack.i.b16 %v1220, %v1219
      %v1223 = vcombine.low %v1193, %v1209
      %v1225 = vunpack.c.l.s4 1983009808
      %v1226 = vunpack.c.0.s8 %v1225
      %v1227 = vlaneseq
      %v1228 = vshrl.u32 %v1227, 7
      %v1229 = vsub.s32 %v1226, %v1228
      %v1230 = vrot.slane %v1223, %v1229
      %v1231 = vcombine.low %v1201, %v1217
      %v1233 = vunpack.c.l.s4 1983009808
      %v1234 = vunpack.c.0.s8 %v1233
      %v1235 = vlaneseq
      %v1236 = vshrl.u32 %v1235, 7
      %v1237 = vsub.s32 %v1234, %v1236
      %v1238 = vrot.slane %v1231, %v1237
      %v1239 = vcombine.low %v1230, %v1238
      %v1241 = vunpack.c.l.s4 1934713408
      %v1242 = vunpack.c.0.s8 %v1241
      %v1243 = vlaneseq
      %v1244 = vshrl.u32 %v1243, 7
      %v1245 = vsub.s32 %v1242, %v1244
      %v1246 = vrot.slane %v1239, %v1245
      %v1247 = vcombine.high %v1246, 0
      %v1248 = vcombine.low %v1197, %v1213
      %v1250 = vunpack.c.l.s4 1983009808
      %v1251 = vunpack.c.0.s8 %v1250
      %v1252 = vlaneseq
      %v1253 = vshrl.u32 %v1252, 7
      %v1254 = vsub.s32 %v1251, %v1253
      %v1255 = vrot.slane %v1248, %v1254
      %v1256 = vcombine.low %v1205, %v1221
      %v1258 = vunpack.c.l.s4 1983009808
      %v1259 = vunpack.c.0.s8 %v1258
      %v1260 = vlaneseq
      %v1261 = vshrl.u32 %v1260, 7
      %v1262 = vsub.s32 %v1259, %v1261
      %v1263 = vrot.slane %v1256, %v1262
      %v1264 = vcombine.low %v1255, %v1263
      %v1266 = vunpack.c.l.s4 1934713408
      %v1267 = vunpack.c.0.s8 %v1266
      %v1268 = vlaneseq
      %v1269 = vshrl.u32 %v1268, 7
      %v1270 = vsub.s32 %v1267, %v1269
      %v1271 = vrot.slane %v1264, %v1270
      %v1272 = vcombine.high %v1271, 0
      %v1275 = vpack.i.b16 %v1271, %v1246
      %v1276 = vshrl.u32 %v1246, 16
      %v1277 = vshrl.u32 %v1271, 16
      %v1278 = vpack.i.b16 %v1277, %v1276
      %v1281 = vpack.i.b16 %v1272, %v1247
      %v1282 = vshrl.u32 %v1247, 16
      %v1283 = vshrl.u32 %v1272, 16
      %v1284 = vpack.i.b16 %v1283, %v1282
      %v1285 = vpack.c.bf16 %v942, %v942
      %1287 = vrot.lane.b32.xlu0 %v1285, 96
      %v1288 = vpop.permute.xlu0 %1287
      %1289 = vrot.lane.b32.xlu0 %v1285, 64
      %v1290 = vpop.permute.xlu0 %1289
      %1291 = vrot.lane.b32.xlu0 %v1285, 32
      %v1292 = vpop.permute.xlu0 %1291
      %v1294 = vunpack.c.l.s4 1983009808
      %v1295 = vunpack.c.0.s8 %v1294
      %v1296 = vlaneseq
      %v1297 = vshrl.u32 %v1296, 7
      %v1298 = vsub.s32 %v1295, %v1297
      %v1299 = vrot.slane %v1285, %v1298
      %v1302 = vunpack.c.l.s4 1983009808
      %v1303 = vunpack.c.0.s8 %v1302
      %v1304 = vlaneseq
      %v1305 = vshrl.u32 %v1304, 7
      %v1306 = vsub.s32 %v1303, %v1305
      %v1307 = vrot.slane %v1290, %v1306
      %v1308 = vcombine.low %v1299, %v1307
      %v1309 = vcombine.high %v1299, %v1307
      %v1311 = vunpack.c.l.s4 1934713408
      %v1312 = vunpack.c.0.s8 %v1311
      %v1313 = vlaneseq
      %v1314 = vshrl.u32 %v1313, 7
      %v1315 = vsub.s32 %v1312, %v1314
      %v1316 = vrot.slane %v1308, %v1315
      %v1318 = vunpack.c.l.s4 1934713408
      %v1319 = vunpack.c.0.s8 %v1318
      %v1320 = vlaneseq
      %v1321 = vshrl.u32 %v1320, 7
      %v1322 = vsub.s32 %v1319, %v1321
      %v1323 = vrot.slane %v1309, %v1322
      %v1324 = vcombine.high %v1316, 0
      %v1325 = vcombine.high %v1323, 0
      %v1328 = vunpack.c.l.s4 1983009808
      %v1329 = vunpack.c.0.s8 %v1328
      %v1330 = vlaneseq
      %v1331 = vshrl.u32 %v1330, 7
      %v1332 = vsub.s32 %v1329, %v1331
      %v1333 = vrot.slane %v1288, %v1332
      %v1336 = vunpack.c.l.s4 1983009808
      %v1337 = vunpack.c.0.s8 %v1336
      %v1338 = vlaneseq
      %v1339 = vshrl.u32 %v1338, 7
      %v1340 = vsub.s32 %v1337, %v1339
      %v1341 = vrot.slane %v1292, %v1340
      %v1342 = vcombine.low %v1333, %v1341
      %v1343 = vcombine.high %v1333, %v1341
      %v1345 = vunpack.c.l.s4 1934713408
      %v1346 = vunpack.c.0.s8 %v1345
      %v1347 = vlaneseq
      %v1348 = vshrl.u32 %v1347, 7
      %v1349 = vsub.s32 %v1346, %v1348
      %v1350 = vrot.slane %v1342, %v1349
      %v1352 = vunpack.c.l.s4 1934713408
      %v1353 = vunpack.c.0.s8 %v1352
      %v1354 = vlaneseq
      %v1355 = vshrl.u32 %v1354, 7
      %v1356 = vsub.s32 %v1353, %v1355
      %v1357 = vrot.slane %v1343, %v1356
      %v1358 = vcombine.high %v1350, 0
      %v1359 = vcombine.high %v1357, 0
      %v1362 = vpack.i.b16 %v1350, %v1316
      %v1364 = vshrl.u32 %v1316, 16
      %v1365 = vshrl.u32 %v1350, 16
      %v1366 = vpack.i.b16 %v1365, %v1364
      %v1370 = vpack.i.b16 %v1358, %v1324
      %v1372 = vshrl.u32 %v1324, 16
      %v1373 = vshrl.u32 %v1358, 16
      %v1374 = vpack.i.b16 %v1373, %v1372
      %v1378 = vpack.i.b16 %v1357, %v1323
      %v1380 = vshrl.u32 %v1323, 16
      %v1381 = vshrl.u32 %v1357, 16
      %v1382 = vpack.i.b16 %v1381, %v1380
      %v1386 = vpack.i.b16 %v1359, %v1325
      %v1388 = vshrl.u32 %v1325, 16
      %v1389 = vshrl.u32 %v1359, 16
      %v1390 = vpack.i.b16 %v1389, %v1388
      %v1392 = vcombine.low %v1362, %v1378
      %v1394 = vunpack.c.l.s4 1983009808
      %v1395 = vunpack.c.0.s8 %v1394
      %v1396 = vlaneseq
      %v1397 = vshrl.u32 %v1396, 7
      %v1398 = vsub.s32 %v1395, %v1397
      %v1399 = vrot.slane %v1392, %v1398
      %v1400 = vcombine.low %v1370, %v1386
      %v1402 = vunpack.c.l.s4 1983009808
      %v1403 = vunpack.c.0.s8 %v1402
      %v1404 = vlaneseq
      %v1405 = vshrl.u32 %v1404, 7
      %v1406 = vsub.s32 %v1403, %v1405
      %v1407 = vrot.slane %v1400, %v1406
      %v1408 = vcombine.low %v1399, %v1407
      %v1410 = vunpack.c.l.s4 1934713408
      %v1411 = vunpack.c.0.s8 %v1410
      %v1412 = vlaneseq
      %v1413 = vshrl.u32 %v1412, 7
      %v1414 = vsub.s32 %v1411, %v1413
      %v1415 = vrot.slane %v1408, %v1414
      %v1416 = vcombine.high %v1415, 0
      %v1417 = vcombine.low %v1366, %v1382
      %v1419 = vunpack.c.l.s4 1983009808
      %v1420 = vunpack.c.0.s8 %v1419
      %v1421 = vlaneseq
      %v1422 = vshrl.u32 %v1421, 7
      %v1423 = vsub.s32 %v1420, %v1422
      %v1424 = vrot.slane %v1417, %v1423
      %v1425 = vcombine.low %v1374, %v1390
      %v1427 = vunpack.c.l.s4 1983009808
      %v1428 = vunpack.c.0.s8 %v1427
      %v1429 = vlaneseq
      %v1430 = vshrl.u32 %v1429, 7
      %v1431 = vsub.s32 %v1428, %v1430
      %v1432 = vrot.slane %v1425, %v1431
      %v1433 = vcombine.low %v1424, %v1432
      %v1435 = vunpack.c.l.s4 1934713408
      %v1436 = vunpack.c.0.s8 %v1435
      %v1437 = vlaneseq
      %v1438 = vshrl.u32 %v1437, 7
      %v1439 = vsub.s32 %v1436, %v1438
      %v1440 = vrot.slane %v1433, %v1439
      %v1441 = vcombine.high %v1440, 0
      %v1444 = vpack.i.b16 %v1440, %v1415
      %v1445 = vshrl.u32 %v1415, 16
      %v1446 = vshrl.u32 %v1440, 16
      %v1447 = vpack.i.b16 %v1446, %v1445
      %v1450 = vpack.i.b16 %v1441, %v1416
      %v1451 = vshrl.u32 %v1416, 16
      %v1452 = vshrl.u32 %v1441, 16
      %v1453 = vpack.i.b16 %v1452, %v1451
      %vm1454 = vcmask 261120
      %v1456 = vsel %vm1454, %v1106, 0
      %v1459 = vsel %vm1454, %v1275, 0
      %1461 = vmatprep.subr.bf16.mxu0 0
      %1462 = vmatpush1.bf16.xpose.msra.mxu0 0
      %1463 = vmatprep.subr.bf16.mxu0 0
      %1464 = vmatpush1.bf16.xpose.msra.mxu0 0
      %1465 = vmatprep.subr.bf16.mxu0 0
      %1466 = vmatpush1.bf16.xpose.msra.mxu0 0
      %1467 = vmatprep.subr.bf16.mxu0 0
      %1468 = vmatpush1.bf16.xpose.msra.mxu0 0
      %1469 = vmatprep.subr.bf16.mxu0 0
      %1470 = vmatpush1.bf16.xpose.msra.mxu0 0
      %1471 = vmatprep.subr.bf16.mxu0 0
      %1472 = vmatpush1.bf16.xpose.msra.mxu0 0
      %1473 = vmatprep.subr.bf16.mxu0 0
      %1474 = vmatpush1.bf16.xpose.msra.mxu0 0
      %1475 = vmatprep.subr.bf16.mxu0 0
      %1476 = vmatpush1.bf16.xpose.msra.mxu0 %v1459
      %1477 = vmatprep.subr.bf16.mxu0 0
      %1478 = vmatpush2.bf16.xpose.msra.mxu0 0
      %1479 = vmatprep.subr.bf16.mxu0 0
      %1480 = vmatpush2.bf16.xpose.msra.mxu0 0
      %1481 = vmatprep.subr.bf16.mxu0 0
      %1482 = vmatpush2.bf16.xpose.msra.mxu0 0
      %1483 = vmatprep.subr.bf16.mxu0 0
      %1484 = vmatpush2.bf16.xpose.msra.mxu0 0
      %1485 = vmatprep.subr.bf16.mxu0 0
      %1486 = vmatpush2.bf16.xpose.msra.mxu0 0
      %1487 = vmatprep.subr.bf16.mxu0 0
      %1488 = vmatpush2.bf16.xpose.msra.mxu0 0
      %1489 = vmatprep.subr.bf16.mxu0 0
      %1490 = vmatpush2.bf16.xpose.msra.mxu0 0
      %1491 = vmatprep.subr.bf16.mxu0 0
      %1492 = vmatpush2.bf16.xpose.msra.mxu0 0
      %1493 = vmatprep.mubr.bf16.mxu0 0
      %1494 = vmatmul.mubr.bf16.gmra.mxu0 %v1456
      %v1495 = vpop.f32.mrf.mxu0
      %v1496 = vadd.f32 0.0, %v1495
      %v1497 = vpop.f32.mrf.mxu0
      %v1498 = vpop.f32.mrf.mxu0
      %v1499 = vpop.f32.mrf.mxu0
      %1500 = vdwg.mxu0
      %v1502 = vsel %vm1454, %v1109, 0
      %v1505 = vsel %vm1454, %v1278, 0
      %1507 = vmatprep.subr.bf16.mxu0 0
      %1508 = vmatpush1.bf16.xpose.msra.mxu0 0
      %1509 = vmatprep.subr.bf16.mxu0 0
      %1510 = vmatpush1.bf16.xpose.msra.mxu0 0
      %1511 = vmatprep.subr.bf16.mxu0 0
      %1512 = vmatpush1.bf16.xpose.msra.mxu0 0
      %1513 = vmatprep.subr.bf16.mxu0 0
      %1514 = vmatpush1.bf16.xpose.msra.mxu0 0
      %1515 = vmatprep.subr.bf16.mxu0 0
      %1516 = vmatpush1.bf16.xpose.msra.mxu0 0
      %1517 = vmatprep.subr.bf16.mxu0 0
      %1518 = vmatpush1.bf16.xpose.msra.mxu0 0
      %1519 = vmatprep.subr.bf16.mxu0 0
      %1520 = vmatpush1.bf16.xpose.msra.mxu0 0
      %1521 = vmatprep.subr.bf16.mxu0 0
      %1522 = vmatpush1.bf16.xpose.msra.mxu0 %v1505
      %1523 = vmatprep.subr.bf16.mxu0 0
      %1524 = vmatpush2.bf16.xpose.msra.mxu0 0
      %1525 = vmatprep.subr.bf16.mxu0 0
      %1526 = vmatpush2.bf16.xpose.msra.mxu0 0
      %1527 = vmatprep.subr.bf16.mxu0 0
      %1528 = vmatpush2.bf16.xpose.msra.mxu0 0
      %1529 = vmatprep.subr.bf16.mxu0 0
      %1530 = vmatpush2.bf16.xpose.msra.mxu0 0
      %1531 = vmatprep.subr.bf16.mxu0 0
      %1532 = vmatpush2.bf16.xpose.msra.mxu0 0
      %1533 = vmatprep.subr.bf16.mxu0 0
      %1534 = vmatpush2.bf16.xpose.msra.mxu0 0
      %1535 = vmatprep.subr.bf16.mxu0 0
      %1536 = vmatpush2.bf16.xpose.msra.mxu0 0
      %1537 = vmatprep.subr.bf16.mxu0 0
      %1538 = vmatpush2.bf16.xpose.msra.mxu0 0
      %1539 = vmatprep.mubr.bf16.mxu0 0
      %1540 = vmatmul.mubr.bf16.gmra.mxu0 %v1502
      %v1541 = vpop.f32.mrf.mxu0
      %v1542 = vadd.f32 0.0, %v1541
      %v1543 = vpop.f32.mrf.mxu0
      %v1544 = vpop.f32.mrf.mxu0
      %v1545 = vpop.f32.mrf.mxu0
      %1546 = vdwg.mxu0
      %v1548 = vsel %vm1454, %v1112, 0
      %v1551 = vsel %vm1454, %v1281, 0
      %1553 = vmatprep.subr.bf16.mxu0 0
      %1554 = vmatpush1.bf16.xpose.msra.mxu0 0
      %1555 = vmatprep.subr.bf16.mxu0 0
      %1556 = vmatpush1.bf16.xpose.msra.mxu0 0
      %1557 = vmatprep.subr.bf16.mxu0 0
      %1558 = vmatpush1.bf16.xpose.msra.mxu0 0
      %1559 = vmatprep.subr.bf16.mxu0 0
      %1560 = vmatpush1.bf16.xpose.msra.mxu0 0
      %1561 = vmatprep.subr.bf16.mxu0 0
      %1562 = vmatpush1.bf16.xpose.msra.mxu0 0
      %1563 = vmatprep.subr.bf16.mxu0 0
      %1564 = vmatpush1.bf16.xpose.msra.mxu0 0
      %1565 = vmatprep.subr.bf16.mxu0 0
      %1566 = vmatpush1.bf16.xpose.msra.mxu0 0
      %1567 = vmatprep.subr.bf16.mxu0 0
      %1568 = vmatpush1.bf16.xpose.msra.mxu0 %v1551
      %1569 = vmatprep.subr.bf16.mxu0 0
      %1570 = vmatpush2.bf16.xpose.msra.mxu0 0
      %1571 = vmatprep.subr.bf16.mxu0 0
      %1572 = vmatpush2.bf16.xpose.msra.mxu0 0
      %1573 = vmatprep.subr.bf16.mxu0 0
      %1574 = vmatpush2.bf16.xpose.msra.mxu0 0
      %1575 = vmatprep.subr.bf16.mxu0 0
      %1576 = vmatpush2.bf16.xpose.msra.mxu0 0
      %1577 = vmatprep.subr.bf16.mxu0 0
      %1578 = vmatpush2.bf16.xpose.msra.mxu0 0
      %1579 = vmatprep.subr.bf16.mxu0 0
      %1580 = vmatpush2.bf16.xpose.msra.mxu0 0
      %1581 = vmatprep.subr.bf16.mxu0 0
      %1582 = vmatpush2.bf16.xpose.msra.mxu0 0
      %1583 = vmatprep.subr.bf16.mxu0 0
      %1584 = vmatpush2.bf16.xpose.msra.mxu0 0
      %1585 = vmatprep.mubr.bf16.mxu0 0
      %1586 = vmatmul.mubr.bf16.gmra.mxu0 %v1548
      %v1587 = vpop.f32.mrf.mxu0
      %v1588 = vadd.f32 0.0, %v1587
      %v1589 = vpop.f32.mrf.mxu0
      %v1590 = vpop.f32.mrf.mxu0
      %v1591 = vpop.f32.mrf.mxu0
      %1592 = vdwg.mxu0
      %v1594 = vsel %vm1454, %v1115, 0
      %v1597 = vsel %vm1454, %v1284, 0
      %1599 = vmatprep.subr.bf16.mxu0 0
      %1600 = vmatpush1.bf16.xpose.msra.mxu0 0
      %1601 = vmatprep.subr.bf16.mxu0 0
      %1602 = vmatpush1.bf16.xpose.msra.mxu0 0
      %1603 = vmatprep.subr.bf16.mxu0 0
      %1604 = vmatpush1.bf16.xpose.msra.mxu0 0
      %1605 = vmatprep.subr.bf16.mxu0 0
      %1606 = vmatpush1.bf16.xpose.msra.mxu0 0
      %1607 = vmatprep.subr.bf16.mxu0 0
      %1608 = vmatpush1.bf16.xpose.msra.mxu0 0
      %1609 = vmatprep.subr.bf16.mxu0 0
      %1610 = vmatpush1.bf16.xpose.msra.mxu0 0
      %1611 = vmatprep.subr.bf16.mxu0 0
      %1612 = vmatpush1.bf16.xpose.msra.mxu0 0
      %1613 = vmatprep.subr.bf16.mxu0 0
      %1614 = vmatpush1.bf16.xpose.msra.mxu0 %v1597
      %1615 = vmatprep.subr.bf16.mxu0 0
      %1616 = vmatpush2.bf16.xpose.msra.mxu0 0
      %1617 = vmatprep.subr.bf16.mxu0 0
      %1618 = vmatpush2.bf16.xpose.msra.mxu0 0
      %1619 = vmatprep.subr.bf16.mxu0 0
      %1620 = vmatpush2.bf16.xpose.msra.mxu0 0
      %1621 = vmatprep.subr.bf16.mxu0 0
      %1622 = vmatpush2.bf16.xpose.msra.mxu0 0
      %1623 = vmatprep.subr.bf16.mxu0 0
      %1624 = vmatpush2.bf16.xpose.msra.mxu0 0
      %1625 = vmatprep.subr.bf16.mxu0 0
      %1626 = vmatpush2.bf16.xpose.msra.mxu0 0
      %1627 = vmatprep.subr.bf16.mxu0 0
      %1628 = vmatpush2.bf16.xpose.msra.mxu0 0
      %1629 = vmatprep.subr.bf16.mxu0 0
      %1630 = vmatpush2.bf16.xpose.msra.mxu0 0
      %1631 = vmatprep.mubr.bf16.mxu0 0
      %1632 = vmatmul.mubr.bf16.gmra.mxu0 %v1594
      %v1633 = vpop.f32.mrf.mxu0
      %v1634 = vadd.f32 0.0, %v1633
      %v1635 = vpop.f32.mrf.mxu0
      %v1636 = vpop.f32.mrf.mxu0
      %v1637 = vpop.f32.mrf.mxu0
      %1638 = vdwg.mxu0
      %v1640 = vlaneseq
      %v1641 = vshrl.u32 %v1640, 7
      %v1642 = vsub.s32 0, %v1641
      %v1643 = vrot.slane %v610, %v1642
      %v1645 = vmul.f32 %v1496, %v1643
      %v1646 = vmul.f32 %v1542, %v1643
      %v1647 = vmul.f32 %v1588, %v1643
      %v1648 = vmul.f32 %v1634, %v1643
      %vm1649 = vcmask 64512
      %v1650 = vsel %vm1649, %v1645, -inf
      %1651 = vmax.xlane.f32.xlu0 %v1650
      %v1652 = vpop.xlane.xlu0 %1651
      %v1653 = vsel %vm1649, %v1646, -inf
      %1654 = vmax.xlane.f32.xlu0 %v1653
      %v1655 = vpop.xlane.xlu0 %1654
      %v1656 = vsel %vm1649, %v1647, -inf
      %1657 = vmax.xlane.f32.xlu0 %v1656
      %v1658 = vpop.xlane.xlu0 %1657
      %v1659 = vsel %vm1649, %v1648, -inf
      %1660 = vmax.xlane.f32.xlu0 %v1659
      %v1661 = vpop.xlane.xlu0 %1660
      %v1662 = vsub.f32 %v1645, %v1652
      %v1663 = vsub.f32 %v1646, %v1655
      %v1664 = vsub.f32 %v1647, %v1658
      %v1665 = vsub.f32 %v1648, %v1661
      %v1666 = vmul.f32 %v1662, 1.442695
      %v1667 = vpow.pop %v1666
      %v1668 = vmul.f32 %v1663, 1.442695
      %v1669 = vpow.pop %v1668
      %v1670 = vmul.f32 %v1664, 1.442695
      %v1671 = vpow.pop %v1670
      %v1672 = vmul.f32 %v1665, 1.442695
      %v1673 = vpow.pop %v1672
      %v1674 = vmul.f32 %v1667, %v1643
      %v1675 = vmul.f32 %v1669, %v1643
      %v1676 = vmul.f32 %v1671, %v1643
      %v1677 = vmul.f32 %v1673, %v1643
      %v1678 = vsel %vm1649, %v1674, 0.0
      %1679 = vadd.xlane.f32.xlu0 %v1678
      %v1680 = vpop.xlane.xlu0 %1679
      %v1681 = vsel %vm1649, %v1675, 0.0
      %1682 = vadd.xlane.f32.xlu0 %v1681
      %v1683 = vpop.xlane.xlu0 %1682
      %v1684 = vsel %vm1649, %v1676, 0.0
      %1685 = vadd.xlane.f32.xlu0 %v1684
      %v1686 = vpop.xlane.xlu0 %1685
      %v1687 = vsel %vm1649, %v1677, 0.0
      %1688 = vadd.xlane.f32.xlu0 %v1687
      %v1689 = vpop.xlane.xlu0 %1688
      %vm1690 = vcmp.eq.f32.partialorder %v1680, 0.0
      %vm1691 = vcmp.eq.f32.partialorder %v1683, 0.0
      %vm1692 = vcmp.eq.f32.partialorder %v1686, 0.0
      %vm1693 = vcmp.eq.f32.partialorder %v1689, 0.0
      %v1694 = vsel %vm1690, 1, 0
      %v1695 = vsel %vm1691, 1, 0
      %v1696 = vsel %vm1692, 1, 0
      %v1697 = vsel %vm1693, 1, 0
      %v1698 = vcvt.s32.f32 %v1694
      %v1699 = vcvt.s32.f32 %v1695
      %v1700 = vcvt.s32.f32 %v1696
      %v1701 = vcvt.s32.f32 %v1697
      %v1702 = vadd.f32 %v1680, %v1698
      %v1703 = vadd.f32 %v1683, %v1699
      %v1704 = vadd.f32 %v1686, %v1700
      %v1705 = vadd.f32 %v1689, %v1701
      %v1706 = vrcp.pop %v1702
      %v1707 = vrcp.pop %v1703
      %v1708 = vrcp.pop %v1704
      %v1709 = vrcp.pop %v1705
      %v1710 = vmul.f32 %v1674, %v1706
      %v1711 = vmul.f32 %v1675, %v1707
      %v1712 = vmul.f32 %v1676, %v1708
      %v1713 = vmul.f32 %v1677, %v1709
      %v1714 = vpack.c.bf16 %v1710, %v1710
      %v1715 = vpack.c.bf16 %v1711, %v1711
      %v1716 = vpack.c.bf16 %v1712, %v1712
      %v1717 = vpack.c.bf16 %v1713, %v1713
      %v1719 = vsel %vm1649, %v1714, 0
      %vm1721 = vcmask 1043456
      %v1723 = vsel %vm1721, %v1444, 0
      %1725 = vmatprep.subr.bf16.mxu0 0
      %1726 = vmatpush1.bf16.msra.mxu0 0
      %1727 = vmatprep.subr.bf16.mxu0 0
      %1728 = vmatpush1.bf16.msra.mxu0 0
      %1729 = vmatprep.subr.bf16.mxu0 0
      %1730 = vmatpush1.bf16.msra.mxu0 0
      %1731 = vmatprep.subr.bf16.mxu0 0
      %1732 = vmatpush1.bf16.msra.mxu0 0
      %1733 = vmatprep.subr.bf16.mxu0 0
      %1734 = vmatpush1.bf16.msra.mxu0 0
      %1735 = vmatprep.subr.bf16.mxu0 0
      %1736 = vmatpush1.bf16.msra.mxu0 0
      %1737 = vmatprep.subr.bf16.mxu0 0
      %1738 = vmatpush1.bf16.msra.mxu0 0
      %1739 = vmatprep.subr.bf16.mxu0 0
      %1740 = vmatpush1.bf16.msra.mxu0 %v1723
      %1741 = vmatprep.subr.bf16.mxu0 0
      %1742 = vmatpush2.bf16.msra.mxu0 0
      %1743 = vmatprep.subr.bf16.mxu0 0
      %1744 = vmatpush2.bf16.msra.mxu0 0
      %1745 = vmatprep.subr.bf16.mxu0 0
      %1746 = vmatpush2.bf16.msra.mxu0 0
      %1747 = vmatprep.subr.bf16.mxu0 0
      %1748 = vmatpush2.bf16.msra.mxu0 0
      %1749 = vmatprep.subr.bf16.mxu0 0
      %1750 = vmatpush2.bf16.msra.mxu0 0
      %1751 = vmatprep.subr.bf16.mxu0 0
      %1752 = vmatpush2.bf16.msra.mxu0 0
      %1753 = vmatprep.subr.bf16.mxu0 0
      %1754 = vmatpush2.bf16.msra.mxu0 0
      %1755 = vmatprep.subr.bf16.mxu0 0
      %1756 = vmatpush2.bf16.msra.mxu0 0
      %1757 = vmatprep.mubr.bf16.mxu0 0
      %1758 = vmatmul.mubr.bf16.gmra.mxu0 %v1719
      %v1759 = vpop.f32.mrf.mxu0
      %v1760 = vadd.f32 0.0, %v1759
      %v1761 = vpop.f32.mrf.mxu0
      %v1762 = vpop.f32.mrf.mxu0
      %v1763 = vpop.f32.mrf.mxu0
      %1764 = vdwg.mxu0
      %v1766 = vsel %vm1649, %v1715, 0
      %v1769 = vsel %vm1721, %v1447, 0
      %1771 = vmatprep.subr.bf16.mxu0 0
      %1772 = vmatpush1.bf16.msra.mxu0 0
      %1773 = vmatprep.subr.bf16.mxu0 0
      %1774 = vmatpush1.bf16.msra.mxu0 0
      %1775 = vmatprep.subr.bf16.mxu0 0
      %1776 = vmatpush1.bf16.msra.mxu0 0
      %1777 = vmatprep.subr.bf16.mxu0 0
      %1778 = vmatpush1.bf16.msra.mxu0 0
      %1779 = vmatprep.subr.bf16.mxu0 0
      %1780 = vmatpush1.bf16.msra.mxu0 0
      %1781 = vmatprep.subr.bf16.mxu0 0
      %1782 = vmatpush1.bf16.msra.mxu0 0
      %1783 = vmatprep.subr.bf16.mxu0 0
      %1784 = vmatpush1.bf16.msra.mxu0 0
      %1785 = vmatprep.subr.bf16.mxu0 0
      %1786 = vmatpush1.bf16.msra.mxu0 %v1769
      %1787 = vmatprep.subr.bf16.mxu0 0
      %1788 = vmatpush2.bf16.msra.mxu0 0
      %1789 = vmatprep.subr.bf16.mxu0 0
      %1790 = vmatpush2.bf16.msra.mxu0 0
      %1791 = vmatprep.subr.bf16.mxu0 0
      %1792 = vmatpush2.bf16.msra.mxu0 0
      %1793 = vmatprep.subr.bf16.mxu0 0
      %1794 = vmatpush2.bf16.msra.mxu0 0
      %1795 = vmatprep.subr.bf16.mxu0 0
      %1796 = vmatpush2.bf16.msra.mxu0 0
      %1797 = vmatprep.subr.bf16.mxu0 0
      %1798 = vmatpush2.bf16.msra.mxu0 0
      %1799 = vmatprep.subr.bf16.mxu0 0
      %1800 = vmatpush2.bf16.msra.mxu0 0
      %1801 = vmatprep.subr.bf16.mxu0 0
      %1802 = vmatpush2.bf16.msra.mxu0 0
      %1803 = vmatprep.mubr.bf16.mxu0 0
      %1804 = vmatmul.mubr.bf16.gmra.mxu0 %v1766
      %v1805 = vpop.f32.mrf.mxu0
      %v1806 = vadd.f32 0.0, %v1805
      %v1807 = vpop.f32.mrf.mxu0
      %v1808 = vpop.f32.mrf.mxu0
      %v1809 = vpop.f32.mrf.mxu0
      %1810 = vdwg.mxu0
      %v1812 = vsel %vm1649, %v1716, 0
      %v1815 = vsel %vm1721, %v1450, 0
      %1817 = vmatprep.subr.bf16.mxu0 0
      %1818 = vmatpush1.bf16.msra.mxu0 0
      %1819 = vmatprep.subr.bf16.mxu0 0
      %1820 = vmatpush1.bf16.msra.mxu0 0
      %1821 = vmatprep.subr.bf16.mxu0 0
      %1822 = vmatpush1.bf16.msra.mxu0 0
      %1823 = vmatprep.subr.bf16.mxu0 0
      %1824 = vmatpush1.bf16.msra.mxu0 0
      %1825 = vmatprep.subr.bf16.mxu0 0
      %1826 = vmatpush1.bf16.msra.mxu0 0
      %1827 = vmatprep.subr.bf16.mxu0 0
      %1828 = vmatpush1.bf16.msra.mxu0 0
      %1829 = vmatprep.subr.bf16.mxu0 0
      %1830 = vmatpush1.bf16.msra.mxu0 0
      %1831 = vmatprep.subr.bf16.mxu0 0
      %1832 = vmatpush1.bf16.msra.mxu0 %v1815
      %1833 = vmatprep.subr.bf16.mxu0 0
      %1834 = vmatpush2.bf16.msra.mxu0 0
      %1835 = vmatprep.subr.bf16.mxu0 0
      %1836 = vmatpush2.bf16.msra.mxu0 0
      %1837 = vmatprep.subr.bf16.mxu0 0
      %1838 = vmatpush2.bf16.msra.mxu0 0
      %1839 = vmatprep.subr.bf16.mxu0 0
      %1840 = vmatpush2.bf16.msra.mxu0 0
      %1841 = vmatprep.subr.bf16.mxu0 0
      %1842 = vmatpush2.bf16.msra.mxu0 0
      %1843 = vmatprep.subr.bf16.mxu0 0
      %1844 = vmatpush2.bf16.msra.mxu0 0
      %1845 = vmatprep.subr.bf16.mxu0 0
      %1846 = vmatpush2.bf16.msra.mxu0 0
      %1847 = vmatprep.subr.bf16.mxu0 0
      %1848 = vmatpush2.bf16.msra.mxu0 0
      %1849 = vmatprep.mubr.bf16.mxu0 0
      %1850 = vmatmul.mubr.bf16.gmra.mxu0 %v1812
      %v1851 = vpop.f32.mrf.mxu0
      %v1852 = vadd.f32 0.0, %v1851
      %v1853 = vpop.f32.mrf.mxu0
      %v1854 = vpop.f32.mrf.mxu0
      %v1855 = vpop.f32.mrf.mxu0
      %1856 = vdwg.mxu0
      %v1858 = vsel %vm1649, %v1717, 0
      %v1861 = vsel %vm1721, %v1453, 0
      %1863 = vmatprep.subr.bf16.mxu0 0
      %1864 = vmatpush1.bf16.msra.mxu0 0
      %1865 = vmatprep.subr.bf16.mxu0 0
      %1866 = vmatpush1.bf16.msra.mxu0 0
      %1867 = vmatprep.subr.bf16.mxu0 0
      %1868 = vmatpush1.bf16.msra.mxu0 0
      %1869 = vmatprep.subr.bf16.mxu0 0
      %1870 = vmatpush1.bf16.msra.mxu0 0
      %1871 = vmatprep.subr.bf16.mxu0 0
      %1872 = vmatpush1.bf16.msra.mxu0 0
      %1873 = vmatprep.subr.bf16.mxu0 0
      %1874 = vmatpush1.bf16.msra.mxu0 0
      %1875 = vmatprep.subr.bf16.mxu0 0
      %1876 = vmatpush1.bf16.msra.mxu0 0
      %1877 = vmatprep.subr.bf16.mxu0 0
      %1878 = vmatpush1.bf16.msra.mxu0 %v1861
      %1879 = vmatprep.subr.bf16.mxu0 0
      %1880 = vmatpush2.bf16.msra.mxu0 0
      %1881 = vmatprep.subr.bf16.mxu0 0
      %1882 = vmatpush2.bf16.msra.mxu0 0
      %1883 = vmatprep.subr.bf16.mxu0 0
      %1884 = vmatpush2.bf16.msra.mxu0 0
      %1885 = vmatprep.subr.bf16.mxu0 0
      %1886 = vmatpush2.bf16.msra.mxu0 0
      %1887 = vmatprep.subr.bf16.mxu0 0
      %1888 = vmatpush2.bf16.msra.mxu0 0
      %1889 = vmatprep.subr.bf16.mxu0 0
      %1890 = vmatpush2.bf16.msra.mxu0 0
      %1891 = vmatprep.subr.bf16.mxu0 0
      %1892 = vmatpush2.bf16.msra.mxu0 0
      %1893 = vmatprep.subr.bf16.mxu0 0
      %1894 = vmatpush2.bf16.msra.mxu0 0
      %1895 = vmatprep.mubr.bf16.mxu0 0
      %1896 = vmatmul.mubr.bf16.gmra.mxu0 %v1858
      %v1897 = vpop.f32.mrf.mxu0
      %v1898 = vadd.f32 0.0, %v1897
      %v1899 = vpop.f32.mrf.mxu0
      %v1900 = vpop.f32.mrf.mxu0
      %v1901 = vpop.f32.mrf.mxu0
      %1902 = vdwg.mxu0
      %v1903 = vpack.c.bf16 %v1760, %v1760
      %v1905 = vunpack.c.l.s4 1983009808
      %v1906 = vunpack.c.0.s8 %v1905
      %v1907 = vlaneseq
      %v1908 = vshrl.u32 %v1907, 7
      %v1909 = vsub.s32 %v1906, %v1908
      %v1910 = vrot.slane %v1903, %v1909
      %v1911 = vpack.c.bf16 %v1852, %v1852
      %v1913 = vunpack.c.l.s4 1983009808
      %v1914 = vunpack.c.0.s8 %v1913
      %v1915 = vlaneseq
      %v1916 = vshrl.u32 %v1915, 7
      %v1917 = vsub.s32 %v1914, %v1916
      %v1918 = vrot.slane %v1911, %v1917
      %v1919 = vcombine.low %v1910, %v1918
      %v1920 = vcombine.high %v1910, %v1918
      %v1922 = vunpack.c.l.s4 1934713408
      %v1923 = vunpack.c.0.s8 %v1922
      %v1924 = vlaneseq
      %v1925 = vshrl.u32 %v1924, 7
      %v1926 = vsub.s32 %v1923, %v1925
      %v1927 = vrot.slane %v1919, %v1926
      %v1929 = vunpack.c.l.s4 1934713408
      %v1930 = vunpack.c.0.s8 %v1929
      %v1931 = vlaneseq
      %v1932 = vshrl.u32 %v1931, 7
      %v1933 = vsub.s32 %v1930, %v1932
      %v1934 = vrot.slane %v1920, %v1933
      %v1935 = vcombine.high %v1927, 0
      %v1936 = vcombine.high %v1934, 0
      %v1937 = vpack.c.bf16 %v1806, %v1806
      %v1939 = vunpack.c.l.s4 1983009808
      %v1940 = vunpack.c.0.s8 %v1939
      %v1941 = vlaneseq
      %v1942 = vshrl.u32 %v1941, 7
      %v1943 = vsub.s32 %v1940, %v1942
      %v1944 = vrot.slane %v1937, %v1943
      %v1945 = vpack.c.bf16 %v1898, %v1898
      %v1947 = vunpack.c.l.s4 1983009808
      %v1948 = vunpack.c.0.s8 %v1947
      %v1949 = vlaneseq
      %v1950 = vshrl.u32 %v1949, 7
      %v1951 = vsub.s32 %v1948, %v1950
      %v1952 = vrot.slane %v1945, %v1951
      %v1953 = vcombine.low %v1944, %v1952
      %v1954 = vcombine.high %v1944, %v1952
      %v1956 = vunpack.c.l.s4 1934713408
      %v1957 = vunpack.c.0.s8 %v1956
      %v1958 = vlaneseq
      %v1959 = vshrl.u32 %v1958, 7
      %v1960 = vsub.s32 %v1957, %v1959
      %v1961 = vrot.slane %v1953, %v1960
      %v1963 = vunpack.c.l.s4 1934713408
      %v1964 = vunpack.c.0.s8 %v1963
      %v1965 = vlaneseq
      %v1966 = vshrl.u32 %v1965, 7
      %v1967 = vsub.s32 %v1964, %v1966
      %v1968 = vrot.slane %v1954, %v1967
      %v1969 = vcombine.high %v1961, 0
      %v1970 = vcombine.high %v1968, 0
      %v1973 = vpack.i.b16 %v1961, %v1927
      %v1975 = vshrl.u32 %v1927, 16
      %v1976 = vshrl.u32 %v1961, 16
      %v1977 = vpack.i.b16 %v1976, %v1975
      %v1981 = vpack.i.b16 %v1969, %v1935
      %v1983 = vshrl.u32 %v1935, 16
      %v1984 = vshrl.u32 %v1969, 16
      %v1985 = vpack.i.b16 %v1984, %v1983
      %v1989 = vpack.i.b16 %v1968, %v1934
      %v1991 = vshrl.u32 %v1934, 16
      %v1992 = vshrl.u32 %v1968, 16
      %v1993 = vpack.i.b16 %v1992, %v1991
      %v1997 = vpack.i.b16 %v1970, %v1936
      %v1999 = vshrl.u32 %v1936, 16
      %v2000 = vshrl.u32 %v1970, 16
      %v2001 = vpack.i.b16 %v2000, %v1999
      %v2003 = vcombine.low %v1973, %v1989
      %v2005 = vunpack.c.l.s4 1983009808
      %v2006 = vunpack.c.0.s8 %v2005
      %v2007 = vlaneseq
      %v2008 = vshrl.u32 %v2007, 7
      %v2009 = vsub.s32 %v2006, %v2008
      %v2010 = vrot.slane %v2003, %v2009
      %v2011 = vcombine.low %v1981, %v1997
      %v2013 = vunpack.c.l.s4 1983009808
      %v2014 = vunpack.c.0.s8 %v2013
      %v2015 = vlaneseq
      %v2016 = vshrl.u32 %v2015, 7
      %v2017 = vsub.s32 %v2014, %v2016
      %v2018 = vrot.slane %v2011, %v2017
      %v2019 = vcombine.low %v2010, %v2018
      %v2021 = vunpack.c.l.s4 1934713408
      %v2022 = vunpack.c.0.s8 %v2021
      %v2023 = vlaneseq
      %v2024 = vshrl.u32 %v2023, 7
      %v2025 = vsub.s32 %v2022, %v2024
      %v2026 = vrot.slane %v2019, %v2025
      %v2027 = vcombine.high %v2026, 0
      %v2028 = vcombine.low %v1977, %v1993
      %v2030 = vunpack.c.l.s4 1983009808
      %v2031 = vunpack.c.0.s8 %v2030
      %v2032 = vlaneseq
      %v2033 = vshrl.u32 %v2032, 7
      %v2034 = vsub.s32 %v2031, %v2033
      %v2035 = vrot.slane %v2028, %v2034
      %v2036 = vcombine.low %v1985, %v2001
      %v2038 = vunpack.c.l.s4 1983009808
      %v2039 = vunpack.c.0.s8 %v2038
      %v2040 = vlaneseq
      %v2041 = vshrl.u32 %v2040, 7
      %v2042 = vsub.s32 %v2039, %v2041
      %v2043 = vrot.slane %v2036, %v2042
      %v2044 = vcombine.low %v2035, %v2043
      %v2046 = vunpack.c.l.s4 1934713408
      %v2047 = vunpack.c.0.s8 %v2046
      %v2048 = vlaneseq
      %v2049 = vshrl.u32 %v2048, 7
      %v2050 = vsub.s32 %v2047, %v2049
      %v2051 = vrot.slane %v2044, %v2050
      %v2052 = vcombine.high %v2051, 0
      %v2055 = vpack.i.b16 %v2051, %v2026
      %v2056 = vshrl.u32 %v2026, 16
      %v2057 = vshrl.u32 %v2051, 16
      %v2058 = vpack.i.b16 %v2057, %v2056
      %v2061 = vpack.i.b16 %v2052, %v2027
      %v2062 = vshrl.u32 %v2027, 16
      %v2063 = vshrl.u32 %v2052, 16
      %v2064 = vpack.i.b16 %v2063, %v2062
      %2065 = vrot.lane.b32.xlu0 %v2058, 32
      %v2066 = vpop.permute.xlu0 %2065
      %2067 = vrot.lane.b32.xlu0 %v2061, 64
      %v2068 = vpop.permute.xlu0 %2067
      %2069 = vrot.lane.b32.xlu0 %v2064, 96
      %v2070 = vpop.permute.xlu0 %2069
      %v2073 = vsel %vm1454, %v2055, %v2066
      %vm2074 = vcmask 523264
      %v2076 = vsel %vm2074, %v2073, %v2068
      %vm2077 = vcmask 785408
      %v2079 = vsel %vm2077, %v2076, %v2070
      %v2081 = vld [vmem:[%s8] sm:$0xf]
      %v2082 = vld [vmem:[%s8 + $0x4] sm:$0xf]
      %v2083 = vld [vmem:[%s8 + $0x8] sm:$0xf]
      %v2084 = vld [vmem:[%s8 + $0xc] sm:$0xf]
      %v2085 = vld [vmem:[%s8 + $0x10] sm:$0xf]
      %v2086 = vld [vmem:[%s8 + $0x14] sm:$0xf]
      %v2087 = vld [vmem:[%s8 + $0x18] sm:$0xf]
      %v2088 = vld [vmem:[%s8 + $0x1c] sm:$0xf]
      %v2089 = vld [vmem:[%s8 + $0x20] sm:$0xf]
      %v2090 = vld [vmem:[%s8 + $0x24] sm:$0xf]
      %v2091 = vld [vmem:[%s8 + $0x28] sm:$0xf]
      %v2092 = vld [vmem:[%s8 + $0x2c] sm:$0xf]
      %v2093 = vld [vmem:[%s8 + $0x30] sm:$0xf]
      %v2094 = vld [vmem:[%s8 + $0x34] sm:$0xf]
      %v2095 = vld [vmem:[%s8 + $0x38] sm:$0xf]
      %v2096 = vld [vmem:[%s8 + $0x3c] sm:$0xf]
      %v2097 = vld [vmem:[%s9] sm:$0x1]
      %v2099 = vlaneseq
      %v2100 = vshrl.u32 %v2099, 7
      %v2101 = vsub.s32 0, %v2100
      %v2102 = vrot.slane %v2097, %v2101
      %v2120 = vunpack.c.l.b16 %v2081
      %v2121 = vunpack.c.l.b16 %v2082
      %v2122 = vunpack.c.l.b16 %v2083
      %v2123 = vunpack.c.l.b16 %v2084
      %v2124 = vunpack.c.l.b16 %v2085
      %v2125 = vunpack.c.l.b16 %v2086
      %v2126 = vunpack.c.l.b16 %v2087
      %v2127 = vunpack.c.l.b16 %v2088
      %v2128 = vunpack.c.l.b16 %v2089
      %v2129 = vunpack.c.l.b16 %v2090
      %v2130 = vunpack.c.l.b16 %v2091
      %v2131 = vunpack.c.l.b16 %v2092
      %v2132 = vunpack.c.l.b16 %v2093
      %v2133 = vunpack.c.l.b16 %v2094
      %v2134 = vunpack.c.l.b16 %v2095
      %v2135 = vunpack.c.l.b16 %v2096
      %v2136 = vpack.c.b16 %v2121, %v2120
      %v2137 = vpack.c.b16 %v2123, %v2122
      %v2138 = vpack.c.b16 %v2125, %v2124
      %v2139 = vpack.c.b16 %v2127, %v2126
      %v2140 = vpack.c.b16 %v2129, %v2128
      %v2141 = vpack.c.b16 %v2131, %v2130
      %v2142 = vpack.c.b16 %v2133, %v2132
      %v2143 = vpack.c.b16 %v2135, %v2134
      %2152 = vmatprep.subr.bf16.mxu0 0
      %2153 = vmatpush1.bf16.msra.mxu0 %v2143
      %2154 = vmatprep.subr.bf16.mxu0 0
      %2155 = vmatpush1.bf16.msra.mxu0 %v2142
      %2156 = vmatprep.subr.bf16.mxu0 0
      %2157 = vmatpush1.bf16.msra.mxu0 %v2141
      %2158 = vmatprep.subr.bf16.mxu0 0
      %2159 = vmatpush1.bf16.msra.mxu0 %v2140
      %2160 = vmatprep.subr.bf16.mxu0 0
      %2161 = vmatpush1.bf16.msra.mxu0 %v2139
      %2162 = vmatprep.subr.bf16.mxu0 0
      %2163 = vmatpush1.bf16.msra.mxu0 %v2138
      %2164 = vmatprep.subr.bf16.mxu0 0
      %2165 = vmatpush1.bf16.msra.mxu0 %v2137
      %2166 = vmatprep.subr.bf16.mxu0 0
      %2167 = vmatpush1.bf16.msra.mxu0 %v2136
      %2168 = vmatprep.subr.bf16.mxu0 0
      %2169 = vmatpush2.bf16.msra.mxu0 0
      %2170 = vmatprep.subr.bf16.mxu0 0
      %2171 = vmatpush2.bf16.msra.mxu0 0
      %2172 = vmatprep.subr.bf16.mxu0 0
      %2173 = vmatpush2.bf16.msra.mxu0 0
      %2174 = vmatprep.subr.bf16.mxu0 0
      %2175 = vmatpush2.bf16.msra.mxu0 0
      %2176 = vmatprep.subr.bf16.mxu0 0
      %2177 = vmatpush2.bf16.msra.mxu0 0
      %2178 = vmatprep.subr.bf16.mxu0 0
      %2179 = vmatpush2.bf16.msra.mxu0 0
      %2180 = vmatprep.subr.bf16.mxu0 0
      %2181 = vmatpush2.bf16.msra.mxu0 0
      %2182 = vmatprep.subr.bf16.mxu0 0
      %2183 = vmatpush2.bf16.msra.mxu0 0
      %2184 = vmatprep.mubr.bf16.mxu0 0
      %2185 = vmatmul.mubr.bf16.gmra.mxu0 %v2079
      %v2186 = vpop.f32.mrf.mxu0
      %v2187 = vadd.f32 %v2102, %v2186
      %v2188 = vpop.f32.mrf.mxu0
      %v2189 = vpop.f32.mrf.mxu0
      %v2190 = vpop.f32.mrf.mxu0
      %2191 = vdwg.mxu0
      %v2192 = vadd.f32 %v608, %v2187
      %v2193 = vld [vmem:[%s10] sm:$0x1]
      %v2194 = vld [vmem:[%s11] sm:$0x1]
      %2195 = vadd.xlane.f32.xlu0 %v2192
      %v2196 = vpop.xlane.xlu0 %2195
      %v2197 = vrcp.pop 128.0
      %v2198 = vmul.f32 %v2196, %v2197
      %v2199 = vsub.f32 %v2192, %v2198
      %v2200 = vmul.f32 %v2199, %v2199
      %2201 = vadd.xlane.f32.xlu0 %v2200
      %v2202 = vpop.xlane.xlu0 %2201
      %v2203 = vmul.f32 %v2202, %v2197
      %v2204 = vadd.f32 %v2203, 1e-12
      %v2205 = vrsqrt.pop %v2204
      %v2206 = vmul.f32 %v2199, %v2205
      %v2208 = vlaneseq
      %v2209 = vshrl.u32 %v2208, 7
      %v2210 = vsub.s32 0, %v2209
      %v2211 = vrot.slane %v2193, %v2210
      %v2213 = vmul.f32 %v2206, %v2211
      %v2215 = vlaneseq
      %v2216 = vshrl.u32 %v2215, 7
      %v2217 = vsub.s32 0, %v2216
      %v2218 = vrot.slane %v2194, %v2217
      %v2220 = vadd.f32 %v2213, %v2218
      %v2221 = vpack.c.bf16 %v2220, %v2220
      %v2222 = vld [vmem:[%s12] sm:$0xff]
      %v2223 = vld [vmem:[%s12 + $0x8] sm:$0xff]
      %v2224 = vld [vmem:[%s12 + $0x10] sm:$0xff]
      %v2225 = vld [vmem:[%s12 + $0x18] sm:$0xff]
      %v2226 = vld [vmem:[%s12 + $0x20] sm:$0xff]
      %v2227 = vld [vmem:[%s12 + $0x28] sm:$0xff]
      %v2228 = vld [vmem:[%s12 + $0x30] sm:$0xff]
      %v2229 = vld [vmem:[%s12 + $0x38] sm:$0xff]
      %v2230 = vld [vmem:[%s12 + $0x40] sm:$0xff]
      %v2231 = vld [vmem:[%s12 + $0x48] sm:$0xff]
      %v2232 = vld [vmem:[%s12 + $0x50] sm:$0xff]
      %v2233 = vld [vmem:[%s12 + $0x58] sm:$0xff]
      %v2234 = vld [vmem:[%s12 + $0x60] sm:$0xff]
      %v2235 = vld [vmem:[%s12 + $0x68] sm:$0xff]
      %v2236 = vld [vmem:[%s12 + $0x70] sm:$0xff]
      %v2237 = vld [vmem:[%s12 + $0x78] sm:$0xff]
      %v2238 = vld [vmem:[%s13] sm:$0x3]
      %v2240 = vlaneseq
      %v2241 = vshrl.u32 %v2240, 7
      %v2242 = vsub.s32 0, %v2241
      %v2243 = vrot.slane %v2238, %v2242
      %v2244 = vlaneseq
      %v2245 = vshrl.u32 %v2244, 7
      %v2246 = vsub.s32 1, %v2245
      %v2247 = vrot.slane %v2238, %v2246
      %v2266 = vunpack.c.l.b16 %v2222
      %v2267 = vunpack.c.h.b16 %v2222
      %v2268 = vunpack.c.l.b16 %v2223
      %v2269 = vunpack.c.h.b16 %v2223
      %v2270 = vunpack.c.l.b16 %v2224
      %v2271 = vunpack.c.h.b16 %v2224
      %v2272 = vunpack.c.l.b16 %v2225
      %v2273 = vunpack.c.h.b16 %v2225
      %v2274 = vunpack.c.l.b16 %v2226
      %v2275 = vunpack.c.h.b16 %v2226
      %v2276 = vunpack.c.l.b16 %v2227
      %v2277 = vunpack.c.h.b16 %v2227
      %v2278 = vunpack.c.l.b16 %v2228
      %v2279 = vunpack.c.h.b16 %v2228
      %v2280 = vunpack.c.l.b16 %v2229
      %v2281 = vunpack.c.h.b16 %v2229
      %v2282 = vunpack.c.l.b16 %v2230
      %v2283 = vunpack.c.h.b16 %v2230
      %v2284 = vunpack.c.l.b16 %v2231
      %v2285 = vunpack.c.h.b16 %v2231
      %v2286 = vunpack.c.l.b16 %v2232
      %v2287 = vunpack.c.h.b16 %v2232
      %v2288 = vunpack.c.l.b16 %v2233
      %v2289 = vunpack.c.h.b16 %v2233
      %v2290 = vunpack.c.l.b16 %v2234
      %v2291 = vunpack.c.h.b16 %v2234
      %v2292 = vunpack.c.l.b16 %v2235
      %v2293 = vunpack.c.h.b16 %v2235
      %v2294 = vunpack.c.l.b16 %v2236
      %v2295 = vunpack.c.h.b16 %v2236
      %v2296 = vunpack.c.l.b16 %v2237
      %v2297 = vunpack.c.h.b16 %v2237
      %v2298 = vpack.c.b16 %v2268, %v2266
      %v2299 = vpack.c.b16 %v2269, %v2267
      %v2300 = vpack.c.b16 %v2272, %v2270
      %v2301 = vpack.c.b16 %v2273, %v2271
      %v2302 = vpack.c.b16 %v2276, %v2274
      %v2303 = vpack.c.b16 %v2277, %v2275
      %v2304 = vpack.c.b16 %v2280, %v2278
      %v2305 = vpack.c.b16 %v2281, %v2279
      %v2306 = vpack.c.b16 %v2284, %v2282
      %v2307 = vpack.c.b16 %v2285, %v2283
      %v2308 = vpack.c.b16 %v2288, %v2286
      %v2309 = vpack.c.b16 %v2289, %v2287
      %v2310 = vpack.c.b16 %v2292, %v2290
      %v2311 = vpack.c.b16 %v2293, %v2291
      %v2312 = vpack.c.b16 %v2296, %v2294
      %v2313 = vpack.c.b16 %v2297, %v2295
      %2330 = vmatprep.subr.bf16.mxu0 %v2313
      %2331 = vmatpush1.bf16.msra.mxu0 %v2312
      %2332 = vmatprep.subr.bf16.mxu0 %v2311
      %2333 = vmatpush1.bf16.msra.mxu0 %v2310
      %2334 = vmatprep.subr.bf16.mxu0 %v2309
      %2335 = vmatpush1.bf16.msra.mxu0 %v2308
      %2336 = vmatprep.subr.bf16.mxu0 %v2307
      %2337 = vmatpush1.bf16.msra.mxu0 %v2306
      %2338 = vmatprep.subr.bf16.mxu0 %v2305
      %2339 = vmatpush1.bf16.msra.mxu0 %v2304
      %2340 = vmatprep.subr.bf16.mxu0 %v2303
      %2341 = vmatpush1.bf16.msra.mxu0 %v2302
      %2342 = vmatprep.subr.bf16.mxu0 %v2301
      %2343 = vmatpush1.bf16.msra.mxu0 %v2300
      %2344 = vmatprep.subr.bf16.mxu0 %v2299
      %2345 = vmatpush1.bf16.msra.mxu0 %v2298
      %2346 = vmatprep.subr.bf16.mxu0 0
      %2347 = vmatpush2.bf16.msra.mxu0 0
      %2348 = vmatprep.subr.bf16.mxu0 0
      %2349 = vmatpush2.bf16.msra.mxu0 0
      %2350 = vmatprep.subr.bf16.mxu0 0
      %2351 = vmatpush2.bf16.msra.mxu0 0
      %2352 = vmatprep.subr.bf16.mxu0 0
      %2353 = vmatpush2.bf16.msra.mxu0 0
      %2354 = vmatprep.subr.bf16.mxu0 0
      %2355 = vmatpush2.bf16.msra.mxu0 0
      %2356 = vmatprep.subr.bf16.mxu0 0
      %2357 = vmatpush2.bf16.msra.mxu0 0
      %2358 = vmatprep.subr.bf16.mxu0 0
      %2359 = vmatpush2.bf16.msra.mxu0 0
      %2360 = vmatprep.subr.bf16.mxu0 0
      %2361 = vmatpush2.bf16.msra.mxu0 0
      %2362 = vmatprep.mubr.bf16.mxu0 0
      %2363 = vmatmul.mubr.bf16.gmra.mxu0 %v2221
      %v2364 = vpop.f32.mrf.mxu0
      %v2365 = vadd.f32 %v2243, %v2364
      %v2366 = vpop.f32.mrf.mxu0
      %v2367 = vadd.f32 %v2247, %v2366
      %v2368 = vpop.f32.mrf.mxu0
      %v2369 = vpop.f32.mrf.mxu0
      %2370 = vdwg.mxu0
      %v2371 = vmul.f32 %v2365, 0.5
      %v2372 = vmul.f32 %v2367, 0.5
      %v2373 = vrcp.pop 1.4142135
      %v2374 = vmul.f32 %v2365, %v2373
      %v2375 = vmul.f32 %v2367, %v2373
      %v2376 = verf.f32.pop %v2374
      %v2377 = verf.f32.pop %v2375
      %v2378 = vadd.f32 %v2376, 1.0
      %v2379 = vadd.f32 %v2377, 1.0
      %v2380 = vmul.f32 %v2371, %v2378
      %v2381 = vmul.f32 %v2372, %v2379
      %v2382 = vpack.c.bf16 %v2380, %v2380
      %v2383 = vpack.c.bf16 %v2381, %v2381
      %v2384 = vld [vmem:[%s14] sm:$0xf]
      %v2385 = vld [vmem:[%s14 + $0x4] sm:$0xf]
      %v2386 = vld [vmem:[%s14 + $0x8] sm:$0xf]
      %v2387 = vld [vmem:[%s14 + $0xc] sm:$0xf]
      %v2388 = vld [vmem:[%s14 + $0x10] sm:$0xf]
      %v2389 = vld [vmem:[%s14 + $0x14] sm:$0xf]
      %v2390 = vld [vmem:[%s14 + $0x18] sm:$0xf]
      %v2391 = vld [vmem:[%s14 + $0x1c] sm:$0xf]
      %v2392 = vld [vmem:[%s14 + $0x20] sm:$0xf]
      %v2393 = vld [vmem:[%s14 + $0x24] sm:$0xf]
      %v2394 = vld [vmem:[%s14 + $0x28] sm:$0xf]
      %v2395 = vld [vmem:[%s14 + $0x2c] sm:$0xf]
      %v2396 = vld [vmem:[%s14 + $0x30] sm:$0xf]
      %v2397 = vld [vmem:[%s14 + $0x34] sm:$0xf]
      %v2398 = vld [vmem:[%s14 + $0x38] sm:$0xf]
      %v2399 = vld [vmem:[%s14 + $0x3c] sm:$0xf]
      %v2400 = vld [vmem:[%s14 + $0x40] sm:$0xf]
      %v2401 = vld [vmem:[%s14 + $0x44] sm:$0xf]
      %v2402 = vld [vmem:[%s14 + $0x48] sm:$0xf]
      %v2403 = vld [vmem:[%s14 + $0x4c] sm:$0xf]
      %v2404 = vld [vmem:[%s14 + $0x50] sm:$0xf]
      %v2405 = vld [vmem:[%s14 + $0x54] sm:$0xf]
      %v2406 = vld [vmem:[%s14 + $0x58] sm:$0xf]
      %v2407 = vld [vmem:[%s14 + $0x5c] sm:$0xf]
      %v2408 = vld [vmem:[%s14 + $0x60] sm:$0xf]
      %v2409 = vld [vmem:[%s14 + $0x64] sm:$0xf]
      %v2410 = vld [vmem:[%s14 + $0x68] sm:$0xf]
      %v2411 = vld [vmem:[%s14 + $0x6c] sm:$0xf]
      %v2412 = vld [vmem:[%s14 + $0x70] sm:$0xf]
      %v2413 = vld [vmem:[%s14 + $0x74] sm:$0xf]
      %v2414 = vld [vmem:[%s14 + $0x78] sm:$0xf]
      %v2415 = vld [vmem:[%s14 + $0x7c] sm:$0xf]
      %v2416 = vld [vmem:[%s15] sm:$0x1]
      %v2418 = vlaneseq
      %v2419 = vshrl.u32 %v2418, 7
      %v2420 = vsub.s32 0, %v2419
      %v2421 = vrot.slane %v2416, %v2420
      %v2455 = vunpack.c.l.b16 %v2384
      %v2456 = vunpack.c.l.b16 %v2385
      %v2457 = vunpack.c.l.b16 %v2386
      %v2458 = vunpack.c.l.b16 %v2387
      %v2459 = vunpack.c.l.b16 %v2388
      %v2460 = vunpack.c.l.b16 %v2389
      %v2461 = vunpack.c.l.b16 %v2390
      %v2462 = vunpack.c.l.b16 %v2391
      %v2463 = vunpack.c.l.b16 %v2392
      %v2464 = vunpack.c.l.b16 %v2393
      %v2465 = vunpack.c.l.b16 %v2394
      %v2466 = vunpack.c.l.b16 %v2395
      %v2467 = vunpack.c.l.b16 %v2396
      %v2468 = vunpack.c.l.b16 %v2397
      %v2469 = vunpack.c.l.b16 %v2398
      %v2470 = vunpack.c.l.b16 %v2399
      %v2471 = vunpack.c.l.b16 %v2400
      %v2472 = vunpack.c.l.b16 %v2401
      %v2473 = vunpack.c.l.b16 %v2402
      %v2474 = vunpack.c.l.b16 %v2403
      %v2475 = vunpack.c.l.b16 %v2404
      %v2476 = vunpack.c.l.b16 %v2405
      %v2477 = vunpack.c.l.b16 %v2406
      %v2478 = vunpack.c.l.b16 %v2407
      %v2479 = vunpack.c.l.b16 %v2408
      %v2480 = vunpack.c.l.b16 %v2409
      %v2481 = vunpack.c.l.b16 %v2410
      %v2482 = vunpack.c.l.b16 %v2411
      %v2483 = vunpack.c.l.b16 %v2412
      %v2484 = vunpack.c.l.b16 %v2413
      %v2485 = vunpack.c.l.b16 %v2414
      %v2486 = vunpack.c.l.b16 %v2415
      %v2487 = vpack.c.b16 %v2456, %v2455
      %v2488 = vpack.c.b16 %v2458, %v2457
      %v2489 = vpack.c.b16 %v2460, %v2459
      %v2490 = vpack.c.b16 %v2462, %v2461
      %v2491 = vpack.c.b16 %v2464, %v2463
      %v2492 = vpack.c.b16 %v2466, %v2465
      %v2493 = vpack.c.b16 %v2468, %v2467
      %v2494 = vpack.c.b16 %v2470, %v2469
      %v2495 = vpack.c.b16 %v2472, %v2471
      %v2496 = vpack.c.b16 %v2474, %v2473
      %v2497 = vpack.c.b16 %v2476, %v2475
      %v2498 = vpack.c.b16 %v2478, %v2477
      %v2499 = vpack.c.b16 %v2480, %v2479
      %v2500 = vpack.c.b16 %v2482, %v2481
      %v2501 = vpack.c.b16 %v2484, %v2483
      %v2502 = vpack.c.b16 %v2486, %v2485
      %2519 = vmatprep.subr.bf16.mxu0 0
      %2520 = vmatpush1.bf16.msra.mxu0 %v2494
      %2521 = vmatprep.subr.bf16.mxu0 0
      %2522 = vmatpush1.bf16.msra.mxu0 %v2493
      %2523 = vmatprep.subr.bf16.mxu0 0
      %2524 = vmatpush1.bf16.msra.mxu0 %v2492
      %2525 = vmatprep.subr.bf16.mxu0 0
      %2526 = vmatpush1.bf16.msra.mxu0 %v2491
      %2527 = vmatprep.subr.bf16.mxu0 0
      %2528 = vmatpush1.bf16.msra.mxu0 %v2490
      %2529 = vmatprep.subr.bf16.mxu0 0
      %2530 = vmatpush1.bf16.msra.mxu0 %v2489
      %2531 = vmatprep.subr.bf16.mxu0 0
      %2532 = vmatpush1.bf16.msra.mxu0 %v2488
      %2533 = vmatprep.subr.bf16.mxu0 0
      %2534 = vmatpush1.bf16.msra.mxu0 %v2487
      %2535 = vmatprep.subr.bf16.mxu0 0
      %2536 = vmatpush2.bf16.msra.mxu0 %v2502
      %2537 = vmatprep.subr.bf16.mxu0 0
      %2538 = vmatpush2.bf16.msra.mxu0 %v2501
      %2539 = vmatprep.subr.bf16.mxu0 0
      %2540 = vmatpush2.bf16.msra.mxu0 %v2500
      %2541 = vmatprep.subr.bf16.mxu0 0
      %2542 = vmatpush2.bf16.msra.mxu0 %v2499
      %2543 = vmatprep.subr.bf16.mxu0 0
      %2544 = vmatpush2.bf16.msra.mxu0 %v2498
      %2545 = vmatprep.subr.bf16.mxu0 0
      %2546 = vmatpush2.bf16.msra.mxu0 %v2497
      %2547 = vmatprep.subr.bf16.mxu0 0
      %2548 = vmatpush2.bf16.msra.mxu0 %v2496
      %2549 = vmatprep.subr.bf16.mxu0 0
      %2550 = vmatpush2.bf16.msra.mxu0 %v2495
      %2551 = vmatprep.mubr.bf16.mxu0 %v2383
      %2552 = vmatmul.mubr.bf16.gmra.mxu0 %v2382
      %v2553 = vpop.f32.mrf.mxu0
      %v2554 = vadd.f32 %v2421, %v2553
      %v2555 = vpop.f32.mrf.mxu0
      %v2556 = vpop.f32.mrf.mxu0
      %v2557 = vpop.f32.mrf.mxu0
      %2558 = vdwg.mxu0
      %v2559 = vadd.f32 %v2220, %v2554
      %v2560 = vld [vmem:[%s16] sm:$0x1]
      %v2561 = vld [vmem:[%s17] sm:$0x1]
      %2562 = vadd.xlane.f32.xlu0 %v2559
      %v2563 = vpop.xlane.xlu0 %2562
      %v2564 = vmul.f32 %v2563, %v2197
      %v2565 = vsub.f32 %v2559, %v2564
      %v2566 = vmul.f32 %v2565, %v2565
      %2567 = vadd.xlane.f32.xlu0 %v2566
      %v2568 = vpop.xlane.xlu0 %2567
      %v2569 = vmul.f32 %v2568, %v2197
      %v2570 = vadd.f32 %v2569, 1e-12
      %v2571 = vrsqrt.pop %v2570
      %v2572 = vmul.f32 %v2565, %v2571
      %v2574 = vlaneseq
      %v2575 = vshrl.u32 %v2574, 7
      %v2576 = vsub.s32 0, %v2575
      %v2577 = vrot.slane %v2560, %v2576
      %v2579 = vmul.f32 %v2572, %v2577
      %v2581 = vlaneseq
      %v2582 = vshrl.u32 %v2581, 7
      %v2583 = vsub.s32 0, %v2582
      %v2584 = vrot.slane %v2561, %v2583
      %v2586 = vadd.f32 %v2579, %v2584
      %2587 = vst [vmem:[%s604] sm:$0xff] %v2586
      %p2588 = scmp.lt.s32.totalorder %s33, 1
      %s2589 = scalar_select %p2588, %s33, 1
      %p2590 = scmp.lt.s32.totalorder %s34, 0
      %s2591 = scalar_select %p2590, %s34, 0
      %s2592 = sadd.s32 %s2591, %s2589
      %s2593 = smul.addr %s2592, 8
      %s2594 = scalar_lea.vmem %s18, %s2593
      // Predicated region
      $region93: #{bert_forward.2} parent=91 // pred_check
        %p2595 = pneg %p449
      $region94: #{bert_forward.2} parent=91 // pred_check_branch
        %2597 = sbr.rel (%p2595) target = $region96
      $region95: #{bert_forward.2} parent=91 // pred_region
        _
      $region96: #{bert_forward.2} parent=91 // pred_fallthru
        _
    $region92: #{bert_forward.2} parent=5 // pred_fallthru
      _
    %p2598 = scmp.le.s32.totalorder 2, %s24
    // Predicated region
    $region97: #{bert_forward.2} parent=5 // pred_check
      %p2599 = pneg %p2598
    $region98: #{bert_forward.2} parent=5 // pred_check_branch
      %2601 = sbr.rel (%p2599) target = $region100
    $region99: #{bert_forward.2} parent=5 // pred_region
      %s2602 = ssub.s32 %s24, 2
      // Predicated region
      $region101: #{bert_forward.2} parent=99 // pred_check
        %p2603 = pneg %p455
      $region102: #{bert_forward.2} parent=99 // pred_check_branch
        %2605 = sbr.rel (%p2603) target = $region104
      $region103: #{bert_forward.2} parent=99 // pred_region
        %p2606 = scmp.lt.s32.totalorder %s35, 1
        %s2607 = scalar_select %p2606, %s35, 1
        %p2608 = scmp.lt.s32.totalorder %s36, 0
        %s2609 = scalar_select %p2608, %s36, 0
        %s2610 = sadd.s32 %s2609, %s2607
        %s2611 = smul.addr %s2610, 8
        %s2612 = scalar_lea.vmem %s18, %s2611
      $region104: #{bert_forward.2} parent=99 // pred_fallthru
        _
    $region100: #{bert_forward.2} parent=5 // pred_fallthru
      _
  $region6: #{bert_forward.2} parent=0 // loop_footer
    %s28 = sadd.s32 1, %s24
  $region7: #{bert_forward.2} parent=0 // loop_footer_branch
    %23 = sbr.rel target = $region3
  $region8: #{bert_forward.2} parent=0 // loop_exit
    _

// kernel: bert_forward.2
$region0: #{bert_forward.2}
  #allocation0 [shape = 'u32[]', space=smem, size = 0x4, offset = 0x4, fixed_abs, tag = 'smem constant byte address 0x4 - core index']
  #allocation1 [shape = 'u32[144,128]{1,0:T(1,128)}', space=vmem, size = 0x12000, scoped, tag = 'internal scratch']
  %s0 = inlined_call_operand.vmem [shape: f32[2,8,128], index: 0, kind: input, shape index: {}]
  %s1 = inlined_call_operand.vmem [shape: f32[2,1,8], index: 1, kind: input, shape index: {}]
  %s2 = inlined_call_operand.vmem [shape: bf16[128,128], index: 2, kind: input, shape index: {}]
  %s3 = inlined_call_operand.vmem [shape: f32[1,128], index: 3, kind: input, shape index: {}]
  %s4 = inlined_call_operand.vmem [shape: bf16[128,128], index: 4, kind: input, shape index: {}]
  %s5 = inlined_call_operand.vmem [shape: f32[1,128], index: 5, kind: input, shape index: {}]
  %s6 = inlined_call_operand.vmem [shape: bf16[128,128], index: 6, kind: input, shape index: {}]
  %s7 = inlined_call_operand.vmem [shape: f32[1,128], index: 7, kind: input, shape index: {}]
  %s8 = inlined_call_operand.vmem [shape: bf16[128,128], index: 8, kind: input, shape index: {}]
  %s9 = inlined_call_operand.vmem [shape: f32[1,128], index: 9, kind: input, shape index: {}]
  %s10 = inlined_call_operand.vmem [shape: f32[1,128], index: 10, kind: input, shape index: {}]
  %s11 = inlined_call_operand.vmem [shape: f32[1,128], index: 11, kind: input, shape index: {}]
  %s12 = inlined_call_operand.vmem [shape: bf16[128,256], index: 12, kind: input, shape index: {}]
  %s13 = inlined_call_operand.vmem [shape: f32[1,256], index: 13, kind: input, shape index: {}]
  %s14 = inlined_call_operand.vmem [shape: bf16[256,128], index: 14, kind: input, shape index: {}]
  %s15 = inlined_call_operand.vmem [shape: f32[1,128], index: 15, kind: input, shape index: {}]
  %s16 = inlined_call_operand.vmem [shape: f32[1,128], index: 16, kind: input, shape index: {}]
  %s17 = inlined_call_operand.vmem [shape: f32[1,128], index: 17, kind: input, shape index: {}]
  %s18 = inlined_call_operand.vmem [shape: f32[2,8,128], index: 18, kind: output, shape index: {}]
  %s19 = sld [smem:[#allocation0]]
  $region105: #{bert_forward.2} parent=0
    _
  %s21 = ssub.s32 1, %s19
  %s22 = scalar_select 0, %s21, %s19
  loop: start=0, step=1, limit=4
  $region2: #{bert_forward.2} parent=0 // loop_pre_header
    _
  $region3: #{bert_forward.2} parent=0 // loop_header
    %s24 = sphi 0, %s28
    %p25 = scmp.ge.s32.totalorder %s24, 4
    %s31 = sphi 0, %s43
    %s32 = sphi 0, %s39
    %s33 = sphi 0, %s31
    %s34 = sphi 0, %s32
    %s35 = sphi 0, %s33
    %s36 = sphi 0, %s34
    %s46 = sphi 0, %s48
    %s49 = sphi 0, %s46
    %s50 = sphi 0, %s49
    %s66 = sphi 0, %s50
    %s72 = sphi 0, %s74
    %s75 = sphi 0, %s72
    %s76 = sphi 0, %s75
    %s92 = sphi 0, %s76
    %s96 = sphi 0, %s96
    %s98 = sphi 0, %s96
    %s99 = sphi 0, %s98
    %s113 = sphi 0, %s99
    %s117 = sphi 0, %s117
    %s119 = sphi 0, %s117
    %s120 = sphi 0, %s119
    %s134 = sphi 0, %s120
    %s138 = sphi 0, %s138
    %s140 = sphi 0, %s138
    %s141 = sphi 0, %s140
    %s155 = sphi 0, %s141
    %s159 = sphi 0, %s159
    %s161 = sphi 0, %s159
    %s162 = sphi 0, %s161
    %s176 = sphi 0, %s162
    %s180 = sphi 0, %s180
    %s182 = sphi 0, %s180
    %s183 = sphi 0, %s182
    %s197 = sphi 0, %s183
    %s201 = sphi 0, %s201
    %s203 = sphi 0, %s201
    %s204 = sphi 0, %s203
    %s218 = sphi 0, %s204
    %s222 = sphi 0, %s222
    %s224 = sphi 0, %s222
    %s225 = sphi 0, %s224
    %s239 = sphi 0, %s225
    %s243 = sphi 0, %s243
    %s245 = sphi 0, %s243
    %s246 = sphi 0, %s245
    %s260 = sphi 0, %s246
    %s264 = sphi 0, %s264
    %s266 = sphi 0, %s264
    %s267 = sphi 0, %s266
    %s281 = sphi 0, %s267
    %s285 = sphi 0, %s285
    %s287 = sphi 0, %s285
    %s288 = sphi 0, %s287
    %s302 = sphi 0, %s288
    %s306 = sphi 0, %s306
    %s308 = sphi 0, %s306
    %s309 = sphi 0, %s308
    %s323 = sphi 0, %s309
    %s327 = sphi 0, %s327
    %s329 = sphi 0, %s327
    %s330 = sphi 0, %s329
    %s344 = sphi 0, %s330
    %s348 = sphi 0, %s348
    %s350 = sphi 0, %s348
    %s351 = sphi 0, %s350
    %s365 = sphi 0, %s351
    %s369 = sphi 0, %s369
    %s371 = sphi 0, %s369
    %s372 = sphi 0, %s371
    %s386 = sphi 0, %s372
    %s390 = sphi 0, %s390
    %s392 = sphi 0, %s390
    %s393 = sphi 0, %s392
    %s407 = sphi 0, %s393
    %s411 = sphi 0, %s411
    %s413 = sphi 0, %s411
    %s414 = sphi 0, %s413
    %s428 = sphi 0, %s414
    %s436 = sphi 0, %s438
    %s439 = sphi 0, %s436
    %s440 = sphi 0, %s439
    %s456 = sphi 0, %s440
  $region4: #{bert_forward.2} parent=0 // loop_header_branch
    %27 = sbr.rel (%p25) target = $region8
  $region5: #{bert_forward.2} parent=0 // loop_body
    %s29 = ssub.s32 %s24, 1
    %s30 = ssub.s32 %s24, 2
    %s37 = sadd.s32 1, %s32
    %p38 = scmp.ge.s32.totalorder %s37, 1
    %s39 = scalar_select %p38, 0, %s37
    %s40 = sadd.s32 1, %s31
    %s41 = scalar_select %p38, %s40, %s31
    %p42 = scmp.ge.s32.totalorder %s41, 2
    %s43 = scalar_select %p42, 0, %s41
    %s44 = ssub.s32 %s31, %s43
    %p45 = scmp.eq.s32.totalorder %s44, 0
    %s47 = sadd.s32 %s46, 1
    %s48 = scalar_select %p45, %s46, %s47
    %p51 = pneg %p45
    %p52 = scmp.eq.s32.totalorder %s24, 1
    %p53 = por %p51, %p52
    %p54 = scmp.ne.s32.totalorder %s46, %s49
    %p55 = scmp.eq.s32.totalorder %s24, 0
    %p56 = por %p54, %p55
    %p57 = scmp.ne.s32.totalorder %s46, %s49
    %p58 = scmp.eq.s32.totalorder %s29, 1
    %p59 = por %p57, %p58
    %p60 = scmp.ne.s32.totalorder %s49, %s50
    %p61 = scmp.eq.s32.totalorder %s29, 0
    %p62 = por %p60, %p61
    %p63 = scmp.ne.s32.totalorder %s49, %s50
    %p64 = scmp.eq.s32.totalorder %s30, 1
    %p65 = por %p63, %p64
    %p67 = scmp.ne.s32.totalorder %s50, %s66
    %p68 = scmp.eq.s32.totalorder %s30, 0
    %p69 = por %p67, %p68
    %s70 = ssub.s32 %s31, %s43
    %p71 = scmp.eq.s32.totalorder %s70, 0
    %s73 = sadd.s32 %s72, 1
    %s74 = scalar_select %p71, %s72, %s73
    %p77 = pneg %p71
    %p78 = scmp.eq.s32.totalorder %s24, 1
    %p79 = por %p77, %p78
    %p80 = scmp.ne.s32.totalorder %s72, %s75
    %p81 = scmp.eq.s32.totalorder %s24, 0
    %p82 = por %p80, %p81
    %p83 = scmp.ne.s32.totalorder %s72, %s75
    %p84 = scmp.eq.s32.totalorder %s29, 1
    %p85 = por %p83, %p84
    %p86 = scmp.ne.s32.totalorder %s75, %s76
    %p87 = scmp.eq.s32.totalorder %s29, 0
    %p88 = por %p86, %p87
    %p89 = scmp.ne.s32.totalorder %s75, %s76
    %p90 = scmp.eq.s32.totalorder %s30, 1
    %p91 = por %p89, %p90
    %p93 = scmp.ne.s32.totalorder %s76, %s92
    %p94 = scmp.eq.s32.totalorder %s30, 0
    %p95 = por %p93, %p94
    %s97 = sadd.s32 %s96, 1
    %p100 = scmp.eq.s32.totalorder %s24, 1
    %p101 = scmp.ne.s32.totalorder %s96, %s98
    %p102 = scmp.eq.s32.totalorder %s24, 0
    %p103 = por %p101, %p102
    %p104 = scmp.ne.s32.totalorder %s96, %s98
    %p105 = scmp.eq.s32.totalorder %s29, 1
    %p106 = por %p104, %p105
    %p107 = scmp.ne.s32.totalorder %s98, %s99
    %p108 = scmp.eq.s32.totalorder %s29, 0
    %p109 = por %p107, %p108
    %p110 = scmp.ne.s32.totalorder %s98, %s99
    %p111 = scmp.eq.s32.totalorder %s30, 1
    %p112 = por %p110, %p111
    %p114 = scmp.ne.s32.totalorder %s99, %s113
    %p115 = scmp.eq.s32.totalorder %s30, 0
    %p116 = por %p114, %p115
    %s118 = sadd.s32 %s117, 1
    %p121 = scmp.eq.s32.totalorder %s24, 1
    %p122 = scmp.ne.s32.totalorder %s117, %s119
    %p123 = scmp.eq.s32.totalorder %s24, 0
    %p124 = por %p122, %p123
    %p125 = scmp.ne.s32.totalorder %s117, %s119
    %p126 = scmp.eq.s32.totalorder %s29, 1
    %p127 = por %p125, %p126
    %p128 = scmp.ne.s32.totalorder %s119, %s120
    %p129 = scmp.eq.s32.totalorder %s29, 0
    %p130 = por %p128, %p129
    %p131 = scmp.ne.s32.totalorder %s119, %s120
    %p132 = scmp.eq.s32.totalorder %s30, 1
    %p133 = por %p131, %p132
    %p135 = scmp.ne.s32.totalorder %s120, %s134
    %p136 = scmp.eq.s32.totalorder %s30, 0
    %p137 = por %p135, %p136
    %s139 = sadd.s32 %s138, 1
    %p142 = scmp.eq.s32.totalorder %s24, 1
    %p143 = scmp.ne.s32.totalorder %s138, %s140
    %p144 = scmp.eq.s32.totalorder %s24, 0
    %p145 = por %p143, %p144
    %p146 = scmp.ne.s32.totalorder %s138, %s140
    %p147 = scmp.eq.s32.totalorder %s29, 1
    %p148 = por %p146, %p147
    %p149 = scmp.ne.s32.totalorder %s140, %s141
    %p150 = scmp.eq.s32.totalorder %s29, 0
    %p151 = por %p149, %p150
    %p152 = scmp.ne.s32.totalorder %s140, %s141
    %p153 = scmp.eq.s32.totalorder %s30, 1
    %p154 = por %p152, %p153
    %p156 = scmp.ne.s32.totalorder %s141, %s155
    %p157 = scmp.eq.s32.totalorder %s30, 0
    %p158 = por %p156, %p157
    %s160 = sadd.s32 %s159, 1
    %p163 = scmp.eq.s32.totalorder %s24, 1
    %p164 = scmp.ne.s32.totalorder %s159, %s161
    %p165 = scmp.eq.s32.totalorder %s24, 0
    %p166 = por %p164, %p165
    %p167 = scmp.ne.s32.totalorder %s159, %s161
    %p168 = scmp.eq.s32.totalorder %s29, 1
    %p169 = por %p167, %p168
    %p170 = scmp.ne.s32.totalorder %s161, %s162
    %p171 = scmp.eq.s32.totalorder %s29, 0
    %p172 = por %p170, %p171
    %p173 = scmp.ne.s32.totalorder %s161, %s162
    %p174 = scmp.eq.s32.totalorder %s30, 1
    %p175 = por %p173, %p174
    %p177 = scmp.ne.s32.totalorder %s162, %s176
    %p178 = scmp.eq.s32.totalorder %s30, 0
    %p179 = por %p177, %p178
    %s181 = sadd.s32 %s180, 1
    %p184 = scmp.eq.s32.totalorder %s24, 1
    %p185 = scmp.ne.s32.totalorder %s180, %s182
    %p186 = scmp.eq.s32.totalorder %s24, 0
    %p187 = por %p185, %p186
    %p188 = scmp.ne.s32.totalorder %s180, %s182
    %p189 = scmp.eq.s32.totalorder %s29, 1
    %p190 = por %p188, %p189
    %p191 = scmp.ne.s32.totalorder %s182, %s183
    %p192 = scmp.eq.s32.totalorder %s29, 0
    %p193 = por %p191, %p192
    %p194 = scmp.ne.s32.totalorder %s182, %s183
    %p195 = scmp.eq.s32.totalorder %s30, 1
    %p196 = por %p194, %p195
    %p198 = scmp.ne.s32.totalorder %s183, %s197
    %p199 = scmp.eq.s32.totalorder %s30, 0
    %p200 = por %p198, %p199
    %s202 = sadd.s32 %s201, 1
    %p205 = scmp.eq.s32.totalorder %s24, 1
    %p206 = scmp.ne.s32.totalorder %s201, %s203
    %p207 = scmp.eq.s32.totalorder %s24, 0
    %p208 = por %p206, %p207
    %p209 = scmp.ne.s32.totalorder %s201, %s203
    %p210 = scmp.eq.s32.totalorder %s29, 1
    %p211 = por %p209, %p210
    %p212 = scmp.ne.s32.totalorder %s203, %s204
    %p213 = scmp.eq.s32.totalorder %s29, 0
    %p214 = por %p212, %p213
    %p215 = scmp.ne.s32.totalorder %s203, %s204
    %p216 = scmp.eq.s32.totalorder %s30, 1
    %p217 = por %p215, %p216
    %p219 = scmp.ne.s32.totalorder %s204, %s218
    %p220 = scmp.eq.s32.totalorder %s30, 0
    %p221 = por %p219, %p220
    %s223 = sadd.s32 %s222, 1
    %p226 = scmp.eq.s32.totalorder %s24, 1
    %p227 = scmp.ne.s32.totalorder %s222, %s224
    %p228 = scmp.eq.s32.totalorder %s24, 0
    %p229 = por %p227, %p228
    %p230 = scmp.ne.s32.totalorder %s222, %s224
    %p231 = scmp.eq.s32.totalorder %s29, 1
    %p232 = por %p230, %p231
    %p233 = scmp.ne.s32.totalorder %s224, %s225
    %p234 = scmp.eq.s32.totalorder %s29, 0
    %p235 = por %p233, %p234
    %p236 = scmp.ne.s32.totalorder %s224, %s225
    %p237 = scmp.eq.s32.totalorder %s30, 1
    %p238 = por %p236, %p237
    %p240 = scmp.ne.s32.totalorder %s225, %s239
    %p241 = scmp.eq.s32.totalorder %s30, 0
    %p242 = por %p240, %p241
    %s244 = sadd.s32 %s243, 1
    %p247 = scmp.eq.s32.totalorder %s24, 1
    %p248 = scmp.ne.s32.totalorder %s243, %s245
    %p249 = scmp.eq.s32.totalorder %s24, 0
    %p250 = por %p248, %p249
    %p251 = scmp.ne.s32.totalorder %s243, %s245
    %p252 = scmp.eq.s32.totalorder %s29, 1
    %p253 = por %p251, %p252
    %p254 = scmp.ne.s32.totalorder %s245, %s246
    %p255 = scmp.eq.s32.totalorder %s29, 0
    %p256 = por %p254, %p255
    %p257 = scmp.ne.s32.totalorder %s245, %s246
    %p258 = scmp.eq.s32.totalorder %s30, 1
    %p259 = por %p257, %p258
    %p261 = scmp.ne.s32.totalorder %s246, %s260
    %p262 = scmp.eq.s32.totalorder %s30, 0
    %p263 = por %p261, %p262
    %s265 = sadd.s32 %s264, 1
    %p268 = scmp.eq.s32.totalorder %s24, 1
    %p269 = scmp.ne.s32.totalorder %s264, %s266
    %p270 = scmp.eq.s32.totalorder %s24, 0
    %p271 = por %p269, %p270
    %p272 = scmp.ne.s32.totalorder %s264, %s266
    %p273 = scmp.eq.s32.totalorder %s29, 1
    %p274 = por %p272, %p273
    %p275 = scmp.ne.s32.totalorder %s266, %s267
    %p276 = scmp.eq.s32.totalorder %s29, 0
    %p277 = por %p275, %p276
    %p278 = scmp.ne.s32.totalorder %s266, %s267
    %p279 = scmp.eq.s32.totalorder %s30, 1
    %p280 = por %p278, %p279
    %p282 = scmp.ne.s32.totalorder %s267, %s281
    %p283 = scmp.eq.s32.totalorder %s30, 0
    %p284 = por %p282, %p283
    %s286 = sadd.s32 %s285, 1
    %p289 = scmp.eq.s32.totalorder %s24, 1
    %p290 = scmp.ne.s32.totalorder %s285, %s287
    %p291 = scmp.eq.s32.totalorder %s24, 0
    %p292 = por %p290, %p291
    %p293 = scmp.ne.s32.totalorder %s285, %s287
    %p294 = scmp.eq.s32.totalorder %s29, 1
    %p295 = por %p293, %p294
    %p296 = scmp.ne.s32.totalorder %s287, %s288
    %p297 = scmp.eq.s32.totalorder %s29, 0
    %p298 = por %p296, %p297
    %p299 = scmp.ne.s32.totalorder %s287, %s288
    %p300 = scmp.eq.s32.totalorder %s30, 1
    %p301 = por %p299, %p300
    %p303 = scmp.ne.s32.totalorder %s288, %s302
    %p304 = scmp.eq.s32.totalorder %s30, 0
    %p305 = por %p303, %p304
    %s307 = sadd.s32 %s306, 1
    %p310 = scmp.eq.s32.totalorder %s24, 1
    %p311 = scmp.ne.s32.totalorder %s306, %s308
    %p312 = scmp.eq.s32.totalorder %s24, 0
    %p313 = por %p311, %p312
    %p314 = scmp.ne.s32.totalorder %s306, %s308
    %p315 = scmp.eq.s32.totalorder %s29, 1
    %p316 = por %p314, %p315
    %p317 = scmp.ne.s32.totalorder %s308, %s309
    %p318 = scmp.eq.s32.totalorder %s29, 0
    %p319 = por %p317, %p318
    %p320 = scmp.ne.s32.totalorder %s308, %s309
    %p321 = scmp.eq.s32.totalorder %s30, 1
    %p322 = por %p320, %p321
    %p324 = scmp.ne.s32.totalorder %s309, %s323
    %p325 = scmp.eq.s32.totalorder %s30, 0
    %p326 = por %p324, %p325
    %s328 = sadd.s32 %s327, 1
    %p331 = scmp.eq.s32.totalorder %s24, 1
    %p332 = scmp.ne.s32.totalorder %s327, %s329
    %p333 = scmp.eq.s32.totalorder %s24, 0
    %p334 = por %p332, %p333
    %p335 = scmp.ne.s32.totalorder %s327, %s329
    %p336 = scmp.eq.s32.totalorder %s29, 1
    %p337 = por %p335, %p336
    %p338 = scmp.ne.s32.totalorder %s329, %s330
    %p339 = scmp.eq.s32.totalorder %s29, 0
    %p340 = por %p338, %p339
    %p341 = scmp.ne.s32.totalorder %s329, %s330
    %p342 = scmp.eq.s32.totalorder %s30, 1
    %p343 = por %p341, %p342
    %p345 = scmp.ne.s32.totalorder %s330, %s344
    %p346 = scmp.eq.s32.totalorder %s30, 0
    %p347 = por %p345, %p346
    %s349 = sadd.s32 %s348, 1
    %p352 = scmp.eq.s32.totalorder %s24, 1
    %p353 = scmp.ne.s32.totalorder %s348, %s350
    %p354 = scmp.eq.s32.totalorder %s24, 0
    %p355 = por %p353, %p354
    %p356 = scmp.ne.s32.totalorder %s348, %s350
    %p357 = scmp.eq.s32.totalorder %s29, 1
    %p358 = por %p356, %p357
    %p359 = scmp.ne.s32.totalorder %s350, %s351
    %p360 = scmp.eq.s32.totalorder %s29, 0
    %p361 = por %p359, %p360
    %p362 = scmp.ne.s32.totalorder %s350, %s351
    %p363 = scmp.eq.s32.totalorder %s30, 1
    %p364 = por %p362, %p363
    %p366 = scmp.ne.s32.totalorder %s351, %s365
    %p367 = scmp.eq.s32.totalorder %s30, 0
    %p368 = por %p366, %p367
    %s370 = sadd.s32 %s369, 1
    %p373 = scmp.eq.s32.totalorder %s24, 1
    %p374 = scmp.ne.s32.totalorder %s369, %s371
    %p375 = scmp.eq.s32.totalorder %s24, 0
    %p376 = por %p374, %p375
    %p377 = scmp.ne.s32.totalorder %s369, %s371
    %p378 = scmp.eq.s32.totalorder %s29, 1
    %p379 = por %p377, %p378
    %p380 = scmp.ne.s32.totalorder %s371, %s372
    %p381 = scmp.eq.s32.totalorder %s29, 0
    %p382 = por %p380, %p381
    %p383 = scmp.ne.s32.totalorder %s371, %s372
    %p384 = scmp.eq.s32.totalorder %s30, 1
    %p385 = por %p383, %p384
    %p387 = scmp.ne.s32.totalorder %s372, %s386
    %p388 = scmp.eq.s32.totalorder %s30, 0
    %p389 = por %p387, %p388
    %s391 = sadd.s32 %s390, 1
    %p394 = scmp.eq.s32.totalorder %s24, 1
    %p395 = scmp.ne.s32.totalorder %s390, %s392
    %p396 = scmp.eq.s32.totalorder %s24, 0
    %p397 = por %p395, %p396
    %p398 = scmp.ne.s32.totalorder %s390, %s392
    %p399 = scmp.eq.s32.totalorder %s29, 1
    %p400 = por %p398, %p399
    %p401 = scmp.ne.s32.totalorder %s392, %s393
    %p402 = scmp.eq.s32.totalorder %s29, 0
    %p403 = por %p401, %p402
    %p404 = scmp.ne.s32.totalorder %s392, %s393
    %p405 = scmp.eq.s32.totalorder %s30, 1
    %p406 = por %p404, %p405
    %p408 = scmp.ne.s32.totalorder %s393, %s407
    %p409 = scmp.eq.s32.totalorder %s30, 0
    %p410 = por %p408, %p409
    %s412 = sadd.s32 %s411, 1
    %p415 = scmp.eq.s32.totalorder %s24, 1
    %p416 = scmp.ne.s32.totalorder %s411, %s413
    %p417 = scmp.eq.s32.totalorder %s24, 0
    %p418 = por %p416, %p417
    %p419 = scmp.ne.s32.totalorder %s411, %s413
    %p420 = scmp.eq.s32.totalorder %s29, 1
    %p421 = por %p419, %p420
    %p422 = scmp.ne.s32.totalorder %s413, %s414
    %p423 = scmp.eq.s32.totalorder %s29, 0
    %p424 = por %p422, %p423
    %p425 = scmp.ne.s32.totalorder %s413, %s414
    %p426 = scmp.eq.s32.totalorder %s30, 1
    %p427 = por %p425, %p426
    %p429 = scmp.ne.s32.totalorder %s414, %s428
    %p430 = scmp.eq.s32.totalorder %s30, 0
    %p431 = por %p429, %p430
    %s432 = ssub.s32 %s31, %s43
    %s433 = ssub.s32 %s32, %s39
    %s434 = sor.u32 %s432, %s433
    %p435 = scmp.eq.s32.totalorder %s434, 0
    %s437 = sadd.s32 %s436, 1
    %s438 = scalar_select %p435, %s436, %s437
    %p441 = pneg %p435
    %p442 = scmp.eq.s32.totalorder %s24, 1
    %p443 = por %p441, %p442
    %p444 = scmp.ne.s32.totalorder %s436, %s439
    %p445 = scmp.eq.s32.totalorder %s24, 0
    %p446 = por %p444, %p445
    %p447 = scmp.ne.s32.totalorder %s436, %s439
    %p448 = scmp.eq.s32.totalorder %s29, 1
    %p449 = por %p447, %p448
    %p450 = scmp.ne.s32.totalorder %s439, %s440
    %p451 = scmp.eq.s32.totalorder %s29, 0
    %p452 = por %p450, %p451
    %p453 = scmp.ne.s32.totalorder %s439, %s440
    %p454 = scmp.eq.s32.totalorder %s30, 1
    %p455 = por %p453, %p454
    %p457 = scmp.ne.s32.totalorder %s440, %s456
    %p458 = scmp.eq.s32.totalorder %s30, 0
    %p459 = por %p457, %p458
    %p460 = scmp.le.s32.totalorder 1, %s24
    %p461 = scmp.lt.s32.totalorder %s24, 3
    %p462 = pnand %p460, %p461
    %p463 = pneg %p462
    // Predicated region
    $region9: #{bert_forward.2} parent=5 // pred_check
      _
    $region10: #{bert_forward.2} parent=5 // pred_check_branch
      %465 = sbr.rel (%p462) target = $region12
    $region11: #{bert_forward.2} parent=5 // pred_region
      %s466 = ssub.s32 %s24, 1
      // Predicated region
      $region13: #{bert_forward.2} parent=11 // pred_check
        %p467 = pneg %p109
      $region14: #{bert_forward.2} parent=11 // pred_check_branch
        %469 = sbr.rel (%p467) target = $region16
      $region15: #{bert_forward.2} parent=11 // pred_region
        _
      $region16: #{bert_forward.2} parent=11 // pred_fallthru
        _
      // Predicated region
      $region17: #{bert_forward.2} parent=11 // pred_check
        %p470 = pneg %p130
      $region18: #{bert_forward.2} parent=11 // pred_check_branch
        %472 = sbr.rel (%p470) target = $region20
      $region19: #{bert_forward.2} parent=11 // pred_region
        _
      $region20: #{bert_forward.2} parent=11 // pred_fallthru
        _
      // Predicated region
      $region21: #{bert_forward.2} parent=11 // pred_check
        %p473 = pneg %p151
      $region22: #{bert_forward.2} parent=11 // pred_check_branch
        %475 = sbr.rel (%p473) target = $region24
      $region23: #{bert_forward.2} parent=11 // pred_region
        _
      $region24: #{bert_forward.2} parent=11 // pred_fallthru
        _
      // Predicated region
      $region25: #{bert_forward.2} parent=11 // pred_check
        %p476 = pneg %p172
      $region26: #{bert_forward.2} parent=11 // pred_check_branch
        %478 = sbr.rel (%p476) target = $region28
      $region27: #{bert_forward.2} parent=11 // pred_region
        _
      $region28: #{bert_forward.2} parent=11 // pred_fallthru
        _
      // Predicated region
      $region29: #{bert_forward.2} parent=11 // pred_check
        %p479 = pneg %p193
      $region30: #{bert_forward.2} parent=11 // pred_check_branch
        %481 = sbr.rel (%p479) target = $region32
      $region31: #{bert_forward.2} parent=11 // pred_region
        _
      $region32: #{bert_forward.2} parent=11 // pred_fallthru
        _
      // Predicated region
      $region33: #{bert_forward.2} parent=11 // pred_check
        %p482 = pneg %p214
      $region34: #{bert_forward.2} parent=11 // pred_check_branch
        %484 = sbr.rel (%p482) target = $region36
      $region35: #{bert_forward.2} parent=11 // pred_region
        _
      $region36: #{bert_forward.2} parent=11 // pred_fallthru
        _
      // Predicated region
      $region37: #{bert_forward.2} parent=11 // pred_check
        %p485 = pneg %p235
      $region38: #{bert_forward.2} parent=11 // pred_check_branch
        %487 = sbr.rel (%p485) target = $region40
      $region39: #{bert_forward.2} parent=11 // pred_region
        _
      $region40: #{bert_forward.2} parent=11 // pred_fallthru
        _
      // Predicated region
      $region41: #{bert_forward.2} parent=11 // pred_check
        %p488 = pneg %p256
      $region42: #{bert_forward.2} parent=11 // pred_check_branch
        %490 = sbr.rel (%p488) target = $region44
      $region43: #{bert_forward.2} parent=11 // pred_region
        _
      $region44: #{bert_forward.2} parent=11 // pred_fallthru
        _
      // Predicated region
      $region45: #{bert_forward.2} parent=11 // pred_check
        %p491 = pneg %p277
      $region46: #{bert_forward.2} parent=11 // pred_check_branch
        %493 = sbr.rel (%p491) target = $region48
      $region47: #{bert_forward.2} parent=11 // pred_region
        _
      $region48: #{bert_forward.2} parent=11 // pred_fallthru
        _
      // Predicated region
      $region49: #{bert_forward.2} parent=11 // pred_check
        %p494 = pneg %p298
      $region50: #{bert_forward.2} parent=11 // pred_check_branch
        %496 = sbr.rel (%p494) target = $region52
      $region51: #{bert_forward.2} parent=11 // pred_region
        _
      $region52: #{bert_forward.2} parent=11 // pred_fallthru
        _
      // Predicated region
      $region53: #{bert_forward.2} parent=11 // pred_check
        %p497 = pneg %p319
      $region54: #{bert_forward.2} parent=11 // pred_check_branch
        %499 = sbr.rel (%p497) target = $region56
      $region55: #{bert_forward.2} parent=11 // pred_region
        _
      $region56: #{bert_forward.2} parent=11 // pred_fallthru
        _
      // Predicated region
      $region57: #{bert_forward.2} parent=11 // pred_check
        %p500 = pneg %p340
      $region58: #{bert_forward.2} parent=11 // pred_check_branch
        %502 = sbr.rel (%p500) target = $region60
      $region59: #{bert_forward.2} parent=11 // pred_region
        _
      $region60: #{bert_forward.2} parent=11 // pred_fallthru
        _
      // Predicated region
      $region61: #{bert_forward.2} parent=11 // pred_check
        %p503 = pneg %p361
      $region62: #{bert_forward.2} parent=11 // pred_check_branch
        %505 = sbr.rel (%p503) target = $region64
      $region63: #{bert_forward.2} parent=11 // pred_region
        _
      $region64: #{bert_forward.2} parent=11 // pred_fallthru
        _
      // Predicated region
      $region65: #{bert_forward.2} parent=11 // pred_check
        %p506 = pneg %p382
      $region66: #{bert_forward.2} parent=11 // pred_check_branch
        %508 = sbr.rel (%p506) target = $region68
      $region67: #{bert_forward.2} parent=11 // pred_region
        _
      $region68: #{bert_forward.2} parent=11 // pred_fallthru
        _
      // Predicated region
      $region69: #{bert_forward.2} parent=11 // pred_check
        %p509 = pneg %p403
      $region70: #{bert_forward.2} parent=11 // pred_check_branch
        %511 = sbr.rel (%p509) target = $region72
      $region71: #{bert_forward.2} parent=11 // pred_region
        _
      $region72: #{bert_forward.2} parent=11 // pred_fallthru
        _
      // Predicated region
      $region73: #{bert_forward.2} parent=11 // pred_check
        %p512 = pneg %p424
      $region74: #{bert_forward.2} parent=11 // pred_check_branch
        %514 = sbr.rel (%p512) target = $region76
      $region75: #{bert_forward.2} parent=11 // pred_region
        _
      $region76: #{bert_forward.2} parent=11 // pred_fallthru
        _
    $region12: #{bert_forward.2} parent=5 // pred_fallthru
      _
    %p515 = scmp.lt.s32.totalorder %s24, 2
    // Predicated region
    $region77: #{bert_forward.2} parent=5 // pred_check
      %p516 = pneg %p515
    $region78: #{bert_forward.2} parent=5 // pred_check_branch
      %518 = sbr.rel (%p516) target = $region80
    $region79: #{bert_forward.2} parent=5 // pred_region
      // Predicated region
      $region81: #{bert_forward.2} parent=79 // pred_check
        %p519 = pneg %p56
      $region82: #{bert_forward.2} parent=79 // pred_check_branch
        %521 = sbr.rel (%p519) target = $region84
      $region83: #{bert_forward.2} parent=79 // pred_region
        %p522 = scmp.lt.s32.totalorder %s31, 1
        %s523 = scalar_select %p522, %s31, 1
        %s524 = smul.addr %s523, 8
        %s525 = scalar_lea.vmem %s0, %s524
      $region84: #{bert_forward.2} parent=79 // pred_fallthru
        _
      // Predicated region
      $region85: #{bert_forward.2} parent=79 // pred_check
        %p526 = pneg %p82
      $region86: #{bert_forward.2} parent=79 // pred_check_branch
        %528 = sbr.rel (%p526) target = $region88
      $region87: #{bert_forward.2} parent=79 // pred_region
        %p529 = scmp.lt.s32.totalorder %s31, 1
        %s530 = scalar_select %p529, %s31, 1
        %s531 = scalar_lea.vmem %s1, %s530
      $region88: #{bert_forward.2} parent=79 // pred_fallthru
        _
    $region80: #{bert_forward.2} parent=5 // pred_fallthru
      _
    %p532 = scmp.le.s32.totalorder 1, %s24
    %p533 = scmp.lt.s32.totalorder %s24, 3
    %p534 = pnand %p532, %p533
    %p535 = pneg %p534
    // Predicated region
    $region89: #{bert_forward.2} parent=5 // pred_check
      _
    $region90: #{bert_forward.2} parent=5 // pred_check_branch
      %537 = sbr.rel (%p534) target = $region92
    $region91: #{bert_forward.2} parent=5 // pred_region
      %s538 = ssub.s32 %s24, 1
      %p539 = scmp.lt.s32.totalorder %s33, 1
      %s540 = scalar_select %p539, %s33, 1
      %s541 = smul.addr %s540, 8
      %s542 = scalar_lea.vmem %s0, %s541
      %p543 = pneg %p62
      %p544 = pneg %p59
      %p545 = scmp.lt.s32.totalorder %s33, 1
      %s546 = scalar_select %p545, %s33, 1
      %s547 = scalar_lea.vmem %s1, %s546
      %p548 = pneg %p88
      %p549 = pneg %p85
      %p550 = pneg %p109
      %p551 = pneg %p106
      %p552 = pneg %p130
      %p553 = pneg %p127
      %p554 = pneg %p151
      %p555 = pneg %p148
      %p556 = pneg %p172
      %p557 = pneg %p169
      %p558 = pneg %p193
      %p559 = pneg %p190
      %p560 = pneg %p214
      %p561 = pneg %p211
      %p562 = pneg %p235
      %p563 = pneg %p232
      %p564 = pneg %p256
      %p565 = pneg %p253
      %p566 = pneg %p277
      %p567 = pneg %p274
      %p568 = pneg %p298
      %p569 = pneg %p295
      %p570 = pneg %p319
      %p571 = pneg %p316
      %p572 = pneg %p340
      %p573 = pneg %p337
      %p574 = pneg %p361
      %p575 = pneg %p358
      %p576 = pneg %p382
      %p577 = pneg %p379
      %p578 = pneg %p403
      %p579 = pneg %p400
      %p580 = pneg %p424
      %p581 = pneg %p421
      %p582 = pneg %p452
      %p583 = pneg %p449
      %p584 = scmp.lt.s32.totalorder %s33, 1
      %s585 = scalar_select %p584, %s33, 1
      %p586 = scmp.lt.s32.totalorder %s34, 0
      %s587 = scalar_select %p586, %s34, 0
      %s588 = sadd.s32 %s587, %s585
      %s589 = smul.addr %s588, 8
      %s590 = scalar_lea.vmem %s18, %s589
      %p591 = scmp.lt.s32.totalorder %s33, 1
      %s592 = scalar_select %p591, %s33, 1
      %s593 = smul.addr %s592, 8
      %s594 = scalar_lea.vmem %s0, %s593
      %p595 = scmp.lt.s32.totalorder %s33, 1
      %s596 = scalar_select %p595, %s33, 1
      %s597 = scalar_lea.vmem %s1, %s596
      %p598 = scmp.lt.s32.totalorder %s33, 1
      %s599 = scalar_select %p598, %s33, 1
      %p600 = scmp.lt.s32.totalorder %s34, 0
      %s601 = scalar_select %p600, %s34, 0
      %s602 = sadd.s32 %s601, %s599
      %s603 = smul.addr %s602, 8
      %s604 = scalar_lea.vmem %s18, %s603
      %s606 = smul.u32 %s34, 8
      %s607 = scalar_lea.vmem %s594, %s606
      %v608 = vld [vmem:[%s607] sm:$0xff]
      %v609 = vld [vmem:[%s594] sm:$0xff]
      %v610 = vld [vmem:[%s597] sm:$0x1]
      %v611 = vpack.c.bf16 %v608, %v608
      %v612 = vpack.c.bf16 %v609, %v609
      %v613 = vld [vmem:[%s2] sm:$0xf]
      %v614 = vld [vmem:[%s2 + $0x4] sm:$0xf]
      %v615 = vld [vmem:[%s2 + $0x8] sm:$0xf]
      %v616 = vld [vmem:[%s2 + $0xc] sm:$0xf]
      %v617 = vld [vmem:[%s2 + $0x10] sm:$0xf]
      %v618 = vld [vmem:[%s2 + $0x14] sm:$0xf]
      %v619 = vld [vmem:[%s2 + $0x18] sm:$0xf]
      %v620 = vld [vmem:[%s2 + $0x1c] sm:$0xf]
      %v621 = vld [vmem:[%s2 + $0x20] sm:$0xf]
      %v622 = vld [vmem:[%s2 + $0x24] sm:$0xf]
      %v623 = vld [vmem:[%s2 + $0x28] sm:$0xf]
      %v624 = vld [vmem:[%s2 + $0x2c] sm:$0xf]
      %v625 = vld [vmem:[%s2 + $0x30] sm:$0xf]
      %v626 = vld [vmem:[%s2 + $0x34] sm:$0xf]
      %v627 = vld [vmem:[%s2 + $0x38] sm:$0xf]
      %v628 = vld [vmem:[%s2 + $0x3c] sm:$0xf]
      %v629 = vld [vmem:[%s3] sm:$0x1]
      %v631 = vlaneseq
      %v632 = vshrl.u32 %v631, 7
      %v633 = vsub.s32 0, %v632
      %v634 = vrot.slane %v629, %v633
      %v652 = vunpack.c.l.b16 %v613
      %v653 = vunpack.c.l.b16 %v614
      %v654 = vunpack.c.l.b16 %v615
      %v655 = vunpack.c.l.b16 %v616
      %v656 = vunpack.c.l.b16 %v617
      %v657 = vunpack.c.l.b16 %v618
      %v658 = vunpack.c.l.b16 %v619
      %v659 = vunpack.c.l.b16 %v620
      %v660 = vunpack.c.l.b16 %v621
      %v661 = vunpack.c.l.b16 %v622
      %v662 = vunpack.c.l.b16 %v623
      %v663 = vunpack.c.l.b16 %v624
      %v664 = vunpack.c.l.b16 %v625
      %v665 = vunpack.c.l.b16 %v626
      %v666 = vunpack.c.l.b16 %v627
      %v667 = vunpack.c.l.b16 %v628
      %v668 = vpack.c.b16 %v653, %v652
      %v669 = vpack.c.b16 %v655, %v654
      %v670 = vpack.c.b16 %v657, %v656
      %v671 = vpack.c.b16 %v659, %v658
      %v672 = vpack.c.b16 %v661, %v660
      %v673 = vpack.c.b16 %v663, %v662
      %v674 = vpack.c.b16 %v665, %v664
      %v675 = vpack.c.b16 %v667, %v666
      %684 = vmatprep.subr.bf16.mxu0 0
      %685 = vmatpush1.bf16.msra.mxu0 %v675
      %686 = vmatprep.subr.bf16.mxu0 0
      %687 = vmatpush1.bf16.msra.mxu0 %v674
      %688 = vmatprep.subr.bf16.mxu0 0
      %689 = vmatpush1.bf16.msra.mxu0 %v673
      %690 = vmatprep.subr.bf16.mxu0 0
      %691 = vmatpush1.bf16.msra.mxu0 %v672
      %692 = vmatprep.subr.bf16.mxu0 0
      %693 = vmatpush1.bf16.msra.mxu0 %v671
      %694 = vmatprep.subr.bf16.mxu0 0
      %695 = vmatpush1.bf16.msra.mxu0 %v670
      %696 = vmatprep.subr.bf16.mxu0 0
      %697 = vmatpush1.bf16.msra.mxu0 %v669
      %698 = vmatprep.subr.bf16.mxu0 0
      %699 = vmatpush1.bf16.msra.mxu0 %v668
      %700 = vmatprep.subr.bf16.mxu0 0
      %701 = vmatpush2.bf16.msra.mxu0 0
      %702 = vmatprep.subr.bf16.mxu0 0
      %703 = vmatpush2.bf16.msra.mxu0 0
      %704 = vmatprep.subr.bf16.mxu0 0
      %705 = vmatpush2.bf16.msra.mxu0 0
      %706 = vmatprep.subr.bf16.mxu0 0
      %707 = vmatpush2.bf16.msra.mxu0 0
      %708 = vmatprep.subr.bf16.mxu0 0
      %709 = vmatpush2.bf16.msra.mxu0 0
      %710 = vmatprep.subr.bf16.mxu0 0
      %711 = vmatpush2.bf16.msra.mxu0 0
      %712 = vmatprep.subr.bf16.mxu0 0
      %713 = vmatpush2.bf16.msra.mxu0 0
      %714 = vmatprep.subr.bf16.mxu0 0
      %715 = vmatpush2.bf16.msra.mxu0 0
      %716 = vmatprep.mubr.bf16.mxu0 0
      %717 = vmatmul.mubr.bf16.gmra.mxu0 %v611
      %v718 = vpop.f32.mrf.mxu0
      %v719 = vadd.f32 %v634, %v718
      %v720 = vpop.f32.mrf.mxu0
      %v721 = vpop.f32.mrf.mxu0
      %v722 = vpop.f32.mrf.mxu0
      %723 = vdwg.mxu0
      %v724 = vmul.f32 %v719, 0.17677669
      %v725 = vld [vmem:[%s4] sm:$0xf]
      %v726 = vld [vmem:[%s4 + $0x4] sm:$0xf]
      %v727 = vld [vmem:[%s4 + $0x8] sm:$0xf]
      %v728 = vld [vmem:[%s4 + $0xc] sm:$0xf]
      %v729 = vld [vmem:[%s4 + $0x10] sm:$0xf]
      %v730 = vld [vmem:[%s4 + $0x14] sm:$0xf]
      %v731 = vld [vmem:[%s4 + $0x18] sm:$0xf]
      %v732 = vld [vmem:[%s4 + $0x1c] sm:$0xf]
      %v733 = vld [vmem:[%s4 + $0x20] sm:$0xf]
      %v734 = vld [vmem:[%s4 + $0x24] sm:$0xf]
      %v735 = vld [vmem:[%s4 + $0x28] sm:$0xf]
      %v736 = vld [vmem:[%s4 + $0x2c] sm:$0xf]
      %v737 = vld [vmem:[%s4 + $0x30] sm:$0xf]
      %v738 = vld [vmem:[%s4 + $0x34] sm:$0xf]
      %v739 = vld [vmem:[%s4 + $0x38] sm:$0xf]
      %v740 = vld [vmem:[%s4 + $0x3c] sm:$0xf]
      %v741 = vld [vmem:[%s5] sm:$0x1]
      %v743 = vlaneseq
      %v744 = vshrl.u32 %v743, 7
      %v745 = vsub.s32 0, %v744
      %v746 = vrot.slane %v741, %v745
      %v764 = vunpack.c.l.b16 %v725
      %v765 = vunpack.c.l.b16 %v726
      %v766 = vunpack.c.l.b16 %v727
      %v767 = vunpack.c.l.b16 %v728
      %v768 = vunpack.c.l.b16 %v729
      %v769 = vunpack.c.l.b16 %v730
      %v770 = vunpack.c.l.b16 %v731
      %v771 = vunpack.c.l.b16 %v732
      %v772 = vunpack.c.l.b16 %v733
      %v773 = vunpack.c.l.b16 %v734
      %v774 = vunpack.c.l.b16 %v735
      %v775 = vunpack.c.l.b16 %v736
      %v776 = vunpack.c.l.b16 %v737
      %v777 = vunpack.c.l.b16 %v738
      %v778 = vunpack.c.l.b16 %v739
      %v779 = vunpack.c.l.b16 %v740
      %v780 = vpack.c.b16 %v765, %v764
      %v781 = vpack.c.b16 %v767, %v766
      %v782 = vpack.c.b16 %v769, %v768
      %v783 = vpack.c.b16 %v771, %v770
      %v784 = vpack.c.b16 %v773, %v772
      %v785 = vpack.c.b16 %v775, %v774
      %v786 = vpack.c.b16 %v777, %v776
      %v787 = vpack.c.b16 %v779, %v778
      %796 = vmatprep.subr.bf16.mxu0 0
      %797 = vmatpush1.bf16.msra.mxu0 %v787
      %798 = vmatprep.subr.bf16.mxu0 0
      %799 = vmatpush1.bf16.msra.mxu0 %v786
      %800 = vmatprep.subr.bf16.mxu0 0
      %801 = vmatpush1.bf16.msra.mxu0 %v785
      %802 = vmatprep.subr.bf16.mxu0 0
      %803 = vmatpush1.bf16.msra.mxu0 %v784
      %804 = vmatprep.subr.bf16.mxu0 0
      %805 = vmatpush1.bf16.msra.mxu0 %v783
      %806 = vmatprep.subr.bf16.mxu0 0
      %807 = vmatpush1.bf16.msra.mxu0 %v782
      %808 = vmatprep.subr.bf16.mxu0 0
      %809 = vmatpush1.bf16.msra.mxu0 %v781
      %810 = vmatprep.subr.bf16.mxu0 0
      %811 = vmatpush1.bf16.msra.mxu0 %v780
      %812 = vmatprep.subr.bf16.mxu0 0
      %813 = vmatpush2.bf16.msra.mxu0 0
      %814 = vmatprep.subr.bf16.mxu0 0
      %815 = vmatpush2.bf16.msra.mxu0 0
      %816 = vmatprep.subr.bf16.mxu0 0
      %817 = vmatpush2.bf16.msra.mxu0 0
      %818 = vmatprep.subr.bf16.mxu0 0
      %819 = vmatpush2.bf16.msra.mxu0 0
      %820 = vmatprep.subr.bf16.mxu0 0
      %821 = vmatpush2.bf16.msra.mxu0 0
      %822 = vmatprep.subr.bf16.mxu0 0
      %823 = vmatpush2.bf16.msra.mxu0 0
      %824 = vmatprep.subr.bf16.mxu0 0
      %825 = vmatpush2.bf16.msra.mxu0 0
      %826 = vmatprep.subr.bf16.mxu0 0
      %827 = vmatpush2.bf16.msra.mxu0 0
      %828 = vmatprep.mubr.bf16.mxu0 0
      %829 = vmatmul.mubr.bf16.gmra.mxu0 %v612
      %v830 = vpop.f32.mrf.mxu0
      %v831 = vadd.f32 %v746, %v830
      %v832 = vpop.f32.mrf.mxu0
      %v833 = vpop.f32.mrf.mxu0
      %v834 = vpop.f32.mrf.mxu0
      %835 = vdwg.mxu0
      %v836 = vld [vmem:[%s6] sm:$0xf]
      %v837 = vld [vmem:[%s6 + $0x4] sm:$0xf]
      %v838 = vld [vmem:[%s6 + $0x8] sm:$0xf]
      %v839 = vld [vmem:[%s6 + $0xc] sm:$0xf]
      %v840 = vld [vmem:[%s6 + $0x10] sm:$0xf]
      %v841 = vld [vmem:[%s6 + $0x14] sm:$0xf]
      %v842 = vld [vmem:[%s6 + $0x18] sm:$0xf]
      %v843 = vld [vmem:[%s6 + $0x1c] sm:$0xf]
      %v844 = vld [vmem:[%s6 + $0x20] sm:$0xf]
      %v845 = vld [vmem:[%s6 + $0x24] sm:$0xf]
      %v846 = vld [vmem:[%s6 + $0x28] sm:$0xf]
      %v847 = vld [vmem:[%s6 + $0x2c] sm:$0xf]
      %v848 = vld [vmem:[%s6 + $0x30] sm:$0xf]
      %v849 = vld [vmem:[%s6 + $0x34] sm:$0xf]
      %v850 = vld [vmem:[%s6 + $0x38] sm:$0xf]
      %v851 = vld [vmem:[%s6 + $0x3c] sm:$0xf]
      %v852 = vld [vmem:[%s7] sm:$0x1]
      %v854 = vlaneseq
      %v855 = vshrl.u32 %v854, 7
      %v856 = vsub.s32 0, %v855
      %v857 = vrot.slane %v852, %v856
      %v875 = vunpack.c.l.b16 %v836
      %v876 = vunpack.c.l.b16 %v837
      %v877 = vunpack.c.l.b16 %v838
      %v878 = vunpack.c.l.b16 %v839
      %v879 = vunpack.c.l.b16 %v840
      %v880 = vunpack.c.l.b16 %v841
      %v881 = vunpack.c.l.b16 %v842
      %v882 = vunpack.c.l.b16 %v843
      %v883 = vunpack.c.l.b16 %v844
      %v884 = vunpack.c.l.b16 %v845
      %v885 = vunpack.c.l.b16 %v846
      %v886 = vunpack.c.l.b16 %v847
      %v887 = vunpack.c.l.b16 %v848
      %v888 = vunpack.c.l.b16 %v849
      %v889 = vunpack.c.l.b16 %v850
      %v890 = vunpack.c.l.b16 %v851
      %v891 = vpack.c.b16 %v876, %v875
      %v892 = vpack.c.b16 %v878, %v877
      %v893 = vpack.c.b16 %v880, %v879
      %v894 = vpack.c.b16 %v882, %v881
      %v895 = vpack.c.b16 %v884, %v883
      %v896 = vpack.c.b16 %v886, %v885
      %v897 = vpack.c.b16 %v888, %v887
      %v898 = vpack.c.b16 %v890, %v889
      %907 = vmatprep.subr.bf16.mxu0 0
      %908 = vmatpush1.bf16.msra.mxu0 %v898
      %909 = vmatprep.subr.bf16.mxu0 0
      %910 = vmatpush1.bf16.msra.mxu0 %v897
      %911 = vmatprep.subr.bf16.mxu0 0
      %912 = vmatpush1.bf16.msra.mxu0 %v896
      %913 = vmatprep.subr.bf16.mxu0 0
      %914 = vmatpush1.bf16.msra.mxu0 %v895
      %915 = vmatprep.subr.bf16.mxu0 0
      %916 = vmatpush1.bf16.msra.mxu0 %v894
      %917 = vmatprep.subr.bf16.mxu0 0
      %918 = vmatpush1.bf16.msra.mxu0 %v893
      %919 = vmatprep.subr.bf16.mxu0 0
      %920 = vmatpush1.bf16.msra.mxu0 %v892
      %921 = vmatprep.subr.bf16.mxu0 0
      %922 = vmatpush1.bf16.msra.mxu0 %v891
      %923 = vmatprep.subr.bf16.mxu0 0
      %924 = vmatpush2.bf16.msra.mxu0 0
      %925 = vmatprep.subr.bf16.mxu0 0
      %926 = vmatpush2.bf16.msra.mxu0 0
      %927 = vmatprep.subr.bf16.mxu0 0
      %928 = vmatpush2.bf16.msra.mxu0 0
      %929 = vmatprep.subr.bf16.mxu0 0
      %930 = vmatpush2.bf16.msra.mxu0 0
      %931 = vmatprep.subr.bf16.mxu0 0
      %932 = vmatpush2.bf16.msra.mxu0 0
      %933 = vmatprep.subr.bf16.mxu0 0
      %934 = vmatpush2.bf16.msra.mxu0 0
      %935 = vmatprep.subr.bf16.mxu0 0
      %936 = vmatpush2.bf16.msra.mxu0 0
      %937 = vmatprep.subr.bf16.mxu0 0
      %938 = vmatpush2.bf16.msra.mxu0 0
      %939 = vmatprep.mubr.bf16.mxu0 0
      %940 = vmatmul.mubr.bf16.gmra.mxu0 %v612
      %v941 = vpop.f32.mrf.mxu0
      %v942 = vadd.f32 %v857, %v941
      %v943 = vpop.f32.mrf.mxu0
      %v944 = vpop.f32.mrf.mxu0
      %v945 = vpop.f32.mrf.mxu0
      %946 = vdwg.mxu0
      %v947 = vpack.c.bf16 %v724, %v724
      %949 = vrot.lane.b32.xlu0 %v947, 96
      %v950 = vpop.permute.xlu0 %949
      %951 = vrot.lane.b32.xlu0 %v947, 64
      %v952 = vpop.permute.xlu0 %951
      %953 = vrot.lane.b32.xlu0 %v947, 32
      %v954 = vpop.permute.xlu0 %953
      %v956 = vunpack.c.l.s4 1983009808
      %v957 = vunpack.c.0.s8 %v956
      %v958 = vlaneseq
      %v959 = vshrl.u32 %v958, 7
      %v960 = vsub.s32 %v957, %v959
      %v961 = vrot.slane %v947, %v960
      %v964 = vunpack.c.l.s4 1983009808
      %v965 = vunpack.c.0.s8 %v964
      %v966 = vlaneseq
      %v967 = vshrl.u32 %v966, 7
      %v968 = vsub.s32 %v965, %v967
      %v969 = vrot.slane %v952, %v968
      %v970 = vcombine.low %v961, %v969
      %v971 = vcombine.high %v961, %v969
      %v973 = vunpack.c.l.s4 1934713408
      %v974 = vunpack.c.0.s8 %v973
      %v975 = vlaneseq
      %v976 = vshrl.u32 %v975, 7
      %v977 = vsub.s32 %v974, %v976
      %v978 = vrot.slane %v970, %v977
      %v980 = vunpack.c.l.s4 1934713408
      %v981 = vunpack.c.0.s8 %v980
      %v982 = vlaneseq
      %v983 = vshrl.u32 %v982, 7
      %v984 = vsub.s32 %v981, %v983
      %v985 = vrot.slane %v971, %v984
      %v986 = vcombine.high %v978, 0
      %v987 = vcombine.high %v985, 0
      %v990 = vunpack.c.l.s4 1983009808
      %v991 = vunpack.c.0.s8 %v990
      %v992 = vlaneseq
      %v993 = vshrl.u32 %v992, 7
      %v994 = vsub.s32 %v991, %v993
      %v995 = vrot.slane %v950, %v994
      %v998 = vunpack.c.l.s4 1983009808
      %v999 = vunpack.c.0.s8 %v998
      %v1000 = vlaneseq
      %v1001 = vshrl.u32 %v1000, 7
      %v1002 = vsub.s32 %v999, %v1001
      %v1003 = vrot.slane %v954, %v1002
      %v1004 = vcombine.low %v995, %v1003
      %v1005 = vcombine.high %v995, %v1003
      %v1007 = vunpack.c.l.s4 1934713408
      %v1008 = vunpack.c.0.s8 %v1007
      %v1009 = vlaneseq
      %v1010 = vshrl.u32 %v1009, 7
      %v1011 = vsub.s32 %v1008, %v1010
      %v1012 = vrot.slane %v1004, %v1011
      %v1014 = vunpack.c.l.s4 1934713408
      %v1015 = vunpack.c.0.s8 %v1014
      %v1016 = vlaneseq
      %v1017 = vshrl.u32 %v1016, 7
      %v1018 = vsub.s32 %v1015, %v1017
      %v1019 = vrot.slane %v1005, %v1018
      %v1020 = vcombine.high %v1012, 0
      %v1021 = vcombine.high %v1019, 0
      %v1024 = vpack.i.b16 %v1012, %v978
      %v1026 = vshrl.u32 %v978, 16
      %v1027 = vshrl.u32 %v1012, 16
      %v1028 = vpack.i.b16 %v1027, %v1026
      %v1032 = vpack.i.b16 %v1020, %v986
      %v1034 = vshrl.u32 %v986, 16
      %v1035 = vshrl.u32 %v1020, 16
      %v1036 = vpack.i.b16 %v1035, %v1034
      %v1040 = vpack.i.b16 %v1019, %v985
      %v1042 = vshrl.u32 %v985, 16
      %v1043 = vshrl.u32 %v1019, 16
      %v1044 = vpack.i.b16 %v1043, %v1042
      %v1048 = vpack.i.b16 %v1021, %v987
      %v1050 = vshrl.u32 %v987, 16
      %v1051 = vshrl.u32 %v1021, 16
      %v1052 = vpack.i.b16 %v1051, %v1050
      %v1054 = vcombine.low %v1024, %v1040
      %v1056 = vunpack.c.l.s4 1983009808
      %v1057 = vunpack.c.0.s8 %v1056
      %v1058 = vlaneseq
      %v1059 = vshrl.u32 %v1058, 7
      %v1060 = vsub.s32 %v1057, %v1059
      %v1061 = vrot.slane %v1054, %v1060
      %v1062 = vcombine.low %v1032, %v1048
      %v1064 = vunpack.c.l.s4 1983009808
      %v1065 = vunpack.c.0.s8 %v1064
      %v1066 = vlaneseq
      %v1067 = vshrl.u32 %v1066, 7
      %v1068 = vsub.s32 %v1065, %v1067
      %v1069 = vrot.slane %v1062, %v1068
      %v1070 = vcombine.low %v1061, %v1069
      %v1072 = vunpack.c.l.s4 1934713408
      %v1073 = vunpack.c.0.s8 %v1072
      %v1074 = vlaneseq
      %v1075 = vshrl.u32 %v1074, 7
      %v1076 = vsub.s32 %v1073, %v1075
      %v1077 = vrot.slane %v1070, %v1076
      %v1078 = vcombine.high %v1077, 0
      %v1079 = vcombine.low %v1028, %v1044
      %v1081 = vunpack.c.l.s4 1983009808
      %v1082 = vunpack.c.0.s8 %v1081
      %v1083 = vlaneseq
      %v1084 = vshrl.u32 %v1083, 7
      %v1085 = vsub.s32 %v1082, %v1084
      %v1086 = vrot.slane %v1079, %v1085
      %v1087 = vcombine.low %v1036, %v1052
      %v1089 = vunpack.c.l.s4 1983009808
      %v1090 = vunpack.c.0.s8 %v1089
      %v1091 = vlaneseq
      %v1092 = vshrl.u32 %v1091, 7
      %v1093 = vsub.s32 %v1090, %v1092
      %v1094 = vrot.slane %v1087, %v1093
      %v1095 = vcombine.low %v1086, %v1094
      %v1097 = vunpack.c.l.s4 1934713408
      %v1098 = vunpack.c.0.s8 %v1097
      %v1099 = vlaneseq
      %v1100 = vshrl.u32 %v1099, 7
      %v1101 = vsub.s32 %v1098, %v1100
      %v1102 = vrot.slane %v1095, %v1101
      %v1103 = vcombine.high %v1102, 0
      %v1106 = vpack.i.b16 %v1102, %v1077
      %v1107 = vshrl.u32 %v1077, 16
      %v1108 = vshrl.u32 %v1102, 16
      %v1109 = vpack.i.b16 %v1108, %v1107
      %v1112 = vpack.i.b16 %v1103, %v1078
      %v1113 = vshrl.u32 %v1078, 16
      %v1114 = vshrl.u32 %v1103, 16
      %v1115 = vpack.i.b16 %v1114, %v1113
      %v1116 = vpack.c.bf16 %v831, %v831
      %1118 = vrot.lane.b32.xlu0 %v1116, 96
      %v1119 = vpop.permute.xlu0 %1118
      %1120 = vrot.lane.b32.xlu0 %v1116, 64
      %v1121 = vpop.permute.xlu0 %1120
      %1122 = vrot.lane.b32.xlu0 %v1116, 32
      %v1123 = vpop.permute.xlu0 %1122
      %v1125 = vunpack.c.l.s4 1983009808
      %v1126 = vunpack.c.0.s8 %v1125
      %v1127 = vlaneseq
      %v1128 = vshrl.u32 %v1127, 7
      %v1129 = vsub.s32 %v1126, %v1128
      %v1130 = vrot.slane %v1116, %v1129
      %v1133 = vunpack.c.l.s4 1983009808
      %v1134 = vunpack.c.0.s8 %v1133
      %v1135 = vlaneseq
      %v1136 = vshrl.u32 %v1135, 7
      %v1137 = vsub.s32 %v1134, %v1136
      %v1138 = vrot.slane %v1121, %v1137
      %v1139 = vcombine.low %v1130, %v1138
      %v1140 = vcombine.high %v1130, %v1138
      %v1142 = vunpack.c.l.s4 1934713408
      %v1143 = vunpack.c.0.s8 %v1142
      %v1144 = vlaneseq
      %v1145 = vshrl.u32 %v1144, 7
      %v1146 = vsub.s32 %v1143, %v1145
      %v1147 = vrot.slane %v1139, %v1146
      %v1149 = vunpack.c.l.s4 1934713408
      %v1150 = vunpack.c.0.s8 %v1149
      %v1151 = vlaneseq
      %v1152 = vshrl.u32 %v1151, 7
      %v1153 = vsub.s32 %v1150, %v1152
      %v1154 = vrot.slane %v1140, %v1153
      %v1155 = vcombine.high %v1147, 0
      %v1156 = vcombine.high %v1154, 0
      %v1159 = vunpack.c.l.s4 1983009808
      %v1160 = vunpack.c.0.s8 %v1159
      %v1161 = vlaneseq
      %v1162 = vshrl.u32 %v1161, 7
      %v1163 = vsub.s32 %v1160, %v1162
      %v1164 = vrot.slane %v1119, %v1163
      %v1167 = vunpack.c.l.s4 1983009808
      %v1168 = vunpack.c.0.s8 %v1167
      %v1169 = vlaneseq
      %v1170 = vshrl.u32 %v1169, 7
      %v1171 = vsub.s32 %v1168, %v1170
      %v1172 = vrot.slane %v1123, %v1171
      %v1173 = vcombine.low %v1164, %v1172
      %v1174 = vcombine.high %v1164, %v1172
      %v1176 = vunpack.c.l.s4 1934713408
      %v1177 = vunpack.c.0.s8 %v1176
      %v1178 = vlaneseq
      %v1179 = vshrl.u32 %v1178, 7
      %v1180 = vsub.s32 %v1177, %v1179
      %v1181 = vrot.slane %v1173, %v1180
      %v1183 = vunpack.c.l.s4 1934713408
      %v1184 = vunpack.c.0.s8 %v1183
      %v1185 = vlaneseq
      %v1186 = vshrl.u32 %v1185, 7
      %v1187 = vsub.s32 %v1184, %v1186
      %v1188 = vrot.slane %v1174, %v1187
      %v1189 = vcombine.high %v1181, 0
      %v1190 = vcombine.high %v1188, 0
      %v1193 = vpack.i.b16 %v1181, %v1147
      %v1195 = vshrl.u32 %v1147, 16
      %v1196 = vshrl.u32 %v1181, 16
      %v1197 = vpack.i.b16 %v1196, %v1195
      %v1201 = vpack.i.b16 %v1189, %v1155
      %v1203 = vshrl.u32 %v1155, 16
      %v1204 = vshrl.u32 %v1189, 16
      %v1205 = vpack.i.b16 %v1204, %v1203
      %v1209 = vpack.i.b16 %v1188, %v1154
      %v1211 = vshrl.u32 %v1154, 16
      %v1212 = vshrl.u32 %v1188, 16
      %v1213 = vpack.i.b16 %v1212, %v1211
      %v1217 = vpack.i.b16 %v1190, %v1156
      %v1219 = vshrl.u32 %v1156, 16
      %v1220 = vshrl.u32 %v1190, 16
      %v1221 = vpack.i.b16 %v1220, %v1219
      %v1223 = vcombine.low %v1193, %v1209
      %v1225 = vunpack.c.l.s4 1983009808
      %v1226 = vunpack.c.0.s8 %v1225
      %v1227 = vlaneseq
      %v1228 = vshrl.u32 %v1227, 7
      %v1229 = vsub.s32 %v1226, %v1228
      %v1230 = vrot.slane %v1223, %v1229
      %v1231 = vcombine.low %v1201, %v1217
      %v1233 = vunpack.c.l.s4 1983009808
      %v1234 = vunpack.c.0.s8 %v1233
      %v1235 = vlaneseq
      %v1236 = vshrl.u32 %v1235, 7
      %v1237 = vsub.s32 %v1234, %v1236
      %v1238 = vrot.slane %v1231, %v1237
      %v1239 = vcombine.low %v1230, %v1238
      %v1241 = vunpack.c.l.s4 1934713408
      %v1242 = vunpack.c.0.s8 %v1241
      %v1243 = vlaneseq
      %v1244 = vshrl.u32 %v1243, 7
      %v1245 = vsub.s32 %v1242, %v1244
      %v1246 = vrot.slane %v1239, %v1245
      %v1247 = vcombine.high %v1246, 0
      %v1248 = vcombine.low %v1197, %v1213
      %v1250 = vunpack.c.l.s4 1983009808
      %v1251 = vunpack.c.0.s8 %v1250
      %v1252 = vlaneseq
      %v1253 = vshrl.u32 %v1252, 7
      %v1254 = vsub.s32 %v1251, %v1253
      %v1255 = vrot.slane %v1248, %v1254
      %v1256 = vcombine.low %v1205, %v1221
      %v1258 = vunpack.c.l.s4 1983009808
      %v1259 = vunpack.c.0.s8 %v1258
      %v1260 = vlaneseq
      %v1261 = vshrl.u32 %v1260, 7
      %v1262 = vsub.s32 %v1259, %v1261
      %v1263 = vrot.slane %v1256, %v1262
      %v1264 = vcombine.low %v1255, %v1263
      %v1266 = vunpack.c.l.s4 1934713408
      %v1267 = vunpack.c.0.s8 %v1266
      %v1268 = vlaneseq
      %v1269 = vshrl.u32 %v1268, 7
      %v1270 = vsub.s32 %v1267, %v1269
      %v1271 = vrot.slane %v1264, %v1270
      %v1272 = vcombine.high %v1271, 0
      %v1275 = vpack.i.b16 %v1271, %v1246
      %v1276 = vshrl.u32 %v1246, 16
      %v1277 = vshrl.u32 %v1271, 16
      %v1278 = vpack.i.b16 %v1277, %v1276
      %v1281 = vpack.i.b16 %v1272, %v1247
      %v1282 = vshrl.u32 %v1247, 16
      %v1283 = vshrl.u32 %v1272, 16
      %v1284 = vpack.i.b16 %v1283, %v1282
      %v1285 = vpack.c.bf16 %v942, %v942
      %1287 = vrot.lane.b32.xlu0 %v1285, 96
      %v1288 = vpop.permute.xlu0 %1287
      %1289 = vrot.lane.b32.xlu0 %v1285, 64
      %v1290 = vpop.permute.xlu0 %1289
      %1291 = vrot.lane.b32.xlu0 %v1285, 32
      %v1292 = vpop.permute.xlu0 %1291
      %v1294 = vunpack.c.l.s4 1983009808
      %v1295 = vunpack.c.0.s8 %v1294
      %v1296 = vlaneseq
      %v1297 = vshrl.u32 %v1296, 7
      %v1298 = vsub.s32 %v1295, %v1297
      %v1299 = vrot.slane %v1285, %v1298
      %v1302 = vunpack.c.l.s4 1983009808
      %v1303 = vunpack.c.0.s8 %v1302
      %v1304 = vlaneseq
      %v1305 = vshrl.u32 %v1304, 7
      %v1306 = vsub.s32 %v1303, %v1305
      %v1307 = vrot.slane %v1290, %v1306
      %v1308 = vcombine.low %v1299, %v1307
      %v1309 = vcombine.high %v1299, %v1307
      %v1311 = vunpack.c.l.s4 1934713408
      %v1312 = vunpack.c.0.s8 %v1311
      %v1313 = vlaneseq
      %v1314 = vshrl.u32 %v1313, 7
      %v1315 = vsub.s32 %v1312, %v1314
      %v1316 = vrot.slane %v1308, %v1315
      %v1318 = vunpack.c.l.s4 1934713408
      %v1319 = vunpack.c.0.s8 %v1318
      %v1320 = vlaneseq
      %v1321 = vshrl.u32 %v1320, 7
      %v1322 = vsub.s32 %v1319, %v1321
      %v1323 = vrot.slane %v1309, %v1322
      %v1324 = vcombine.high %v1316, 0
      %v1325 = vcombine.high %v1323, 0
      %v1328 = vunpack.c.l.s4 1983009808
      %v1329 = vunpack.c.0.s8 %v1328
      %v1330 = vlaneseq
      %v1331 = vshrl.u32 %v1330, 7
      %v1332 = vsub.s32 %v1329, %v1331
      %v1333 = vrot.slane %v1288, %v1332
      %v1336 = vunpack.c.l.s4 1983009808
      %v1337 = vunpack.c.0.s8 %v1336
      %v1338 = vlaneseq
      %v1339 = vshrl.u32 %v1338, 7
      %v1340 = vsub.s32 %v1337, %v1339
      %v1341 = vrot.slane %v1292, %v1340
      %v1342 = vcombine.low %v1333, %v1341
      %v1343 = vcombine.high %v1333, %v1341
      %v1345 = vunpack.c.l.s4 1934713408
      %v1346 = vunpack.c.0.s8 %v1345
      %v1347 = vlaneseq
      %v1348 = vshrl.u32 %v1347, 7
      %v1349 = vsub.s32 %v1346, %v1348
      %v1350 = vrot.slane %v1342, %v1349
      %v1352 = vunpack.c.l.s4 1934713408
      %v1353 = vunpack.c.0.s8 %v1352
      %v1354 = vlaneseq
      %v1355 = vshrl.u32 %v1354, 7
      %v1356 = vsub.s32 %v1353, %v1355
      %v1357 = vrot.slane %v1343, %v1356
      %v1358 = vcombine.high %v1350, 0
      %v1359 = vcombine.high %v1357, 0
      %v1362 = vpack.i.b16 %v1350, %v1316
      %v1364 = vshrl.u32 %v1316, 16
      %v1365 = vshrl.u32 %v1350, 16
      %v1366 = vpack.i.b16 %v1365, %v1364
      %v1370 = vpack.i.b16 %v1358, %v1324
      %v1372 = vshrl.u32 %v1324, 16
      %v1373 = vshrl.u32 %v1358, 16
      %v1374 = vpack.i.b16 %v1373, %v1372
      %v1378 = vpack.i.b16 %v1357, %v1323
      %v1380 = vshrl.u32 %v1323, 16
      %v1381 = vshrl.u32 %v1357, 16
      %v1382 = vpack.i.b16 %v1381, %v1380
      %v1386 = vpack.i.b16 %v1359, %v1325
      %v1388 = vshrl.u32 %v1325, 16
      %v1389 = vshrl.u32 %v1359, 16
      %v1390 = vpack.i.b16 %v1389, %v1388
      %v1392 = vcombine.low %v1362, %v1378
      %v1394 = vunpack.c.l.s4 1983009808
      %v1395 = vunpack.c.0.s8 %v1394
      %v1396 = vlaneseq
      %v1397 = vshrl.u32 %v1396, 7
      %v1398 = vsub.s32 %v1395, %v1397
      %v1399 = vrot.slane %v1392, %v1398
      %v1400 = vcombine.low %v1370, %v1386
      %v1402 = vunpack.c.l.s4 1983009808
      %v1403 = vunpack.c.0.s8 %v1402
      %v1404 = vlaneseq
      %v1405 = vshrl.u32 %v1404, 7
      %v1406 = vsub.s32 %v1403, %v1405
      %v1407 = vrot.slane %v1400, %v1406
      %v1408 = vcombine.low %v1399, %v1407
      %v1410 = vunpack.c.l.s4 1934713408
      %v1411 = vunpack.c.0.s8 %v1410
      %v1412 = vlaneseq
      %v1413 = vshrl.u32 %v1412, 7
      %v1414 = vsub.s32 %v1411, %v1413
      %v1415 = vrot.slane %v1408, %v1414
      %v1416 = vcombine.high %v1415, 0
      %v1417 = vcombine.low %v1366, %v1382
      %v1419 = vunpack.c.l.s4 1983009808
      %v1420 = vunpack.c.0.s8 %v1419
      %v1421 = vlaneseq
      %v1422 = vshrl.u32 %v1421, 7
      %v1423 = vsub.s32 %v1420, %v1422
      %v1424 = vrot.slane %v1417, %v1423
      %v1425 = vcombine.low %v1374, %v1390
      %v1427 = vunpack.c.l.s4 1983009808
      %v1428 = vunpack.c.0.s8 %v1427
      %v1429 = vlaneseq
      %v1430 = vshrl.u32 %v1429, 7
      %v1431 = vsub.s32 %v1428, %v1430
      %v1432 = vrot.slane %v1425, %v1431
      %v1433 = vcombine.low %v1424, %v1432
      %v1435 = vunpack.c.l.s4 1934713408
      %v1436 = vunpack.c.0.s8 %v1435
      %v1437 = vlaneseq
      %v1438 = vshrl.u32 %v1437, 7
      %v1439 = vsub.s32 %v1436, %v1438
      %v1440 = vrot.slane %v1433, %v1439
      %v1441 = vcombine.high %v1440, 0
      %v1444 = vpack.i.b16 %v1440, %v1415
      %v1445 = vshrl.u32 %v1415, 16
      %v1446 = vshrl.u32 %v1440, 16
      %v1447 = vpack.i.b16 %v1446, %v1445
      %v1450 = vpack.i.b16 %v1441, %v1416
      %v1451 = vshrl.u32 %v1416, 16
      %v1452 = vshrl.u32 %v1441, 16
      %v1453 = vpack.i.b16 %v1452, %v1451
      %vm1454 = vcmask 261120
      %v1456 = vsel %vm1454, %v1106, 0
      %v1459 = vsel %vm1454, %v1275, 0
      %1461 = vmatprep.subr.bf16.mxu0 0
      %1462 = vmatpush1.bf16.xpose.msra.mxu0 0
      %1463 = vmatprep.subr.bf16.mxu0 0
      %1464 = vmatpush1.bf16.xpose.msra.mxu0 0
      %1465 = vmatprep.subr.bf16.mxu0 0
      %1466 = vmatpush1.bf16.xpose.msra.mxu0 0
      %1467 = vmatprep.subr.bf16.mxu0 0
      %1468 = vmatpush1.bf16.xpose.msra.mxu0 0
      %1469 = vmatprep.subr.bf16.mxu0 0
      %1470 = vmatpush1.bf16.xpose.msra.mxu0 0
      %1471 = vmatprep.subr.bf16.mxu0 0
      %1472 = vmatpush1.bf16.xpose.msra.mxu0 0
      %1473 = vmatprep.subr.bf16.mxu0 0
      %1474 = vmatpush1.bf16.xpose.msra.mxu0 0
      %1475 = vmatprep.subr.bf16.mxu0 0
      %1476 = vmatpush1.bf16.xpose.msra.mxu0 %v1459
      %1477 = vmatprep.subr.bf16.mxu0 0
      %1478 = vmatpush2.bf16.xpose.msra.mxu0 0
      %1479 = vmatprep.subr.bf16.mxu0 0
      %1480 = vmatpush2.bf16.xpose.msra.mxu0 0
      %1481 = vmatprep.subr.bf16.mxu0 0
      %1482 = vmatpush2.bf16.xpose.msra.mxu0 0
      %1483 = vmatprep.subr.bf16.mxu0 0
      %1484 = vmatpush2.bf16.xpose.msra.mxu0 0
      %1485 = vmatprep.subr.bf16.mxu0 0
      %1486 = vmatpush2.bf16.xpose.msra.mxu0 0
      %1487 = vmatprep.subr.bf16.mxu0 0
      %1488 = vmatpush2.bf16.xpose.msra.mxu0 0
      %1489 = vmatprep.subr.bf16.mxu0 0
      %1490 = vmatpush2.bf16.xpose.msra.mxu0 0
      %1491 = vmatprep.subr.bf16.mxu0 0
      %1492 = vmatpush2.bf16.xpose.msra.mxu0 0
      %1493 = vmatprep.mubr.bf16.mxu0 0
      %1494 = vmatmul.mubr.bf16.gmra.mxu0 %v1456
      %v1495 = vpop.f32.mrf.mxu0
      %v1496 = vadd.f32 0.0, %v1495
      %v1497 = vpop.f32.mrf.mxu0
      %v1498 = vpop.f32.mrf.mxu0
      %v1499 = vpop.f32.mrf.mxu0
      %1500 = vdwg.mxu0
      %v1502 = vsel %vm1454, %v1109, 0
      %v1505 = vsel %vm1454, %v1278, 0
      %1507 = vmatprep.subr.bf16.mxu0 0
      %1508 = vmatpush1.bf16.xpose.msra.mxu0 0
      %1509 = vmatprep.subr.bf16.mxu0 0
      %1510 = vmatpush1.bf16.xpose.msra.mxu0 0
      %1511 = vmatprep.subr.bf16.mxu0 0
      %1512 = vmatpush1.bf16.xpose.msra.mxu0 0
      %1513 = vmatprep.subr.bf16.mxu0 0
      %1514 = vmatpush1.bf16.xpose.msra.mxu0 0
      %1515 = vmatprep.subr.bf16.mxu0 0
      %1516 = vmatpush1.bf16.xpose.msra.mxu0 0
      %1517 = vmatprep.subr.bf16.mxu0 0
      %1518 = vmatpush1.bf16.xpose.msra.mxu0 0
      %1519 = vmatprep.subr.bf16.mxu0 0
      %1520 = vmatpush1.bf16.xpose.msra.mxu0 0
      %1521 = vmatprep.subr.bf16.mxu0 0
      %1522 = vmatpush1.bf16.xpose.msra.mxu0 %v1505
      %1523 = vmatprep.subr.bf16.mxu0 0
      %1524 = vmatpush2.bf16.xpose.msra.mxu0 0
      %1525 = vmatprep.subr.bf16.mxu0 0
      %1526 = vmatpush2.bf16.xpose.msra.mxu0 0
      %1527 = vmatprep.subr.bf16.mxu0 0
      %1528 = vmatpush2.bf16.xpose.msra.mxu0 0
      %1529 = vmatprep.subr.bf16.mxu0 0
      %1530 = vmatpush2.bf16.xpose.msra.mxu0 0
      %1531 = vmatprep.subr.bf16.mxu0 0
      %1532 = vmatpush2.bf16.xpose.msra.mxu0 0
      %1533 = vmatprep.subr.bf16.mxu0 0
      %1534 = vmatpush2.bf16.xpose.msra.mxu0 0
      %1535 = vmatprep.subr.bf16.mxu0 0
      %1536 = vmatpush2.bf16.xpose.msra.mxu0 0
      %1537 = vmatprep.subr.bf16.mxu0 0
      %1538 = vmatpush2.bf16.xpose.msra.mxu0 0
      %1539 = vmatprep.mubr.bf16.mxu0 0
      %1540 = vmatmul.mubr.bf16.gmra.mxu0 %v1502
      %v1541 = vpop.f32.mrf.mxu0
      %v1542 = vadd.f32 0.0, %v1541
      %v1543 = vpop.f32.mrf.mxu0
      %v1544 = vpop.f32.mrf.mxu0
      %v1545 = vpop.f32.mrf.mxu0
      %1546 = vdwg.mxu0
      %v1548 = vsel %vm1454, %v1112, 0
      %v1551 = vsel %vm1454, %v1281, 0
      %1553 = vmatprep.subr.bf16.mxu0 0
      %1554 = vmatpush1.bf16.xpose.msra.mxu0 0
      %1555 = vmatprep.subr.bf16.mxu0 0
      %1556 = vmatpush1.bf16.xpose.msra.mxu0 0
      %1557 = vmatprep.subr.bf16.mxu0 0
      %1558 = vmatpush1.bf16.xpose.msra.mxu0 0
      %1559 = vmatprep.subr.bf16.mxu0 0
      %1560 = vmatpush1.bf16.xpose.msra.mxu0 0
      %1561 = vmatprep.subr.bf16.mxu0 0
      %1562 = vmatpush1.bf16.xpose.msra.mxu0 0
      %1563 = vmatprep.subr.bf16.mxu0 0
      %1564 = vmatpush1.bf16.xpose.msra.mxu0 0
      %1565 = vmatprep.subr.bf16.mxu0 0
      %1566 = vmatpush1.bf16.xpose.msra.mxu0 0
      %1567 = vmatprep.subr.bf16.mxu0 0
      %1568 = vmatpush1.bf16.xpose.msra.mxu0 %v1551
      %1569 = vmatprep.subr.bf16.mxu0 0
      %1570 = vmatpush2.bf16.xpose.msra.mxu0 0
      %1571 = vmatprep.subr.bf16.mxu0 0
      %1572 = vmatpush2.bf16.xpose.msra.mxu0 0
      %1573 = vmatprep.subr.bf16.mxu0 0
      %1574 = vmatpush2.bf16.xpose.msra.mxu0 0
      %1575 = vmatprep.subr.bf16.mxu0 0
      %1576 = vmatpush2.bf16.xpose.msra.mxu0 0
      %1577 = vmatprep.subr.bf16.mxu0 0
      %1578 = vmatpush2.bf16.xpose.msra.mxu0 0
      %1579 = vmatprep.subr.bf16.mxu0 0
      %1580 = vmatpush2.bf16.xpose.msra.mxu0 0
      %1581 = vmatprep.subr.bf16.mxu0 0
      %1582 = vmatpush2.bf16.xpose.msra.mxu0 0
      %1583 = vmatprep.subr.bf16.mxu0 0
      %1584 = vmatpush2.bf16.xpose.msra.mxu0 0
      %1585 = vmatprep.mubr.bf16.mxu0 0
      %1586 = vmatmul.mubr.bf16.gmra.mxu0 %v1548
      %v1587 = vpop.f32.mrf.mxu0
      %v1588 = vadd.f32 0.0, %v1587
      %v1589 = vpop.f32.mrf.mxu0
      %v1590 = vpop.f32.mrf.mxu0
      %v1591 = vpop.f32.mrf.mxu0
      %1592 = vdwg.mxu0
      %v1594 = vsel %vm1454, %v1115, 0
      %v1597 = vsel %vm1454, %v1284, 0
      %1599 = vmatprep.subr.bf16.mxu0 0
      %1600 = vmatpush1.bf16.xpose.msra.mxu0 0
      %1601 = vmatprep.subr.bf16.mxu0 0
      %1602 = vmatpush1.bf16.xpose.msra.mxu0 0
      %1603 = vmatprep.subr.bf16.mxu0 0
      %1604 = vmatpush1.bf16.xpose.msra.mxu0 0
      %1605 = vmatprep.subr.bf16.mxu0 0
      %1606 = vmatpush1.bf16.xpose.msra.mxu0 0
      %1607 = vmatprep.subr.bf16.mxu0 0
      %1608 = vmatpush1.bf16.xpose.msra.mxu0 0
      %1609 = vmatprep.subr.bf16.mxu0 0
      %1610 = vmatpush1.bf16.xpose.msra.mxu0 0
      %1611 = vmatprep.subr.bf16.mxu0 0
      %1612 = vmatpush1.bf16.xpose.msra.mxu0 0
      %1613 = vmatprep.subr.bf16.mxu0 0
      %1614 = vmatpush1.bf16.xpose.msra.mxu0 %v1597
      %1615 = vmatprep.subr.bf16.mxu0 0
      %1616 = vmatpush2.bf16.xpose.msra.mxu0 0
      %1617 = vmatprep.subr.bf16.mxu0 0
      %1618 = vmatpush2.bf16.xpose.msra.mxu0 0
      %1619 = vmatprep.subr.bf16.mxu0 0
      %1620 = vmatpush2.bf16.xpose.msra.mxu0 0
      %1621 = vmatprep.subr.bf16.mxu0 0
      %1622 = vmatpush2.bf16.xpose.msra.mxu0 0
      %1623 = vmatprep.subr.bf16.mxu0 0
      %1624 = vmatpush2.bf16.xpose.msra.mxu0 0
      %1625 = vmatprep.subr.bf16.mxu0 0
      %1626 = vmatpush2.bf16.xpose.msra.mxu0 0
      %1627 = vmatprep.subr.bf16.mxu0 0
      %1628 = vmatpush2.bf16.xpose.msra.mxu0 0
      %1629 = vmatprep.subr.bf16.mxu0 0
      %1630 = vmatpush2.bf16.xpose.msra.mxu0 0
      %1631 = vmatprep.mubr.bf16.mxu0 0
      %1632 = vmatmul.mubr.bf16.gmra.mxu0 %v1594
      %v1633 = vpop.f32.mrf.mxu0
      %v1634 = vadd.f32 0.0, %v1633
      %v1635 = vpop.f32.mrf.mxu0
      %v1636 = vpop.f32.mrf.mxu0
      %v1637 = vpop.f32.mrf.mxu0
      %1638 = vdwg.mxu0
      %v1640 = vlaneseq
      %v1641 = vshrl.u32 %v1640, 7
      %v1642 = vsub.s32 0, %v1641
      %v1643 = vrot.slane %v610, %v1642
      %v1645 = vmul.f32 %v1496, %v1643
      %v1646 = vmul.f32 %v1542, %v1643
      %v1647 = vmul.f32 %v1588, %v1643
      %v1648 = vmul.f32 %v1634, %v1643
      %vm1649 = vcmask 64512
      %v1650 = vsel %vm1649, %v1645, -inf
      %1651 = vmax.xlane.f32.xlu0 %v1650
      %v1652 = vpop.xlane.xlu0 %1651
      %v1653 = vsel %vm1649, %v1646, -inf
      %1654 = vmax.xlane.f32.xlu0 %v1653
      %v1655 = vpop.xlane.xlu0 %1654
      %v1656 = vsel %vm1649, %v1647, -inf
      %1657 = vmax.xlane.f32.xlu0 %v1656
      %v1658 = vpop.xlane.xlu0 %1657
      %v1659 = vsel %vm1649, %v1648, -inf
      %1660 = vmax.xlane.f32.xlu0 %v1659
      %v1661 = vpop.xlane.xlu0 %1660
      %v1662 = vsub.f32 %v1645, %v1652
      %v1663 = vsub.f32 %v1646, %v1655
      %v1664 = vsub.f32 %v1647, %v1658
      %v1665 = vsub.f32 %v1648, %v1661
      %v1666 = vmul.f32 %v1662, 1.442695
      %v1667 = vpow.pop %v1666
      %v1668 = vmul.f32 %v1663, 1.442695
      %v1669 = vpow.pop %v1668
      %v1670 = vmul.f32 %v1664, 1.442695
      %v1671 = vpow.pop %v1670
      %v1672 = vmul.f32 %v1665, 1.442695
      %v1673 = vpow.pop %v1672
      %v1674 = vmul.f32 %v1667, %v1643
      %v1675 = vmul.f32 %v1669, %v1643
      %v1676 = vmul.f32 %v1671, %v1643
      %v1677 = vmul.f32 %v1673, %v1643
      %v1678 = vsel %vm1649, %v1674, 0.0
      %1679 = vadd.xlane.f32.xlu0 %v1678
      %v1680 = vpop.xlane.xlu0 %1679
      %v1681 = vsel %vm1649, %v1675, 0.0
      %1682 = vadd.xlane.f32.xlu0 %v1681
      %v1683 = vpop.xlane.xlu0 %1682
      %v1684 = vsel %vm1649, %v1676, 0.0
      %1685 = vadd.xlane.f32.xlu0 %v1684
      %v1686 = vpop.xlane.xlu0 %1685
      %v1687 = vsel %vm1649, %v1677, 0.0
      %1688 = vadd.xlane.f32.xlu0 %v1687
      %v1689 = vpop.xlane.xlu0 %1688
      %vm1690 = vcmp.eq.f32.partialorder %v1680, 0.0
      %vm1691 = vcmp.eq.f32.partialorder %v1683, 0.0
      %vm1692 = vcmp.eq.f32.partialorder %v1686, 0.0
      %vm1693 = vcmp.eq.f32.partialorder %v1689, 0.0
      %v1694 = vsel %vm1690, 1, 0
      %v1695 = vsel %vm1691, 1, 0
      %v1696 = vsel %vm1692, 1, 0
      %v1697 = vsel %vm1693, 1, 0
      %v1698 = vcvt.s32.f32 %v1694
      %v1699 = vcvt.s32.f32 %v1695
      %v1700 = vcvt.s32.f32 %v1696
      %v1701 = vcvt.s32.f32 %v1697
      %v1702 = vadd.f32 %v1680, %v1698
      %v1703 = vadd.f32 %v1683, %v1699
      %v1704 = vadd.f32 %v1686, %v1700
      %v1705 = vadd.f32 %v1689, %v1701
      %v1706 = vrcp.pop %v1702
      %v1707 = vrcp.pop %v1703
      %v1708 = vrcp.pop %v1704
      %v1709 = vrcp.pop %v1705
      %v1710 = vmul.f32 %v1674, %v1706
      %v1711 = vmul.f32 %v1675, %v1707
      %v1712 = vmul.f32 %v1676, %v1708
      %v1713 = vmul.f32 %v1677, %v1709
      %v1714 = vpack.c.bf16 %v1710, %v1710
      %v1715 = vpack.c.bf16 %v1711, %v1711
      %v1716 = vpack.c.bf16 %v1712, %v1712
      %v1717 = vpack.c.bf16 %v1713, %v1713
      %v1719 = vsel %vm1649, %v1714, 0
      %vm1721 = vcmask 1043456
      %v1723 = vsel %vm1721, %v1444, 0
      %1725 = vmatprep.subr.bf16.mxu0 0
      %1726 = vmatpush1.bf16.msra.mxu0 0
      %1727 = vmatprep.subr.bf16.mxu0 0
      %1728 = vmatpush1.bf16.msra.mxu0 0
      %1729 = vmatprep.subr.bf16.mxu0 0
      %1730 = vmatpush1.bf16.msra.mxu0 0
      %1731 = vmatprep.subr.bf16.mxu0 0
      %1732 = vmatpush1.bf16.msra.mxu0 0
      %1733 = vmatprep.subr.bf16.mxu0 0
      %1734 = vmatpush1.bf16.msra.mxu0 0
      %1735 = vmatprep.subr.bf16.mxu0 0
      %1736 = vmatpush1.bf16.msra.mxu0 0
      %1737 = vmatprep.subr.bf16.mxu0 0
      %1738 = vmatpush1.bf16.msra.mxu0 0
      %1739 = vmatprep.subr.bf16.mxu0 0
      %1740 = vmatpush1.bf16.msra.mxu0 %v1723
      %1741 = vmatprep.subr.bf16.mxu0 0
      %1742 = vmatpush2.bf16.msra.mxu0 0
      %1743 = vmatprep.subr.bf16.mxu0 0
      %1744 = vmatpush2.bf16.msra.mxu0 0
      %1745 = vmatprep.subr.bf16.mxu0 0
      %1746 = vmatpush2.bf16.msra.mxu0 0
      %1747 = vmatprep.subr.bf16.mxu0 0
      %1748 = vmatpush2.bf16.msra.mxu0 0
      %1749 = vmatprep.subr.bf16.mxu0 0
      %1750 = vmatpush2.bf16.msra.mxu0 0
      %1751 = vmatprep.subr.bf16.mxu0 0
      %1752 = vmatpush2.bf16.msra.mxu0 0
      %1753 = vmatprep.subr.bf16.mxu0 0
      %1754 = vmatpush2.bf16.msra.mxu0 0
      %1755 = vmatprep.subr.bf16.mxu0 0
      %1756 = vmatpush2.bf16.msra.mxu0 0
      %1757 = vmatprep.mubr.bf16.mxu0 0
      %1758 = vmatmul.mubr.bf16.gmra.mxu0 %v1719
      %v1759 = vpop.f32.mrf.mxu0
      %v1760 = vadd.f32 0.0, %v1759
      %v1761 = vpop.f32.mrf.mxu0
      %v1762 = vpop.f32.mrf.mxu0
      %v1763 = vpop.f32.mrf.mxu0
      %1764 = vdwg.mxu0
      %v1766 = vsel %vm1649, %v1715, 0
      %v1769 = vsel %vm1721, %v1447, 0
      %1771 = vmatprep.subr.bf16.mxu0 0
      %1772 = vmatpush1.bf16.msra.mxu0 0
      %1773 = vmatprep.subr.bf16.mxu0 0
      %1774 = vmatpush1.bf16.msra.mxu0 0
      %1775 = vmatprep.subr.bf16.mxu0 0
      %1776 = vmatpush1.bf16.msra.mxu0 0
      %1777 = vmatprep.subr.bf16.mxu0 0
      %1778 = vmatpush1.bf16.msra.mxu0 0
      %1779 = vmatprep.subr.bf16.mxu0 0
      %1780 = vmatpush1.bf16.msra.mxu0 0
      %1781 = vmatprep.subr.bf16.mxu0 0
      %1782 = vmatpush1.bf16.msra.mxu0 0
      %1783 = vmatprep.subr.bf16.mxu0 0
      %1784 = vmatpush1.bf16.msra.mxu0 0
      %1785 = vmatprep.subr.bf16.mxu0 0
      %1786 = vmatpush1.bf16.msra.mxu0 %v1769
      %1787 = vmatprep.subr.bf16.mxu0 0
      %1788 = vmatpush2.bf16.msra.mxu0 0
      %1789 = vmatprep.subr.bf16.mxu0 0
      %1790 = vmatpush2.bf16.msra.mxu0 0
      %1791 = vmatprep.subr.bf16.mxu0 0
      %1792 = vmatpush2.bf16.msra.mxu0 0
      %1793 = vmatprep.subr.bf16.mxu0 0
      %1794 = vmatpush2.bf16.msra.mxu0 0
      %1795 = vmatprep.subr.bf16.mxu0 0
      %1796 = vmatpush2.bf16.msra.mxu0 0
      %1797 = vmatprep.subr.bf16.mxu0 0
      %1798 = vmatpush2.bf16.msra.mxu0 0
      %1799 = vmatprep.subr.bf16.mxu0 0
      %1800 = vmatpush2.bf16.msra.mxu0 0
      %1801 = vmatprep.subr.bf16.mxu0 0
      %1802 = vmatpush2.bf16.msra.mxu0 0
      %1803 = vmatprep.mubr.bf16.mxu0 0
      %1804 = vmatmul.mubr.bf16.gmra.mxu0 %v1766
      %v1805 = vpop.f32.mrf.mxu0
      %v1806 = vadd.f32 0.0, %v1805
      %v1807 = vpop.f32.mrf.mxu0
      %v1808 = vpop.f32.mrf.mxu0
      %v1809 = vpop.f32.mrf.mxu0
      %1810 = vdwg.mxu0
      %v1812 = vsel %vm1649, %v1716, 0
      %v1815 = vsel %vm1721, %v1450, 0
      %1817 = vmatprep.subr.bf16.mxu0 0
      %1818 = vmatpush1.bf16.msra.mxu0 0
      %1819 = vmatprep.subr.bf16.mxu0 0
      %1820 = vmatpush1.bf16.msra.mxu0 0
      %1821 = vmatprep.subr.bf16.mxu0 0
      %1822 = vmatpush1.bf16.msra.mxu0 0
      %1823 = vmatprep.subr.bf16.mxu0 0
      %1824 = vmatpush1.bf16.msra.mxu0 0
      %1825 = vmatprep.subr.bf16.mxu0 0
      %1826 = vmatpush1.bf16.msra.mxu0 0
      %1827 = vmatprep.subr.bf16.mxu0 0
      %1828 = vmatpush1.bf16.msra.mxu0 0
      %1829 = vmatprep.subr.bf16.mxu0 0
      %1830 = vmatpush1.bf16.msra.mxu0 0
      %1831 = vmatprep.subr.bf16.mxu0 0
      %1832 = vmatpush1.bf16.msra.mxu0 %v1815
      %1833 = vmatprep.subr.bf16.mxu0 0
      %1834 = vmatpush2.bf16.msra.mxu0 0
      %1835 = vmatprep.subr.bf16.mxu0 0
      %1836 = vmatpush2.bf16.msra.mxu0 0
      %1837 = vmatprep.subr.bf16.mxu0 0
      %1838 = vmatpush2.bf16.msra.mxu0 0
      %1839 = vmatprep.subr.bf16.mxu0 0
      %1840 = vmatpush2.bf16.msra.mxu0 0
      %1841 = vmatprep.subr.bf16.mxu0 0
      %1842 = vmatpush2.bf16.msra.mxu0 0
      %1843 = vmatprep.subr.bf16.mxu0 0
      %1844 = vmatpush2.bf16.msra.mxu0 0
      %1845 = vmatprep.subr.bf16.mxu0 0
      %1846 = vmatpush2.bf16.msra.mxu0 0
      %1847 = vmatprep.subr.bf16.mxu0 0
      %1848 = vmatpush2.bf16.msra.mxu0 0
      %1849 = vmatprep.mubr.bf16.mxu0 0
      %1850 = vmatmul.mubr.bf16.gmra.mxu0 %v1812
      %v1851 = vpop.f32.mrf.mxu0
      %v1852 = vadd.f32 0.0, %v1851
      %v1853 = vpop.f32.mrf.mxu0
      %v1854 = vpop.f32.mrf.mxu0
      %v1855 = vpop.f32.mrf.mxu0
      %1856 = vdwg.mxu0
      %v1858 = vsel %vm1649, %v1717, 0
      %v1861 = vsel %vm1721, %v1453, 0
      %1863 = vmatprep.subr.bf16.mxu0 0
      %1864 = vmatpush1.bf16.msra.mxu0 0
      %1865 = vmatprep.subr.bf16.mxu0 0
      %1866 = vmatpush1.bf16.msra.mxu0 0
      %1867 = vmatprep.subr.bf16.mxu0 0
      %1868 = vmatpush1.bf16.msra.mxu0 0
      %1869 = vmatprep.subr.bf16.mxu0 0
      %1870 = vmatpush1.bf16.msra.mxu0 0
      %1871 = vmatprep.subr.bf16.mxu0 0
      %1872 = vmatpush1.bf16.msra.mxu0 0
      %1873 = vmatprep.subr.bf16.mxu0 0
      %1874 = vmatpush1.bf16.msra.mxu0 0
      %1875 = vmatprep.subr.bf16.mxu0 0
      %1876 = vmatpush1.bf16.msra.mxu0 0
      %1877 = vmatprep.subr.bf16.mxu0 0
      %1878 = vmatpush1.bf16.msra.mxu0 %v1861
      %1879 = vmatprep.subr.bf16.mxu0 0
      %1880 = vmatpush2.bf16.msra.mxu0 0
      %1881 = vmatprep.subr.bf16.mxu0 0
      %1882 = vmatpush2.bf16.msra.mxu0 0
      %1883 = vmatprep.subr.bf16.mxu0 0
      %1884 = vmatpush2.bf16.msra.mxu0 0
      %1885 = vmatprep.subr.bf16.mxu0 0
      %1886 = vmatpush2.bf16.msra.mxu0 0
      %1887 = vmatprep.subr.bf16.mxu0 0
      %1888 = vmatpush2.bf16.msra.mxu0 0
      %1889 = vmatprep.subr.bf16.mxu0 0
      %1890 = vmatpush2.bf16.msra.mxu0 0
      %1891 = vmatprep.subr.bf16.mxu0 0
      %1892 = vmatpush2.bf16.msra.mxu0 0
      %1893 = vmatprep.subr.bf16.mxu0 0
      %1894 = vmatpush2.bf16.msra.mxu0 0
      %1895 = vmatprep.mubr.bf16.mxu0 0
      %1896 = vmatmul.mubr.bf16.gmra.mxu0 %v1858
      %v1897 = vpop.f32.mrf.mxu0
      %v1898 = vadd.f32 0.0, %v1897
      %v1899 = vpop.f32.mrf.mxu0
      %v1900 = vpop.f32.mrf.mxu0
      %v1901 = vpop.f32.mrf.mxu0
      %1902 = vdwg.mxu0
      %v1903 = vpack.c.bf16 %v1760, %v1760
      %v1905 = vunpack.c.l.s4 1983009808
      %v1906 = vunpack.c.0.s8 %v1905
      %v1907 = vlaneseq
      %v1908 = vshrl.u32 %v1907, 7
      %v1909 = vsub.s32 %v1906, %v1908
      %v1910 = vrot.slane %v1903, %v1909
      %v1911 = vpack.c.bf16 %v1852, %v1852
      %v1913 = vunpack.c.l.s4 1983009808
      %v1914 = vunpack.c.0.s8 %v1913
      %v1915 = vlaneseq
      %v1916 = vshrl.u32 %v1915, 7
      %v1917 = vsub.s32 %v1914, %v1916
      %v1918 = vrot.slane %v1911, %v1917
      %v1919 = vcombine.low %v1910, %v1918
      %v1920 = vcombine.high %v1910, %v1918
      %v1922 = vunpack.c.l.s4 1934713408
      %v1923 = vunpack.c.0.s8 %v1922
      %v1924 = vlaneseq
      %v1925 = vshrl.u32 %v1924, 7
      %v1926 = vsub.s32 %v1923, %v1925
      %v1927 = vrot.slane %v1919, %v1926
      %v1929 = vunpack.c.l.s4 1934713408
      %v1930 = vunpack.c.0.s8 %v1929
      %v1931 = vlaneseq
      %v1932 = vshrl.u32 %v1931, 7
      %v1933 = vsub.s32 %v1930, %v1932
      %v1934 = vrot.slane %v1920, %v1933
      %v1935 = vcombine.high %v1927, 0
      %v1936 = vcombine.high %v1934, 0
      %v1937 = vpack.c.bf16 %v1806, %v1806
      %v1939 = vunpack.c.l.s4 1983009808
      %v1940 = vunpack.c.0.s8 %v1939
      %v1941 = vlaneseq
      %v1942 = vshrl.u32 %v1941, 7
      %v1943 = vsub.s32 %v1940, %v1942
      %v1944 = vrot.slane %v1937, %v1943
      %v1945 = vpack.c.bf16 %v1898, %v1898
      %v1947 = vunpack.c.l.s4 1983009808
      %v1948 = vunpack.c.0.s8 %v1947
      %v1949 = vlaneseq
      %v1950 = vshrl.u32 %v1949, 7
      %v1951 = vsub.s32 %v1948, %v1950
      %v1952 = vrot.slane %v1945, %v1951
      %v1953 = vcombine.low %v1944, %v1952
      %v1954 = vcombine.high %v1944, %v1952
      %v1956 = vunpack.c.l.s4 1934713408
      %v1957 = vunpack.c.0.s8 %v1956
      %v1958 = vlaneseq
      %v1959 = vshrl.u32 %v1958, 7
      %v1960 = vsub.s32 %v1957, %v1959
      %v1961 = vrot.slane %v1953, %v1960
      %v1963 = vunpack.c.l.s4 1934713408
      %v1964 = vunpack.c.0.s8 %v1963
      %v1965 = vlaneseq
      %v1966 = vshrl.u32 %v1965, 7
      %v1967 = vsub.s32 %v1964, %v1966
      %v1968 = vrot.slane %v1954, %v1967
      %v1969 = vcombine.high %v1961, 0
      %v1970 = vcombine.high %v1968, 0
      %v1973 = vpack.i.b16 %v1961, %v1927
      %v1975 = vshrl.u32 %v1927, 16
      %v1976 = vshrl.u32 %v1961, 16
      %v1977 = vpack.i.b16 %v1976, %v1975
      %v1981 = vpack.i.b16 %v1969, %v1935
      %v1983 = vshrl.u32 %v1935, 16
      %v1984 = vshrl.u32 %v1969, 16
      %v1985 = vpack.i.b16 %v1984, %v1983
      %v1989 = vpack.i.b16 %v1968, %v1934
      %v1991 = vshrl.u32 %v1934, 16
      %v1992 = vshrl.u32 %v1968, 16
      %v1993 = vpack.i.b16 %v1992, %v1991
      %v1997 = vpack.i.b16 %v1970, %v1936
      %v1999 = vshrl.u32 %v1936, 16
      %v2000 = vshrl.u32 %v1970, 16
      %v2001 = vpack.i.b16 %v2000, %v1999
      %v2003 = vcombine.low %v1973, %v1989
      %v2005 = vunpack.c.l.s4 1983009808
      %v2006 = vunpack.c.0.s8 %v2005
      %v2007 = vlaneseq
      %v2008 = vshrl.u32 %v2007, 7
      %v2009 = vsub.s32 %v2006, %v2008
      %v2010 = vrot.slane %v2003, %v2009
      %v2011 = vcombine.low %v1981, %v1997
      %v2013 = vunpack.c.l.s4 1983009808
      %v2014 = vunpack.c.0.s8 %v2013
      %v2015 = vlaneseq
      %v2016 = vshrl.u32 %v2015, 7
      %v2017 = vsub.s32 %v2014, %v2016
      %v2018 = vrot.slane %v2011, %v2017
      %v2019 = vcombine.low %v2010, %v2018
      %v2021 = vunpack.c.l.s4 1934713408
      %v2022 = vunpack.c.0.s8 %v2021
      %v2023 = vlaneseq
      %v2024 = vshrl.u32 %v2023, 7
      %v2025 = vsub.s32 %v2022, %v2024
      %v2026 = vrot.slane %v2019, %v2025
      %v2027 = vcombine.high %v2026, 0
      %v2028 = vcombine.low %v1977, %v1993
      %v2030 = vunpack.c.l.s4 1983009808
      %v2031 = vunpack.c.0.s8 %v2030
      %v2032 = vlaneseq
      %v2033 = vshrl.u32 %v2032, 7
      %v2034 = vsub.s32 %v2031, %v2033
      %v2035 = vrot.slane %v2028, %v2034
      %v2036 = vcombine.low %v1985, %v2001
      %v2038 = vunpack.c.l.s4 1983009808
      %v2039 = vunpack.c.0.s8 %v2038
      %v2040 = vlaneseq
      %v2041 = vshrl.u32 %v2040, 7
      %v2042 = vsub.s32 %v2039, %v2041
      %v2043 = vrot.slane %v2036, %v2042
      %v2044 = vcombine.low %v2035, %v2043
      %v2046 = vunpack.c.l.s4 1934713408
      %v2047 = vunpack.c.0.s8 %v2046
      %v2048 = vlaneseq
      %v2049 = vshrl.u32 %v2048, 7
      %v2050 = vsub.s32 %v2047, %v2049
      %v2051 = vrot.slane %v2044, %v2050
      %v2052 = vcombine.high %v2051, 0
      %v2055 = vpack.i.b16 %v2051, %v2026
      %v2056 = vshrl.u32 %v2026, 16
      %v2057 = vshrl.u32 %v2051, 16
      %v2058 = vpack.i.b16 %v2057, %v2056
      %v2061 = vpack.i.b16 %v2052, %v2027
      %v2062 = vshrl.u32 %v2027, 16
      %v2063 = vshrl.u32 %v2052, 16
      %v2064 = vpack.i.b16 %v2063, %v2062
      %2065 = vrot.lane.b32.xlu0 %v2058, 32
      %v2066 = vpop.permute.xlu0 %2065
      %2067 = vrot.lane.b32.xlu0 %v2061, 64
      %v2068 = vpop.permute.xlu0 %2067
      %2069 = vrot.lane.b32.xlu0 %v2064, 96
      %v2070 = vpop.permute.xlu0 %2069
      %v2073 = vsel %vm1454, %v2055, %v2066
      %vm2074 = vcmask 523264
      %v2076 = vsel %vm2074, %v2073, %v2068
      %vm2077 = vcmask 785408
      %v2079 = vsel %vm2077, %v2076, %v2070
      %v2081 = vld [vmem:[%s8] sm:$0xf]
      %v2082 = vld [vmem:[%s8 + $0x4] sm:$0xf]
      %v2083 = vld [vmem:[%s8 + $0x8] sm:$0xf]
      %v2084 = vld [vmem:[%s8 + $0xc] sm:$0xf]
      %v2085 = vld [vmem:[%s8 + $0x10] sm:$0xf]
      %v2086 = vld [vmem:[%s8 + $0x14] sm:$0xf]
      %v2087 = vld [vmem:[%s8 + $0x18] sm:$0xf]
      %v2088 = vld [vmem:[%s8 + $0x1c] sm:$0xf]
      %v2089 = vld [vmem:[%s8 + $0x20] sm:$0xf]
      %v2090 = vld [vmem:[%s8 + $0x24] sm:$0xf]
      %v2091 = vld [vmem:[%s8 + $0x28] sm:$0xf]
      %v2092 = vld [vmem:[%s8 + $0x2c] sm:$0xf]
      %v2093 = vld [vmem:[%s8 + $0x30] sm:$0xf]
      %v2094 = vld [vmem:[%s8 + $0x34] sm:$0xf]
      %v2095 = vld [vmem:[%s8 + $0x38] sm:$0xf]
      %v2096 = vld [vmem:[%s8 + $0x3c] sm:$0xf]
      %v2097 = vld [vmem:[%s9] sm:$0x1]
      %v2099 = vlaneseq
      %v2100 = vshrl.u32 %v2099, 7
      %v2101 = vsub.s32 0, %v2100
      %v2102 = vrot.slane %v2097, %v2101
      %v2120 = vunpack.c.l.b16 %v2081
      %v2121 = vunpack.c.l.b16 %v2082
      %v2122 = vunpack.c.l.b16 %v2083
      %v2123 = vunpack.c.l.b16 %v2084
      %v2124 = vunpack.c.l.b16 %v2085
      %v2125 = vunpack.c.l.b16 %v2086
      %v2126 = vunpack.c.l.b16 %v2087
      %v2127 = vunpack.c.l.b16 %v2088
      %v2128 = vunpack.c.l.b16 %v2089
      %v2129 = vunpack.c.l.b16 %v2090
      %v2130 = vunpack.c.l.b16 %v2091
      %v2131 = vunpack.c.l.b16 %v2092
      %v2132 = vunpack.c.l.b16 %v2093
      %v2133 = vunpack.c.l.b16 %v2094
      %v2134 = vunpack.c.l.b16 %v2095
      %v2135 = vunpack.c.l.b16 %v2096
      %v2136 = vpack.c.b16 %v2121, %v2120
      %v2137 = vpack.c.b16 %v2123, %v2122
      %v2138 = vpack.c.b16 %v2125, %v2124
      %v2139 = vpack.c.b16 %v2127, %v2126
      %v2140 = vpack.c.b16 %v2129, %v2128
      %v2141 = vpack.c.b16 %v2131, %v2130
      %v2142 = vpack.c.b16 %v2133, %v2132
      %v2143 = vpack.c.b16 %v2135, %v2134
      %2152 = vmatprep.subr.bf16.mxu0 0
      %2153 = vmatpush1.bf16.msra.mxu0 %v2143
      %2154 = vmatprep.subr.bf16.mxu0 0
      %2155 = vmatpush1.bf16.msra.mxu0 %v2142
      %2156 = vmatprep.subr.bf16.mxu0 0
      %2157 = vmatpush1.bf16.msra.mxu0 %v2141
      %2158 = vmatprep.subr.bf16.mxu0 0
      %2159 = vmatpush1.bf16.msra.mxu0 %v2140
      %2160 = vmatprep.subr.bf16.mxu0 0
      %2161 = vmatpush1.bf16.msra.mxu0 %v2139
      %2162 = vmatprep.subr.bf16.mxu0 0
      %2163 = vmatpush1.bf16.msra.mxu0 %v2138
      %2164 = vmatprep.subr.bf16.mxu0 0
      %2165 = vmatpush1.bf16.msra.mxu0 %v2137
      %2166 = vmatprep.subr.bf16.mxu0 0
      %2167 = vmatpush1.bf16.msra.mxu0 %v2136
      %2168 = vmatprep.subr.bf16.mxu0 0
      %2169 = vmatpush2.bf16.msra.mxu0 0
      %2170 = vmatprep.subr.bf16.mxu0 0
      %2171 = vmatpush2.bf16.msra.mxu0 0
      %2172 = vmatprep.subr.bf16.mxu0 0
      %2173 = vmatpush2.bf16.msra.mxu0 0
      %2174 = vmatprep.subr.bf16.mxu0 0
      %2175 = vmatpush2.bf16.msra.mxu0 0
      %2176 = vmatprep.subr.bf16.mxu0 0
      %2177 = vmatpush2.bf16.msra.mxu0 0
      %2178 = vmatprep.subr.bf16.mxu0 0
      %2179 = vmatpush2.bf16.msra.mxu0 0
      %2180 = vmatprep.subr.bf16.mxu0 0
      %2181 = vmatpush2.bf16.msra.mxu0 0
      %2182 = vmatprep.subr.bf16.mxu0 0
      %2183 = vmatpush2.bf16.msra.mxu0 0
      %2184 = vmatprep.mubr.bf16.mxu0 0
      %2185 = vmatmul.mubr.bf16.gmra.mxu0 %v2079
      %v2186 = vpop.f32.mrf.mxu0
      %v2187 = vadd.f32 %v2102, %v2186
      %v2188 = vpop.f32.mrf.mxu0
      %v2189 = vpop.f32.mrf.mxu0
      %v2190 = vpop.f32.mrf.mxu0
      %2191 = vdwg.mxu0
      %v2192 = vadd.f32 %v608, %v2187
      %v2193 = vld [vmem:[%s10] sm:$0x1]
      %v2194 = vld [vmem:[%s11] sm:$0x1]
      %2195 = vadd.xlane.f32.xlu0 %v2192
      %v2196 = vpop.xlane.xlu0 %2195
      %v2197 = vrcp.pop 128.0
      %v2198 = vmul.f32 %v2196, %v2197
      %v2199 = vsub.f32 %v2192, %v2198
      %v2200 = vmul.f32 %v2199, %v2199
      %2201 = vadd.xlane.f32.xlu0 %v2200
      %v2202 = vpop.xlane.xlu0 %2201
      %v2203 = vmul.f32 %v2202, %v2197
      %v2204 = vadd.f32 %v2203, 1e-12
      %v2205 = vrsqrt.pop %v2204
      %v2206 = vmul.f32 %v2199, %v2205
      %v2208 = vlaneseq
      %v2209 = vshrl.u32 %v2208, 7
      %v2210 = vsub.s32 0, %v2209
      %v2211 = vrot.slane %v2193, %v2210
      %v2213 = vmul.f32 %v2206, %v2211
      %v2215 = vlaneseq
      %v2216 = vshrl.u32 %v2215, 7
      %v2217 = vsub.s32 0, %v2216
      %v2218 = vrot.slane %v2194, %v2217
      %v2220 = vadd.f32 %v2213, %v2218
      %v2221 = vpack.c.bf16 %v2220, %v2220
      %v2222 = vld [vmem:[%s12] sm:$0xff]
      %v2223 = vld [vmem:[%s12 + $0x8] sm:$0xff]
      %v2224 = vld [vmem:[%s12 + $0x10] sm:$0xff]
      %v2225 = vld [vmem:[%s12 + $0x18] sm:$0xff]
      %v2226 = vld [vmem:[%s12 + $0x20] sm:$0xff]
      %v2227 = vld [vmem:[%s12 + $0x28] sm:$0xff]
      %v2228 = vld [vmem:[%s12 + $0x30] sm:$0xff]
      %v2229 = vld [vmem:[%s12 + $0x38] sm:$0xff]
      %v2230 = vld [vmem:[%s12 + $0x40] sm:$0xff]
      %v2231 = vld [vmem:[%s12 + $0x48] sm:$0xff]
      %v2232 = vld [vmem:[%s12 + $0x50] sm:$0xff]
      %v2233 = vld [vmem:[%s12 + $0x58] sm:$0xff]
      %v2234 = vld [vmem:[%s12 + $0x60] sm:$0xff]
      %v2235 = vld [vmem:[%s12 + $0x68] sm:$0xff]
      %v2236 = vld [vmem:[%s12 + $0x70] sm:$0xff]
      %v2237 = vld [vmem:[%s12 + $0x78] sm:$0xff]
      %v2238 = vld [vmem:[%s13] sm:$0x3]
      %v2240 = vlaneseq
      %v2241 = vshrl.u32 %v2240, 7
      %v2242 = vsub.s32 0, %v2241
      %v2243 = vrot.slane %v2238, %v2242
      %v2244 = vlaneseq
      %v2245 = vshrl.u32 %v2244, 7
      %v2246 = vsub.s32 1, %v2245
      %v2247 = vrot.slane %v2238, %v2246
      %v2266 = vunpack.c.l.b16 %v2222
      %v2267 = vunpack.c.h.b16 %v2222
      %v2268 = vunpack.c.l.b16 %v2223
      %v2269 = vunpack.c.h.b16 %v2223
      %v2270 = vunpack.c.l.b16 %v2224
      %v2271 = vunpack.c.h.b16 %v2224
      %v2272 = vunpack.c.l.b16 %v2225
      %v2273 = vunpack.c.h.b16 %v2225
      %v2274 = vunpack.c.l.b16 %v2226
      %v2275 = vunpack.c.h.b16 %v2226
      %v2276 = vunpack.c.l.b16 %v2227
      %v2277 = vunpack.c.h.b16 %v2227
      %v2278 = vunpack.c.l.b16 %v2228
      %v2279 = vunpack.c.h.b16 %v2228
      %v2280 = vunpack.c.l.b16 %v2229
      %v2281 = vunpack.c.h.b16 %v2229
      %v2282 = vunpack.c.l.b16 %v2230
      %v2283 = vunpack.c.h.b16 %v2230
      %v2284 = vunpack.c.l.b16 %v2231
      %v2285 = vunpack.c.h.b16 %v2231
      %v2286 = vunpack.c.l.b16 %v2232
      %v2287 = vunpack.c.h.b16 %v2232
      %v2288 = vunpack.c.l.b16 %v2233
      %v2289 = vunpack.c.h.b16 %v2233
      %v2290 = vunpack.c.l.b16 %v2234
      %v2291 = vunpack.c.h.b16 %v2234
      %v2292 = vunpack.c.l.b16 %v2235
      %v2293 = vunpack.c.h.b16 %v2235
      %v2294 = vunpack.c.l.b16 %v2236
      %v2295 = vunpack.c.h.b16 %v2236
      %v2296 = vunpack.c.l.b16 %v2237
      %v2297 = vunpack.c.h.b16 %v2237
      %v2298 = vpack.c.b16 %v2268, %v2266
      %v2299 = vpack.c.b16 %v2269, %v2267
      %v2300 = vpack.c.b16 %v2272, %v2270
      %v2301 = vpack.c.b16 %v2273, %v2271
      %v2302 = vpack.c.b16 %v2276, %v2274
      %v2303 = vpack.c.b16 %v2277, %v2275
      %v2304 = vpack.c.b16 %v2280, %v2278
      %v2305 = vpack.c.b16 %v2281, %v2279
      %v2306 = vpack.c.b16 %v2284, %v2282
      %v2307 = vpack.c.b16 %v2285, %v2283
      %v2308 = vpack.c.b16 %v2288, %v2286
      %v2309 = vpack.c.b16 %v2289, %v2287
      %v2310 = vpack.c.b16 %v2292, %v2290
      %v2311 = vpack.c.b16 %v2293, %v2291
      %v2312 = vpack.c.b16 %v2296, %v2294
      %v2313 = vpack.c.b16 %v2297, %v2295
      %2330 = vmatprep.subr.bf16.mxu0 %v2313
      %2331 = vmatpush1.bf16.msra.mxu0 %v2312
      %2332 = vmatprep.subr.bf16.mxu0 %v2311
      %2333 = vmatpush1.bf16.msra.mxu0 %v2310
      %2334 = vmatprep.subr.bf16.mxu0 %v2309
      %2335 = vmatpush1.bf16.msra.mxu0 %v2308
      %2336 = vmatprep.subr.bf16.mxu0 %v2307
      %2337 = vmatpush1.bf16.msra.mxu0 %v2306
      %2338 = vmatprep.subr.bf16.mxu0 %v2305
      %2339 = vmatpush1.bf16.msra.mxu0 %v2304
      %2340 = vmatprep.subr.bf16.mxu0 %v2303
      %2341 = vmatpush1.bf16.msra.mxu0 %v2302
      %2342 = vmatprep.subr.bf16.mxu0 %v2301
      %2343 = vmatpush1.bf16.msra.mxu0 %v2300
      %2344 = vmatprep.subr.bf16.mxu0 %v2299
      %2345 = vmatpush1.bf16.msra.mxu0 %v2298
      %2346 = vmatprep.subr.bf16.mxu0 0
      %2347 = vmatpush2.bf16.msra.mxu0 0
      %2348 = vmatprep.subr.bf16.mxu0 0
      %2349 = vmatpush2.bf16.msra.mxu0 0
      %2350 = vmatprep.subr.bf16.mxu0 0
      %2351 = vmatpush2.bf16.msra.mxu0 0
      %2352 = vmatprep.subr.bf16.mxu0 0
      %2353 = vmatpush2.bf16.msra.mxu0 0
      %2354 = vmatprep.subr.bf16.mxu0 0
      %2355 = vmatpush2.bf16.msra.mxu0 0
      %2356 = vmatprep.subr.bf16.mxu0 0
      %2357 = vmatpush2.bf16.msra.mxu0 0
      %2358 = vmatprep.subr.bf16.mxu0 0
      %2359 = vmatpush2.bf16.msra.mxu0 0
      %2360 = vmatprep.subr.bf16.mxu0 0
      %2361 = vmatpush2.bf16.msra.mxu0 0
      %2362 = vmatprep.mubr.bf16.mxu0 0
      %2363 = vmatmul.mubr.bf16.gmra.mxu0 %v2221
      %v2364 = vpop.f32.mrf.mxu0
      %v2365 = vadd.f32 %v2243, %v2364
      %v2366 = vpop.f32.mrf.mxu0
      %v2367 = vadd.f32 %v2247, %v2366
      %v2368 = vpop.f32.mrf.mxu0
      %v2369 = vpop.f32.mrf.mxu0
      %2370 = vdwg.mxu0
      %v2371 = vmul.f32 %v2365, 0.5
      %v2372 = vmul.f32 %v2367, 0.5
      %v2373 = vrcp.pop 1.4142135
      %v2374 = vmul.f32 %v2365, %v2373
      %v2375 = vmul.f32 %v2367, %v2373
      %v2376 = verf.f32.pop %v2374
      %v2377 = verf.f32.pop %v2375
      %v2378 = vadd.f32 %v2376, 1.0
      %v2379 = vadd.f32 %v2377, 1.0
      %v2380 = vmul.f32 %v2371, %v2378
      %v2381 = vmul.f32 %v2372, %v2379
      %v2382 = vpack.c.bf16 %v2380, %v2380
      %v2383 = vpack.c.bf16 %v2381, %v2381
      %v2384 = vld [vmem:[%s14] sm:$0xf]
      %v2385 = vld [vmem:[%s14 + $0x4] sm:$0xf]
      %v2386 = vld [vmem:[%s14 + $0x8] sm:$0xf]
      %v2387 = vld [vmem:[%s14 + $0xc] sm:$0xf]
      %v2388 = vld [vmem:[%s14 + $0x10] sm:$0xf]
      %v2389 = vld [vmem:[%s14 + $0x14] sm:$0xf]
      %v2390 = vld [vmem:[%s14 + $0x18] sm:$0xf]
      %v2391 = vld [vmem:[%s14 + $0x1c] sm:$0xf]
      %v2392 = vld [vmem:[%s14 + $0x20] sm:$0xf]
      %v2393 = vld [vmem:[%s14 + $0x24] sm:$0xf]
      %v2394 = vld [vmem:[%s14 + $0x28] sm:$0xf]
      %v2395 = vld [vmem:[%s14 + $0x2c] sm:$0xf]
      %v2396 = vld [vmem:[%s14 + $0x30] sm:$0xf]
      %v2397 = vld [vmem:[%s14 + $0x34] sm:$0xf]
      %v2398 = vld [vmem:[%s14 + $0x38] sm:$0xf]
      %v2399 = vld [vmem:[%s14 + $0x3c] sm:$0xf]
      %v2400 = vld [vmem:[%s14 + $0x40] sm:$0xf]
      %v2401 = vld [vmem:[%s14 + $0x44] sm:$0xf]
      %v2402 = vld [vmem:[%s14 + $0x48] sm:$0xf]
      %v2403 = vld [vmem:[%s14 + $0x4c] sm:$0xf]
      %v2404 = vld [vmem:[%s14 + $0x50] sm:$0xf]
      %v2405 = vld [vmem:[%s14 + $0x54] sm:$0xf]
      %v2406 = vld [vmem:[%s14 + $0x58] sm:$0xf]
      %v2407 = vld [vmem:[%s14 + $0x5c] sm:$0xf]
      %v2408 = vld [vmem:[%s14 + $0x60] sm:$0xf]
      %v2409 = vld [vmem:[%s14 + $0x64] sm:$0xf]
      %v2410 = vld [vmem:[%s14 + $0x68] sm:$0xf]
      %v2411 = vld [vmem:[%s14 + $0x6c] sm:$0xf]
      %v2412 = vld [vmem:[%s14 + $0x70] sm:$0xf]
      %v2413 = vld [vmem:[%s14 + $0x74] sm:$0xf]
      %v2414 = vld [vmem:[%s14 + $0x78] sm:$0xf]
      %v2415 = vld [vmem:[%s14 + $0x7c] sm:$0xf]
      %v2416 = vld [vmem:[%s15] sm:$0x1]
      %v2418 = vlaneseq
      %v2419 = vshrl.u32 %v2418, 7
      %v2420 = vsub.s32 0, %v2419
      %v2421 = vrot.slane %v2416, %v2420
      %v2455 = vunpack.c.l.b16 %v2384
      %v2456 = vunpack.c.l.b16 %v2385
      %v2457 = vunpack.c.l.b16 %v2386
      %v2458 = vunpack.c.l.b16 %v2387
      %v2459 = vunpack.c.l.b16 %v2388
      %v2460 = vunpack.c.l.b16 %v2389
      %v2461 = vunpack.c.l.b16 %v2390
      %v2462 = vunpack.c.l.b16 %v2391
      %v2463 = vunpack.c.l.b16 %v2392
      %v2464 = vunpack.c.l.b16 %v2393
      %v2465 = vunpack.c.l.b16 %v2394
      %v2466 = vunpack.c.l.b16 %v2395
      %v2467 = vunpack.c.l.b16 %v2396
      %v2468 = vunpack.c.l.b16 %v2397
      %v2469 = vunpack.c.l.b16 %v2398
      %v2470 = vunpack.c.l.b16 %v2399
      %v2471 = vunpack.c.l.b16 %v2400
      %v2472 = vunpack.c.l.b16 %v2401
      %v2473 = vunpack.c.l.b16 %v2402
      %v2474 = vunpack.c.l.b16 %v2403
      %v2475 = vunpack.c.l.b16 %v2404
      %v2476 = vunpack.c.l.b16 %v2405
      %v2477 = vunpack.c.l.b16 %v2406
      %v2478 = vunpack.c.l.b16 %v2407
      %v2479 = vunpack.c.l.b16 %v2408
      %v2480 = vunpack.c.l.b16 %v2409
      %v2481 = vunpack.c.l.b16 %v2410
      %v2482 = vunpack.c.l.b16 %v2411
      %v2483 = vunpack.c.l.b16 %v2412
      %v2484 = vunpack.c.l.b16 %v2413
      %v2485 = vunpack.c.l.b16 %v2414
      %v2486 = vunpack.c.l.b16 %v2415
      %v2487 = vpack.c.b16 %v2456, %v2455
      %v2488 = vpack.c.b16 %v2458, %v2457
      %v2489 = vpack.c.b16 %v2460, %v2459
      %v2490 = vpack.c.b16 %v2462, %v2461
      %v2491 = vpack.c.b16 %v2464, %v2463
      %v2492 = vpack.c.b16 %v2466, %v2465
      %v2493 = vpack.c.b16 %v2468, %v2467
      %v2494 = vpack.c.b16 %v2470, %v2469
      %v2495 = vpack.c.b16 %v2472, %v2471
      %v2496 = vpack.c.b16 %v2474, %v2473
      %v2497 = vpack.c.b16 %v2476, %v2475
      %v2498 = vpack.c.b16 %v2478, %v2477
      %v2499 = vpack.c.b16 %v2480, %v2479
      %v2500 = vpack.c.b16 %v2482, %v2481
      %v2501 = vpack.c.b16 %v2484, %v2483
      %v2502 = vpack.c.b16 %v2486, %v2485
      %2519 = vmatprep.subr.bf16.mxu0 0
      %2520 = vmatpush1.bf16.msra.mxu0 %v2494
      %2521 = vmatprep.subr.bf16.mxu0 0
      %2522 = vmatpush1.bf16.msra.mxu0 %v2493
      %2523 = vmatprep.subr.bf16.mxu0 0
      %2524 = vmatpush1.bf16.msra.mxu0 %v2492
      %2525 = vmatprep.subr.bf16.mxu0 0
      %2526 = vmatpush1.bf16.msra.mxu0 %v2491
      %2527 = vmatprep.subr.bf16.mxu0 0
      %2528 = vmatpush1.bf16.msra.mxu0 %v2490
      %2529 = vmatprep.subr.bf16.mxu0 0
      %2530 = vmatpush1.bf16.msra.mxu0 %v2489
      %2531 = vmatprep.subr.bf16.mxu0 0
      %2532 = vmatpush1.bf16.msra.mxu0 %v2488
      %2533 = vmatprep.subr.bf16.mxu0 0
      %2534 = vmatpush1.bf16.msra.mxu0 %v2487
      %2535 = vmatprep.subr.bf16.mxu0 0
      %2536 = vmatpush2.bf16.msra.mxu0 %v2502
      %2537 = vmatprep.subr.bf16.mxu0 0
      %2538 = vmatpush2.bf16.msra.mxu0 %v2501
      %2539 = vmatprep.subr.bf16.mxu0 0
      %2540 = vmatpush2.bf16.msra.mxu0 %v2500
      %2541 = vmatprep.subr.bf16.mxu0 0
      %2542 = vmatpush2.bf16.msra.mxu0 %v2499
      %2543 = vmatprep.subr.bf16.mxu0 0
      %2544 = vmatpush2.bf16.msra.mxu0 %v2498
      %2545 = vmatprep.subr.bf16.mxu0 0
      %2546 = vmatpush2.bf16.msra.mxu0 %v2497
      %2547 = vmatprep.subr.bf16.mxu0 0
      %2548 = vmatpush2.bf16.msra.mxu0 %v2496
      %2549 = vmatprep.subr.bf16.mxu0 0
      %2550 = vmatpush2.bf16.msra.mxu0 %v2495
      %2551 = vmatprep.mubr.bf16.mxu0 %v2383
      %2552 = vmatmul.mubr.bf16.gmra.mxu0 %v2382
      %v2553 = vpop.f32.mrf.mxu0
      %v2554 = vadd.f32 %v2421, %v2553
      %v2555 = vpop.f32.mrf.mxu0
      %v2556 = vpop.f32.mrf.mxu0
      %v2557 = vpop.f32.mrf.mxu0
      %2558 = vdwg.mxu0
      %v2559 = vadd.f32 %v2220, %v2554
      %v2560 = vld [vmem:[%s16] sm:$0x1]
      %v2561 = vld [vmem:[%s17] sm:$0x1]
      %2562 = vadd.xlane.f32.xlu0 %v2559
      %v2563 = vpop.xlane.xlu0 %2562
      %v2564 = vmul.f32 %v2563, %v2197
      %v2565 = vsub.f32 %v2559, %v2564
      %v2566 = vmul.f32 %v2565, %v2565
      %2567 = vadd.xlane.f32.xlu0 %v2566
      %v2568 = vpop.xlane.xlu0 %2567
      %v2569 = vmul.f32 %v2568, %v2197
      %v2570 = vadd.f32 %v2569, 1e-12
      %v2571 = vrsqrt.pop %v2570
      %v2572 = vmul.f32 %v2565, %v2571
      %v2574 = vlaneseq
      %v2575 = vshrl.u32 %v2574, 7
      %v2576 = vsub.s32 0, %v2575
      %v2577 = vrot.slane %v2560, %v2576
      %v2579 = vmul.f32 %v2572, %v2577
      %v2581 = vlaneseq
      %v2582 = vshrl.u32 %v2581, 7
      %v2583 = vsub.s32 0, %v2582
      %v2584 = vrot.slane %v2561, %v2583
      %v2586 = vadd.f32 %v2579, %v2584
      %2587 = vst [vmem:[%s604] sm:$0xff] %v2586
      %p2588 = scmp.lt.s32.totalorder %s33, 1
      %s2589 = scalar_select %p2588, %s33, 1
      %p2590 = scmp.lt.s32.totalorder %s34, 0
      %s2591 = scalar_select %p2590, %s34, 0
      %s2592 = sadd.s32 %s2591, %s2589
      %s2593 = smul.addr %s2592, 8
      %s2594 = scalar_lea.vmem %s18, %s2593
      // Predicated region
      $region93: #{bert_forward.2} parent=91 // pred_check
        %p2595 = pneg %p449
      $region94: #{bert_forward.2} parent=91 // pred_check_branch
        %2597 = sbr.rel (%p2595) target = $region96
      $region95: #{bert_forward.2} parent=91 // pred_region
        _
      $region96: #{bert_forward.2} parent=91 // pred_fallthru
        _
    $region92: #{bert_forward.2} parent=5 // pred_fallthru
      _
    %p2598 = scmp.le.s32.totalorder 2, %s24
    // Predicated region
    $region97: #{bert_forward.2} parent=5 // pred_check
      %p2599 = pneg %p2598
    $region98: #{bert_forward.2} parent=5 // pred_check_branch
      %2601 = sbr.rel (%p2599) target = $region100
    $region99: #{bert_forward.2} parent=5 // pred_region
      %s2602 = ssub.s32 %s24, 2
      // Predicated region
      $region101: #{bert_forward.2} parent=99 // pred_check
        %p2603 = pneg %p455
      $region102: #{bert_forward.2} parent=99 // pred_check_branch
        %2605 = sbr.rel (%p2603) target = $region104
      $region103: #{bert_forward.2} parent=99 // pred_region
        %p2606 = scmp.lt.s32.totalorder %s35, 1
        %s2607 = scalar_select %p2606, %s35, 1
        %p2608 = scmp.lt.s32.totalorder %s36, 0
        %s2609 = scalar_select %p2608, %s36, 0
        %s2610 = sadd.s32 %s2609, %s2607
        %s2611 = smul.addr %s2610, 8
        %s2612 = scalar_lea.vmem %s18, %s2611
      $region104: #{bert_forward.2} parent=99 // pred_fallthru
        _
    $region100: #{bert_forward.2} parent=5 // pred_fallthru
      _
  $region6: #{bert_forward.2} parent=0 // loop_footer
    %s28 = sadd.s32 1, %s24
  $region7: #{bert_forward.2} parent=0 // loop_footer_branch
    %23 = sbr.rel target = $region3
  $region8: #{bert_forward.2} parent=0 // loop_exit
    _

// kernel: bert_forward.3
$region0: #{bert_forward.3}
  #allocation0 [shape = 'u32[]', space=smem, size = 0x4, offset = 0x4, fixed_abs, tag = 'smem constant byte address 0x4 - core index']
  #allocation1 [shape = 'u32[144,128]{1,0:T(1,128)}', space=vmem, size = 0x12000, scoped, tag = 'internal scratch']
  %s0 = inlined_call_operand.vmem [shape: f32[2,8,128], index: 0, kind: input, shape index: {}]
  %s1 = inlined_call_operand.vmem [shape: f32[2,1,8], index: 1, kind: input, shape index: {}]
  %s2 = inlined_call_operand.vmem [shape: bf16[128,128], index: 2, kind: input, shape index: {}]
  %s3 = inlined_call_operand.vmem [shape: f32[1,128], index: 3, kind: input, shape index: {}]
  %s4 = inlined_call_operand.vmem [shape: bf16[128,128], index: 4, kind: input, shape index: {}]
  %s5 = inlined_call_operand.vmem [shape: f32[1,128], index: 5, kind: input, shape index: {}]
  %s6 = inlined_call_operand.vmem [shape: bf16[128,128], index: 6, kind: input, shape index: {}]
  %s7 = inlined_call_operand.vmem [shape: f32[1,128], index: 7, kind: input, shape index: {}]
  %s8 = inlined_call_operand.vmem [shape: bf16[128,128], index: 8, kind: input, shape index: {}]
  %s9 = inlined_call_operand.vmem [shape: f32[1,128], index: 9, kind: input, shape index: {}]
  %s10 = inlined_call_operand.vmem [shape: f32[1,128], index: 10, kind: input, shape index: {}]
  %s11 = inlined_call_operand.vmem [shape: f32[1,128], index: 11, kind: input, shape index: {}]
  %s12 = inlined_call_operand.vmem [shape: bf16[128,256], index: 12, kind: input, shape index: {}]
  %s13 = inlined_call_operand.vmem [shape: f32[1,256], index: 13, kind: input, shape index: {}]
  %s14 = inlined_call_operand.vmem [shape: bf16[256,128], index: 14, kind: input, shape index: {}]
  %s15 = inlined_call_operand.vmem [shape: f32[1,128], index: 15, kind: input, shape index: {}]
  %s16 = inlined_call_operand.vmem [shape: f32[1,128], index: 16, kind: input, shape index: {}]
  %s17 = inlined_call_operand.vmem [shape: f32[1,128], index: 17, kind: input, shape index: {}]
  %s18 = inlined_call_operand.hbm [shape: f32[2,8,128], index: 18, kind: output, shape index: {}]
  %s19 = sld [smem:[#allocation0]]
  $region105: #{bert_forward.3} parent=0
    _
  %s21 = ssub.s32 1, %s19
  %s22 = scalar_select 0, %s21, %s19
  $region1: #{bert_forward.3} parent=0
    #allocation2 [shape = 'u8[8192]{0}', space=vmem, size = 0x2000, scoped, tag = 'output window, operand 0']
    #allocation3 [shape = 's32[2]{0}', space=sflag, size = 0x8, scoped, tag = 'scoped memory for bert_forward.3']
    %23 = vsyncpa [#allocation3], 0
    %s24 = scalar_lea.sflag [#allocation3], 1
    %25 = vsyncpa %s24, 0
    loop: start=0, step=1, limit=4
    $region2: #{bert_forward.3} parent=1 // loop_pre_header
      _
    $region3: #{bert_forward.3} parent=1 // loop_header
      %s27 = sphi 0, %s31
      %p28 = scmp.ge.s32.totalorder %s27, 4
      %s34 = sphi 0, %s46
      %s35 = sphi 0, %s42
      %s36 = sphi 0, %s34
      %s37 = sphi 0, %s35
      %s38 = sphi 0, %s36
      %s39 = sphi 0, %s37
      %s49 = sphi 0, %s51
      %s52 = sphi 0, %s49
      %s53 = sphi 0, %s52
      %s69 = sphi 0, %s53
      %s75 = sphi 0, %s77
      %s78 = sphi 0, %s75
      %s79 = sphi 0, %s78
      %s95 = sphi 0, %s79
      %s99 = sphi 0, %s99
      %s101 = sphi 0, %s99
      %s102 = sphi 0, %s101
      %s116 = sphi 0, %s102
      %s120 = sphi 0, %s120
      %s122 = sphi 0, %s120
      %s123 = sphi 0, %s122
      %s137 = sphi 0, %s123
      %s141 = sphi 0, %s141
      %s143 = sphi 0, %s141
      %s144 = sphi 0, %s143
      %s158 = sphi 0, %s144
      %s162 = sphi 0, %s162
      %s164 = sphi 0, %s162
      %s165 = sphi 0, %s164
      %s179 = sphi 0, %s165
      %s183 = sphi 0, %s183
      %s185 = sphi 0, %s183
      %s186 = sphi 0, %s185
      %s200 = sphi 0, %s186
      %s204 = sphi 0, %s204
      %s206 = sphi 0, %s204
      %s207 = sphi 0, %s206
      %s221 = sphi 0, %s207
      %s225 = sphi 0, %s225
      %s227 = sphi 0, %s225
      %s228 = sphi 0, %s227
      %s242 = sphi 0, %s228
      %s246 = sphi 0, %s246
      %s248 = sphi 0, %s246
      %s249 = sphi 0, %s248
      %s263 = sphi 0, %s249
      %s267 = sphi 0, %s267
      %s269 = sphi 0, %s267
      %s270 = sphi 0, %s269
      %s284 = sphi 0, %s270
      %s288 = sphi 0, %s288
      %s290 = sphi 0, %s288
      %s291 = sphi 0, %s290
      %s305 = sphi 0, %s291
      %s309 = sphi 0, %s309
      %s311 = sphi 0, %s309
      %s312 = sphi 0, %s311
      %s326 = sphi 0, %s312
      %s330 = sphi 0, %s330
      %s332 = sphi 0, %s330
      %s333 = sphi 0, %s332
      %s347 = sphi 0, %s333
      %s351 = sphi 0, %s351
      %s353 = sphi 0, %s351
      %s354 = sphi 0, %s353
      %s368 = sphi 0, %s354
      %s372 = sphi 0, %s372
      %s374 = sphi 0, %s372
      %s375 = sphi 0, %s374
      %s389 = sphi 0, %s375
      %s393 = sphi 0, %s393
      %s395 = sphi 0, %s393
      %s396 = sphi 0, %s395
      %s410 = sphi 0, %s396
      %s414 = sphi 0, %s414
      %s416 = sphi 0, %s414
      %s417 = sphi 0, %s416
      %s431 = sphi 0, %s417
      %s439 = sphi 0, %s441
      %s442 = sphi 0, %s439
      %s443 = sphi 0, %s442
      %s459 = sphi 0, %s443
    $region4: #{bert_forward.3} parent=1 // loop_header_branch
      %30 = sbr.rel (%p28) target = $region8
    $region5: #{bert_forward.3} parent=1 // loop_body
      %s32 = ssub.s32 %s27, 1
      %s33 = ssub.s32 %s27, 2
      %s40 = sadd.s32 1, %s35
      %p41 = scmp.ge.s32.totalorder %s40, 1
      %s42 = scalar_select %p41, 0, %s40
      %s43 = sadd.s32 1, %s34
      %s44 = scalar_select %p41, %s43, %s34
      %p45 = scmp.ge.s32.totalorder %s44, 2
      %s46 = scalar_select %p45, 0, %s44
      %s47 = ssub.s32 %s34, %s46
      %p48 = scmp.eq.s32.totalorder %s47, 0
      %s50 = sadd.s32 %s49, 1
      %s51 = scalar_select %p48, %s49, %s50
      %p54 = pneg %p48
      %p55 = scmp.eq.s32.totalorder %s27, 1
      %p56 = por %p54, %p55
      %p57 = scmp.ne.s32.totalorder %s49, %s52
      %p58 = scmp.eq.s32.totalorder %s27, 0
      %p59 = por %p57, %p58
      %p60 = scmp.ne.s32.totalorder %s49, %s52
      %p61 = scmp.eq.s32.totalorder %s32, 1
      %p62 = por %p60, %p61
      %p63 = scmp.ne.s32.totalorder %s52, %s53
      %p64 = scmp.eq.s32.totalorder %s32, 0
      %p65 = por %p63, %p64
      %p66 = scmp.ne.s32.totalorder %s52, %s53
      %p67 = scmp.eq.s32.totalorder %s33, 1
      %p68 = por %p66, %p67
      %p70 = scmp.ne.s32.totalorder %s53, %s69
      %p71 = scmp.eq.s32.totalorder %s33, 0
      %p72 = por %p70, %p71
      %s73 = ssub.s32 %s34, %s46
      %p74 = scmp.eq.s32.totalorder %s73, 0
      %s76 = sadd.s32 %s75, 1
      %s77 = scalar_select %p74, %s75, %s76
      %p80 = pneg %p74
      %p81 = scmp.eq.s32.totalorder %s27, 1
      %p82 = por %p80, %p81
      %p83 = scmp.ne.s32.totalorder %s75, %s78
      %p84 = scmp.eq.s32.totalorder %s27, 0
      %p85 = por %p83, %p84
      %p86 = scmp.ne.s32.totalorder %s75, %s78
      %p87 = scmp.eq.s32.totalorder %s32, 1
      %p88 = por %p86, %p87
      %p89 = scmp.ne.s32.totalorder %s78, %s79
      %p90 = scmp.eq.s32.totalorder %s32, 0
      %p91 = por %p89, %p90
      %p92 = scmp.ne.s32.totalorder %s78, %s79
      %p93 = scmp.eq.s32.totalorder %s33, 1
      %p94 = por %p92, %p93
      %p96 = scmp.ne.s32.totalorder %s79, %s95
      %p97 = scmp.eq.s32.totalorder %s33, 0
      %p98 = por %p96, %p97
      %s100 = sadd.s32 %s99, 1
      %p103 = scmp.eq.s32.totalorder %s27, 1
      %p104 = scmp.ne.s32.totalorder %s99, %s101
      %p105 = scmp.eq.s32.totalorder %s27, 0
      %p106 = por %p104, %p105
      %p107 = scmp.ne.s32.totalorder %s99, %s101
      %p108 = scmp.eq.s32.totalorder %s32, 1
      %p109 = por %p107, %p108
      %p110 = scmp.ne.s32.totalorder %s101, %s102
      %p111 = scmp.eq.s32.totalorder %s32, 0
      %p112 = por %p110, %p111
      %p113 = scmp.ne.s32.totalorder %s101, %s102
      %p114 = scmp.eq.s32.totalorder %s33, 1
      %p115 = por %p113, %p114
      %p117 = scmp.ne.s32.totalorder %s102, %s116
      %p118 = scmp.eq.s32.totalorder %s33, 0
      %p119 = por %p117, %p118
      %s121 = sadd.s32 %s120, 1
      %p124 = scmp.eq.s32.totalorder %s27, 1
      %p125 = scmp.ne.s32.totalorder %s120, %s122
      %p126 = scmp.eq.s32.totalorder %s27, 0
      %p127 = por %p125, %p126
      %p128 = scmp.ne.s32.totalorder %s120, %s122
      %p129 = scmp.eq.s32.totalorder %s32, 1
      %p130 = por %p128, %p129
      %p131 = scmp.ne.s32.totalorder %s122, %s123
      %p132 = scmp.eq.s32.totalorder %s32, 0
      %p133 = por %p131, %p132
      %p134 = scmp.ne.s32.totalorder %s122, %s123
      %p135 = scmp.eq.s32.totalorder %s33, 1
      %p136 = por %p134, %p135
      %p138 = scmp.ne.s32.totalorder %s123, %s137
      %p139 = scmp.eq.s32.totalorder %s33, 0
      %p140 = por %p138, %p139
      %s142 = sadd.s32 %s141, 1
      %p145 = scmp.eq.s32.totalorder %s27, 1
      %p146 = scmp.ne.s32.totalorder %s141, %s143
      %p147 = scmp.eq.s32.totalorder %s27, 0
      %p148 = por %p146, %p147
      %p149 = scmp.ne.s32.totalorder %s141, %s143
      %p150 = scmp.eq.s32.totalorder %s32, 1
      %p151 = por %p149, %p150
      %p152 = scmp.ne.s32.totalorder %s143, %s144
      %p153 = scmp.eq.s32.totalorder %s32, 0
      %p154 = por %p152, %p153
      %p155 = scmp.ne.s32.totalorder %s143, %s144
      %p156 = scmp.eq.s32.totalorder %s33, 1
      %p157 = por %p155, %p156
      %p159 = scmp.ne.s32.totalorder %s144, %s158
      %p160 = scmp.eq.s32.totalorder %s33, 0
      %p161 = por %p159, %p160
      %s163 = sadd.s32 %s162, 1
      %p166 = scmp.eq.s32.totalorder %s27, 1
      %p167 = scmp.ne.s32.totalorder %s162, %s164
      %p168 = scmp.eq.s32.totalorder %s27, 0
      %p169 = por %p167, %p168
      %p170 = scmp.ne.s32.totalorder %s162, %s164
      %p171 = scmp.eq.s32.totalorder %s32, 1
      %p172 = por %p170, %p171
      %p173 = scmp.ne.s32.totalorder %s164, %s165
      %p174 = scmp.eq.s32.totalorder %s32, 0
      %p175 = por %p173, %p174
      %p176 = scmp.ne.s32.totalorder %s164, %s165
      %p177 = scmp.eq.s32.totalorder %s33, 1
      %p178 = por %p176, %p177
      %p180 = scmp.ne.s32.totalorder %s165, %s179
      %p181 = scmp.eq.s32.totalorder %s33, 0
      %p182 = por %p180, %p181
      %s184 = sadd.s32 %s183, 1
      %p187 = scmp.eq.s32.totalorder %s27, 1
      %p188 = scmp.ne.s32.totalorder %s183, %s185
      %p189 = scmp.eq.s32.totalorder %s27, 0
      %p190 = por %p188, %p189
      %p191 = scmp.ne.s32.totalorder %s183, %s185
      %p192 = scmp.eq.s32.totalorder %s32, 1
      %p193 = por %p191, %p192
      %p194 = scmp.ne.s32.totalorder %s185, %s186
      %p195 = scmp.eq.s32.totalorder %s32, 0
      %p196 = por %p194, %p195
      %p197 = scmp.ne.s32.totalorder %s185, %s186
      %p198 = scmp.eq.s32.totalorder %s33, 1
      %p199 = por %p197, %p198
      %p201 = scmp.ne.s32.totalorder %s186, %s200
      %p202 = scmp.eq.s32.totalorder %s33, 0
      %p203 = por %p201, %p202
      %s205 = sadd.s32 %s204, 1
      %p208 = scmp.eq.s32.totalorder %s27, 1
      %p209 = scmp.ne.s32.totalorder %s204, %s206
      %p210 = scmp.eq.s32.totalorder %s27, 0
      %p211 = por %p209, %p210
      %p212 = scmp.ne.s32.totalorder %s204, %s206
      %p213 = scmp.eq.s32.totalorder %s32, 1
      %p214 = por %p212, %p213
      %p215 = scmp.ne.s32.totalorder %s206, %s207
      %p216 = scmp.eq.s32.totalorder %s32, 0
      %p217 = por %p215, %p216
      %p218 = scmp.ne.s32.totalorder %s206, %s207
      %p219 = scmp.eq.s32.totalorder %s33, 1
      %p220 = por %p218, %p219
      %p222 = scmp.ne.s32.totalorder %s207, %s221
      %p223 = scmp.eq.s32.totalorder %s33, 0
      %p224 = por %p222, %p223
      %s226 = sadd.s32 %s225, 1
      %p229 = scmp.eq.s32.totalorder %s27, 1
      %p230 = scmp.ne.s32.totalorder %s225, %s227
      %p231 = scmp.eq.s32.totalorder %s27, 0
      %p232 = por %p230, %p231
      %p233 = scmp.ne.s32.totalorder %s225, %s227
      %p234 = scmp.eq.s32.totalorder %s32, 1
      %p235 = por %p233, %p234
      %p236 = scmp.ne.s32.totalorder %s227, %s228
      %p237 = scmp.eq.s32.totalorder %s32, 0
      %p238 = por %p236, %p237
      %p239 = scmp.ne.s32.totalorder %s227, %s228
      %p240 = scmp.eq.s32.totalorder %s33, 1
      %p241 = por %p239, %p240
      %p243 = scmp.ne.s32.totalorder %s228, %s242
      %p244 = scmp.eq.s32.totalorder %s33, 0
      %p245 = por %p243, %p244
      %s247 = sadd.s32 %s246, 1
      %p250 = scmp.eq.s32.totalorder %s27, 1
      %p251 = scmp.ne.s32.totalorder %s246, %s248
      %p252 = scmp.eq.s32.totalorder %s27, 0
      %p253 = por %p251, %p252
      %p254 = scmp.ne.s32.totalorder %s246, %s248
      %p255 = scmp.eq.s32.totalorder %s32, 1
      %p256 = por %p254, %p255
      %p257 = scmp.ne.s32.totalorder %s248, %s249
      %p258 = scmp.eq.s32.totalorder %s32, 0
      %p259 = por %p257, %p258
      %p260 = scmp.ne.s32.totalorder %s248, %s249
      %p261 = scmp.eq.s32.totalorder %s33, 1
      %p262 = por %p260, %p261
      %p264 = scmp.ne.s32.totalorder %s249, %s263
      %p265 = scmp.eq.s32.totalorder %s33, 0
      %p266 = por %p264, %p265
      %s268 = sadd.s32 %s267, 1
      %p271 = scmp.eq.s32.totalorder %s27, 1
      %p272 = scmp.ne.s32.totalorder %s267, %s269
      %p273 = scmp.eq.s32.totalorder %s27, 0
      %p274 = por %p272, %p273
      %p275 = scmp.ne.s32.totalorder %s267, %s269
      %p276 = scmp.eq.s32.totalorder %s32, 1
      %p277 = por %p275, %p276
      %p278 = scmp.ne.s32.totalorder %s269, %s270
      %p279 = scmp.eq.s32.totalorder %s32, 0
      %p280 = por %p278, %p279
      %p281 = scmp.ne.s32.totalorder %s269, %s270
      %p282 = scmp.eq.s32.totalorder %s33, 1
      %p283 = por %p281, %p282
      %p285 = scmp.ne.s32.totalorder %s270, %s284
      %p286 = scmp.eq.s32.totalorder %s33, 0
      %p287 = por %p285, %p286
      %s289 = sadd.s32 %s288, 1
      %p292 = scmp.eq.s32.totalorder %s27, 1
      %p293 = scmp.ne.s32.totalorder %s288, %s290
      %p294 = scmp.eq.s32.totalorder %s27, 0
      %p295 = por %p293, %p294
      %p296 = scmp.ne.s32.totalorder %s288, %s290
      %p297 = scmp.eq.s32.totalorder %s32, 1
      %p298 = por %p296, %p297
      %p299 = scmp.ne.s32.totalorder %s290, %s291
      %p300 = scmp.eq.s32.totalorder %s32, 0
      %p301 = por %p299, %p300
      %p302 = scmp.ne.s32.totalorder %s290, %s291
      %p303 = scmp.eq.s32.totalorder %s33, 1
      %p304 = por %p302, %p303
      %p306 = scmp.ne.s32.totalorder %s291, %s305
      %p307 = scmp.eq.s32.totalorder %s33, 0
      %p308 = por %p306, %p307
      %s310 = sadd.s32 %s309, 1
      %p313 = scmp.eq.s32.totalorder %s27, 1
      %p314 = scmp.ne.s32.totalorder %s309, %s311
      %p315 = scmp.eq.s32.totalorder %s27, 0
      %p316 = por %p314, %p315
      %p317 = scmp.ne.s32.totalorder %s309, %s311
      %p318 = scmp.eq.s32.totalorder %s32, 1
      %p319 = por %p317, %p318
      %p320 = scmp.ne.s32.totalorder %s311, %s312
      %p321 = scmp.eq.s32.totalorder %s32, 0
      %p322 = por %p320, %p321
      %p323 = scmp.ne.s32.totalorder %s311, %s312
      %p324 = scmp.eq.s32.totalorder %s33, 1
      %p325 = por %p323, %p324
      %p327 = scmp.ne.s32.totalorder %s312, %s326
      %p328 = scmp.eq.s32.totalorder %s33, 0
      %p329 = por %p327, %p328
      %s331 = sadd.s32 %s330, 1
      %p334 = scmp.eq.s32.totalorder %s27, 1
      %p335 = scmp.ne.s32.totalorder %s330, %s332
      %p336 = scmp.eq.s32.totalorder %s27, 0
      %p337 = por %p335, %p336
      %p338 = scmp.ne.s32.totalorder %s330, %s332
      %p339 = scmp.eq.s32.totalorder %s32, 1
      %p340 = por %p338, %p339
      %p341 = scmp.ne.s32.totalorder %s332, %s333
      %p342 = scmp.eq.s32.totalorder %s32, 0
      %p343 = por %p341, %p342
      %p344 = scmp.ne.s32.totalorder %s332, %s333
      %p345 = scmp.eq.s32.totalorder %s33, 1
      %p346 = por %p344, %p345
      %p348 = scmp.ne.s32.totalorder %s333, %s347
      %p349 = scmp.eq.s32.totalorder %s33, 0
      %p350 = por %p348, %p349
      %s352 = sadd.s32 %s351, 1
      %p355 = scmp.eq.s32.totalorder %s27, 1
      %p356 = scmp.ne.s32.totalorder %s351, %s353
      %p357 = scmp.eq.s32.totalorder %s27, 0
      %p358 = por %p356, %p357
      %p359 = scmp.ne.s32.totalorder %s351, %s353
      %p360 = scmp.eq.s32.totalorder %s32, 1
      %p361 = por %p359, %p360
      %p362 = scmp.ne.s32.totalorder %s353, %s354
      %p363 = scmp.eq.s32.totalorder %s32, 0
      %p364 = por %p362, %p363
      %p365 = scmp.ne.s32.totalorder %s353, %s354
      %p366 = scmp.eq.s32.totalorder %s33, 1
      %p367 = por %p365, %p366
      %p369 = scmp.ne.s32.totalorder %s354, %s368
      %p370 = scmp.eq.s32.totalorder %s33, 0
      %p371 = por %p369, %p370
      %s373 = sadd.s32 %s372, 1
      %p376 = scmp.eq.s32.totalorder %s27, 1
      %p377 = scmp.ne.s32.totalorder %s372, %s374
      %p378 = scmp.eq.s32.totalorder %s27, 0
      %p379 = por %p377, %p378
      %p380 = scmp.ne.s32.totalorder %s372, %s374
      %p381 = scmp.eq.s32.totalorder %s32, 1
      %p382 = por %p380, %p381
      %p383 = scmp.ne.s32.totalorder %s374, %s375
      %p384 = scmp.eq.s32.totalorder %s32, 0
      %p385 = por %p383, %p384
      %p386 = scmp.ne.s32.totalorder %s374, %s375
      %p387 = scmp.eq.s32.totalorder %s33, 1
      %p388 = por %p386, %p387
      %p390 = scmp.ne.s32.totalorder %s375, %s389
      %p391 = scmp.eq.s32.totalorder %s33, 0
      %p392 = por %p390, %p391
      %s394 = sadd.s32 %s393, 1
      %p397 = scmp.eq.s32.totalorder %s27, 1
      %p398 = scmp.ne.s32.totalorder %s393, %s395
      %p399 = scmp.eq.s32.totalorder %s27, 0
      %p400 = por %p398, %p399
      %p401 = scmp.ne.s32.totalorder %s393, %s395
      %p402 = scmp.eq.s32.totalorder %s32, 1
      %p403 = por %p401, %p402
      %p404 = scmp.ne.s32.totalorder %s395, %s396
      %p405 = scmp.eq.s32.totalorder %s32, 0
      %p406 = por %p404, %p405
      %p407 = scmp.ne.s32.totalorder %s395, %s396
      %p408 = scmp.eq.s32.totalorder %s33, 1
      %p409 = por %p407, %p408
      %p411 = scmp.ne.s32.totalorder %s396, %s410
      %p412 = scmp.eq.s32.totalorder %s33, 0
      %p413 = por %p411, %p412
      %s415 = sadd.s32 %s414, 1
      %p418 = scmp.eq.s32.totalorder %s27, 1
      %p419 = scmp.ne.s32.totalorder %s414, %s416
      %p420 = scmp.eq.s32.totalorder %s27, 0
      %p421 = por %p419, %p420
      %p422 = scmp.ne.s32.totalorder %s414, %s416
      %p423 = scmp.eq.s32.totalorder %s32, 1
      %p424 = por %p422, %p423
      %p425 = scmp.ne.s32.totalorder %s416, %s417
      %p426 = scmp.eq.s32.totalorder %s32, 0
      %p427 = por %p425, %p426
      %p428 = scmp.ne.s32.totalorder %s416, %s417
      %p429 = scmp.eq.s32.totalorder %s33, 1
      %p430 = por %p428, %p429
      %p432 = scmp.ne.s32.totalorder %s417, %s431
      %p433 = scmp.eq.s32.totalorder %s33, 0
      %p434 = por %p432, %p433
      %s435 = ssub.s32 %s34, %s46
      %s436 = ssub.s32 %s35, %s42
      %s437 = sor.u32 %s435, %s436
      %p438 = scmp.eq.s32.totalorder %s437, 0
      %s440 = sadd.s32 %s439, 1
      %s441 = scalar_select %p438, %s439, %s440
      %p444 = pneg %p438
      %p445 = scmp.eq.s32.totalorder %s27, 1
      %p446 = por %p444, %p445
      %p447 = scmp.ne.s32.totalorder %s439, %s442
      %p448 = scmp.eq.s32.totalorder %s27, 0
      %p449 = por %p447, %p448
      %p450 = scmp.ne.s32.totalorder %s439, %s442
      %p451 = scmp.eq.s32.totalorder %s32, 1
      %p452 = por %p450, %p451
      %p453 = scmp.ne.s32.totalorder %s442, %s443
      %p454 = scmp.eq.s32.totalorder %s32, 0
      %p455 = por %p453, %p454
      %p456 = scmp.ne.s32.totalorder %s442, %s443
      %p457 = scmp.eq.s32.totalorder %s33, 1
      %p458 = por %p456, %p457
      %p460 = scmp.ne.s32.totalorder %s443, %s459
      %p461 = scmp.eq.s32.totalorder %s33, 0
      %p462 = por %p460, %p461
      %p463 = scmp.le.s32.totalorder 1, %s27
      %p464 = scmp.lt.s32.totalorder %s27, 3
      %p465 = pnand %p463, %p464
      %p466 = pneg %p465
      // Predicated region
      $region9: #{bert_forward.3} parent=5 // pred_check
        _
      $region10: #{bert_forward.3} parent=5 // pred_check_branch
        %468 = sbr.rel (%p465) target = $region12
      $region11: #{bert_forward.3} parent=5 // pred_region
        %s469 = ssub.s32 %s27, 1
        // Predicated region
        $region13: #{bert_forward.3} parent=11 // pred_check
          %p470 = pneg %p112
        $region14: #{bert_forward.3} parent=11 // pred_check_branch
          %472 = sbr.rel (%p470) target = $region16
        $region15: #{bert_forward.3} parent=11 // pred_region
          _
        $region16: #{bert_forward.3} parent=11 // pred_fallthru
          _
        // Predicated region
        $region17: #{bert_forward.3} parent=11 // pred_check
          %p473 = pneg %p133
        $region18: #{bert_forward.3} parent=11 // pred_check_branch
          %475 = sbr.rel (%p473) target = $region20
        $region19: #{bert_forward.3} parent=11 // pred_region
          _
        $region20: #{bert_forward.3} parent=11 // pred_fallthru
          _
        // Predicated region
        $region21: #{bert_forward.3} parent=11 // pred_check
          %p476 = pneg %p154
        $region22: #{bert_forward.3} parent=11 // pred_check_branch
          %478 = sbr.rel (%p476) target = $region24
        $region23: #{bert_forward.3} parent=11 // pred_region
          _
        $region24: #{bert_forward.3} parent=11 // pred_fallthru
          _
        // Predicated region
        $region25: #{bert_forward.3} parent=11 // pred_check
          %p479 = pneg %p175
        $region26: #{bert_forward.3} parent=11 // pred_check_branch
          %481 = sbr.rel (%p479) target = $region28
        $region27: #{bert_forward.3} parent=11 // pred_region
          _
        $region28: #{bert_forward.3} parent=11 // pred_fallthru
          _
        // Predicated region
        $region29: #{bert_forward.3} parent=11 // pred_check
          %p482 = pneg %p196
        $region30: #{bert_forward.3} parent=11 // pred_check_branch
          %484 = sbr.rel (%p482) target = $region32
        $region31: #{bert_forward.3} parent=11 // pred_region
          _
        $region32: #{bert_forward.3} parent=11 // pred_fallthru
          _
        // Predicated region
        $region33: #{bert_forward.3} parent=11 // pred_check
          %p485 = pneg %p217
        $region34: #{bert_forward.3} parent=11 // pred_check_branch
          %487 = sbr.rel (%p485) target = $region36
        $region35: #{bert_forward.3} parent=11 // pred_region
          _
        $region36: #{bert_forward.3} parent=11 // pred_fallthru
          _
        // Predicated region
        $region37: #{bert_forward.3} parent=11 // pred_check
          %p488 = pneg %p238
        $region38: #{bert_forward.3} parent=11 // pred_check_branch
          %490 = sbr.rel (%p488) target = $region40
        $region39: #{bert_forward.3} parent=11 // pred_region
          _
        $region40: #{bert_forward.3} parent=11 // pred_fallthru
          _
        // Predicated region
        $region41: #{bert_forward.3} parent=11 // pred_check
          %p491 = pneg %p259
        $region42: #{bert_forward.3} parent=11 // pred_check_branch
          %493 = sbr.rel (%p491) target = $region44
        $region43: #{bert_forward.3} parent=11 // pred_region
          _
        $region44: #{bert_forward.3} parent=11 // pred_fallthru
          _
        // Predicated region
        $region45: #{bert_forward.3} parent=11 // pred_check
          %p494 = pneg %p280
        $region46: #{bert_forward.3} parent=11 // pred_check_branch
          %496 = sbr.rel (%p494) target = $region48
        $region47: #{bert_forward.3} parent=11 // pred_region
          _
        $region48: #{bert_forward.3} parent=11 // pred_fallthru
          _
        // Predicated region
        $region49: #{bert_forward.3} parent=11 // pred_check
          %p497 = pneg %p301
        $region50: #{bert_forward.3} parent=11 // pred_check_branch
          %499 = sbr.rel (%p497) target = $region52
        $region51: #{bert_forward.3} parent=11 // pred_region
          _
        $region52: #{bert_forward.3} parent=11 // pred_fallthru
          _
        // Predicated region
        $region53: #{bert_forward.3} parent=11 // pred_check
          %p500 = pneg %p322
        $region54: #{bert_forward.3} parent=11 // pred_check_branch
          %502 = sbr.rel (%p500) target = $region56
        $region55: #{bert_forward.3} parent=11 // pred_region
          _
        $region56: #{bert_forward.3} parent=11 // pred_fallthru
          _
        // Predicated region
        $region57: #{bert_forward.3} parent=11 // pred_check
          %p503 = pneg %p343
        $region58: #{bert_forward.3} parent=11 // pred_check_branch
          %505 = sbr.rel (%p503) target = $region60
        $region59: #{bert_forward.3} parent=11 // pred_region
          _
        $region60: #{bert_forward.3} parent=11 // pred_fallthru
          _
        // Predicated region
        $region61: #{bert_forward.3} parent=11 // pred_check
          %p506 = pneg %p364
        $region62: #{bert_forward.3} parent=11 // pred_check_branch
          %508 = sbr.rel (%p506) target = $region64
        $region63: #{bert_forward.3} parent=11 // pred_region
          _
        $region64: #{bert_forward.3} parent=11 // pred_fallthru
          _
        // Predicated region
        $region65: #{bert_forward.3} parent=11 // pred_check
          %p509 = pneg %p385
        $region66: #{bert_forward.3} parent=11 // pred_check_branch
          %511 = sbr.rel (%p509) target = $region68
        $region67: #{bert_forward.3} parent=11 // pred_region
          _
        $region68: #{bert_forward.3} parent=11 // pred_fallthru
          _
        // Predicated region
        $region69: #{bert_forward.3} parent=11 // pred_check
          %p512 = pneg %p406
        $region70: #{bert_forward.3} parent=11 // pred_check_branch
          %514 = sbr.rel (%p512) target = $region72
        $region71: #{bert_forward.3} parent=11 // pred_region
          _
        $region72: #{bert_forward.3} parent=11 // pred_fallthru
          _
        // Predicated region
        $region73: #{bert_forward.3} parent=11 // pred_check
          %p515 = pneg %p427
        $region74: #{bert_forward.3} parent=11 // pred_check_branch
          %517 = sbr.rel (%p515) target = $region76
        $region75: #{bert_forward.3} parent=11 // pred_region
          _
        $region76: #{bert_forward.3} parent=11 // pred_fallthru
          _
      $region12: #{bert_forward.3} parent=5 // pred_fallthru
        _
      %p518 = scmp.lt.s32.totalorder %s27, 2
      // Predicated region
      $region77: #{bert_forward.3} parent=5 // pred_check
        %p519 = pneg %p518
      $region78: #{bert_forward.3} parent=5 // pred_check_branch
        %521 = sbr.rel (%p519) target = $region80
      $region79: #{bert_forward.3} parent=5 // pred_region
        // Predicated region
        $region81: #{bert_forward.3} parent=79 // pred_check
          %p522 = pneg %p59
        $region82: #{bert_forward.3} parent=79 // pred_check_branch
          %524 = sbr.rel (%p522) target = $region84
        $region83: #{bert_forward.3} parent=79 // pred_region
          %p525 = scmp.lt.s32.totalorder %s34, 1
          %s526 = scalar_select %p525, %s34, 1
          %s527 = smul.addr %s526, 8
          %s528 = scalar_lea.vmem %s0, %s527
        $region84: #{bert_forward.3} parent=79 // pred_fallthru
          _
        // Predicated region
        $region85: #{bert_forward.3} parent=79 // pred_check
          %p529 = pneg %p85
        $region86: #{bert_forward.3} parent=79 // pred_check_branch
          %531 = sbr.rel (%p529) target = $region88
        $region87: #{bert_forward.3} parent=79 // pred_region
          %p532 = scmp.lt.s32.totalorder %s34, 1
          %s533 = scalar_select %p532, %s34, 1
          %s534 = scalar_lea.vmem %s1, %s533
        $region88: #{bert_forward.3} parent=79 // pred_fallthru
          _
      $region80: #{bert_forward.3} parent=5 // pred_fallthru
        _
      %p535 = scmp.le.s32.totalorder 1, %s27
      %p536 = scmp.lt.s32.totalorder %s27, 3
      %p537 = pnand %p535, %p536
      %p538 = pneg %p537
      // Predicated region
      $region89: #{bert_forward.3} parent=5 // pred_check
        _
      $region90: #{bert_forward.3} parent=5 // pred_check_branch
        %540 = sbr.rel (%p537) target = $region92
      $region91: #{bert_forward.3} parent=5 // pred_region
        %s541 = ssub.s32 %s27, 1
        %p542 = scmp.lt.s32.totalorder %s36, 1
        %s543 = scalar_select %p542, %s36, 1
        %s544 = smul.addr %s543, 8
        %s545 = scalar_lea.vmem %s0, %s544
        %p546 = pneg %p65
        %p547 = pneg %p62
        %p548 = scmp.lt.s32.totalorder %s36, 1
        %s549 = scalar_select %p548, %s36, 1
        %s550 = scalar_lea.vmem %s1, %s549
        %p551 = pneg %p91
        %p552 = pneg %p88
        %p553 = pneg %p112
        %p554 = pneg %p109
        %p555 = pneg %p133
        %p556 = pneg %p130
        %p557 = pneg %p154
        %p558 = pneg %p151
        %p559 = pneg %p175
        %p560 = pneg %p172
        %p561 = pneg %p196
        %p562 = pneg %p193
        %p563 = pneg %p217
        %p564 = pneg %p214
        %p565 = pneg %p238
        %p566 = pneg %p235
        %p567 = pneg %p259
        %p568 = pneg %p256
        %p569 = pneg %p280
        %p570 = pneg %p277
        %p571 = pneg %p301
        %p572 = pneg %p298
        %p573 = pneg %p322
        %p574 = pneg %p319
        %p575 = pneg %p343
        %p576 = pneg %p340
        %p577 = pneg %p364
        %p578 = pneg %p361
        %p579 = pneg %p385
        %p580 = pneg %p382
        %p581 = pneg %p406
        %p582 = pneg %p403
        %p583 = pneg %p427
        %p584 = pneg %p424
        %p585 = pneg %p455
        %p586 = pneg %p452
        %s587 = sand.u32 %s442, 1
        %s588 = scalar_lea.sflag [#allocation3], %s587
        %s589 = sand.u32 %s442, 1
        %s590 = smul.addr %s589, 8
        %s591 = scalar_lea.vmem [#allocation2], %s590
        %p592 = scmp.lt.s32.totalorder %s36, 1
        %s593 = scalar_select %p592, %s36, 1
        %s594 = smul.addr %s593, 8
        %s595 = scalar_lea.vmem %s0, %s594
        %p596 = scmp.lt.s32.totalorder %s36, 1
        %s597 = scalar_select %p596, %s36, 1
        %s598 = scalar_lea.vmem %s1, %s597
        %s600 = smul.u32 %s37, 8
        %s601 = scalar_lea.vmem %s595, %s600
        %v602 = vld [vmem:[%s601] sm:$0xff]
        %v603 = vld [vmem:[%s595] sm:$0xff]
        %v604 = vld [vmem:[%s598] sm:$0x1]
        %v605 = vpack.c.bf16 %v602, %v602
        %v606 = vpack.c.bf16 %v603, %v603
        %v607 = vld [vmem:[%s2] sm:$0xf]
        %v608 = vld [vmem:[%s2 + $0x4] sm:$0xf]
        %v609 = vld [vmem:[%s2 + $0x8] sm:$0xf]
        %v610 = vld [vmem:[%s2 + $0xc] sm:$0xf]
        %v611 = vld [vmem:[%s2 + $0x10] sm:$0xf]
        %v612 = vld [vmem:[%s2 + $0x14] sm:$0xf]
        %v613 = vld [vmem:[%s2 + $0x18] sm:$0xf]
        %v614 = vld [vmem:[%s2 + $0x1c] sm:$0xf]
        %v615 = vld [vmem:[%s2 + $0x20] sm:$0xf]
        %v616 = vld [vmem:[%s2 + $0x24] sm:$0xf]
        %v617 = vld [vmem:[%s2 + $0x28] sm:$0xf]
        %v618 = vld [vmem:[%s2 + $0x2c] sm:$0xf]
        %v619 = vld [vmem:[%s2 + $0x30] sm:$0xf]
        %v620 = vld [vmem:[%s2 + $0x34] sm:$0xf]
        %v621 = vld [vmem:[%s2 + $0x38] sm:$0xf]
        %v622 = vld [vmem:[%s2 + $0x3c] sm:$0xf]
        %v623 = vld [vmem:[%s3] sm:$0x1]
        %v625 = vlaneseq
        %v626 = vshrl.u32 %v625, 7
        %v627 = vsub.s32 0, %v626
        %v628 = vrot.slane %v623, %v627
        %v646 = vunpack.c.l.b16 %v607
        %v647 = vunpack.c.l.b16 %v608
        %v648 = vunpack.c.l.b16 %v609
        %v649 = vunpack.c.l.b16 %v610
        %v650 = vunpack.c.l.b16 %v611
        %v651 = vunpack.c.l.b16 %v612
        %v652 = vunpack.c.l.b16 %v613
        %v653 = vunpack.c.l.b16 %v614
        %v654 = vunpack.c.l.b16 %v615
        %v655 = vunpack.c.l.b16 %v616
        %v656 = vunpack.c.l.b16 %v617
        %v657 = vunpack.c.l.b16 %v618
        %v658 = vunpack.c.l.b16 %v619
        %v659 = vunpack.c.l.b16 %v620
        %v660 = vunpack.c.l.b16 %v621
        %v661 = vunpack.c.l.b16 %v622
        %v662 = vpack.c.b16 %v647, %v646
        %v663 = vpack.c.b16 %v649, %v648
        %v664 = vpack.c.b16 %v651, %v650
        %v665 = vpack.c.b16 %v653, %v652
        %v666 = vpack.c.b16 %v655, %v654
        %v667 = vpack.c.b16 %v657, %v656
        %v668 = vpack.c.b16 %v659, %v658
        %v669 = vpack.c.b16 %v661, %v660
        %678 = vmatprep.subr.bf16.mxu0 0
        %679 = vmatpush1.bf16.msra.mxu0 %v669
        %680 = vmatprep.subr.bf16.mxu0 0
        %681 = vmatpush1.bf16.msra.mxu0 %v668
        %682 = vmatprep.subr.bf16.mxu0 0
        %683 = vmatpush1.bf16.msra.mxu0 %v667
        %684 = vmatprep.subr.bf16.mxu0 0
        %685 = vmatpush1.bf16.msra.mxu0 %v666
        %686 = vmatprep.subr.bf16.mxu0 0
        %687 = vmatpush1.bf16.msra.mxu0 %v665
        %688 = vmatprep.subr.bf16.mxu0 0
        %689 = vmatpush1.bf16.msra.mxu0 %v664
        %690 = vmatprep.subr.bf16.mxu0 0
        %691 = vmatpush1.bf16.msra.mxu0 %v663
        %692 = vmatprep.subr.bf16.mxu0 0
        %693 = vmatpush1.bf16.msra.mxu0 %v662
        %694 = vmatprep.subr.bf16.mxu0 0
        %695 = vmatpush2.bf16.msra.mxu0 0
        %696 = vmatprep.subr.bf16.mxu0 0
        %697 = vmatpush2.bf16.msra.mxu0 0
        %698 = vmatprep.subr.bf16.mxu0 0
        %699 = vmatpush2.bf16.msra.mxu0 0
        %700 = vmatprep.subr.bf16.mxu0 0
        %701 = vmatpush2.bf16.msra.mxu0 0
        %702 = vmatprep.subr.bf16.mxu0 0
        %703 = vmatpush2.bf16.msra.mxu0 0
        %704 = vmatprep.subr.bf16.mxu0 0
        %705 = vmatpush2.bf16.msra.mxu0 0
        %706 = vmatprep.subr.bf16.mxu0 0
        %707 = vmatpush2.bf16.msra.mxu0 0
        %708 = vmatprep.subr.bf16.mxu0 0
        %709 = vmatpush2.bf16.msra.mxu0 0
        %710 = vmatprep.mubr.bf16.mxu0 0
        %711 = vmatmul.mubr.bf16.gmra.mxu0 %v605
        %v712 = vpop.f32.mrf.mxu0
        %v713 = vadd.f32 %v628, %v712
        %v714 = vpop.f32.mrf.mxu0
        %v715 = vpop.f32.mrf.mxu0
        %v716 = vpop.f32.mrf.mxu0
        %717 = vdwg.mxu0
        %v718 = vmul.f32 %v713, 0.17677669
        %v719 = vld [vmem:[%s4] sm:$0xf]
        %v720 = vld [vmem:[%s4 + $0x4] sm:$0xf]
        %v721 = vld [vmem:[%s4 + $0x8] sm:$0xf]
        %v722 = vld [vmem:[%s4 + $0xc] sm:$0xf]
        %v723 = vld [vmem:[%s4 + $0x10] sm:$0xf]
        %v724 = vld [vmem:[%s4 + $0x14] sm:$0xf]
        %v725 = vld [vmem:[%s4 + $0x18] sm:$0xf]
        %v726 = vld [vmem:[%s4 + $0x1c] sm:$0xf]
        %v727 = vld [vmem:[%s4 + $0x20] sm:$0xf]
        %v728 = vld [vmem:[%s4 + $0x24] sm:$0xf]
        %v729 = vld [vmem:[%s4 + $0x28] sm:$0xf]
        %v730 = vld [vmem:[%s4 + $0x2c] sm:$0xf]
        %v731 = vld [vmem:[%s4 + $0x30] sm:$0xf]
        %v732 = vld [vmem:[%s4 + $0x34] sm:$0xf]
        %v733 = vld [vmem:[%s4 + $0x38] sm:$0xf]
        %v734 = vld [vmem:[%s4 + $0x3c] sm:$0xf]
        %v735 = vld [vmem:[%s5] sm:$0x1]
        %v737 = vlaneseq
        %v738 = vshrl.u32 %v737, 7
        %v739 = vsub.s32 0, %v738
        %v740 = vrot.slane %v735, %v739
        %v758 = vunpack.c.l.b16 %v719
        %v759 = vunpack.c.l.b16 %v720
        %v760 = vunpack.c.l.b16 %v721
        %v761 = vunpack.c.l.b16 %v722
        %v762 = vunpack.c.l.b16 %v723
        %v763 = vunpack.c.l.b16 %v724
        %v764 = vunpack.c.l.b16 %v725
        %v765 = vunpack.c.l.b16 %v726
        %v766 = vunpack.c.l.b16 %v727
        %v767 = vunpack.c.l.b16 %v728
        %v768 = vunpack.c.l.b16 %v729
        %v769 = vunpack.c.l.b16 %v730
        %v770 = vunpack.c.l.b16 %v731
        %v771 = vunpack.c.l.b16 %v732
        %v772 = vunpack.c.l.b16 %v733
        %v773 = vunpack.c.l.b16 %v734
        %v774 = vpack.c.b16 %v759, %v758
        %v775 = vpack.c.b16 %v761, %v760
        %v776 = vpack.c.b16 %v763, %v762
        %v777 = vpack.c.b16 %v765, %v764
        %v778 = vpack.c.b16 %v767, %v766
        %v779 = vpack.c.b16 %v769, %v768
        %v780 = vpack.c.b16 %v771, %v770
        %v781 = vpack.c.b16 %v773, %v772
        %790 = vmatprep.subr.bf16.mxu0 0
        %791 = vmatpush1.bf16.msra.mxu0 %v781
        %792 = vmatprep.subr.bf16.mxu0 0
        %793 = vmatpush1.bf16.msra.mxu0 %v780
        %794 = vmatprep.subr.bf16.mxu0 0
        %795 = vmatpush1.bf16.msra.mxu0 %v779
        %796 = vmatprep.subr.bf16.mxu0 0
        %797 = vmatpush1.bf16.msra.mxu0 %v778
        %798 = vmatprep.subr.bf16.mxu0 0
        %799 = vmatpush1.bf16.msra.mxu0 %v777
        %800 = vmatprep.subr.bf16.mxu0 0
        %801 = vmatpush1.bf16.msra.mxu0 %v776
        %802 = vmatprep.subr.bf16.mxu0 0
        %803 = vmatpush1.bf16.msra.mxu0 %v775
        %804 = vmatprep.subr.bf16.mxu0 0
        %805 = vmatpush1.bf16.msra.mxu0 %v774
        %806 = vmatprep.subr.bf16.mxu0 0
        %807 = vmatpush2.bf16.msra.mxu0 0
        %808 = vmatprep.subr.bf16.mxu0 0
        %809 = vmatpush2.bf16.msra.mxu0 0
        %810 = vmatprep.subr.bf16.mxu0 0
        %811 = vmatpush2.bf16.msra.mxu0 0
        %812 = vmatprep.subr.bf16.mxu0 0
        %813 = vmatpush2.bf16.msra.mxu0 0
        %814 = vmatprep.subr.bf16.mxu0 0
        %815 = vmatpush2.bf16.msra.mxu0 0
        %816 = vmatprep.subr.bf16.mxu0 0
        %817 = vmatpush2.bf16.msra.mxu0 0
        %818 = vmatprep.subr.bf16.mxu0 0
        %819 = vmatpush2.bf16.msra.mxu0 0
        %820 = vmatprep.subr.bf16.mxu0 0
        %821 = vmatpush2.bf16.msra.mxu0 0
        %822 = vmatprep.mubr.bf16.mxu0 0
        %823 = vmatmul.mubr.bf16.gmra.mxu0 %v606
        %v824 = vpop.f32.mrf.mxu0
        %v825 = vadd.f32 %v740, %v824
        %v826 = vpop.f32.mrf.mxu0
        %v827 = vpop.f32.mrf.mxu0
        %v828 = vpop.f32.mrf.mxu0
        %829 = vdwg.mxu0
        %v830 = vld [vmem:[%s6] sm:$0xf]
        %v831 = vld [vmem:[%s6 + $0x4] sm:$0xf]
        %v832 = vld [vmem:[%s6 + $0x8] sm:$0xf]
        %v833 = vld [vmem:[%s6 + $0xc] sm:$0xf]
        %v834 = vld [vmem:[%s6 + $0x10] sm:$0xf]
        %v835 = vld [vmem:[%s6 + $0x14] sm:$0xf]
        %v836 = vld [vmem:[%s6 + $0x18] sm:$0xf]
        %v837 = vld [vmem:[%s6 + $0x1c] sm:$0xf]
        %v838 = vld [vmem:[%s6 + $0x20] sm:$0xf]
        %v839 = vld [vmem:[%s6 + $0x24] sm:$0xf]
        %v840 = vld [vmem:[%s6 + $0x28] sm:$0xf]
        %v841 = vld [vmem:[%s6 + $0x2c] sm:$0xf]
        %v842 = vld [vmem:[%s6 + $0x30] sm:$0xf]
        %v843 = vld [vmem:[%s6 + $0x34] sm:$0xf]
        %v844 = vld [vmem:[%s6 + $0x38] sm:$0xf]
        %v845 = vld [vmem:[%s6 + $0x3c] sm:$0xf]
        %v846 = vld [vmem:[%s7] sm:$0x1]
        %v848 = vlaneseq
        %v849 = vshrl.u32 %v848, 7
        %v850 = vsub.s32 0, %v849
        %v851 = vrot.slane %v846, %v850
        %v869 = vunpack.c.l.b16 %v830
        %v870 = vunpack.c.l.b16 %v831
        %v871 = vunpack.c.l.b16 %v832
        %v872 = vunpack.c.l.b16 %v833
        %v873 = vunpack.c.l.b16 %v834
        %v874 = vunpack.c.l.b16 %v835
        %v875 = vunpack.c.l.b16 %v836
        %v876 = vunpack.c.l.b16 %v837
        %v877 = vunpack.c.l.b16 %v838
        %v878 = vunpack.c.l.b16 %v839
        %v879 = vunpack.c.l.b16 %v840
        %v880 = vunpack.c.l.b16 %v841
        %v881 = vunpack.c.l.b16 %v842
        %v882 = vunpack.c.l.b16 %v843
        %v883 = vunpack.c.l.b16 %v844
        %v884 = vunpack.c.l.b16 %v845
        %v885 = vpack.c.b16 %v870, %v869
        %v886 = vpack.c.b16 %v872, %v871
        %v887 = vpack.c.b16 %v874, %v873
        %v888 = vpack.c.b16 %v876, %v875
        %v889 = vpack.c.b16 %v878, %v877
        %v890 = vpack.c.b16 %v880, %v879
        %v891 = vpack.c.b16 %v882, %v881
        %v892 = vpack.c.b16 %v884, %v883
        %901 = vmatprep.subr.bf16.mxu0 0
        %902 = vmatpush1.bf16.msra.mxu0 %v892
        %903 = vmatprep.subr.bf16.mxu0 0
        %904 = vmatpush1.bf16.msra.mxu0 %v891
        %905 = vmatprep.subr.bf16.mxu0 0
        %906 = vmatpush1.bf16.msra.mxu0 %v890
        %907 = vmatprep.subr.bf16.mxu0 0
        %908 = vmatpush1.bf16.msra.mxu0 %v889
        %909 = vmatprep.subr.bf16.mxu0 0
        %910 = vmatpush1.bf16.msra.mxu0 %v888
        %911 = vmatprep.subr.bf16.mxu0 0
        %912 = vmatpush1.bf16.msra.mxu0 %v887
        %913 = vmatprep.subr.bf16.mxu0 0
        %914 = vmatpush1.bf16.msra.mxu0 %v886
        %915 = vmatprep.subr.bf16.mxu0 0
        %916 = vmatpush1.bf16.msra.mxu0 %v885
        %917 = vmatprep.subr.bf16.mxu0 0
        %918 = vmatpush2.bf16.msra.mxu0 0
        %919 = vmatprep.subr.bf16.mxu0 0
        %920 = vmatpush2.bf16.msra.mxu0 0
        %921 = vmatprep.subr.bf16.mxu0 0
        %922 = vmatpush2.bf16.msra.mxu0 0
        %923 = vmatprep.subr.bf16.mxu0 0
        %924 = vmatpush2.bf16.msra.mxu0 0
        %925 = vmatprep.subr.bf16.mxu0 0
        %926 = vmatpush2.bf16.msra.mxu0 0
        %927 = vmatprep.subr.bf16.mxu0 0
        %928 = vmatpush2.bf16.msra.mxu0 0
        %929 = vmatprep.subr.bf16.mxu0 0
        %930 = vmatpush2.bf16.msra.mxu0 0
        %931 = vmatprep.subr.bf16.mxu0 0
        %932 = vmatpush2.bf16.msra.mxu0 0
        %933 = vmatprep.mubr.bf16.mxu0 0
        %934 = vmatmul.mubr.bf16.gmra.mxu0 %v606
        %v935 = vpop.f32.mrf.mxu0
        %v936 = vadd.f32 %v851, %v935
        %v937 = vpop.f32.mrf.mxu0
        %v938 = vpop.f32.mrf.mxu0
        %v939 = vpop.f32.mrf.mxu0
        %940 = vdwg.mxu0
        %v941 = vpack.c.bf16 %v718, %v718
        %943 = vrot.lane.b32.xlu0 %v941, 96
        %v944 = vpop.permute.xlu0 %943
        %945 = vrot.lane.b32.xlu0 %v941, 64
        %v946 = vpop.permute.xlu0 %945
        %947 = vrot.lane.b32.xlu0 %v941, 32
        %v948 = vpop.permute.xlu0 %947
        %v950 = vunpack.c.l.s4 1983009808
        %v951 = vunpack.c.0.s8 %v950
        %v952 = vlaneseq
        %v953 = vshrl.u32 %v952, 7
        %v954 = vsub.s32 %v951, %v953
        %v955 = vrot.slane %v941, %v954
        %v958 = vunpack.c.l.s4 1983009808
        %v959 = vunpack.c.0.s8 %v958
        %v960 = vlaneseq
        %v961 = vshrl.u32 %v960, 7
        %v962 = vsub.s32 %v959, %v961
        %v963 = vrot.slane %v946, %v962
        %v964 = vcombine.low %v955, %v963
        %v965 = vcombine.high %v955, %v963
        %v967 = vunpack.c.l.s4 1934713408
        %v968 = vunpack.c.0.s8 %v967
        %v969 = vlaneseq
        %v970 = vshrl.u32 %v969, 7
        %v971 = vsub.s32 %v968, %v970
        %v972 = vrot.slane %v964, %v971
        %v974 = vunpack.c.l.s4 1934713408
        %v975 = vunpack.c.0.s8 %v974
        %v976 = vlaneseq
        %v977 = vshrl.u32 %v976, 7
        %v978 = vsub.s32 %v975, %v977
        %v979 = vrot.slane %v965, %v978
        %v980 = vcombine.high %v972, 0
        %v981 = vcombine.high %v979, 0
        %v984 = vunpack.c.l.s4 1983009808
        %v985 = vunpack.c.0.s8 %v984
        %v986 = vlaneseq
        %v987 = vshrl.u32 %v986, 7
        %v988 = vsub.s32 %v985, %v987
        %v989 = vrot.slane %v944, %v988
        %v992 = vunpack.c.l.s4 1983009808
        %v993 = vunpack.c.0.s8 %v992
        %v994 = vlaneseq
        %v995 = vshrl.u32 %v994, 7
        %v996 = vsub.s32 %v993, %v995
        %v997 = vrot.slane %v948, %v996
        %v998 = vcombine.low %v989, %v997
        %v999 = vcombine.high %v989, %v997
        %v1001 = vunpack.c.l.s4 1934713408
        %v1002 = vunpack.c.0.s8 %v1001
        %v1003 = vlaneseq
        %v1004 = vshrl.u32 %v1003, 7
        %v1005 = vsub.s32 %v1002, %v1004
        %v1006 = vrot.slane %v998, %v1005
        %v1008 = vunpack.c.l.s4 1934713408
        %v1009 = vunpack.c.0.s8 %v1008
        %v1010 = vlaneseq
        %v1011 = vshrl.u32 %v1010, 7
        %v1012 = vsub.s32 %v1009, %v1011
        %v1013 = vrot.slane %v999, %v1012
        %v1014 = vcombine.high %v1006, 0
        %v1015 = vcombine.high %v1013, 0
        %v1018 = vpack.i.b16 %v1006, %v972
        %v1020 = vshrl.u32 %v972, 16
        %v1021 = vshrl.u32 %v1006, 16
        %v1022 = vpack.i.b16 %v1021, %v1020
        %v1026 = vpack.i.b16 %v1014, %v980
        %v1028 = vshrl.u32 %v980, 16
        %v1029 = vshrl.u32 %v1014, 16
        %v1030 = vpack.i.b16 %v1029, %v1028
        %v1034 = vpack.i.b16 %v1013, %v979
        %v1036 = vshrl.u32 %v979, 16
        %v1037 = vshrl.u32 %v1013, 16
        %v1038 = vpack.i.b16 %v1037, %v1036
        %v1042 = vpack.i.b16 %v1015, %v981
        %v1044 = vshrl.u32 %v981, 16
        %v1045 = vshrl.u32 %v1015, 16
        %v1046 = vpack.i.b16 %v1045, %v1044
        %v1048 = vcombine.low %v1018, %v1034
        %v1050 = vunpack.c.l.s4 1983009808
        %v1051 = vunpack.c.0.s8 %v1050
        %v1052 = vlaneseq
        %v1053 = vshrl.u32 %v1052, 7
        %v1054 = vsub.s32 %v1051, %v1053
        %v1055 = vrot.slane %v1048, %v1054
        %v1056 = vcombine.low %v1026, %v1042
        %v1058 = vunpack.c.l.s4 1983009808
        %v1059 = vunpack.c.0.s8 %v1058
        %v1060 = vlaneseq
        %v1061 = vshrl.u32 %v1060, 7
        %v1062 = vsub.s32 %v1059, %v1061
        %v1063 = vrot.slane %v1056, %v1062
        %v1064 = vcombine.low %v1055, %v1063
        %v1066 = vunpack.c.l.s4 1934713408
        %v1067 = vunpack.c.0.s8 %v1066
        %v1068 = vlaneseq
        %v1069 = vshrl.u32 %v1068, 7
        %v1070 = vsub.s32 %v1067, %v1069
        %v1071 = vrot.slane %v1064, %v1070
        %v1072 = vcombine.high %v1071, 0
        %v1073 = vcombine.low %v1022, %v1038
        %v1075 = vunpack.c.l.s4 1983009808
        %v1076 = vunpack.c.0.s8 %v1075
        %v1077 = vlaneseq
        %v1078 = vshrl.u32 %v1077, 7
        %v1079 = vsub.s32 %v1076, %v1078
        %v1080 = vrot.slane %v1073, %v1079
        %v1081 = vcombine.low %v1030, %v1046
        %v1083 = vunpack.c.l.s4 1983009808
        %v1084 = vunpack.c.0.s8 %v1083
        %v1085 = vlaneseq
        %v1086 = vshrl.u32 %v1085, 7
        %v1087 = vsub.s32 %v1084, %v1086
        %v1088 = vrot.slane %v1081, %v1087
        %v1089 = vcombine.low %v1080, %v1088
        %v1091 = vunpack.c.l.s4 1934713408
        %v1092 = vunpack.c.0.s8 %v1091
        %v1093 = vlaneseq
        %v1094 = vshrl.u32 %v1093, 7
        %v1095 = vsub.s32 %v1092, %v1094
        %v1096 = vrot.slane %v1089, %v1095
        %v1097 = vcombine.high %v1096, 0
        %v1100 = vpack.i.b16 %v1096, %v1071
        %v1101 = vshrl.u32 %v1071, 16
        %v1102 = vshrl.u32 %v1096, 16
        %v1103 = vpack.i.b16 %v1102, %v1101
        %v1106 = vpack.i.b16 %v1097, %v1072
        %v1107 = vshrl.u32 %v1072, 16
        %v1108 = vshrl.u32 %v1097, 16
        %v1109 = vpack.i.b16 %v1108, %v1107
        %v1110 = vpack.c.bf16 %v825, %v825
        %1112 = vrot.lane.b32.xlu0 %v1110, 96
        %v1113 = vpop.permute.xlu0 %1112
        %1114 = vrot.lane.b32.xlu0 %v1110, 64
        %v1115 = vpop.permute.xlu0 %1114
        %1116 = vrot.lane.b32.xlu0 %v1110, 32
        %v1117 = vpop.permute.xlu0 %1116
        %v1119 = vunpack.c.l.s4 1983009808
        %v1120 = vunpack.c.0.s8 %v1119
        %v1121 = vlaneseq
        %v1122 = vshrl.u32 %v1121, 7
        %v1123 = vsub.s32 %v1120, %v1122
        %v1124 = vrot.slane %v1110, %v1123
        %v1127 = vunpack.c.l.s4 1983009808
        %v1128 = vunpack.c.0.s8 %v1127
        %v1129 = vlaneseq
        %v1130 = vshrl.u32 %v1129, 7
        %v1131 = vsub.s32 %v1128, %v1130
        %v1132 = vrot.slane %v1115, %v1131
        %v1133 = vcombine.low %v1124, %v1132
        %v1134 = vcombine.high %v1124, %v1132
        %v1136 = vunpack.c.l.s4 1934713408
        %v1137 = vunpack.c.0.s8 %v1136
        %v1138 = vlaneseq
        %v1139 = vshrl.u32 %v1138, 7
        %v1140 = vsub.s32 %v1137, %v1139
        %v1141 = vrot.slane %v1133, %v1140
        %v1143 = vunpack.c.l.s4 1934713408
        %v1144 = vunpack.c.0.s8 %v1143
        %v1145 = vlaneseq
        %v1146 = vshrl.u32 %v1145, 7
        %v1147 = vsub.s32 %v1144, %v1146
        %v1148 = vrot.slane %v1134, %v1147
        %v1149 = vcombine.high %v1141, 0
        %v1150 = vcombine.high %v1148, 0
        %v1153 = vunpack.c.l.s4 1983009808
        %v1154 = vunpack.c.0.s8 %v1153
        %v1155 = vlaneseq
        %v1156 = vshrl.u32 %v1155, 7
        %v1157 = vsub.s32 %v1154, %v1156
        %v1158 = vrot.slane %v1113, %v1157
        %v1161 = vunpack.c.l.s4 1983009808
        %v1162 = vunpack.c.0.s8 %v1161
        %v1163 = vlaneseq
        %v1164 = vshrl.u32 %v1163, 7
        %v1165 = vsub.s32 %v1162, %v1164
        %v1166 = vrot.slane %v1117, %v1165
        %v1167 = vcombine.low %v1158, %v1166
        %v1168 = vcombine.high %v1158, %v1166
        %v1170 = vunpack.c.l.s4 1934713408
        %v1171 = vunpack.c.0.s8 %v1170
        %v1172 = vlaneseq
        %v1173 = vshrl.u32 %v1172, 7
        %v1174 = vsub.s32 %v1171, %v1173
        %v1175 = vrot.slane %v1167, %v1174
        %v1177 = vunpack.c.l.s4 1934713408
        %v1178 = vunpack.c.0.s8 %v1177
        %v1179 = vlaneseq
        %v1180 = vshrl.u32 %v1179, 7
        %v1181 = vsub.s32 %v1178, %v1180
        %v1182 = vrot.slane %v1168, %v1181
        %v1183 = vcombine.high %v1175, 0
        %v1184 = vcombine.high %v1182, 0
        %v1187 = vpack.i.b16 %v1175, %v1141
        %v1189 = vshrl.u32 %v1141, 16
        %v1190 = vshrl.u32 %v1175, 16
        %v1191 = vpack.i.b16 %v1190, %v1189
        %v1195 = vpack.i.b16 %v1183, %v1149
        %v1197 = vshrl.u32 %v1149, 16
        %v1198 = vshrl.u32 %v1183, 16
        %v1199 = vpack.i.b16 %v1198, %v1197
        %v1203 = vpack.i.b16 %v1182, %v1148
        %v1205 = vshrl.u32 %v1148, 16
        %v1206 = vshrl.u32 %v1182, 16
        %v1207 = vpack.i.b16 %v1206, %v1205
        %v1211 = vpack.i.b16 %v1184, %v1150
        %v1213 = vshrl.u32 %v1150, 16
        %v1214 = vshrl.u32 %v1184, 16
        %v1215 = vpack.i.b16 %v1214, %v1213
        %v1217 = vcombine.low %v1187, %v1203
        %v1219 = vunpack.c.l.s4 1983009808
        %v1220 = vunpack.c.0.s8 %v1219
        %v1221 = vlaneseq
        %v1222 = vshrl.u32 %v1221, 7
        %v1223 = vsub.s32 %v1220, %v1222
        %v1224 = vrot.slane %v1217, %v1223
        %v1225 = vcombine.low %v1195, %v1211
        %v1227 = vunpack.c.l.s4 1983009808
        %v1228 = vunpack.c.0.s8 %v1227
        %v1229 = vlaneseq
        %v1230 = vshrl.u32 %v1229, 7
        %v1231 = vsub.s32 %v1228, %v1230
        %v1232 = vrot.slane %v1225, %v1231
        %v1233 = vcombine.low %v1224, %v1232
        %v1235 = vunpack.c.l.s4 1934713408
        %v1236 = vunpack.c.0.s8 %v1235
        %v1237 = vlaneseq
        %v1238 = vshrl.u32 %v1237, 7
        %v1239 = vsub.s32 %v1236, %v1238
        %v1240 = vrot.slane %v1233, %v1239
        %v1241 = vcombine.high %v1240, 0
        %v1242 = vcombine.low %v1191, %v1207
        %v1244 = vunpack.c.l.s4 1983009808
        %v1245 = vunpack.c.0.s8 %v1244
        %v1246 = vlaneseq
        %v1247 = vshrl.u32 %v1246, 7
        %v1248 = vsub.s32 %v1245, %v1247
        %v1249 = vrot.slane %v1242, %v1248
        %v1250 = vcombine.low %v1199, %v1215
        %v1252 = vunpack.c.l.s4 1983009808
        %v1253 = vunpack.c.0.s8 %v1252
        %v1254 = vlaneseq
        %v1255 = vshrl.u32 %v1254, 7
        %v1256 = vsub.s32 %v1253, %v1255
        %v1257 = vrot.slane %v1250, %v1256
        %v1258 = vcombine.low %v1249, %v1257
        %v1260 = vunpack.c.l.s4 1934713408
        %v1261 = vunpack.c.0.s8 %v1260
        %v1262 = vlaneseq
        %v1263 = vshrl.u32 %v1262, 7
        %v1264 = vsub.s32 %v1261, %v1263
        %v1265 = vrot.slane %v1258, %v1264
        %v1266 = vcombine.high %v1265, 0
        %v1269 = vpack.i.b16 %v1265, %v1240
        %v1270 = vshrl.u32 %v1240, 16
        %v1271 = vshrl.u32 %v1265, 16
        %v1272 = vpack.i.b16 %v1271, %v1270
        %v1275 = vpack.i.b16 %v1266, %v1241
        %v1276 = vshrl.u32 %v1241, 16
        %v1277 = vshrl.u32 %v1266, 16
        %v1278 = vpack.i.b16 %v1277, %v1276
        %v1279 = vpack.c.bf16 %v936, %v936
        %1281 = vrot.lane.b32.xlu0 %v1279, 96
        %v1282 = vpop.permute.xlu0 %1281
        %1283 = vrot.lane.b32.xlu0 %v1279, 64
        %v1284 = vpop.permute.xlu0 %1283
        %1285 = vrot.lane.b32.xlu0 %v1279, 32
        %v1286 = vpop.permute.xlu0 %1285
        %v1288 = vunpack.c.l.s4 1983009808
        %v1289 = vunpack.c.0.s8 %v1288
        %v1290 = vlaneseq
        %v1291 = vshrl.u32 %v1290, 7
        %v1292 = vsub.s32 %v1289, %v1291
        %v1293 = vrot.slane %v1279, %v1292
        %v1296 = vunpack.c.l.s4 1983009808
        %v1297 = vunpack.c.0.s8 %v1296
        %v1298 = vlaneseq
        %v1299 = vshrl.u32 %v1298, 7
        %v1300 = vsub.s32 %v1297, %v1299
        %v1301 = vrot.slane %v1284, %v1300
        %v1302 = vcombine.low %v1293, %v1301
        %v1303 = vcombine.high %v1293, %v1301
        %v1305 = vunpack.c.l.s4 1934713408
        %v1306 = vunpack.c.0.s8 %v1305
        %v1307 = vlaneseq
        %v1308 = vshrl.u32 %v1307, 7
        %v1309 = vsub.s32 %v1306, %v1308
        %v1310 = vrot.slane %v1302, %v1309
        %v1312 = vunpack.c.l.s4 1934713408
        %v1313 = vunpack.c.0.s8 %v1312
        %v1314 = vlaneseq
        %v1315 = vshrl.u32 %v1314, 7
        %v1316 = vsub.s32 %v1313, %v1315
        %v1317 = vrot.slane %v1303, %v1316
        %v1318 = vcombine.high %v1310, 0
        %v1319 = vcombine.high %v1317, 0
        %v1322 = vunpack.c.l.s4 1983009808
        %v1323 = vunpack.c.0.s8 %v1322
        %v1324 = vlaneseq
        %v1325 = vshrl.u32 %v1324, 7
        %v1326 = vsub.s32 %v1323, %v1325
        %v1327 = vrot.slane %v1282, %v1326
        %v1330 = vunpack.c.l.s4 1983009808
        %v1331 = vunpack.c.0.s8 %v1330
        %v1332 = vlaneseq
        %v1333 = vshrl.u32 %v1332, 7
        %v1334 = vsub.s32 %v1331, %v1333
        %v1335 = vrot.slane %v1286, %v1334
        %v1336 = vcombine.low %v1327, %v1335
        %v1337 = vcombine.high %v1327, %v1335
        %v1339 = vunpack.c.l.s4 1934713408
        %v1340 = vunpack.c.0.s8 %v1339
        %v1341 = vlaneseq
        %v1342 = vshrl.u32 %v1341, 7
        %v1343 = vsub.s32 %v1340, %v1342
        %v1344 = vrot.slane %v1336, %v1343
        %v1346 = vunpack.c.l.s4 1934713408
        %v1347 = vunpack.c.0.s8 %v1346
        %v1348 = vlaneseq
        %v1349 = vshrl.u32 %v1348, 7
        %v1350 = vsub.s32 %v1347, %v1349
        %v1351 = vrot.slane %v1337, %v1350
        %v1352 = vcombine.high %v1344, 0
        %v1353 = vcombine.high %v1351, 0
        %v1356 = vpack.i.b16 %v1344, %v1310
        %v1358 = vshrl.u32 %v1310, 16
        %v1359 = vshrl.u32 %v1344, 16
        %v1360 = vpack.i.b16 %v1359, %v1358
        %v1364 = vpack.i.b16 %v1352, %v1318
        %v1366 = vshrl.u32 %v1318, 16
        %v1367 = vshrl.u32 %v1352, 16
        %v1368 = vpack.i.b16 %v1367, %v1366
        %v1372 = vpack.i.b16 %v1351, %v1317
        %v1374 = vshrl.u32 %v1317, 16
        %v1375 = vshrl.u32 %v1351, 16
        %v1376 = vpack.i.b16 %v1375, %v1374
        %v1380 = vpack.i.b16 %v1353, %v1319
        %v1382 = vshrl.u32 %v1319, 16
        %v1383 = vshrl.u32 %v1353, 16
        %v1384 = vpack.i.b16 %v1383, %v1382
        %v1386 = vcombine.low %v1356, %v1372
        %v1388 = vunpack.c.l.s4 1983009808
        %v1389 = vunpack.c.0.s8 %v1388
        %v1390 = vlaneseq
        %v1391 = vshrl.u32 %v1390, 7
        %v1392 = vsub.s32 %v1389, %v1391
        %v1393 = vrot.slane %v1386, %v1392
        %v1394 = vcombine.low %v1364, %v1380
        %v1396 = vunpack.c.l.s4 1983009808
        %v1397 = vunpack.c.0.s8 %v1396
        %v1398 = vlaneseq
        %v1399 = vshrl.u32 %v1398, 7
        %v1400 = vsub.s32 %v1397, %v1399
        %v1401 = vrot.slane %v1394, %v1400
        %v1402 = vcombine.low %v1393, %v1401
        %v1404 = vunpack.c.l.s4 1934713408
        %v1405 = vunpack.c.0.s8 %v1404
        %v1406 = vlaneseq
        %v1407 = vshrl.u32 %v1406, 7
        %v1408 = vsub.s32 %v1405, %v1407
        %v1409 = vrot.slane %v1402, %v1408
        %v1410 = vcombine.high %v1409, 0
        %v1411 = vcombine.low %v1360, %v1376
        %v1413 = vunpack.c.l.s4 1983009808
        %v1414 = vunpack.c.0.s8 %v1413
        %v1415 = vlaneseq
        %v1416 = vshrl.u32 %v1415, 7
        %v1417 = vsub.s32 %v1414, %v1416
        %v1418 = vrot.slane %v1411, %v1417
        %v1419 = vcombine.low %v1368, %v1384
        %v1421 = vunpack.c.l.s4 1983009808
        %v1422 = vunpack.c.0.s8 %v1421
        %v1423 = vlaneseq
        %v1424 = vshrl.u32 %v1423, 7
        %v1425 = vsub.s32 %v1422, %v1424
        %v1426 = vrot.slane %v1419, %v1425
        %v1427 = vcombine.low %v1418, %v1426
        %v1429 = vunpack.c.l.s4 1934713408
        %v1430 = vunpack.c.0.s8 %v1429
        %v1431 = vlaneseq
        %v1432 = vshrl.u32 %v1431, 7
        %v1433 = vsub.s32 %v1430, %v1432
        %v1434 = vrot.slane %v1427, %v1433
        %v1435 = vcombine.high %v1434, 0
        %v1438 = vpack.i.b16 %v1434, %v1409
        %v1439 = vshrl.u32 %v1409, 16
        %v1440 = vshrl.u32 %v1434, 16
        %v1441 = vpack.i.b16 %v1440, %v1439
        %v1444 = vpack.i.b16 %v1435, %v1410
        %v1445 = vshrl.u32 %v1410, 16
        %v1446 = vshrl.u32 %v1435, 16
        %v1447 = vpack.i.b16 %v1446, %v1445
        %vm1448 = vcmask 261120
        %v1450 = vsel %vm1448, %v1100, 0
        %v1453 = vsel %vm1448, %v1269, 0
        %1455 = vmatprep.subr.bf16.mxu0 0
        %1456 = vmatpush1.bf16.xpose.msra.mxu0 0
        %1457 = vmatprep.subr.bf16.mxu0 0
        %1458 = vmatpush1.bf16.xpose.msra.mxu0 0
        %1459 = vmatprep.subr.bf16.mxu0 0
        %1460 = vmatpush1.bf16.xpose.msra.mxu0 0
        %1461 = vmatprep.subr.bf16.mxu0 0
        %1462 = vmatpush1.bf16.xpose.msra.mxu0 0
        %1463 = vmatprep.subr.bf16.mxu0 0
        %1464 = vmatpush1.bf16.xpose.msra.mxu0 0
        %1465 = vmatprep.subr.bf16.mxu0 0
        %1466 = vmatpush1.bf16.xpose.msra.mxu0 0
        %1467 = vmatprep.subr.bf16.mxu0 0
        %1468 = vmatpush1.bf16.xpose.msra.mxu0 0
        %1469 = vmatprep.subr.bf16.mxu0 0
        %1470 = vmatpush1.bf16.xpose.msra.mxu0 %v1453
        %1471 = vmatprep.subr.bf16.mxu0 0
        %1472 = vmatpush2.bf16.xpose.msra.mxu0 0
        %1473 = vmatprep.subr.bf16.mxu0 0
        %1474 = vmatpush2.bf16.xpose.msra.mxu0 0
        %1475 = vmatprep.subr.bf16.mxu0 0
        %1476 = vmatpush2.bf16.xpose.msra.mxu0 0
        %1477 = vmatprep.subr.bf16.mxu0 0
        %1478 = vmatpush2.bf16.xpose.msra.mxu0 0
        %1479 = vmatprep.subr.bf16.mxu0 0
        %1480 = vmatpush2.bf16.xpose.msra.mxu0 0
        %1481 = vmatprep.subr.bf16.mxu0 0
        %1482 = vmatpush2.bf16.xpose.msra.mxu0 0
        %1483 = vmatprep.subr.bf16.mxu0 0
        %1484 = vmatpush2.bf16.xpose.msra.mxu0 0
        %1485 = vmatprep.subr.bf16.mxu0 0
        %1486 = vmatpush2.bf16.xpose.msra.mxu0 0
        %1487 = vmatprep.mubr.bf16.mxu0 0
        %1488 = vmatmul.mubr.bf16.gmra.mxu0 %v1450
        %v1489 = vpop.f32.mrf.mxu0
        %v1490 = vadd.f32 0.0, %v1489
        %v1491 = vpop.f32.mrf.mxu0
        %v1492 = vpop.f32.mrf.mxu0
        %v1493 = vpop.f32.mrf.mxu0
        %1494 = vdwg.mxu0
        %v1496 = vsel %vm1448, %v1103, 0
        %v1499 = vsel %vm1448, %v1272, 0
        %1501 = vmatprep.subr.bf16.mxu0 0
        %1502 = vmatpush1.bf16.xpose.msra.mxu0 0
        %1503 = vmatprep.subr.bf16.mxu0 0
        %1504 = vmatpush1.bf16.xpose.msra.mxu0 0
        %1505 = vmatprep.subr.bf16.mxu0 0
        %1506 = vmatpush1.bf16.xpose.msra.mxu0 0
        %1507 = vmatprep.subr.bf16.mxu0 0
        %1508 = vmatpush1.bf16.xpose.msra.mxu0 0
        %1509 = vmatprep.subr.bf16.mxu0 0
        %1510 = vmatpush1.bf16.xpose.msra.mxu0 0
        %1511 = vmatprep.subr.bf16.mxu0 0
        %1512 = vmatpush1.bf16.xpose.msra.mxu0 0
        %1513 = vmatprep.subr.bf16.mxu0 0
        %1514 = vmatpush1.bf16.xpose.msra.mxu0 0
        %1515 = vmatprep.subr.bf16.mxu0 0
        %1516 = vmatpush1.bf16.xpose.msra.mxu0 %v1499
        %1517 = vmatprep.subr.bf16.mxu0 0
        %1518 = vmatpush2.bf16.xpose.msra.mxu0 0
        %1519 = vmatprep.subr.bf16.mxu0 0
        %1520 = vmatpush2.bf16.xpose.msra.mxu0 0
        %1521 = vmatprep.subr.bf16.mxu0 0
        %1522 = vmatpush2.bf16.xpose.msra.mxu0 0
        %1523 = vmatprep.subr.bf16.mxu0 0
        %1524 = vmatpush2.bf16.xpose.msra.mxu0 0
        %1525 = vmatprep.subr.bf16.mxu0 0
        %1526 = vmatpush2.bf16.xpose.msra.mxu0 0
        %1527 = vmatprep.subr.bf16.mxu0 0
        %1528 = vmatpush2.bf16.xpose.msra.mxu0 0
        %1529 = vmatprep.subr.bf16.mxu0 0
        %1530 = vmatpush2.bf16.xpose.msra.mxu0 0
        %1531 = vmatprep.subr.bf16.mxu0 0
        %1532 = vmatpush2.bf16.xpose.msra.mxu0 0
        %1533 = vmatprep.mubr.bf16.mxu0 0
        %1534 = vmatmul.mubr.bf16.gmra.mxu0 %v1496
        %v1535 = vpop.f32.mrf.mxu0
        %v1536 = vadd.f32 0.0, %v1535
        %v1537 = vpop.f32.mrf.mxu0
        %v1538 = vpop.f32.mrf.mxu0
        %v1539 = vpop.f32.mrf.mxu0
        %1540 = vdwg.mxu0
        %v1542 = vsel %vm1448, %v1106, 0
        %v1545 = vsel %vm1448, %v1275, 0
        %1547 = vmatprep.subr.bf16.mxu0 0
        %1548 = vmatpush1.bf16.xpose.msra.mxu0 0
        %1549 = vmatprep.subr.bf16.mxu0 0
        %1550 = vmatpush1.bf16.xpose.msra.mxu0 0
        %1551 = vmatprep.subr.bf16.mxu0 0
        %1552 = vmatpush1.bf16.xpose.msra.mxu0 0
        %1553 = vmatprep.subr.bf16.mxu0 0
        %1554 = vmatpush1.bf16.xpose.msra.mxu0 0
        %1555 = vmatprep.subr.bf16.mxu0 0
        %1556 = vmatpush1.bf16.xpose.msra.mxu0 0
        %1557 = vmatprep.subr.bf16.mxu0 0
        %1558 = vmatpush1.bf16.xpose.msra.mxu0 0
        %1559 = vmatprep.subr.bf16.mxu0 0
        %1560 = vmatpush1.bf16.xpose.msra.mxu0 0
        %1561 = vmatprep.subr.bf16.mxu0 0
        %1562 = vmatpush1.bf16.xpose.msra.mxu0 %v1545
        %1563 = vmatprep.subr.bf16.mxu0 0
        %1564 = vmatpush2.bf16.xpose.msra.mxu0 0
        %1565 = vmatprep.subr.bf16.mxu0 0
        %1566 = vmatpush2.bf16.xpose.msra.mxu0 0
        %1567 = vmatprep.subr.bf16.mxu0 0
        %1568 = vmatpush2.bf16.xpose.msra.mxu0 0
        %1569 = vmatprep.subr.bf16.mxu0 0
        %1570 = vmatpush2.bf16.xpose.msra.mxu0 0
        %1571 = vmatprep.subr.bf16.mxu0 0
        %1572 = vmatpush2.bf16.xpose.msra.mxu0 0
        %1573 = vmatprep.subr.bf16.mxu0 0
        %1574 = vmatpush2.bf16.xpose.msra.mxu0 0
        %1575 = vmatprep.subr.bf16.mxu0 0
        %1576 = vmatpush2.bf16.xpose.msra.mxu0 0
        %1577 = vmatprep.subr.bf16.mxu0 0
        %1578 = vmatpush2.bf16.xpose.msra.mxu0 0
        %1579 = vmatprep.mubr.bf16.mxu0 0
        %1580 = vmatmul.mubr.bf16.gmra.mxu0 %v1542
        %v1581 = vpop.f32.mrf.mxu0
        %v1582 = vadd.f32 0.0, %v1581
        %v1583 = vpop.f32.mrf.mxu0
        %v1584 = vpop.f32.mrf.mxu0
        %v1585 = vpop.f32.mrf.mxu0
        %1586 = vdwg.mxu0
        %v1588 = vsel %vm1448, %v1109, 0
        %v1591 = vsel %vm1448, %v1278, 0
        %1593 = vmatprep.subr.bf16.mxu0 0
        %1594 = vmatpush1.bf16.xpose.msra.mxu0 0
        %1595 = vmatprep.subr.bf16.mxu0 0
        %1596 = vmatpush1.bf16.xpose.msra.mxu0 0
        %1597 = vmatprep.subr.bf16.mxu0 0
        %1598 = vmatpush1.bf16.xpose.msra.mxu0 0
        %1599 = vmatprep.subr.bf16.mxu0 0
        %1600 = vmatpush1.bf16.xpose.msra.mxu0 0
        %1601 = vmatprep.subr.bf16.mxu0 0
        %1602 = vmatpush1.bf16.xpose.msra.mxu0 0
        %1603 = vmatprep.subr.bf16.mxu0 0
        %1604 = vmatpush1.bf16.xpose.msra.mxu0 0
        %1605 = vmatprep.subr.bf16.mxu0 0
        %1606 = vmatpush1.bf16.xpose.msra.mxu0 0
        %1607 = vmatprep.subr.bf16.mxu0 0
        %1608 = vmatpush1.bf16.xpose.msra.mxu0 %v1591
        %1609 = vmatprep.subr.bf16.mxu0 0
        %1610 = vmatpush2.bf16.xpose.msra.mxu0 0
        %1611 = vmatprep.subr.bf16.mxu0 0
        %1612 = vmatpush2.bf16.xpose.msra.mxu0 0
        %1613 = vmatprep.subr.bf16.mxu0 0
        %1614 = vmatpush2.bf16.xpose.msra.mxu0 0
        %1615 = vmatprep.subr.bf16.mxu0 0
        %1616 = vmatpush2.bf16.xpose.msra.mxu0 0
        %1617 = vmatprep.subr.bf16.mxu0 0
        %1618 = vmatpush2.bf16.xpose.msra.mxu0 0
        %1619 = vmatprep.subr.bf16.mxu0 0
        %1620 = vmatpush2.bf16.xpose.msra.mxu0 0
        %1621 = vmatprep.subr.bf16.mxu0 0
        %1622 = vmatpush2.bf16.xpose.msra.mxu0 0
        %1623 = vmatprep.subr.bf16.mxu0 0
        %1624 = vmatpush2.bf16.xpose.msra.mxu0 0
        %1625 = vmatprep.mubr.bf16.mxu0 0
        %1626 = vmatmul.mubr.bf16.gmra.mxu0 %v1588
        %v1627 = vpop.f32.mrf.mxu0
        %v1628 = vadd.f32 0.0, %v1627
        %v1629 = vpop.f32.mrf.mxu0
        %v1630 = vpop.f32.mrf.mxu0
        %v1631 = vpop.f32.mrf.mxu0
        %1632 = vdwg.mxu0
        %v1634 = vlaneseq
        %v1635 = vshrl.u32 %v1634, 7
        %v1636 = vsub.s32 0, %v1635
        %v1637 = vrot.slane %v604, %v1636
        %v1639 = vmul.f32 %v1490, %v1637
        %v1640 = vmul.f32 %v1536, %v1637
        %v1641 = vmul.f32 %v1582, %v1637
        %v1642 = vmul.f32 %v1628, %v1637
        %vm1643 = vcmask 64512
        %v1644 = vsel %vm1643, %v1639, -inf
        %1645 = vmax.xlane.f32.xlu0 %v1644
        %v1646 = vpop.xlane.xlu0 %1645
        %v1647 = vsel %vm1643, %v1640, -inf
        %1648 = vmax.xlane.f32.xlu0 %v1647
        %v1649 = vpop.xlane.xlu0 %1648
        %v1650 = vsel %vm1643, %v1641, -inf
        %1651 = vmax.xlane.f32.xlu0 %v1650
        %v1652 = vpop.xlane.xlu0 %1651
        %v1653 = vsel %vm1643, %v1642, -inf
        %1654 = vmax.xlane.f32.xlu0 %v1653
        %v1655 = vpop.xlane.xlu0 %1654
        %v1656 = vsub.f32 %v1639, %v1646
        %v1657 = vsub.f32 %v1640, %v1649
        %v1658 = vsub.f32 %v1641, %v1652
        %v1659 = vsub.f32 %v1642, %v1655
        %v1660 = vmul.f32 %v1656, 1.442695
        %v1661 = vpow.pop %v1660
        %v1662 = vmul.f32 %v1657, 1.442695
        %v1663 = vpow.pop %v1662
        %v1664 = vmul.f32 %v1658, 1.442695
        %v1665 = vpow.pop %v1664
        %v1666 = vmul.f32 %v1659, 1.442695
        %v1667 = vpow.pop %v1666
        %v1668 = vmul.f32 %v1661, %v1637
        %v1669 = vmul.f32 %v1663, %v1637
        %v1670 = vmul.f32 %v1665, %v1637
        %v1671 = vmul.f32 %v1667, %v1637
        %v1672 = vsel %vm1643, %v1668, 0.0
        %1673 = vadd.xlane.f32.xlu0 %v1672
        %v1674 = vpop.xlane.xlu0 %1673
        %v1675 = vsel %vm1643, %v1669, 0.0
        %1676 = vadd.xlane.f32.xlu0 %v1675
        %v1677 = vpop.xlane.xlu0 %1676
        %v1678 = vsel %vm1643, %v1670, 0.0
        %1679 = vadd.xlane.f32.xlu0 %v1678
        %v1680 = vpop.xlane.xlu0 %1679
        %v1681 = vsel %vm1643, %v1671, 0.0
        %1682 = vadd.xlane.f32.xlu0 %v1681
        %v1683 = vpop.xlane.xlu0 %1682
        %vm1684 = vcmp.eq.f32.partialorder %v1674, 0.0
        %vm1685 = vcmp.eq.f32.partialorder %v1677, 0.0
        %vm1686 = vcmp.eq.f32.partialorder %v1680, 0.0
        %vm1687 = vcmp.eq.f32.partialorder %v1683, 0.0
        %v1688 = vsel %vm1684, 1, 0
        %v1689 = vsel %vm1685, 1, 0
        %v1690 = vsel %vm1686, 1, 0
        %v1691 = vsel %vm1687, 1, 0
        %v1692 = vcvt.s32.f32 %v1688
        %v1693 = vcvt.s32.f32 %v1689
        %v1694 = vcvt.s32.f32 %v1690
        %v1695 = vcvt.s32.f32 %v1691
        %v1696 = vadd.f32 %v1674, %v1692
        %v1697 = vadd.f32 %v1677, %v1693
        %v1698 = vadd.f32 %v1680, %v1694
        %v1699 = vadd.f32 %v1683, %v1695
        %v1700 = vrcp.pop %v1696
        %v1701 = vrcp.pop %v1697
        %v1702 = vrcp.pop %v1698
        %v1703 = vrcp.pop %v1699
        %v1704 = vmul.f32 %v1668, %v1700
        %v1705 = vmul.f32 %v1669, %v1701
        %v1706 = vmul.f32 %v1670, %v1702
        %v1707 = vmul.f32 %v1671, %v1703
        %v1708 = vpack.c.bf16 %v1704, %v1704
        %v1709 = vpack.c.bf16 %v1705, %v1705
        %v1710 = vpack.c.bf16 %v1706, %v1706
        %v1711 = vpack.c.bf16 %v1707, %v1707
        %v1713 = vsel %vm1643, %v1708, 0
        %vm1715 = vcmask 1043456
        %v1717 = vsel %vm1715, %v1438, 0
        %1719 = vmatprep.subr.bf16.mxu0 0
        %1720 = vmatpush1.bf16.msra.mxu0 0
        %1721 = vmatprep.subr.bf16.mxu0 0
        %1722 = vmatpush1.bf16.msra.mxu0 0
        %1723 = vmatprep.subr.bf16.mxu0 0
        %1724 = vmatpush1.bf16.msra.mxu0 0
        %1725 = vmatprep.subr.bf16.mxu0 0
        %1726 = vmatpush1.bf16.msra.mxu0 0
        %1727 = vmatprep.subr.bf16.mxu0 0
        %1728 = vmatpush1.bf16.msra.mxu0 0
        %1729 = vmatprep.subr.bf16.mxu0 0
        %1730 = vmatpush1.bf16.msra.mxu0 0
        %1731 = vmatprep.subr.bf16.mxu0 0
        %1732 = vmatpush1.bf16.msra.mxu0 0
        %1733 = vmatprep.subr.bf16.mxu0 0
        %1734 = vmatpush1.bf16.msra.mxu0 %v1717
        %1735 = vmatprep.subr.bf16.mxu0 0
        %1736 = vmatpush2.bf16.msra.mxu0 0
        %1737 = vmatprep.subr.bf16.mxu0 0
        %1738 = vmatpush2.bf16.msra.mxu0 0
        %1739 = vmatprep.subr.bf16.mxu0 0
        %1740 = vmatpush2.bf16.msra.mxu0 0
        %1741 = vmatprep.subr.bf16.mxu0 0
        %1742 = vmatpush2.bf16.msra.mxu0 0
        %1743 = vmatprep.subr.bf16.mxu0 0
        %1744 = vmatpush2.bf16.msra.mxu0 0
        %1745 = vmatprep.subr.bf16.mxu0 0
        %1746 = vmatpush2.bf16.msra.mxu0 0
        %1747 = vmatprep.subr.bf16.mxu0 0
        %1748 = vmatpush2.bf16.msra.mxu0 0
        %1749 = vmatprep.subr.bf16.mxu0 0
        %1750 = vmatpush2.bf16.msra.mxu0 0
        %1751 = vmatprep.mubr.bf16.mxu0 0
        %1752 = vmatmul.mubr.bf16.gmra.mxu0 %v1713
        %v1753 = vpop.f32.mrf.mxu0
        %v1754 = vadd.f32 0.0, %v1753
        %v1755 = vpop.f32.mrf.mxu0
        %v1756 = vpop.f32.mrf.mxu0
        %v1757 = vpop.f32.mrf.mxu0
        %1758 = vdwg.mxu0
        %v1760 = vsel %vm1643, %v1709, 0
        %v1763 = vsel %vm1715, %v1441, 0
        %1765 = vmatprep.subr.bf16.mxu0 0
        %1766 = vmatpush1.bf16.msra.mxu0 0
        %1767 = vmatprep.subr.bf16.mxu0 0
        %1768 = vmatpush1.bf16.msra.mxu0 0
        %1769 = vmatprep.subr.bf16.mxu0 0
        %1770 = vmatpush1.bf16.msra.mxu0 0
        %1771 = vmatprep.subr.bf16.mxu0 0
        %1772 = vmatpush1.bf16.msra.mxu0 0
        %1773 = vmatprep.subr.bf16.mxu0 0
        %1774 = vmatpush1.bf16.msra.mxu0 0
        %1775 = vmatprep.subr.bf16.mxu0 0
        %1776 = vmatpush1.bf16.msra.mxu0 0
        %1777 = vmatprep.subr.bf16.mxu0 0
        %1778 = vmatpush1.bf16.msra.mxu0 0
        %1779 = vmatprep.subr.bf16.mxu0 0
        %1780 = vmatpush1.bf16.msra.mxu0 %v1763
        %1781 = vmatprep.subr.bf16.mxu0 0
        %1782 = vmatpush2.bf16.msra.mxu0 0
        %1783 = vmatprep.subr.bf16.mxu0 0
        %1784 = vmatpush2.bf16.msra.mxu0 0
        %1785 = vmatprep.subr.bf16.mxu0 0
        %1786 = vmatpush2.bf16.msra.mxu0 0
        %1787 = vmatprep.subr.bf16.mxu0 0
        %1788 = vmatpush2.bf16.msra.mxu0 0
        %1789 = vmatprep.subr.bf16.mxu0 0
        %1790 = vmatpush2.bf16.msra.mxu0 0
        %1791 = vmatprep.subr.bf16.mxu0 0
        %1792 = vmatpush2.bf16.msra.mxu0 0
        %1793 = vmatprep.subr.bf16.mxu0 0
        %1794 = vmatpush2.bf16.msra.mxu0 0
        %1795 = vmatprep.subr.bf16.mxu0 0
        %1796 = vmatpush2.bf16.msra.mxu0 0
        %1797 = vmatprep.mubr.bf16.mxu0 0
        %1798 = vmatmul.mubr.bf16.gmra.mxu0 %v1760
        %v1799 = vpop.f32.mrf.mxu0
        %v1800 = vadd.f32 0.0, %v1799
        %v1801 = vpop.f32.mrf.mxu0
        %v1802 = vpop.f32.mrf.mxu0
        %v1803 = vpop.f32.mrf.mxu0
        %1804 = vdwg.mxu0
        %v1806 = vsel %vm1643, %v1710, 0
        %v1809 = vsel %vm1715, %v1444, 0
        %1811 = vmatprep.subr.bf16.mxu0 0
        %1812 = vmatpush1.bf16.msra.mxu0 0
        %1813 = vmatprep.subr.bf16.mxu0 0
        %1814 = vmatpush1.bf16.msra.mxu0 0
        %1815 = vmatprep.subr.bf16.mxu0 0
        %1816 = vmatpush1.bf16.msra.mxu0 0
        %1817 = vmatprep.subr.bf16.mxu0 0
        %1818 = vmatpush1.bf16.msra.mxu0 0
        %1819 = vmatprep.subr.bf16.mxu0 0
        %1820 = vmatpush1.bf16.msra.mxu0 0
        %1821 = vmatprep.subr.bf16.mxu0 0
        %1822 = vmatpush1.bf16.msra.mxu0 0
        %1823 = vmatprep.subr.bf16.mxu0 0
        %1824 = vmatpush1.bf16.msra.mxu0 0
        %1825 = vmatprep.subr.bf16.mxu0 0
        %1826 = vmatpush1.bf16.msra.mxu0 %v1809
        %1827 = vmatprep.subr.bf16.mxu0 0
        %1828 = vmatpush2.bf16.msra.mxu0 0
        %1829 = vmatprep.subr.bf16.mxu0 0
        %1830 = vmatpush2.bf16.msra.mxu0 0
        %1831 = vmatprep.subr.bf16.mxu0 0
        %1832 = vmatpush2.bf16.msra.mxu0 0
        %1833 = vmatprep.subr.bf16.mxu0 0
        %1834 = vmatpush2.bf16.msra.mxu0 0
        %1835 = vmatprep.subr.bf16.mxu0 0
        %1836 = vmatpush2.bf16.msra.mxu0 0
        %1837 = vmatprep.subr.bf16.mxu0 0
        %1838 = vmatpush2.bf16.msra.mxu0 0
        %1839 = vmatprep.subr.bf16.mxu0 0
        %1840 = vmatpush2.bf16.msra.mxu0 0
        %1841 = vmatprep.subr.bf16.mxu0 0
        %1842 = vmatpush2.bf16.msra.mxu0 0
        %1843 = vmatprep.mubr.bf16.mxu0 0
        %1844 = vmatmul.mubr.bf16.gmra.mxu0 %v1806
        %v1845 = vpop.f32.mrf.mxu0
        %v1846 = vadd.f32 0.0, %v1845
        %v1847 = vpop.f32.mrf.mxu0
        %v1848 = vpop.f32.mrf.mxu0
        %v1849 = vpop.f32.mrf.mxu0
        %1850 = vdwg.mxu0
        %v1852 = vsel %vm1643, %v1711, 0
        %v1855 = vsel %vm1715, %v1447, 0
        %1857 = vmatprep.subr.bf16.mxu0 0
        %1858 = vmatpush1.bf16.msra.mxu0 0
        %1859 = vmatprep.subr.bf16.mxu0 0
        %1860 = vmatpush1.bf16.msra.mxu0 0
        %1861 = vmatprep.subr.bf16.mxu0 0
        %1862 = vmatpush1.bf16.msra.mxu0 0
        %1863 = vmatprep.subr.bf16.mxu0 0
        %1864 = vmatpush1.bf16.msra.mxu0 0
        %1865 = vmatprep.subr.bf16.mxu0 0
        %1866 = vmatpush1.bf16.msra.mxu0 0
        %1867 = vmatprep.subr.bf16.mxu0 0
        %1868 = vmatpush1.bf16.msra.mxu0 0
        %1869 = vmatprep.subr.bf16.mxu0 0
        %1870 = vmatpush1.bf16.msra.mxu0 0
        %1871 = vmatprep.subr.bf16.mxu0 0
        %1872 = vmatpush1.bf16.msra.mxu0 %v1855
        %1873 = vmatprep.subr.bf16.mxu0 0
        %1874 = vmatpush2.bf16.msra.mxu0 0
        %1875 = vmatprep.subr.bf16.mxu0 0
        %1876 = vmatpush2.bf16.msra.mxu0 0
        %1877 = vmatprep.subr.bf16.mxu0 0
        %1878 = vmatpush2.bf16.msra.mxu0 0
        %1879 = vmatprep.subr.bf16.mxu0 0
        %1880 = vmatpush2.bf16.msra.mxu0 0
        %1881 = vmatprep.subr.bf16.mxu0 0
        %1882 = vmatpush2.bf16.msra.mxu0 0
        %1883 = vmatprep.subr.bf16.mxu0 0
        %1884 = vmatpush2.bf16.msra.mxu0 0
        %1885 = vmatprep.subr.bf16.mxu0 0
        %1886 = vmatpush2.bf16.msra.mxu0 0
        %1887 = vmatprep.subr.bf16.mxu0 0
        %1888 = vmatpush2.bf16.msra.mxu0 0
        %1889 = vmatprep.mubr.bf16.mxu0 0
        %1890 = vmatmul.mubr.bf16.gmra.mxu0 %v1852
        %v1891 = vpop.f32.mrf.mxu0
        %v1892 = vadd.f32 0.0, %v1891
        %v1893 = vpop.f32.mrf.mxu0
        %v1894 = vpop.f32.mrf.mxu0
        %v1895 = vpop.f32.mrf.mxu0
        %1896 = vdwg.mxu0
        %v1897 = vpack.c.bf16 %v1754, %v1754
        %v1899 = vunpack.c.l.s4 1983009808
        %v1900 = vunpack.c.0.s8 %v1899
        %v1901 = vlaneseq
        %v1902 = vshrl.u32 %v1901, 7
        %v1903 = vsub.s32 %v1900, %v1902
        %v1904 = vrot.slane %v1897, %v1903
        %v1905 = vpack.c.bf16 %v1846, %v1846
        %v1907 = vunpack.c.l.s4 1983009808
        %v1908 = vunpack.c.0.s8 %v1907
        %v1909 = vlaneseq
        %v1910 = vshrl.u32 %v1909, 7
        %v1911 = vsub.s32 %v1908, %v1910
        %v1912 = vrot.slane %v1905, %v1911
        %v1913 = vcombine.low %v1904, %v1912
        %v1914 = vcombine.high %v1904, %v1912
        %v1916 = vunpack.c.l.s4 1934713408
        %v1917 = vunpack.c.0.s8 %v1916
        %v1918 = vlaneseq
        %v1919 = vshrl.u32 %v1918, 7
        %v1920 = vsub.s32 %v1917, %v1919
        %v1921 = vrot.slane %v1913, %v1920
        %v1923 = vunpack.c.l.s4 1934713408
        %v1924 = vunpack.c.0.s8 %v1923
        %v1925 = vlaneseq
        %v1926 = vshrl.u32 %v1925, 7
        %v1927 = vsub.s32 %v1924, %v1926
        %v1928 = vrot.slane %v1914, %v1927
        %v1929 = vcombine.high %v1921, 0
        %v1930 = vcombine.high %v1928, 0
        %v1931 = vpack.c.bf16 %v1800, %v1800
        %v1933 = vunpack.c.l.s4 1983009808
        %v1934 = vunpack.c.0.s8 %v1933
        %v1935 = vlaneseq
        %v1936 = vshrl.u32 %v1935, 7
        %v1937 = vsub.s32 %v1934, %v1936
        %v1938 = vrot.slane %v1931, %v1937
        %v1939 = vpack.c.bf16 %v1892, %v1892
        %v1941 = vunpack.c.l.s4 1983009808
        %v1942 = vunpack.c.0.s8 %v1941
        %v1943 = vlaneseq
        %v1944 = vshrl.u32 %v1943, 7
        %v1945 = vsub.s32 %v1942, %v1944
        %v1946 = vrot.slane %v1939, %v1945
        %v1947 = vcombine.low %v1938, %v1946
        %v1948 = vcombine.high %v1938, %v1946
        %v1950 = vunpack.c.l.s4 1934713408
        %v1951 = vunpack.c.0.s8 %v1950
        %v1952 = vlaneseq
        %v1953 = vshrl.u32 %v1952, 7
        %v1954 = vsub.s32 %v1951, %v1953
        %v1955 = vrot.slane %v1947, %v1954
        %v1957 = vunpack.c.l.s4 1934713408
        %v1958 = vunpack.c.0.s8 %v1957
        %v1959 = vlaneseq
        %v1960 = vshrl.u32 %v1959, 7
        %v1961 = vsub.s32 %v1958, %v1960
        %v1962 = vrot.slane %v1948, %v1961
        %v1963 = vcombine.high %v1955, 0
        %v1964 = vcombine.high %v1962, 0
        %v1967 = vpack.i.b16 %v1955, %v1921
        %v1969 = vshrl.u32 %v1921, 16
        %v1970 = vshrl.u32 %v1955, 16
        %v1971 = vpack.i.b16 %v1970, %v1969
        %v1975 = vpack.i.b16 %v1963, %v1929
        %v1977 = vshrl.u32 %v1929, 16
        %v1978 = vshrl.u32 %v1963, 16
        %v1979 = vpack.i.b16 %v1978, %v1977
        %v1983 = vpack.i.b16 %v1962, %v1928
        %v1985 = vshrl.u32 %v1928, 16
        %v1986 = vshrl.u32 %v1962, 16
        %v1987 = vpack.i.b16 %v1986, %v1985
        %v1991 = vpack.i.b16 %v1964, %v1930
        %v1993 = vshrl.u32 %v1930, 16
        %v1994 = vshrl.u32 %v1964, 16
        %v1995 = vpack.i.b16 %v1994, %v1993
        %v1997 = vcombine.low %v1967, %v1983
        %v1999 = vunpack.c.l.s4 1983009808
        %v2000 = vunpack.c.0.s8 %v1999
        %v2001 = vlaneseq
        %v2002 = vshrl.u32 %v2001, 7
        %v2003 = vsub.s32 %v2000, %v2002
        %v2004 = vrot.slane %v1997, %v2003
        %v2005 = vcombine.low %v1975, %v1991
        %v2007 = vunpack.c.l.s4 1983009808
        %v2008 = vunpack.c.0.s8 %v2007
        %v2009 = vlaneseq
        %v2010 = vshrl.u32 %v2009, 7
        %v2011 = vsub.s32 %v2008, %v2010
        %v2012 = vrot.slane %v2005, %v2011
        %v2013 = vcombine.low %v2004, %v2012
        %v2015 = vunpack.c.l.s4 1934713408
        %v2016 = vunpack.c.0.s8 %v2015
        %v2017 = vlaneseq
        %v2018 = vshrl.u32 %v2017, 7
        %v2019 = vsub.s32 %v2016, %v2018
        %v2020 = vrot.slane %v2013, %v2019
        %v2021 = vcombine.high %v2020, 0
        %v2022 = vcombine.low %v1971, %v1987
        %v2024 = vunpack.c.l.s4 1983009808
        %v2025 = vunpack.c.0.s8 %v2024
        %v2026 = vlaneseq
        %v2027 = vshrl.u32 %v2026, 7
        %v2028 = vsub.s32 %v2025, %v2027
        %v2029 = vrot.slane %v2022, %v2028
        %v2030 = vcombine.low %v1979, %v1995
        %v2032 = vunpack.c.l.s4 1983009808
        %v2033 = vunpack.c.0.s8 %v2032
        %v2034 = vlaneseq
        %v2035 = vshrl.u32 %v2034, 7
        %v2036 = vsub.s32 %v2033, %v2035
        %v2037 = vrot.slane %v2030, %v2036
        %v2038 = vcombine.low %v2029, %v2037
        %v2040 = vunpack.c.l.s4 1934713408
        %v2041 = vunpack.c.0.s8 %v2040
        %v2042 = vlaneseq
        %v2043 = vshrl.u32 %v2042, 7
        %v2044 = vsub.s32 %v2041, %v2043
        %v2045 = vrot.slane %v2038, %v2044
        %v2046 = vcombine.high %v2045, 0
        %v2049 = vpack.i.b16 %v2045, %v2020
        %v2050 = vshrl.u32 %v2020, 16
        %v2051 = vshrl.u32 %v2045, 16
        %v2052 = vpack.i.b16 %v2051, %v2050
        %v2055 = vpack.i.b16 %v2046, %v2021
        %v2056 = vshrl.u32 %v2021, 16
        %v2057 = vshrl.u32 %v2046, 16
        %v2058 = vpack.i.b16 %v2057, %v2056
        %2059 = vrot.lane.b32.xlu0 %v2052, 32
        %v2060 = vpop.permute.xlu0 %2059
        %2061 = vrot.lane.b32.xlu0 %v2055, 64
        %v2062 = vpop.permute.xlu0 %2061
        %2063 = vrot.lane.b32.xlu0 %v2058, 96
        %v2064 = vpop.permute.xlu0 %2063
        %v2067 = vsel %vm1448, %v2049, %v2060
        %vm2068 = vcmask 523264
        %v2070 = vsel %vm2068, %v2067, %v2062
        %vm2071 = vcmask 785408
        %v2073 = vsel %vm2071, %v2070, %v2064
        %v2075 = vld [vmem:[%s8] sm:$0xf]
        %v2076 = vld [vmem:[%s8 + $0x4] sm:$0xf]
        %v2077 = vld [vmem:[%s8 + $0x8] sm:$0xf]
        %v2078 = vld [vmem:[%s8 + $0xc] sm:$0xf]
        %v2079 = vld [vmem:[%s8 + $0x10] sm:$0xf]
        %v2080 = vld [vmem:[%s8 + $0x14] sm:$0xf]
        %v2081 = vld [vmem:[%s8 + $0x18] sm:$0xf]
        %v2082 = vld [vmem:[%s8 + $0x1c] sm:$0xf]
        %v2083 = vld [vmem:[%s8 + $0x20] sm:$0xf]
        %v2084 = vld [vmem:[%s8 + $0x24] sm:$0xf]
        %v2085 = vld [vmem:[%s8 + $0x28] sm:$0xf]
        %v2086 = vld [vmem:[%s8 + $0x2c] sm:$0xf]
        %v2087 = vld [vmem:[%s8 + $0x30] sm:$0xf]
        %v2088 = vld [vmem:[%s8 + $0x34] sm:$0xf]
        %v2089 = vld [vmem:[%s8 + $0x38] sm:$0xf]
        %v2090 = vld [vmem:[%s8 + $0x3c] sm:$0xf]
        %v2091 = vld [vmem:[%s9] sm:$0x1]
        %v2093 = vlaneseq
        %v2094 = vshrl.u32 %v2093, 7
        %v2095 = vsub.s32 0, %v2094
        %v2096 = vrot.slane %v2091, %v2095
        %v2114 = vunpack.c.l.b16 %v2075
        %v2115 = vunpack.c.l.b16 %v2076
        %v2116 = vunpack.c.l.b16 %v2077
        %v2117 = vunpack.c.l.b16 %v2078
        %v2118 = vunpack.c.l.b16 %v2079
        %v2119 = vunpack.c.l.b16 %v2080
        %v2120 = vunpack.c.l.b16 %v2081
        %v2121 = vunpack.c.l.b16 %v2082
        %v2122 = vunpack.c.l.b16 %v2083
        %v2123 = vunpack.c.l.b16 %v2084
        %v2124 = vunpack.c.l.b16 %v2085
        %v2125 = vunpack.c.l.b16 %v2086
        %v2126 = vunpack.c.l.b16 %v2087
        %v2127 = vunpack.c.l.b16 %v2088
        %v2128 = vunpack.c.l.b16 %v2089
        %v2129 = vunpack.c.l.b16 %v2090
        %v2130 = vpack.c.b16 %v2115, %v2114
        %v2131 = vpack.c.b16 %v2117, %v2116
        %v2132 = vpack.c.b16 %v2119, %v2118
        %v2133 = vpack.c.b16 %v2121, %v2120
        %v2134 = vpack.c.b16 %v2123, %v2122
        %v2135 = vpack.c.b16 %v2125, %v2124
        %v2136 = vpack.c.b16 %v2127, %v2126
        %v2137 = vpack.c.b16 %v2129, %v2128
        %2146 = vmatprep.subr.bf16.mxu0 0
        %2147 = vmatpush1.bf16.msra.mxu0 %v2137
        %2148 = vmatprep.subr.bf16.mxu0 0
        %2149 = vmatpush1.bf16.msra.mxu0 %v2136
        %2150 = vmatprep.subr.bf16.mxu0 0
        %2151 = vmatpush1.bf16.msra.mxu0 %v2135
        %2152 = vmatprep.subr.bf16.mxu0 0
        %2153 = vmatpush1.bf16.msra.mxu0 %v2134
        %2154 = vmatprep.subr.bf16.mxu0 0
        %2155 = vmatpush1.bf16.msra.mxu0 %v2133
        %2156 = vmatprep.subr.bf16.mxu0 0
        %2157 = vmatpush1.bf16.msra.mxu0 %v2132
        %2158 = vmatprep.subr.bf16.mxu0 0
        %2159 = vmatpush1.bf16.msra.mxu0 %v2131
        %2160 = vmatprep.subr.bf16.mxu0 0
        %2161 = vmatpush1.bf16.msra.mxu0 %v2130
        %2162 = vmatprep.subr.bf16.mxu0 0
        %2163 = vmatpush2.bf16.msra.mxu0 0
        %2164 = vmatprep.subr.bf16.mxu0 0
        %2165 = vmatpush2.bf16.msra.mxu0 0
        %2166 = vmatprep.subr.bf16.mxu0 0
        %2167 = vmatpush2.bf16.msra.mxu0 0
        %2168 = vmatprep.subr.bf16.mxu0 0
        %2169 = vmatpush2.bf16.msra.mxu0 0
        %2170 = vmatprep.subr.bf16.mxu0 0
        %2171 = vmatpush2.bf16.msra.mxu0 0
        %2172 = vmatprep.subr.bf16.mxu0 0
        %2173 = vmatpush2.bf16.msra.mxu0 0
        %2174 = vmatprep.subr.bf16.mxu0 0
        %2175 = vmatpush2.bf16.msra.mxu0 0
        %2176 = vmatprep.subr.bf16.mxu0 0
        %2177 = vmatpush2.bf16.msra.mxu0 0
        %2178 = vmatprep.mubr.bf16.mxu0 0
        %2179 = vmatmul.mubr.bf16.gmra.mxu0 %v2073
        %v2180 = vpop.f32.mrf.mxu0
        %v2181 = vadd.f32 %v2096, %v2180
        %v2182 = vpop.f32.mrf.mxu0
        %v2183 = vpop.f32.mrf.mxu0
        %v2184 = vpop.f32.mrf.mxu0
        %2185 = vdwg.mxu0
        %v2186 = vadd.f32 %v602, %v2181
        %v2187 = vld [vmem:[%s10] sm:$0x1]
        %v2188 = vld [vmem:[%s11] sm:$0x1]
        %2189 = vadd.xlane.f32.xlu0 %v2186
        %v2190 = vpop.xlane.xlu0 %2189
        %v2191 = vrcp.pop 128.0
        %v2192 = vmul.f32 %v2190, %v2191
        %v2193 = vsub.f32 %v2186, %v2192
        %v2194 = vmul.f32 %v2193, %v2193
        %2195 = vadd.xlane.f32.xlu0 %v2194
        %v2196 = vpop.xlane.xlu0 %2195
        %v2197 = vmul.f32 %v2196, %v2191
        %v2198 = vadd.f32 %v2197, 1e-12
        %v2199 = vrsqrt.pop %v2198
        %v2200 = vmul.f32 %v2193, %v2199
        %v2202 = vlaneseq
        %v2203 = vshrl.u32 %v2202, 7
        %v2204 = vsub.s32 0, %v2203
        %v2205 = vrot.slane %v2187, %v2204
        %v2207 = vmul.f32 %v2200, %v2205
        %v2209 = vlaneseq
        %v2210 = vshrl.u32 %v2209, 7
        %v2211 = vsub.s32 0, %v2210
        %v2212 = vrot.slane %v2188, %v2211
        %v2214 = vadd.f32 %v2207, %v2212
        %v2215 = vpack.c.bf16 %v2214, %v2214
        %v2216 = vld [vmem:[%s12] sm:$0xff]
        %v2217 = vld [vmem:[%s12 + $0x8] sm:$0xff]
        %v2218 = vld [vmem:[%s12 + $0x10] sm:$0xff]
        %v2219 = vld [vmem:[%s12 + $0x18] sm:$0xff]
        %v2220 = vld [vmem:[%s12 + $0x20] sm:$0xff]
        %v2221 = vld [vmem:[%s12 + $0x28] sm:$0xff]
        %v2222 = vld [vmem:[%s12 + $0x30] sm:$0xff]
        %v2223 = vld [vmem:[%s12 + $0x38] sm:$0xff]
        %v2224 = vld [vmem:[%s12 + $0x40] sm:$0xff]
        %v2225 = vld [vmem:[%s12 + $0x48] sm:$0xff]
        %v2226 = vld [vmem:[%s12 + $0x50] sm:$0xff]
        %v2227 = vld [vmem:[%s12 + $0x58] sm:$0xff]
        %v2228 = vld [vmem:[%s12 + $0x60] sm:$0xff]
        %v2229 = vld [vmem:[%s12 + $0x68] sm:$0xff]
        %v2230 = vld [vmem:[%s12 + $0x70] sm:$0xff]
        %v2231 = vld [vmem:[%s12 + $0x78] sm:$0xff]
        %v2232 = vld [vmem:[%s13] sm:$0x3]
        %v2234 = vlaneseq
        %v2235 = vshrl.u32 %v2234, 7
        %v2236 = vsub.s32 0, %v2235
        %v2237 = vrot.slane %v2232, %v2236
        %v2238 = vlaneseq
        %v2239 = vshrl.u32 %v2238, 7
        %v2240 = vsub.s32 1, %v2239
        %v2241 = vrot.slane %v2232, %v2240
        %v2260 = vunpack.c.l.b16 %v2216
        %v2261 = vunpack.c.h.b16 %v2216
        %v2262 = vunpack.c.l.b16 %v2217
        %v2263 = vunpack.c.h.b16 %v2217
        %v2264 = vunpack.c.l.b16 %v2218
        %v2265 = vunpack.c.h.b16 %v2218
        %v2266 = vunpack.c.l.b16 %v2219
        %v2267 = vunpack.c.h.b16 %v2219
        %v2268 = vunpack.c.l.b16 %v2220
        %v2269 = vunpack.c.h.b16 %v2220
        %v2270 = vunpack.c.l.b16 %v2221
        %v2271 = vunpack.c.h.b16 %v2221
        %v2272 = vunpack.c.l.b16 %v2222
        %v2273 = vunpack.c.h.b16 %v2222
        %v2274 = vunpack.c.l.b16 %v2223
        %v2275 = vunpack.c.h.b16 %v2223
        %v2276 = vunpack.c.l.b16 %v2224
        %v2277 = vunpack.c.h.b16 %v2224
        %v2278 = vunpack.c.l.b16 %v2225
        %v2279 = vunpack.c.h.b16 %v2225
        %v2280 = vunpack.c.l.b16 %v2226
        %v2281 = vunpack.c.h.b16 %v2226
        %v2282 = vunpack.c.l.b16 %v2227
        %v2283 = vunpack.c.h.b16 %v2227
        %v2284 = vunpack.c.l.b16 %v2228
        %v2285 = vunpack.c.h.b16 %v2228
        %v2286 = vunpack.c.l.b16 %v2229
        %v2287 = vunpack.c.h.b16 %v2229
        %v2288 = vunpack.c.l.b16 %v2230
        %v2289 = vunpack.c.h.b16 %v2230
        %v2290 = vunpack.c.l.b16 %v2231
        %v2291 = vunpack.c.h.b16 %v2231
        %v2292 = vpack.c.b16 %v2262, %v2260
        %v2293 = vpack.c.b16 %v2263, %v2261
        %v2294 = vpack.c.b16 %v2266, %v2264
        %v2295 = vpack.c.b16 %v2267, %v2265
        %v2296 = vpack.c.b16 %v2270, %v2268
        %v2297 = vpack.c.b16 %v2271, %v2269
        %v2298 = vpack.c.b16 %v2274, %v2272
        %v2299 = vpack.c.b16 %v2275, %v2273
        %v2300 = vpack.c.b16 %v2278, %v2276
        %v2301 = vpack.c.b16 %v2279, %v2277
        %v2302 = vpack.c.b16 %v2282, %v2280
        %v2303 = vpack.c.b16 %v2283, %v2281
        %v2304 = vpack.c.b16 %v2286, %v2284
        %v2305 = vpack.c.b16 %v2287, %v2285
        %v2306 = vpack.c.b16 %v2290, %v2288
        %v2307 = vpack.c.b16 %v2291, %v2289
        %2324 = vmatprep.subr.bf16.mxu0 %v2307
        %2325 = vmatpush1.bf16.msra.mxu0 %v2306
        %2326 = vmatprep.subr.bf16.mxu0 %v2305
        %2327 = vmatpush1.bf16.msra.mxu0 %v2304
        %2328 = vmatprep.subr.bf16.mxu0 %v2303
        %2329 = vmatpush1.bf16.msra.mxu0 %v2302
        %2330 = vmatprep.subr.bf16.mxu0 %v2301
        %2331 = vmatpush1.bf16.msra.mxu0 %v2300
        %2332 = vmatprep.subr.bf16.mxu0 %v2299
        %2333 = vmatpush1.bf16.msra.mxu0 %v2298
        %2334 = vmatprep.subr.bf16.mxu0 %v2297
        %2335 = vmatpush1.bf16.msra.mxu0 %v2296
        %2336 = vmatprep.subr.bf16.mxu0 %v2295
        %2337 = vmatpush1.bf16.msra.mxu0 %v2294
        %2338 = vmatprep.subr.bf16.mxu0 %v2293
        %2339 = vmatpush1.bf16.msra.mxu0 %v2292
        %2340 = vmatprep.subr.bf16.mxu0 0
        %2341 = vmatpush2.bf16.msra.mxu0 0
        %2342 = vmatprep.subr.bf16.mxu0 0
        %2343 = vmatpush2.bf16.msra.mxu0 0
        %2344 = vmatprep.subr.bf16.mxu0 0
        %2345 = vmatpush2.bf16.msra.mxu0 0
        %2346 = vmatprep.subr.bf16.mxu0 0
        %2347 = vmatpush2.bf16.msra.mxu0 0
        %2348 = vmatprep.subr.bf16.mxu0 0
        %2349 = vmatpush2.bf16.msra.mxu0 0
        %2350 = vmatprep.subr.bf16.mxu0 0
        %2351 = vmatpush2.bf16.msra.mxu0 0
        %2352 = vmatprep.subr.bf16.mxu0 0
        %2353 = vmatpush2.bf16.msra.mxu0 0
        %2354 = vmatprep.subr.bf16.mxu0 0
        %2355 = vmatpush2.bf16.msra.mxu0 0
        %2356 = vmatprep.mubr.bf16.mxu0 0
        %2357 = vmatmul.mubr.bf16.gmra.mxu0 %v2215
        %v2358 = vpop.f32.mrf.mxu0
        %v2359 = vadd.f32 %v2237, %v2358
        %v2360 = vpop.f32.mrf.mxu0
        %v2361 = vadd.f32 %v2241, %v2360
        %v2362 = vpop.f32.mrf.mxu0
        %v2363 = vpop.f32.mrf.mxu0
        %2364 = vdwg.mxu0
        %v2365 = vmul.f32 %v2359, 0.5
        %v2366 = vmul.f32 %v2361, 0.5
        %v2367 = vrcp.pop 1.4142135
        %v2368 = vmul.f32 %v2359, %v2367
        %v2369 = vmul.f32 %v2361, %v2367
        %v2370 = verf.f32.pop %v2368
        %v2371 = verf.f32.pop %v2369
        %v2372 = vadd.f32 %v2370, 1.0
        %v2373 = vadd.f32 %v2371, 1.0
        %v2374 = vmul.f32 %v2365, %v2372
        %v2375 = vmul.f32 %v2366, %v2373
        %v2376 = vpack.c.bf16 %v2374, %v2374
        %v2377 = vpack.c.bf16 %v2375, %v2375
        %v2378 = vld [vmem:[%s14] sm:$0xf]
        %v2379 = vld [vmem:[%s14 + $0x4] sm:$0xf]
        %v2380 = vld [vmem:[%s14 + $0x8] sm:$0xf]
        %v2381 = vld [vmem:[%s14 + $0xc] sm:$0xf]
        %v2382 = vld [vmem:[%s14 + $0x10] sm:$0xf]
        %v2383 = vld [vmem:[%s14 + $0x14] sm:$0xf]
        %v2384 = vld [vmem:[%s14 + $0x18] sm:$0xf]
        %v2385 = vld [vmem:[%s14 + $0x1c] sm:$0xf]
        %v2386 = vld [vmem:[%s14 + $0x20] sm:$0xf]
        %v2387 = vld [vmem:[%s14 + $0x24] sm:$0xf]
        %v2388 = vld [vmem:[%s14 + $0x28] sm:$0xf]
        %v2389 = vld [vmem:[%s14 + $0x2c] sm:$0xf]
        %v2390 = vld [vmem:[%s14 + $0x30] sm:$0xf]
        %v2391 = vld [vmem:[%s14 + $0x34] sm:$0xf]
        %v2392 = vld [vmem:[%s14 + $0x38] sm:$0xf]
        %v2393 = vld [vmem:[%s14 + $0x3c] sm:$0xf]
        %v2394 = vld [vmem:[%s14 + $0x40] sm:$0xf]
        %v2395 = vld [vmem:[%s14 + $0x44] sm:$0xf]
        %v2396 = vld [vmem:[%s14 + $0x48] sm:$0xf]
        %v2397 = vld [vmem:[%s14 + $0x4c] sm:$0xf]
        %v2398 = vld [vmem:[%s14 + $0x50] sm:$0xf]
        %v2399 = vld [vmem:[%s14 + $0x54] sm:$0xf]
        %v2400 = vld [vmem:[%s14 + $0x58] sm:$0xf]
        %v2401 = vld [vmem:[%s14 + $0x5c] sm:$0xf]
        %v2402 = vld [vmem:[%s14 + $0x60] sm:$0xf]
        %v2403 = vld [vmem:[%s14 + $0x64] sm:$0xf]
        %v2404 = vld [vmem:[%s14 + $0x68] sm:$0xf]
        %v2405 = vld [vmem:[%s14 + $0x6c] sm:$0xf]
        %v2406 = vld [vmem:[%s14 + $0x70] sm:$0xf]
        %v2407 = vld [vmem:[%s14 + $0x74] sm:$0xf]
        %v2408 = vld [vmem:[%s14 + $0x78] sm:$0xf]
        %v2409 = vld [vmem:[%s14 + $0x7c] sm:$0xf]
        %v2410 = vld [vmem:[%s15] sm:$0x1]
        %v2412 = vlaneseq
        %v2413 = vshrl.u32 %v2412, 7
        %v2414 = vsub.s32 0, %v2413
        %v2415 = vrot.slane %v2410, %v2414
        %v2449 = vunpack.c.l.b16 %v2378
        %v2450 = vunpack.c.l.b16 %v2379
        %v2451 = vunpack.c.l.b16 %v2380
        %v2452 = vunpack.c.l.b16 %v2381
        %v2453 = vunpack.c.l.b16 %v2382
        %v2454 = vunpack.c.l.b16 %v2383
        %v2455 = vunpack.c.l.b16 %v2384
        %v2456 = vunpack.c.l.b16 %v2385
        %v2457 = vunpack.c.l.b16 %v2386
        %v2458 = vunpack.c.l.b16 %v2387
        %v2459 = vunpack.c.l.b16 %v2388
        %v2460 = vunpack.c.l.b16 %v2389
        %v2461 = vunpack.c.l.b16 %v2390
        %v2462 = vunpack.c.l.b16 %v2391
        %v2463 = vunpack.c.l.b16 %v2392
        %v2464 = vunpack.c.l.b16 %v2393
        %v2465 = vunpack.c.l.b16 %v2394
        %v2466 = vunpack.c.l.b16 %v2395
        %v2467 = vunpack.c.l.b16 %v2396
        %v2468 = vunpack.c.l.b16 %v2397
        %v2469 = vunpack.c.l.b16 %v2398
        %v2470 = vunpack.c.l.b16 %v2399
        %v2471 = vunpack.c.l.b16 %v2400
        %v2472 = vunpack.c.l.b16 %v2401
        %v2473 = vunpack.c.l.b16 %v2402
        %v2474 = vunpack.c.l.b16 %v2403
        %v2475 = vunpack.c.l.b16 %v2404
        %v2476 = vunpack.c.l.b16 %v2405
        %v2477 = vunpack.c.l.b16 %v2406
        %v2478 = vunpack.c.l.b16 %v2407
        %v2479 = vunpack.c.l.b16 %v2408
        %v2480 = vunpack.c.l.b16 %v2409
        %v2481 = vpack.c.b16 %v2450, %v2449
        %v2482 = vpack.c.b16 %v2452, %v2451
        %v2483 = vpack.c.b16 %v2454, %v2453
        %v2484 = vpack.c.b16 %v2456, %v2455
        %v2485 = vpack.c.b16 %v2458, %v2457
        %v2486 = vpack.c.b16 %v2460, %v2459
        %v2487 = vpack.c.b16 %v2462, %v2461
        %v2488 = vpack.c.b16 %v2464, %v2463
        %v2489 = vpack.c.b16 %v2466, %v2465
        %v2490 = vpack.c.b16 %v2468, %v2467
        %v2491 = vpack.c.b16 %v2470, %v2469
        %v2492 = vpack.c.b16 %v2472, %v2471
        %v2493 = vpack.c.b16 %v2474, %v2473
        %v2494 = vpack.c.b16 %v2476, %v2475
        %v2495 = vpack.c.b16 %v2478, %v2477
        %v2496 = vpack.c.b16 %v2480, %v2479
        %2513 = vmatprep.subr.bf16.mxu0 0
        %2514 = vmatpush1.bf16.msra.mxu0 %v2488
        %2515 = vmatprep.subr.bf16.mxu0 0
        %2516 = vmatpush1.bf16.msra.mxu0 %v2487
        %2517 = vmatprep.subr.bf16.mxu0 0
        %2518 = vmatpush1.bf16.msra.mxu0 %v2486
        %2519 = vmatprep.subr.bf16.mxu0 0
        %2520 = vmatpush1.bf16.msra.mxu0 %v2485
        %2521 = vmatprep.subr.bf16.mxu0 0
        %2522 = vmatpush1.bf16.msra.mxu0 %v2484
        %2523 = vmatprep.subr.bf16.mxu0 0
        %2524 = vmatpush1.bf16.msra.mxu0 %v2483
        %2525 = vmatprep.subr.bf16.mxu0 0
        %2526 = vmatpush1.bf16.msra.mxu0 %v2482
        %2527 = vmatprep.subr.bf16.mxu0 0
        %2528 = vmatpush1.bf16.msra.mxu0 %v2481
        %2529 = vmatprep.subr.bf16.mxu0 0
        %2530 = vmatpush2.bf16.msra.mxu0 %v2496
        %2531 = vmatprep.subr.bf16.mxu0 0
        %2532 = vmatpush2.bf16.msra.mxu0 %v2495
        %2533 = vmatprep.subr.bf16.mxu0 0
        %2534 = vmatpush2.bf16.msra.mxu0 %v2494
        %2535 = vmatprep.subr.bf16.mxu0 0
        %2536 = vmatpush2.bf16.msra.mxu0 %v2493
        %2537 = vmatprep.subr.bf16.mxu0 0
        %2538 = vmatpush2.bf16.msra.mxu0 %v2492
        %2539 = vmatprep.subr.bf16.mxu0 0
        %2540 = vmatpush2.bf16.msra.mxu0 %v2491
        %2541 = vmatprep.subr.bf16.mxu0 0
        %2542 = vmatpush2.bf16.msra.mxu0 %v2490
        %2543 = vmatprep.subr.bf16.mxu0 0
        %2544 = vmatpush2.bf16.msra.mxu0 %v2489
        %2545 = vmatprep.mubr.bf16.mxu0 %v2377
        %2546 = vmatmul.mubr.bf16.gmra.mxu0 %v2376
        %v2547 = vpop.f32.mrf.mxu0
        %v2548 = vadd.f32 %v2415, %v2547
        %v2549 = vpop.f32.mrf.mxu0
        %v2550 = vpop.f32.mrf.mxu0
        %v2551 = vpop.f32.mrf.mxu0
        %2552 = vdwg.mxu0
        %v2553 = vadd.f32 %v2214, %v2548
        %v2554 = vld [vmem:[%s16] sm:$0x1]
        %v2555 = vld [vmem:[%s17] sm:$0x1]
        %2556 = vadd.xlane.f32.xlu0 %v2553
        %v2557 = vpop.xlane.xlu0 %2556
        %v2558 = vmul.f32 %v2557, %v2191
        %v2559 = vsub.f32 %v2553, %v2558
        %v2560 = vmul.f32 %v2559, %v2559
        %2561 = vadd.xlane.f32.xlu0 %v2560
        %v2562 = vpop.xlane.xlu0 %2561
        %v2563 = vmul.f32 %v2562, %v2191
        %v2564 = vadd.f32 %v2563, 1e-12
        %v2565 = vrsqrt.pop %v2564
        %v2566 = vmul.f32 %v2559, %v2565
        %v2568 = vlaneseq
        %v2569 = vshrl.u32 %v2568, 7
        %v2570 = vsub.s32 0, %v2569
        %v2571 = vrot.slane %v2554, %v2570
        %v2573 = vmul.f32 %v2566, %v2571
        %v2575 = vlaneseq
        %v2576 = vshrl.u32 %v2575, 7
        %v2577 = vsub.s32 0, %v2576
        %v2578 = vrot.slane %v2555, %v2577
        %v2580 = vadd.f32 %v2573, %v2578
        %2581 = vst [vmem:[%s591] sm:$0xff] %v2580
        %s2582 = sand.u32 %s442, 1
        %s2583 = scalar_lea.sflag [#allocation3], %s2582
        %s2584 = sand.u32 %s442, 1
        %s2585 = smul.addr %s2584, 8
        %s2586 = scalar_lea.vmem [#allocation2], %s2585
        // Predicated region
        $region93: #{bert_forward.3} parent=91 // pred_check
          %p2587 = pneg %p452
        $region94: #{bert_forward.3} parent=91 // pred_check_branch
          %2589 = sbr.rel (%p2587) target = $region96
        $region95: #{bert_forward.3} parent=91 // pred_region
          %s2591 = ssub.s32 128, 128
          %2592 = vsyncadd %s2583, %s2591
          %s2593 = sadd.s32 %s37, %s36
          %s2594 = smul.addr %s2593, 128
          %s2595 = scalar_lea.hbm %s18, %s2594
          %s2597 = sshll.u32 %s2586, 4
          %s2598 = int_to_ptr.vmem [resolvable:$true] %s2597
          %2600 = dma.vmem_to_hbm [thread:$0]  %s2598, 128, %s2595, %s2583
        $region96: #{bert_forward.3} parent=91 // pred_fallthru
          _
      $region92: #{bert_forward.3} parent=5 // pred_fallthru
        _
      %p2601 = scmp.le.s32.totalorder 2, %s27
      // Predicated region
      $region97: #{bert_forward.3} parent=5 // pred_check
        %p2602 = pneg %p2601
      $region98: #{bert_forward.3} parent=5 // pred_check_branch
        %2604 = sbr.rel (%p2602) target = $region100
      $region99: #{bert_forward.3} parent=5 // pred_region
        %s2605 = ssub.s32 %s27, 2
        // Predicated region
        $region101: #{bert_forward.3} parent=99 // pred_check
          %p2606 = pneg %p458
        $region102: #{bert_forward.3} parent=99 // pred_check_branch
          %2608 = sbr.rel (%p2606) target = $region104
        $region103: #{bert_forward.3} parent=99 // pred_region
          %s2609 = sand.u32 %s443, 1
          %s2610 = scalar_lea.sflag [#allocation3], %s2609
          %s2611 = sand.u32 %s443, 1
          %s2612 = smul.addr %s2611, 8
          %s2613 = scalar_lea.vmem [#allocation2], %s2612
          %2614 = dma.done %s2610, 128
        $region104: #{bert_forward.3} parent=99 // pred_fallthru
          _
      $region100: #{bert_forward.3} parent=5 // pred_fallthru
        _
    $region6: #{bert_forward.3} parent=1 // loop_footer
      %s31 = sadd.s32 1, %s27
    $region7: #{bert_forward.3} parent=1 // loop_footer_branch
      %26 = sbr.rel target = $region3
    $region8: #{bert_forward.3} parent=1 // loop_exit
      _
    %2615 = vsyncpa [#allocation3], 1
    %s2616 = scalar_lea.sflag [#allocation3], 1
    %2617 = vsyncpa %s2616, 1

</llo_original>
